<compile_context>
chip_gen: v7x
topology: tpu7x:2x2x1
jax: 0.10.0
libtpu: 0.0.40
codegen_flags: <defaults>
</compile_context>

<pallas_src>
import jax
import jax.numpy as jnp
from jax import lax
from jax.experimental import pallas as pl
from jax.experimental.pallas import tpu as pltpu


TB = 16  # images per grid step (conv2 M = 128: fills v5e MXU, good on v6e/v7x)


# ----------------------------------------------------------------------------
# Fused forward kernel (TB images per grid step)
# ----------------------------------------------------------------------------
def _cnn_fused_kernel(xt_ref, m1_ref, b1_ref, m2_ref, b2_ref,
                      fc1w_ref, fc1b_ref, outw_ref, outb_ref,
                      o_ref, p1_ref, lhs2_ref, c2_ref):
    f32 = jnp.float32
    bf16 = jnp.bfloat16

    # -------- conv1 (1->32, k=5), all 5 taps folded into one matmul ----------
    # xt rows per image (32): [12 even-output-row windows, 4 zero rows,
    #                          12 odd-output-row windows, 4 zero rows]
    # lane layout of the result: q*384 + c*32 + o  (q = W-pool phase).
    acc = jnp.dot(xt_ref[...], m1_ref[...],
                  preferred_element_type=f32)                     # (TB*32, 768)
    acc = jnp.maximum(acc + b1_ref[...], 0.0)
    # W-direction 2-pool: max over the two pool-phase lane slabs.
    acc = jnp.maximum(acc[:, 0:384], acc[:, 384:768])             # (TB*32, 384)
    # H-direction 2-pool: even-row block vs odd-row block (8-aligned slices).
    acc = acc.reshape(TB, 32, 384)
    p1_ref[...] = jnp.maximum(acc[:, 0:16, :], acc[:, 16:32, :])  # (TB,16,384); rows 12..15 junk

    # -------- conv2 folded LHS: lhs2[n*8+r, i*384+j] = p1[n, r+i, j] ---------
    for i in range(5):
        lhs2_ref[:, i * 384:(i + 1) * 384] = (
            p1_ref[:, i:i + 8, :].reshape(TB * 8, 384))

    # -------- conv2 (32->64, k=5), folded taps, + bias + ReLU ----------------
    acc2 = jnp.dot(lhs2_ref[...].astype(bf16), m2_ref[...],
                   preferred_element_type=f32)                    # (TB*8, 512)
    acc2 = jnp.maximum(acc2 + b2_ref[...], 0.0)
    # W-direction 4-pool: four pool-phase lane slabs of width 128.
    acc2 = jnp.maximum(jnp.maximum(acc2[:, 0:128], acc2[:, 128:256]),
                       jnp.maximum(acc2[:, 256:384], acc2[:, 384:512]))
    c2_ref[...] = acc2.reshape(TB, 8, 128)                        # (TB, 8, 128)

    # H-direction 4-pool: rows 0..3 -> pooled row 0, rows 4..7 -> pooled row 1.
    g0 = jnp.maximum(jnp.maximum(c2_ref[:, 0, :], c2_ref[:, 1, :]),
                     jnp.maximum(c2_ref[:, 2, :], c2_ref[:, 3, :]))   # (TB,128)
    g1 = jnp.maximum(jnp.maximum(c2_ref[:, 4, :], c2_ref[:, 5, :]),
                     jnp.maximum(c2_ref[:, 6, :], c2_ref[:, 7, :]))   # (TB,128)

    # -------- fc1 (256->50) + ReLU -------------------------------------------
    hid = (jnp.dot(g0.astype(bf16), fc1w_ref[0], preferred_element_type=f32)
           + jnp.dot(g1.astype(bf16), fc1w_ref[1], preferred_element_type=f32)
           + fc1b_ref[...])
    hid = jnp.maximum(hid, 0.0)                                   # (TB, 50)

    # -------- out (50->10) + softmax, computed 128 lanes wide ----------------
    # outw cols 10..127 are zero, outb lanes 10..127 are -1e30 -> prob 0 there.
    logits = (jnp.dot(hid.astype(bf16), outw_ref[...],
                      preferred_element_type=f32) + outb_ref[...])    # (TB, 128)
    mx = jnp.max(logits, axis=-1, keepdims=True)
    e = jnp.exp(logits - mx)
    o_ref[...] = e / jnp.sum(e, axis=-1, keepdims=True)


# ----------------------------------------------------------------------------
# Weight preprocessing (plain JAX, run ONCE outside the forward pass)
# ----------------------------------------------------------------------------
def _banded_conv_weights(w_oihw, w_in, pool):
    """PyTorch conv weight (O, I, 5, 5) -> 5 block-banded matrices (K, w_in*I, wo*O).

    M[i][y*I + ci, q*(wo//pool)*O + c*O + o] = w[o, ci, i, y - (c*pool + q)]
    (zero outside the band).  Pool-phase-major lane order makes the W max-pool
    a max over `pool` contiguous lane slabs of width (wo//pool)*O.
    """
    O, I, K, _ = w_oihw.shape
    wo = w_in - K + 1
    wp = wo // pool
    wt = jnp.transpose(w_oihw, (2, 3, 1, 0)).astype(jnp.float32)   # (K, K, I, O)
    sel = (jnp.arange(w_in)[None, :, None] ==
           (jnp.arange(wo)[None, None, :] + jnp.arange(K)[:, None, None]))
    sel = sel.astype(jnp.float32)                                  # (K, w_in, wo)
    m = jnp.einsum('ikpo,kyc->iypco', wt, sel)                     # (K, w_in, I, wo, O)
    m = m.reshape(K, w_in * I, wp, pool, O)
    m = jnp.transpose(m, (0, 1, 3, 2, 4))                          # pool-phase-major
    return m.reshape(K, w_in * I, wo * O)


def preprocess_params(params):
    """One-time layout work; returns resident kernel operands."""
    m1 = _banded_conv_weights(params["w1"], 28, 2).reshape(140, 768)
    m1 = m1.astype(jnp.bfloat16)                                   # (140, 768)
    b1 = jnp.tile(params["b1"].astype(jnp.float32), 24).reshape(1, 768)
    m2 = _banded_conv_weights(params["w2"], 12, 4).reshape(1920, 512)
    m2 = m2.astype(jnp.bfloat16)                                   # (1920, 512)
    b2 = jnp.tile(params["b2"].astype(jnp.float32), 8).reshape(1, 512)
    # fc1 consumes pooled conv2 in PyTorch NCHW-flatten order (k = o*4 + h*2 + w);
    # our pooled rows are (h, lane = w*64 + o) -> permute fc1 columns to match.
    fc1w = jnp.transpose(params["fc1_w"].reshape(50, 64, 2, 2),
                         (2, 3, 1, 0)).reshape(2, 128, 50).astype(jnp.bfloat16)
    fc1b = params["fc1_b"].reshape(1, 50).astype(jnp.float32)
    outw = jnp.concatenate([params["out_w"].T.astype(jnp.float32),
                            jnp.zeros((50, 118), jnp.float32)],
                           axis=1).astype(jnp.bfloat16)            # (50, 128)
    outb = jnp.concatenate([params["out_b"].astype(jnp.float32),
                            jnp.full((118,), -1e30, jnp.float32)]).reshape(1, 128)
    return (m1, b1, m2, b2, fc1w, fc1b, outw, outb)


# ----------------------------------------------------------------------------
# CNNv1 forward
# ----------------------------------------------------------------------------
@jax.jit
def cnn_v1_forward(x_nchw, prep):
    m1, b1, m2, b2, fc1w, fc1b, outw, outb = prep
    N = x_nchw.shape[0]
    x2 = x_nchw.reshape(N, 28, 28).astype(jnp.float32)

    # conv1 folded-band LHS: xt_full[n, r, i*28 + y] = x[n, r + i, y]
    xt_full = jnp.concatenate([x2[:, i:i + 24, :] for i in range(5)], axis=2)
    # Per-image row order [12 even output rows, 4 zero rows, 12 odd, 4 zero]
    # -> in-kernel 2x2 H-pool is a max of two 8-aligned 16-row blocks and the
    #    pooled buffer is 16 rows/image (tile-aligned for the conv2 tap slices).
    zpad = jnp.zeros((N, 4, 140), jnp.float32)
    xt = jnp.concatenate([xt_full[:, 0::2, :], zpad,
                          xt_full[:, 1::2, :], zpad], axis=1)      # (N, 32, 140)

    n_pad = ((N + TB - 1) // TB) * TB
    if n_pad != N:
        xt = jnp.concatenate(
            [xt, jnp.zeros((n_pad - N, 32, 140), jnp.float32)], axis=0)
    xt = xt.reshape(n_pad * 32, 140).astype(jnp.bfloat16)

    out = pl.pallas_call(
        _cnn_fused_kernel,
        out_shape=jax.ShapeDtypeStruct((n_pad, 128), jnp.float32),
        grid=(n_pad // TB,),
        in_specs=[
            pl.BlockSpec((TB * 32, 140), lambda n: (n, 0)),    # conv1 LHS (per step)
            pl.BlockSpec((140, 768), lambda n: (0, 0)),        # conv1 band (resident)
            pl.BlockSpec((1, 768), lambda n: (0, 0)),
            pl.BlockSpec((1920, 512), lambda n: (0, 0)),       # conv2 band (resident)
            pl.BlockSpec((1, 512), lambda n: (0, 0)),
            pl.BlockSpec((2, 128, 50), lambda n: (0, 0, 0)),   # fc1 weight halves
            pl.BlockSpec((1, 50), lambda n: (0, 0)),
            pl.BlockSpec((50, 128), lambda n: (0, 0)),         # out weight (padded)
            pl.BlockSpec((1, 128), lambda n: (0, 0)),          # out bias  (padded)
        ],
        out_specs=pl.BlockSpec((TB, 128), lambda n: (n, 0)),   # lane-dense store
        scratch_shapes=[
            pltpu.VMEM((TB, 16, 384), jnp.float32),   # pooled conv1 (16 rows/img)
            pltpu.VMEM((TB * 8, 1920), jnp.float32),  # conv2 folded LHS
            pltpu.VMEM((TB, 8, 128), jnp.float32),    # W-pooled conv2
        ],
        compiler_params=pltpu.CompilerParams(
            dimension_semantics=("parallel",),
            vmem_limit_bytes=32 * 1024 * 1024,
        ),
    )(xt, m1, b1, m2, b2, fc1w, fc1b, outw, outb)
    return out[:N, :10]


# ----------------------------------------------------------------------------
# Pure-XLA reference (exact PyTorch semantics, f32) for self-checking
# ----------------------------------------------------------------------------
def _reference_forward(x, params):
    y = lax.conv_general_dilated(x, params["w1"], (1, 1), "VALID",
                                 dimension_numbers=("NCHW", "OIHW", "NCHW"))
    y = jax.nn.relu(y + params["b1"][None, :, None, None])
    n, c, h, w = y.shape
    y = y.reshape(n, c, h // 2, 2, w // 2, 2).max(axis=(3, 5))
    y = lax.conv_general_dilated(y, params["w2"], (1, 1), "VALID",
                                 dimension_numbers=("NCHW", "OIHW", "NCHW"))
    y = jax.nn.relu(y + params["b2"][None, :, None, None])
    n, c, h, w = y.shape
    y = y.reshape(n, c, h // 4, 4, w // 4, 4).max(axis=(3, 5))
    y = y.reshape(n, 64 * 2 * 2)
    y = jax.nn.relu(y @ params["fc1_w"].T + params["fc1_b"])
    y = y @ params["out_w"].T + params["out_b"]
    return jax.nn.softmax(y, axis=1)


# ----------------------------------------------------------------------------
# Deterministic parameter init (PyTorch shape conventions)
# ----------------------------------------------------------------------------
def init_params(key):
    ks = jax.random.split(key, 8)

    def uniform(k, shape, fan_in):
        bound = 1.0 / jnp.sqrt(float(fan_in))
        return jax.random.uniform(k, shape, jnp.float32, -bound, bound)

    return {
        "w1": uniform(ks[0], (32, 1, 5, 5), 1 * 5 * 5),
        "b1": uniform(ks[1], (32,), 1 * 5 * 5),
        "w2": uniform(ks[2], (64, 32, 5, 5), 32 * 5 * 5),
        "b2": uniform(ks[3], (64,), 32 * 5 * 5),
        "fc1_w": uniform(ks[4], (50, 256), 256),
        "fc1_b": uniform(ks[5], (50,), 256),
        "out_w": uniform(ks[6], (10, 50), 50),
        "out_b": uniform(ks[7], (10,), 50),
    }


if __name__ == "__main__":
    key = jax.random.PRNGKey(0)
    kx, kp = jax.random.split(key)

    # 28x28 single-channel input is what fc1's in_features (64*2*2) implies.
    x = jax.random.normal(kx, (2, 1, 28, 28), dtype=jnp.float32)
    params = init_params(kp)
    prep = preprocess_params(params)          # hoisted, one-time layout work

    out = cnn_v1_forward(x, prep)
    out = jax.block_until_ready(out)

    assert out.shape == (2, 10), out.shape
    assert out.dtype == jnp.float32
    # softmax rows must sum to 1
    assert bool(jnp.all(jnp.abs(jnp.sum(out, axis=1) - 1.0) < 1e-4))
    # match the pure-XLA reference (bf16 matmul operands -> loose tolerance)
    ref = _reference_forward(x, params)
    err = float(jnp.max(jnp.abs(out - ref)))
    assert err < 3e-2, err

    print("KERNEL_OK")
</pallas_src>

<mosaic_0001>
module attributes {stable_mosaic.version = 11 : i64} {
  func.func @_cnn_fused_kernel(%arg0: i32, %arg1: memref<512x140xbf16, #tpu.memory_space<vmem>>, %arg2: memref<140x768xbf16, #tpu.memory_space<vmem>>, %arg3: memref<1x768xf32, #tpu.memory_space<vmem>>, %arg4: memref<1920x512xbf16, #tpu.memory_space<vmem>>, %arg5: memref<1x512xf32, #tpu.memory_space<vmem>>, %arg6: memref<2x128x50xbf16, #tpu.memory_space<vmem>>, %arg7: memref<1x50xf32, #tpu.memory_space<vmem>>, %arg8: memref<50x128xbf16, #tpu.memory_space<vmem>>, %arg9: memref<1x128xf32, #tpu.memory_space<vmem>>, %arg10: memref<16x128xf32, #tpu.memory_space<vmem>>, %arg11: memref<16x16x384xf32, #tpu.memory_space<vmem>>, %arg12: memref<128x1920xf32, #tpu.memory_space<vmem>>, %arg13: memref<16x8x128xf32, #tpu.memory_space<vmem>>) attributes {dimension_semantics = [#tpu.dimension_semantics<parallel>], iteration_bounds = array<i64: 1>, scalar_prefetch = 0 : i64, scratch_operands = 3 : i64, tpu.core_type = #tpu.core_type<tc>, window_params = [{transform_indices = @transform_0, window_bounds = array<i64: 512, 140>}, {pipeline_mode = #tpu.pipeline_mode<synchronous>, transform_indices = @transform_1, window_bounds = array<i64: 140, 768>}, {pipeline_mode = #tpu.pipeline_mode<synchronous>, transform_indices = @transform_2, window_bounds = array<i64: 1, 768>}, {pipeline_mode = #tpu.pipeline_mode<synchronous>, transform_indices = @transform_3, window_bounds = array<i64: 1920, 512>}, {pipeline_mode = #tpu.pipeline_mode<synchronous>, transform_indices = @transform_4, window_bounds = array<i64: 1, 512>}, {pipeline_mode = #tpu.pipeline_mode<synchronous>, transform_indices = @transform_5, window_bounds = array<i64: 2, 128, 50>}, {pipeline_mode = #tpu.pipeline_mode<synchronous>, transform_indices = @transform_6, window_bounds = array<i64: 1, 50>}, {pipeline_mode = #tpu.pipeline_mode<synchronous>, transform_indices = @transform_7, window_bounds = array<i64: 50, 128>}, {pipeline_mode = #tpu.pipeline_mode<synchronous>, transform_indices = @transform_8, window_bounds = array<i64: 1, 128>}, {transform_indices = @transform_9, window_bounds = array<i64: 16, 128>}]} {
    %c0 = arith.constant 0 : index
    %c0_0 = arith.constant 0 : index
    %0 = vector.load %arg1[%c0, %c0_0] : memref<512x140xbf16, #tpu.memory_space<vmem>>, vector<512x140xbf16>
    %c0_1 = arith.constant 0 : index
    %c0_2 = arith.constant 0 : index
    %1 = vector.load %arg2[%c0_1, %c0_2] : memref<140x768xbf16, #tpu.memory_space<vmem>>, vector<140x768xbf16>
    %cst = arith.constant dense<0.000000e+00> : vector<512x768xf32>
    %2 = tpu.matmul %0, %1, %cst {dimension_numbers = #tpu.dot_dimension_numbers<[1], [0], [0], [1], [0, 0, 1, 1], [], []>} : vector<512x140xbf16>, vector<140x768xbf16>, vector<512x768xf32> -> vector<512x768xf32>
    %c0_3 = arith.constant 0 : index
    %c0_4 = arith.constant 0 : index
    %3 = vector.load %arg3[%c0_3, %c0_4] : memref<1x768xf32, #tpu.memory_space<vmem>>, vector<1x768xf32>
    %4 = vector.broadcast %3 : vector<1x768xf32> to vector<512x768xf32>
    %5 = arith.addf %2, %4 : vector<512x768xf32>
    %cst_5 = arith.constant 0.000000e+00 : f32
    %6 = vector.broadcast %cst_5 : f32 to vector<512x768xf32>
    %7 = arith.maximumf %5, %6 : vector<512x768xf32>
    %8 = vector.extract_strided_slice %7 {offsets = [0, 0], sizes = [512, 384], strides = [1, 1]} : vector<512x768xf32> to vector<512x384xf32>
    %9 = vector.extract_strided_slice %7 {offsets = [0, 384], sizes = [512, 384], strides = [1, 1]} : vector<512x768xf32> to vector<512x384xf32>
    %10 = arith.maximumf %8, %9 : vector<512x384xf32>
    %11 = vector.shape_cast %10 : vector<512x384xf32> to vector<16x32x384xf32>
    %12 = vector.extract_strided_slice %11 {offsets = [0, 0, 0], sizes = [16, 16, 384], strides = [1, 1, 1]} : vector<16x32x384xf32> to vector<16x16x384xf32>
    %13 = vector.extract_strided_slice %11 {offsets = [0, 16, 0], sizes = [16, 16, 384], strides = [1, 1, 1]} : vector<16x32x384xf32> to vector<16x16x384xf32>
    %14 = arith.maximumf %12, %13 : vector<16x16x384xf32>
    %c0_6 = arith.constant 0 : index
    %c0_7 = arith.constant 0 : index
    %c0_8 = arith.constant 0 : index
    %15 = vector.load %arg11[%c0_6, %c0_7, %c0_8] : memref<16x16x384xf32, #tpu.memory_space<vmem>>, vector<16x16x384xf32>
    tpu.vector_store %arg11[%c0_6, %c0_7, %c0_8], %14 {strides = array<i32>} : memref<16x16x384xf32, #tpu.memory_space<vmem>>, vector<16x16x384xf32>,
    %c0_9 = arith.constant 0 : index
    %c0_10 = arith.constant 0 : index
    %c0_11 = arith.constant 0 : index
    %16 = vector.load %arg11[%c0_9, %c0_10, %c0_11] : memref<16x16x384xf32, #tpu.memory_space<vmem>>, vector<16x8x384xf32>
    %17 = vector.shape_cast %16 : vector<16x8x384xf32> to vector<128x384xf32>
    %c0_12 = arith.constant 0 : index
    %c0_13 = arith.constant 0 : index
    %18 = vector.load %arg12[%c0_12, %c0_13] : memref<128x1920xf32, #tpu.memory_space<vmem>>, vector<128x384xf32>
    tpu.vector_store %arg12[%c0_12, %c0_13], %17 {strides = array<i32>} : memref<128x1920xf32, #tpu.memory_space<vmem>>, vector<128x384xf32>,
    %c0_14 = arith.constant 0 : index
    %c1 = arith.constant 1 : index
    %c0_15 = arith.constant 0 : index
    %19 = vector.load %arg11[%c0_14, %c1, %c0_15] : memref<16x16x384xf32, #tpu.memory_space<vmem>>, vector<16x8x384xf32>
    %20 = vector.shape_cast %19 : vector<16x8x384xf32> to vector<128x384xf32>
    %c0_16 = arith.constant 0 : index
    %c384 = arith.constant 384 : index
    %21 = vector.load %arg12[%c0_16, %c384] : memref<128x1920xf32, #tpu.memory_space<vmem>>, vector<128x384xf32>
    tpu.vector_store %arg12[%c0_16, %c384], %20 {strides = array<i32>} : memref<128x1920xf32, #tpu.memory_space<vmem>>, vector<128x384xf32>,
    %c0_17 = arith.constant 0 : index
    %c2 = arith.constant 2 : index
    %c0_18 = arith.constant 0 : index
    %22 = vector.load %arg11[%c0_17, %c2, %c0_18] : memref<16x16x384xf32, #tpu.memory_space<vmem>>, vector<16x8x384xf32>
    %23 = vector.shape_cast %22 : vector<16x8x384xf32> to vector<128x384xf32>
    %c0_19 = arith.constant 0 : index
    %c768 = arith.constant 768 : index
    %24 = vector.load %arg12[%c0_19, %c768] : memref<128x1920xf32, #tpu.memory_space<vmem>>, vector<128x384xf32>
    tpu.vector_store %arg12[%c0_19, %c768], %23 {strides = array<i32>} : memref<128x1920xf32, #tpu.memory_space<vmem>>, vector<128x384xf32>,
    %c0_20 = arith.constant 0 : index
    %c3 = arith.constant 3 : index
    %c0_21 = arith.constant 0 : index
    %25 = vector.load %arg11[%c0_20, %c3, %c0_21] : memref<16x16x384xf32, #tpu.memory_space<vmem>>, vector<16x8x384xf32>
    %26 = vector.shape_cast %25 : vector<16x8x384xf32> to vector<128x384xf32>
    %c0_22 = arith.constant 0 : index
    %c1152 = arith.constant 1152 : index
    %27 = vector.load %arg12[%c0_22, %c1152] : memref<128x1920xf32, #tpu.memory_space<vmem>>, vector<128x384xf32>
    tpu.vector_store %arg12[%c0_22, %c1152], %26 {strides = array<i32>} : memref<128x1920xf32, #tpu.memory_space<vmem>>, vector<128x384xf32>,
    %c0_23 = arith.constant 0 : index
    %c4 = arith.constant 4 : index
    %c0_24 = arith.constant 0 : index
    %28 = vector.load %arg11[%c0_23, %c4, %c0_24] : memref<16x16x384xf32, #tpu.memory_space<vmem>>, vector<16x8x384xf32>
    %29 = vector.shape_cast %28 : vector<16x8x384xf32> to vector<128x384xf32>
    %c0_25 = arith.constant 0 : index
    %c1536 = arith.constant 1536 : index
    %30 = vector.load %arg12[%c0_25, %c1536] : memref<128x1920xf32, #tpu.memory_space<vmem>>, vector<128x384xf32>
    tpu.vector_store %arg12[%c0_25, %c1536], %29 {strides = array<i32>} : memref<128x1920xf32, #tpu.memory_space<vmem>>, vector<128x384xf32>,
    %c0_26 = arith.constant 0 : index
    %c0_27 = arith.constant 0 : index
    %31 = vector.load %arg12[%c0_26, %c0_27] : memref<128x1920xf32, #tpu.memory_space<vmem>>, vector<128x1920xf32>
    %32 = arith.truncf %31 : vector<128x1920xf32> to vector<128x1920xbf16>
    %c0_28 = arith.constant 0 : index
    %c0_29 = arith.constant 0 : index
    %33 = vector.load %arg4[%c0_28, %c0_29] : memref<1920x512xbf16, #tpu.memory_space<vmem>>, vector<1920x512xbf16>
    %cst_30 = arith.constant dense<0.000000e+00> : vector<128x512xf32>
    %34 = tpu.matmul %32, %33, %cst_30 {dimension_numbers = #tpu.dot_dimension_numbers<[1], [0], [0], [1], [0, 0, 1, 1], [], []>} : vector<128x1920xbf16>, vector<1920x512xbf16>, vector<128x512xf32> -> vector<128x512xf32>
    %c0_31 = arith.constant 0 : index
    %c0_32 = arith.constant 0 : index
    %35 = vector.load %arg5[%c0_31, %c0_32] : memref<1x512xf32, #tpu.memory_space<vmem>>, vector<1x512xf32>
    %36 = vector.broadcast %35 : vector<1x512xf32> to vector<128x512xf32>
    %37 = arith.addf %34, %36 : vector<128x512xf32>
    %cst_33 = arith.constant 0.000000e+00 : f32
    %38 = vector.broadcast %cst_33 : f32 to vector<128x512xf32>
    %39 = arith.maximumf %37, %38 : vector<128x512xf32>
    %40 = vector.extract_strided_slice %39 {offsets = [0, 0], sizes = [128, 128], strides = [1, 1]} : vector<128x512xf32> to vector<128x128xf32>
    %41 = vector.extract_strided_slice %39 {offsets = [0, 128], sizes = [128, 128], strides = [1, 1]} : vector<128x512xf32> to vector<128x128xf32>
    %42 = arith.maximumf %40, %41 : vector<128x128xf32>
    %43 = vector.extract_strided_slice %39 {offsets = [0, 256], sizes = [128, 128], strides = [1, 1]} : vector<128x512xf32> to vector<128x128xf32>
    %44 = vector.extract_strided_slice %39 {offsets = [0, 384], sizes = [128, 128], strides = [1, 1]} : vector<128x512xf32> to vector<128x128xf32>
    %45 = arith.maximumf %43, %44 : vector<128x128xf32>
    %46 = arith.maximumf %42, %45 : vector<128x128xf32>
    %47 = vector.shape_cast %46 : vector<128x128xf32> to vector<16x8x128xf32>
    %c0_34 = arith.constant 0 : index
    %c0_35 = arith.constant 0 : index
    %c0_36 = arith.constant 0 : index
    %48 = vector.load %arg13[%c0_34, %c0_35, %c0_36] : memref<16x8x128xf32, #tpu.memory_space<vmem>>, vector<16x8x128xf32>
    tpu.vector_store %arg13[%c0_34, %c0_35, %c0_36], %47 {strides = array<i32>} : memref<16x8x128xf32, #tpu.memory_space<vmem>>, vector<16x8x128xf32>,
    %c0_37 = arith.constant 0 : index
    %c0_38 = arith.constant 0 : index
    %c0_39 = arith.constant 0 : index
    %49 = vector.load %arg13[%c0_37, %c0_38, %c0_39] : memref<16x8x128xf32, #tpu.memory_space<vmem>>, vector<16x1x128xf32>
    %50 = vector.shape_cast %49 : vector<16x1x128xf32> to vector<16x128xf32>
    %c0_40 = arith.constant 0 : index
    %c1_41 = arith.constant 1 : index
    %c0_42 = arith.constant 0 : index
    %51 = vector.load %arg13[%c0_40, %c1_41, %c0_42] : memref<16x8x128xf32, #tpu.memory_space<vmem>>, vector<16x1x128xf32>
    %52 = vector.shape_cast %51 : vector<16x1x128xf32> to vector<16x128xf32>
    %53 = arith.maximumf %50, %52 : vector<16x128xf32>
    %c0_43 = arith.constant 0 : index
    %c2_44 = arith.constant 2 : index
    %c0_45 = arith.constant 0 : index
    %54 = vector.load %arg13[%c0_43, %c2_44, %c0_45] : memref<16x8x128xf32, #tpu.memory_space<vmem>>, vector<16x1x128xf32>
    %55 = vector.shape_cast %54 : vector<16x1x128xf32> to vector<16x128xf32>
    %c0_46 = arith.constant 0 : index
    %c3_47 = arith.constant 3 : index
    %c0_48 = arith.constant 0 : index
    %56 = vector.load %arg13[%c0_46, %c3_47, %c0_48] : memref<16x8x128xf32, #tpu.memory_space<vmem>>, vector<16x1x128xf32>
    %57 = vector.shape_cast %56 : vector<16x1x128xf32> to vector<16x128xf32>
    %58 = arith.maximumf %55, %57 : vector<16x128xf32>
    %59 = arith.maximumf %53, %58 : vector<16x128xf32>
    %c0_49 = arith.constant 0 : index
    %c4_50 = arith.constant 4 : index
    %c0_51 = arith.constant 0 : index
    %60 = vector.load %arg13[%c0_49, %c4_50, %c0_51] : memref<16x8x128xf32, #tpu.memory_space<vmem>>, vector<16x1x128xf32>
    %61 = vector.shape_cast %60 : vector<16x1x128xf32> to vector<16x128xf32>
    %c0_52 = arith.constant 0 : index
    %c5 = arith.constant 5 : index
    %c0_53 = arith.constant 0 : index
    %62 = vector.load %arg13[%c0_52, %c5, %c0_53] : memref<16x8x128xf32, #tpu.memory_space<vmem>>, vector<16x1x128xf32>
    %63 = vector.shape_cast %62 : vector<16x1x128xf32> to vector<16x128xf32>
    %64 = arith.maximumf %61, %63 : vector<16x128xf32>
    %c0_54 = arith.constant 0 : index
    %c6 = arith.constant 6 : index
    %c0_55 = arith.constant 0 : index
    %65 = vector.load %arg13[%c0_54, %c6, %c0_55] : memref<16x8x128xf32, #tpu.memory_space<vmem>>, vector<16x1x128xf32>
    %66 = vector.shape_cast %65 : vector<16x1x128xf32> to vector<16x128xf32>
    %c0_56 = arith.constant 0 : index
    %c7 = arith.constant 7 : index
    %c0_57 = arith.constant 0 : index
    %67 = vector.load %arg13[%c0_56, %c7, %c0_57] : memref<16x8x128xf32, #tpu.memory_space<vmem>>, vector<16x1x128xf32>
    %68 = vector.shape_cast %67 : vector<16x1x128xf32> to vector<16x128xf32>
    %69 = arith.maximumf %66, %68 : vector<16x128xf32>
    %70 = arith.maximumf %64, %69 : vector<16x128xf32>
    %71 = arith.truncf %59 : vector<16x128xf32> to vector<16x128xbf16>
    %c0_58 = arith.constant 0 : index
    %c0_59 = arith.constant 0 : index
    %c0_60 = arith.constant 0 : index
    %72 = vector.load %arg6[%c0_58, %c0_59, %c0_60] : memref<2x128x50xbf16, #tpu.memory_space<vmem>>, vector<1x128x50xbf16>
    %73 = vector.shape_cast %72 : vector<1x128x50xbf16> to vector<128x50xbf16>
    %cst_61 = arith.constant dense<0.000000e+00> : vector<16x50xf32>
    %74 = tpu.matmul %71, %73, %cst_61 {dimension_numbers = #tpu.dot_dimension_numbers<[1], [0], [0], [1], [0, 0, 1, 1], [], []>} : vector<16x128xbf16>, vector<128x50xbf16>, vector<16x50xf32> -> vector<16x50xf32>
    %75 = arith.truncf %70 : vector<16x128xf32> to vector<16x128xbf16>
    %c1_62 = arith.constant 1 : index
    %c0_63 = arith.constant 0 : index
    %c0_64 = arith.constant 0 : index
    %76 = vector.load %arg6[%c1_62, %c0_63, %c0_64] : memref<2x128x50xbf16, #tpu.memory_space<vmem>>, vector<1x128x50xbf16>
    %77 = vector.shape_cast %76 : vector<1x128x50xbf16> to vector<128x50xbf16>
    %cst_65 = arith.constant dense<0.000000e+00> : vector<16x50xf32>
    %78 = tpu.matmul %75, %77, %cst_65 {dimension_numbers = #tpu.dot_dimension_numbers<[1], [0], [0], [1], [0, 0, 1, 1], [], []>} : vector<16x128xbf16>, vector<128x50xbf16>, vector<16x50xf32> -> vector<16x50xf32>
    %79 = arith.addf %74, %78 : vector<16x50xf32>
    %c0_66 = arith.constant 0 : index
    %c0_67 = arith.constant 0 : index
    %80 = vector.load %arg7[%c0_66, %c0_67] : memref<1x50xf32, #tpu.memory_space<vmem>>, vector<1x50xf32>
    %81 = vector.broadcast %80 : vector<1x50xf32> to vector<16x50xf32>
    %82 = arith.addf %79, %81 : vector<16x50xf32>
    %cst_68 = arith.constant 0.000000e+00 : f32
    %83 = vector.broadcast %cst_68 : f32 to vector<16x50xf32>
    %84 = arith.maximumf %82, %83 : vector<16x50xf32>
    %85 = arith.truncf %84 : vector<16x50xf32> to vector<16x50xbf16>
    %c0_69 = arith.constant 0 : index
    %c0_70 = arith.constant 0 : index
    %86 = vector.load %arg8[%c0_69, %c0_70] : memref<50x128xbf16, #tpu.memory_space<vmem>>, vector<50x128xbf16>
    %cst_71 = arith.constant dense<0.000000e+00> : vector<16x128xf32>
    %87 = tpu.matmul %85, %86, %cst_71 {dimension_numbers = #tpu.dot_dimension_numbers<[1], [0], [0], [1], [0, 0, 1, 1], [], []>} : vector<16x50xbf16>, vector<50x128xbf16>, vector<16x128xf32> -> vector<16x128xf32>
    %c0_72 = arith.constant 0 : index
    %c0_73 = arith.constant 0 : index
    %88 = vector.load %arg9[%c0_72, %c0_73] : memref<1x128xf32, #tpu.memory_space<vmem>>, vector<1x128xf32>
    %89 = vector.broadcast %88 : vector<1x128xf32> to vector<16x128xf32>
    %90 = arith.addf %87, %89 : vector<16x128xf32>
    %cst_74 = arith.constant dense<0xFF800000> : vector<16xf32>
    %91 = vector.multi_reduction <maximumf>, %90, %cst_74 [1] : vector<16x128xf32> to vector<16xf32>
    %92 = vector.shape_cast %91 : vector<16xf32> to vector<16x1xf32>
    %93 = vector.broadcast %92 : vector<16x1xf32> to vector<16x128xf32>
    %94 = arith.subf %90, %93 : vector<16x128xf32>
    %95 = math.exp %94 : vector<16x128xf32>
    %cst_75 = arith.constant dense<0.000000e+00> : vector<16xf32>
    %96 = vector.multi_reduction <add>, %95, %cst_75 [1] : vector<16x128xf32> to vector<16xf32>
    %97 = vector.shape_cast %96 : vector<16xf32> to vector<16x1xf32>
    %98 = vector.broadcast %97 : vector<16x1xf32> to vector<16x128xf32>
    %99 = arith.divf %95, %98 : vector<16x128xf32>
    %c0_76 = arith.constant 0 : index
    %c0_77 = arith.constant 0 : index
    %100 = vector.load %arg10[%c0_76, %c0_77] : memref<16x128xf32, #tpu.memory_space<vmem>>, vector<16x128xf32>
    tpu.vector_store %arg10[%c0_76, %c0_77], %99 {strides = array<i32>} : memref<16x128xf32, #tpu.memory_space<vmem>>, vector<16x128xf32>,
    return
  }
  func.func @transform_0(%arg0: i32) -> (i32, i32) {
    %c0_i32 = arith.constant 0 : i32
    %c0_i32_0 = arith.constant 0 : i32
    return %arg0, %c0_i32 : i32, i32
  }
  func.func @transform_1(%arg0: i32) -> (i32, i32) {
    %c0_i32 = arith.constant 0 : i32
    %c0_i32_0 = arith.constant 0 : i32
    %c0_i32_1 = arith.constant 0 : i32
    return %c0_i32, %c0_i32_0 : i32, i32
  }
  func.func @transform_2(%arg0: i32) -> (i32, i32) {
    %c0_i32 = arith.constant 0 : i32
    %c0_i32_0 = arith.constant 0 : i32
    %c0_i32_1 = arith.constant 0 : i32
    return %c0_i32, %c0_i32_0 : i32, i32
  }
  func.func @transform_3(%arg0: i32) -> (i32, i32) {
    %c0_i32 = arith.constant 0 : i32
    %c0_i32_0 = arith.constant 0 : i32
    %c0_i32_1 = arith.constant 0 : i32
    return %c0_i32, %c0_i32_0 : i32, i32
  }
  func.func @transform_4(%arg0: i32) -> (i32, i32) {
    %c0_i32 = arith.constant 0 : i32
    %c0_i32_0 = arith.constant 0 : i32
    %c0_i32_1 = arith.constant 0 : i32
    return %c0_i32, %c0_i32_0 : i32, i32
  }
  func.func @transform_5(%arg0: i32) -> (i32, i32, i32) {
    %c0_i32 = arith.constant 0 : i32
    %c0_i32_0 = arith.constant 0 : i32
    %c0_i32_1 = arith.constant 0 : i32
    %c0_i32_2 = arith.constant 0 : i32
    return %c0_i32, %c0_i32_0, %c0_i32_1 : i32, i32, i32
  }
  func.func @transform_6(%arg0: i32) -> (i32, i32) {
    %c0_i32 = arith.constant 0 : i32
    %c0_i32_0 = arith.constant 0 : i32
    %c0_i32_1 = arith.constant 0 : i32
    return %c0_i32, %c0_i32_0 : i32, i32
  }
  func.func @transform_7(%arg0: i32) -> (i32, i32) {
    %c0_i32 = arith.constant 0 : i32
    %c0_i32_0 = arith.constant 0 : i32
    %c0_i32_1 = arith.constant 0 : i32
    return %c0_i32, %c0_i32_0 : i32, i32
  }
  func.func @transform_8(%arg0: i32) -> (i32, i32) {
    %c0_i32 = arith.constant 0 : i32
    %c0_i32_0 = arith.constant 0 : i32
    %c0_i32_1 = arith.constant 0 : i32
    return %c0_i32, %c0_i32_0 : i32, i32
  }
  func.func @transform_9(%arg0: i32) -> (i32, i32) {
    %c0_i32 = arith.constant 0 : i32
    %c0_i32_0 = arith.constant 0 : i32
    return %arg0, %c0_i32 : i32, i32
  }
}

</mosaic_0001>

<llo_original>
// kernel: cnn_v1_forward.1
$region0: #{cnn_v1_forward.1}
  #allocation0 [shape = 'u32[]', space=smem, size = 0x4, offset = 0x4, fixed_abs, tag = 'smem constant byte address 0x4 - core index']
  #allocation1 [shape = 'u32[144,128]{1,0:T(1,128)}', space=vmem, size = 0x12000, scoped, tag = 'internal scratch']
  #allocation2 [shape = 'f32[16,16,384]{2,1,0:T(8,128)}', space=vmem, size = 0x60000, scoped, tag = 'scratch operand']
  #allocation3 [shape = 'f32[128,1920]{1,0:T(8,128)}', space=vmem, size = 0xf0000, scoped, tag = 'scratch operand']
  #allocation4 [shape = 'f32[16,8,128]{2,1,0:T(8,128)}', space=vmem, size = 0x10000, scoped, tag = 'scratch operand']
  %s0 = inlined_call_operand.vmem [shape: bf16[512,140], index: 0, kind: input, shape index: {}]
  %s1 = inlined_call_operand.hbm [shape: bf16[140,768], index: 1, kind: input, shape index: {}]
  %s2 = inlined_call_operand.hbm [shape: f32[1,768], index: 2, kind: input, shape index: {}]
  %s3 = inlined_call_operand.hbm [shape: bf16[1920,512], index: 3, kind: input, shape index: {}]
  %s4 = inlined_call_operand.hbm [shape: f32[1,512], index: 4, kind: input, shape index: {}]
  %s5 = inlined_call_operand.vmem [shape: bf16[2,128,50], index: 5, kind: input, shape index: {}]
  %s6 = inlined_call_operand.hbm [shape: f32[1,50], index: 6, kind: input, shape index: {}]
  %s7 = inlined_call_operand.hbm [shape: bf16[50,128], index: 7, kind: input, shape index: {}]
  %s8 = inlined_call_operand.hbm [shape: f32[1,128], index: 8, kind: input, shape index: {}]
  %s9 = inlined_call_operand.vmem [shape: f32[16,128], index: 9, kind: output, shape index: {}]
  %s10 = sld [smem:[#allocation0]]
  $region74: #{cnn_v1_forward.1} parent=0
    _
  %s12 = ssub.s32 1, %s10
  %s13 = scalar_select 0, %s12, %s10
  $region1: #{cnn_v1_forward.1} parent=0
    #allocation5 [shape = 'u8[221184]{0}', space=vmem, size = 0x36000, scoped, tag = 'input window, operand 1, single buffered']
    #allocation6 [shape = 's32[1]{0}', space=sflag, size = 0x4, scoped, tag = 'scoped memory for cnn_v1_forward.1']
    #allocation7 [shape = 'u8[3072]{0}', space=vmem, size = 0xc00, scoped, tag = 'input window, operand 2, single buffered']
    #allocation8 [shape = 's32[1]{0}', space=sflag, size = 0x4, scoped, tag = 'scoped memory for cnn_v1_forward.1']
    #allocation9 [shape = 'u8[1966080]{0}', space=vmem, size = 0x1e0000, scoped, tag = 'input window, operand 3, single buffered']
    #allocation10 [shape = 'u8[2048]{0}', space=vmem, size = 0x800, scoped, tag = 'input window, operand 4, single buffered']
    #allocation11 [shape = 's32[1]{0}', space=sflag, size = 0x4, scoped, tag = 'scoped memory for cnn_v1_forward.1']
    #allocation12 [shape = 'u8[512]{0}', space=vmem, size = 0x400, scoped, tag = 'input window, operand 6, single buffered']
    #allocation13 [shape = 'u8[14336]{0}', space=vmem, size = 0x3800, scoped, tag = 'input window, operand 7, single buffered']
    #allocation14 [shape = 's32[1]{0}', space=sflag, size = 0x4, scoped, tag = 'scoped memory for cnn_v1_forward.1']
    #allocation15 [shape = 'u8[512]{0}', space=vmem, size = 0x400, scoped, tag = 'input window, operand 8, single buffered']
    %14 = vsyncpa [#allocation6], 0
    %15 = vsyncpa [#allocation8], 0
    %16 = vsyncpa [#allocation11], 0
    %17 = vsyncpa [#allocation14], 0
    // Predicated region
    $region2: #{cnn_v1_forward.1} parent=1 // pred_check
      _
    $region3: #{cnn_v1_forward.1} parent=1 // pred_check_branch
      %19 = sbr.rel (0) target = $region5
    $region4: #{cnn_v1_forward.1} parent=1 // pred_region
      _
    $region5: #{cnn_v1_forward.1} parent=1 // pred_fallthru
      _
    // Predicated region
    $region6: #{cnn_v1_forward.1} parent=1 // pred_check
      _
    $region7: #{cnn_v1_forward.1} parent=1 // pred_check_branch
      %21 = sbr.rel (0) target = $region9
    $region8: #{cnn_v1_forward.1} parent=1 // pred_region
      %s23 = ssub.s32 6912, 6912
      %24 = vsyncadd [#allocation6], %s23
      %s25 = sshll.u32 [#allocation5], 4
      %s26 = int_to_ptr.vmem [resolvable:$true] %s25
      %31 = dma.hbm_to_vmem [thread:$0]  %s1, 6912, %s26, [#allocation6], 384, 384, 24
    $region9: #{cnn_v1_forward.1} parent=1 // pred_fallthru
      _
    // Predicated region
    $region10: #{cnn_v1_forward.1} parent=1 // pred_check
      _
    $region11: #{cnn_v1_forward.1} parent=1 // pred_check_branch
      %33 = sbr.rel (0) target = $region13
    $region12: #{cnn_v1_forward.1} parent=1 // pred_region
      %s35 = ssub.s32 96, 96
      %36 = vsyncadd [#allocation8], %s35
      %s38 = sshll.u32 [#allocation7], 4
      %s39 = int_to_ptr.vmem [resolvable:$true] %s38
      %41 = dma.hbm_to_vmem [thread:$0]  %s2, 96, %s39, [#allocation8]
    $region13: #{cnn_v1_forward.1} parent=1 // pred_fallthru
      _
    // Predicated region
    $region14: #{cnn_v1_forward.1} parent=1 // pred_check
      _
    $region15: #{cnn_v1_forward.1} parent=1 // pred_check_branch
      %43 = sbr.rel (0) target = $region17
    $region16: #{cnn_v1_forward.1} parent=1 // pred_region
      %s45 = ssub.s32 61440, 61440
      %46 = vsyncadd [#allocation8], %s45
      %s47 = sshll.u32 [#allocation9], 4
      %s48 = int_to_ptr.vmem [resolvable:$true] %s47
      %53 = dma.hbm_to_vmem [thread:$0]  %s3, 61440, %s48, [#allocation8], 256, 256, 16
    $region17: #{cnn_v1_forward.1} parent=1 // pred_fallthru
      _
    // Predicated region
    $region18: #{cnn_v1_forward.1} parent=1 // pred_check
      _
    $region19: #{cnn_v1_forward.1} parent=1 // pred_check_branch
      %55 = sbr.rel (0) target = $region21
    $region20: #{cnn_v1_forward.1} parent=1 // pred_region
      %s57 = ssub.s32 64, 64
      %58 = vsyncadd [#allocation11], %s57
      %s60 = sshll.u32 [#allocation10], 4
      %s61 = int_to_ptr.vmem [resolvable:$true] %s60
      %63 = dma.hbm_to_vmem [thread:$0]  %s4, 64, %s61, [#allocation11]
    $region21: #{cnn_v1_forward.1} parent=1 // pred_fallthru
      _
    // Predicated region
    $region22: #{cnn_v1_forward.1} parent=1 // pred_check
      _
    $region23: #{cnn_v1_forward.1} parent=1 // pred_check_branch
      %65 = sbr.rel (0) target = $region25
    $region24: #{cnn_v1_forward.1} parent=1 // pred_region
      _
    $region25: #{cnn_v1_forward.1} parent=1 // pred_fallthru
      _
    // Predicated region
    $region26: #{cnn_v1_forward.1} parent=1 // pred_check
      _
    $region27: #{cnn_v1_forward.1} parent=1 // pred_check_branch
      %67 = sbr.rel (0) target = $region29
    $region28: #{cnn_v1_forward.1} parent=1 // pred_region
      %s69 = ssub.s32 16, 16
      %70 = vsyncadd [#allocation11], %s69
      %s72 = sshll.u32 [#allocation12], 4
      %s73 = int_to_ptr.vmem [resolvable:$true] %s72
      %75 = dma.hbm_to_vmem [thread:$0]  %s6, 16, %s73, [#allocation11]
    $region29: #{cnn_v1_forward.1} parent=1 // pred_fallthru
      _
    // Predicated region
    $region30: #{cnn_v1_forward.1} parent=1 // pred_check
      _
    $region31: #{cnn_v1_forward.1} parent=1 // pred_check_branch
      %77 = sbr.rel (0) target = $region33
    $region32: #{cnn_v1_forward.1} parent=1 // pred_region
      %s79 = ssub.s32 448, 448
      %80 = vsyncadd [#allocation14], %s79
      %s81 = sshll.u32 [#allocation13], 4
      %s82 = int_to_ptr.vmem [resolvable:$true] %s81
      %87 = dma.hbm_to_vmem [thread:$0]  %s7, 448, %s82, [#allocation14], 64, 64, 4
    $region33: #{cnn_v1_forward.1} parent=1 // pred_fallthru
      _
    // Predicated region
    $region34: #{cnn_v1_forward.1} parent=1 // pred_check
      _
    $region35: #{cnn_v1_forward.1} parent=1 // pred_check_branch
      %89 = sbr.rel (0) target = $region37
    $region36: #{cnn_v1_forward.1} parent=1 // pred_region
      %s91 = ssub.s32 16, 16
      %92 = vsyncadd [#allocation14], %s91
      %s94 = sshll.u32 [#allocation15], 4
      %s95 = int_to_ptr.vmem [resolvable:$true] %s94
      %97 = dma.hbm_to_vmem [thread:$0]  %s8, 16, %s95, [#allocation14]
    $region37: #{cnn_v1_forward.1} parent=1 // pred_fallthru
      _
    // Predicated region
    $region38: #{cnn_v1_forward.1} parent=1 // pred_check
      _
    $region39: #{cnn_v1_forward.1} parent=1 // pred_check_branch
      %99 = sbr.rel (0) target = $region41
    $region40: #{cnn_v1_forward.1} parent=1 // pred_region
      %100 = dma.done [#allocation6], 6912
    $region41: #{cnn_v1_forward.1} parent=1 // pred_fallthru
      _
    // Predicated region
    $region42: #{cnn_v1_forward.1} parent=1 // pred_check
      _
    $region43: #{cnn_v1_forward.1} parent=1 // pred_check_branch
      %102 = sbr.rel (0) target = $region45
    $region44: #{cnn_v1_forward.1} parent=1 // pred_region
      %103 = dma.done [#allocation8], 96
    $region45: #{cnn_v1_forward.1} parent=1 // pred_fallthru
      _
    // Predicated region
    $region46: #{cnn_v1_forward.1} parent=1 // pred_check
      _
    $region47: #{cnn_v1_forward.1} parent=1 // pred_check_branch
      %105 = sbr.rel (0) target = $region49
    $region48: #{cnn_v1_forward.1} parent=1 // pred_region
      %106 = dma.done [#allocation8], 61440
    $region49: #{cnn_v1_forward.1} parent=1 // pred_fallthru
      _
    // Predicated region
    $region50: #{cnn_v1_forward.1} parent=1 // pred_check
      _
    $region51: #{cnn_v1_forward.1} parent=1 // pred_check_branch
      %108 = sbr.rel (0) target = $region53
    $region52: #{cnn_v1_forward.1} parent=1 // pred_region
      %109 = dma.done [#allocation11], 64
    $region53: #{cnn_v1_forward.1} parent=1 // pred_fallthru
      _
    // Predicated region
    $region54: #{cnn_v1_forward.1} parent=1 // pred_check
      _
    $region55: #{cnn_v1_forward.1} parent=1 // pred_check_branch
      %111 = sbr.rel (0) target = $region57
    $region56: #{cnn_v1_forward.1} parent=1 // pred_region
      %112 = dma.done [#allocation11], 16
    $region57: #{cnn_v1_forward.1} parent=1 // pred_fallthru
      _
    // Predicated region
    $region58: #{cnn_v1_forward.1} parent=1 // pred_check
      _
    $region59: #{cnn_v1_forward.1} parent=1 // pred_check_branch
      %114 = sbr.rel (0) target = $region61
    $region60: #{cnn_v1_forward.1} parent=1 // pred_region
      %115 = dma.done [#allocation14], 448
    $region61: #{cnn_v1_forward.1} parent=1 // pred_fallthru
      _
    // Predicated region
    $region62: #{cnn_v1_forward.1} parent=1 // pred_check
      _
    $region63: #{cnn_v1_forward.1} parent=1 // pred_check_branch
      %117 = sbr.rel (0) target = $region65
    $region64: #{cnn_v1_forward.1} parent=1 // pred_region
      %118 = dma.done [#allocation14], 16
    $region65: #{cnn_v1_forward.1} parent=1 // pred_fallthru
      _
    %v120 = vld [vmem:[%s0] sm:$0xff]
    %v121 = vld [vmem:[%s0 + $0x8] sm:$0xff]
    %v122 = vld [vmem:[%s0 + $0x10] sm:$0xff]
    %v123 = vld [vmem:[%s0 + $0x18] sm:$0xff]
    %v124 = vld [vmem:[%s0 + $0x20] sm:$0xff]
    %v125 = vld [vmem:[%s0 + $0x28] sm:$0xff]
    %v126 = vld [vmem:[%s0 + $0x30] sm:$0xff]
    %v127 = vld [vmem:[%s0 + $0x38] sm:$0xff]
    %v128 = vld [vmem:[%s0 + $0x40] sm:$0xff]
    %v129 = vld [vmem:[%s0 + $0x48] sm:$0xff]
    %v130 = vld [vmem:[%s0 + $0x50] sm:$0xff]
    %v131 = vld [vmem:[%s0 + $0x58] sm:$0xff]
    %v132 = vld [vmem:[%s0 + $0x60] sm:$0xff]
    %v133 = vld [vmem:[%s0 + $0x68] sm:$0xff]
    %v134 = vld [vmem:[%s0 + $0x70] sm:$0xff]
    %v135 = vld [vmem:[%s0 + $0x78] sm:$0xff]
    %v136 = vld [vmem:[%s0 + $0x80] sm:$0xff]
    %v137 = vld [vmem:[%s0 + $0x88] sm:$0xff]
    %v138 = vld [vmem:[%s0 + $0x90] sm:$0xff]
    %v139 = vld [vmem:[%s0 + $0x98] sm:$0xff]
    %v140 = vld [vmem:[%s0 + $0xa0] sm:$0xff]
    %v141 = vld [vmem:[%s0 + $0xa8] sm:$0xff]
    %v142 = vld [vmem:[%s0 + $0xb0] sm:$0xff]
    %v143 = vld [vmem:[%s0 + $0xb8] sm:$0xff]
    %v144 = vld [vmem:[%s0 + $0xc0] sm:$0xff]
    %v145 = vld [vmem:[%s0 + $0xc8] sm:$0xff]
    %v146 = vld [vmem:[%s0 + $0xd0] sm:$0xff]
    %v147 = vld [vmem:[%s0 + $0xd8] sm:$0xff]
    %v148 = vld [vmem:[%s0 + $0xe0] sm:$0xff]
    %v149 = vld [vmem:[%s0 + $0xe8] sm:$0xff]
    %v150 = vld [vmem:[%s0 + $0xf0] sm:$0xff]
    %v151 = vld [vmem:[%s0 + $0xf8] sm:$0xff]
    %v152 = vld [vmem:[%s0 + $0x100] sm:$0xff]
    %v153 = vld [vmem:[%s0 + $0x108] sm:$0xff]
    %v154 = vld [vmem:[%s0 + $0x110] sm:$0xff]
    %v155 = vld [vmem:[%s0 + $0x118] sm:$0xff]
    %v156 = vld [vmem:[%s0 + $0x120] sm:$0xff]
    %v157 = vld [vmem:[%s0 + $0x128] sm:$0xff]
    %v158 = vld [vmem:[%s0 + $0x130] sm:$0xff]
    %v159 = vld [vmem:[%s0 + $0x138] sm:$0xff]
    %v160 = vld [vmem:[%s0 + $0x140] sm:$0xff]
    %v161 = vld [vmem:[%s0 + $0x148] sm:$0xff]
    %v162 = vld [vmem:[%s0 + $0x150] sm:$0xff]
    %v163 = vld [vmem:[%s0 + $0x158] sm:$0xff]
    %v164 = vld [vmem:[%s0 + $0x160] sm:$0xff]
    %v165 = vld [vmem:[%s0 + $0x168] sm:$0xff]
    %v166 = vld [vmem:[%s0 + $0x170] sm:$0xff]
    %v167 = vld [vmem:[%s0 + $0x178] sm:$0xff]
    %v168 = vld [vmem:[%s0 + $0x180] sm:$0xff]
    %v169 = vld [vmem:[%s0 + $0x188] sm:$0xff]
    %v170 = vld [vmem:[%s0 + $0x190] sm:$0xff]
    %v171 = vld [vmem:[%s0 + $0x198] sm:$0xff]
    %v172 = vld [vmem:[%s0 + $0x1a0] sm:$0xff]
    %v173 = vld [vmem:[%s0 + $0x1a8] sm:$0xff]
    %v174 = vld [vmem:[%s0 + $0x1b0] sm:$0xff]
    %v175 = vld [vmem:[%s0 + $0x1b8] sm:$0xff]
    %v176 = vld [vmem:[%s0 + $0x1c0] sm:$0xff]
    %v177 = vld [vmem:[%s0 + $0x1c8] sm:$0xff]
    %v178 = vld [vmem:[%s0 + $0x1d0] sm:$0xff]
    %v179 = vld [vmem:[%s0 + $0x1d8] sm:$0xff]
    %v180 = vld [vmem:[%s0 + $0x1e0] sm:$0xff]
    %v181 = vld [vmem:[%s0 + $0x1e8] sm:$0xff]
    %v182 = vld [vmem:[%s0 + $0x1f0] sm:$0xff]
    %v183 = vld [vmem:[%s0 + $0x1f8] sm:$0xff]
    %v184 = vld [vmem:[#allocation5] sm:$0xff]
    %v185 = vld [vmem:[#allocation5 + $0x8] sm:$0xff]
    %v186 = vld [vmem:[#allocation5 + $0x10] sm:$0xff]
    %v187 = vld [vmem:[#allocation5 + $0x18] sm:$0xff]
    %v188 = vld [vmem:[#allocation5 + $0x20] sm:$0xff]
    %v189 = vld [vmem:[#allocation5 + $0x28] sm:$0xff]
    %v190 = vld [vmem:[#allocation5 + $0x30] sm:$0xff]
    %v191 = vld [vmem:[#allocation5 + $0x38] sm:$0xff]
    %v192 = vld [vmem:[#allocation5 + $0x40] sm:$0xff]
    %v193 = vld [vmem:[#allocation5 + $0x48] sm:$0xff]
    %v194 = vld [vmem:[#allocation5 + $0x50] sm:$0xff]
    %v195 = vld [vmem:[#allocation5 + $0x58] sm:$0xff]
    %v196 = vld [vmem:[#allocation5 + $0x60] sm:$0xff]
    %v197 = vld [vmem:[#allocation5 + $0x68] sm:$0xff]
    %v198 = vld [vmem:[#allocation5 + $0x70] sm:$0xff]
    %v199 = vld [vmem:[#allocation5 + $0x78] sm:$0xff]
    %v200 = vld [vmem:[#allocation5 + $0x80] sm:$0xff]
    %v201 = vld [vmem:[#allocation5 + $0x88] sm:$0xff]
    %v202 = vld [vmem:[#allocation5 + $0x90] sm:$0xff]
    %v203 = vld [vmem:[#allocation5 + $0x98] sm:$0xff]
    %v204 = vld [vmem:[#allocation5 + $0xa0] sm:$0xff]
    %v205 = vld [vmem:[#allocation5 + $0xa8] sm:$0xff]
    %v206 = vld [vmem:[#allocation5 + $0xb0] sm:$0xff]
    %v207 = vld [vmem:[#allocation5 + $0xb8] sm:$0xff]
    %v208 = vld [vmem:[#allocation5 + $0xc0] sm:$0xff]
    %v209 = vld [vmem:[#allocation5 + $0xc8] sm:$0xff]
    %v210 = vld [vmem:[#allocation5 + $0xd0] sm:$0xff]
    %v211 = vld [vmem:[#allocation5 + $0xd8] sm:$0xff]
    %v212 = vld [vmem:[#allocation5 + $0xe0] sm:$0xff]
    %v213 = vld [vmem:[#allocation5 + $0xe8] sm:$0xff]
    %v214 = vld [vmem:[#allocation5 + $0xf0] sm:$0xff]
    %v215 = vld [vmem:[#allocation5 + $0xf8] sm:$0xff]
    %v216 = vld [vmem:[#allocation5 + $0x100] sm:$0xff]
    %v217 = vld [vmem:[#allocation5 + $0x108] sm:$0xff]
    %v218 = vld [vmem:[#allocation5 + $0x110] sm:$0xff]
    %v219 = vld [vmem:[#allocation5 + $0x118] sm:$0xff]
    %v220 = vld [vmem:[#allocation5 + $0x120] sm:$0xff]
    %v221 = vld [vmem:[#allocation5 + $0x128] sm:$0xff]
    %v222 = vld [vmem:[#allocation5 + $0x130] sm:$0xff]
    %v223 = vld [vmem:[#allocation5 + $0x138] sm:$0xff]
    %v224 = vld [vmem:[#allocation5 + $0x140] sm:$0xff]
    %v225 = vld [vmem:[#allocation5 + $0x148] sm:$0xff]
    %v226 = vld [vmem:[#allocation5 + $0x150] sm:$0xff]
    %v227 = vld [vmem:[#allocation5 + $0x158] sm:$0xff]
    %v228 = vld [vmem:[#allocation5 + $0x160] sm:$0xff]
    %v229 = vld [vmem:[#allocation5 + $0x168] sm:$0xff]
    %v230 = vld [vmem:[#allocation5 + $0x170] sm:$0xff]
    %v231 = vld [vmem:[#allocation5 + $0x178] sm:$0xff]
    %v232 = vld [vmem:[#allocation5 + $0x180] sm:$0xff]
    %v233 = vld [vmem:[#allocation5 + $0x188] sm:$0xff]
    %v234 = vld [vmem:[#allocation5 + $0x190] sm:$0xff]
    %v235 = vld [vmem:[#allocation5 + $0x198] sm:$0x33]
    %v236 = vld [vmem:[#allocation5 + $0x1a0] sm:$0x33]
    %v237 = vld [vmem:[#allocation5 + $0x1a8] sm:$0x33]
    %v238 = vld [vmem:[#allocation7] sm:$0x3f]
    %v240 = vlaneseq
    %v241 = vshrl.u32 %v240, 7
    %v242 = vsub.s32 0, %v241
    %v243 = vrot.slane %v238, %v242
    %v244 = vlaneseq
    %v245 = vshrl.u32 %v244, 7
    %v246 = vsub.s32 1, %v245
    %v247 = vrot.slane %v238, %v246
    %v248 = vlaneseq
    %v249 = vshrl.u32 %v248, 7
    %v250 = vsub.s32 2, %v249
    %v251 = vrot.slane %v238, %v250
    %v252 = vlaneseq
    %v253 = vshrl.u32 %v252, 7
    %v254 = vsub.s32 3, %v253
    %v255 = vrot.slane %v238, %v254
    %v256 = vlaneseq
    %v257 = vshrl.u32 %v256, 7
    %v258 = vsub.s32 4, %v257
    %v259 = vrot.slane %v238, %v258
    %v260 = vlaneseq
    %v261 = vshrl.u32 %v260, 7
    %v262 = vsub.s32 5, %v261
    %v263 = vrot.slane %v238, %v262
    %v334 = vunpack.c.l.b16 %v120
    %v335 = vunpack.c.h.b16 %v120
    %v336 = vunpack.c.l.b16 %v121
    %v337 = vunpack.c.h.b16 %v121
    %v338 = vunpack.c.l.b16 %v122
    %v339 = vunpack.c.h.b16 %v122
    %v340 = vunpack.c.l.b16 %v123
    %v341 = vunpack.c.h.b16 %v123
    %v342 = vunpack.c.l.b16 %v124
    %v343 = vunpack.c.h.b16 %v124
    %v344 = vunpack.c.l.b16 %v125
    %v345 = vunpack.c.h.b16 %v125
    %v346 = vunpack.c.l.b16 %v126
    %v347 = vunpack.c.h.b16 %v126
    %v348 = vunpack.c.l.b16 %v127
    %v349 = vunpack.c.h.b16 %v127
    %v350 = vunpack.c.l.b16 %v128
    %v351 = vunpack.c.h.b16 %v128
    %v352 = vunpack.c.l.b16 %v129
    %v353 = vunpack.c.h.b16 %v129
    %v354 = vunpack.c.l.b16 %v130
    %v355 = vunpack.c.h.b16 %v130
    %v356 = vunpack.c.l.b16 %v131
    %v357 = vunpack.c.h.b16 %v131
    %v358 = vunpack.c.l.b16 %v132
    %v359 = vunpack.c.h.b16 %v132
    %v360 = vunpack.c.l.b16 %v133
    %v361 = vunpack.c.h.b16 %v133
    %v362 = vunpack.c.l.b16 %v134
    %v363 = vunpack.c.h.b16 %v134
    %v364 = vunpack.c.l.b16 %v135
    %v365 = vunpack.c.h.b16 %v135
    %v366 = vunpack.c.l.b16 %v136
    %v367 = vunpack.c.h.b16 %v136
    %v368 = vunpack.c.l.b16 %v137
    %v369 = vunpack.c.h.b16 %v137
    %v370 = vunpack.c.l.b16 %v138
    %v371 = vunpack.c.h.b16 %v138
    %v372 = vunpack.c.l.b16 %v139
    %v373 = vunpack.c.h.b16 %v139
    %v374 = vunpack.c.l.b16 %v140
    %v375 = vunpack.c.h.b16 %v140
    %v376 = vunpack.c.l.b16 %v141
    %v377 = vunpack.c.h.b16 %v141
    %v378 = vunpack.c.l.b16 %v142
    %v379 = vunpack.c.h.b16 %v142
    %v380 = vunpack.c.l.b16 %v143
    %v381 = vunpack.c.h.b16 %v143
    %v382 = vunpack.c.l.b16 %v144
    %v383 = vunpack.c.h.b16 %v144
    %v384 = vunpack.c.l.b16 %v145
    %v385 = vunpack.c.h.b16 %v145
    %v386 = vunpack.c.l.b16 %v146
    %v387 = vunpack.c.h.b16 %v146
    %v388 = vunpack.c.l.b16 %v147
    %v389 = vunpack.c.h.b16 %v147
    %v390 = vunpack.c.l.b16 %v148
    %v391 = vunpack.c.h.b16 %v148
    %v392 = vunpack.c.l.b16 %v149
    %v393 = vunpack.c.h.b16 %v149
    %v394 = vunpack.c.l.b16 %v150
    %v395 = vunpack.c.h.b16 %v150
    %v396 = vunpack.c.l.b16 %v151
    %v397 = vunpack.c.h.b16 %v151
    %v398 = vunpack.c.l.b16 %v152
    %v399 = vunpack.c.h.b16 %v152
    %v400 = vunpack.c.l.b16 %v153
    %v401 = vunpack.c.h.b16 %v153
    %v402 = vunpack.c.l.b16 %v154
    %v403 = vunpack.c.h.b16 %v154
    %v404 = vunpack.c.l.b16 %v155
    %v405 = vunpack.c.h.b16 %v155
    %v406 = vunpack.c.l.b16 %v156
    %v407 = vunpack.c.h.b16 %v156
    %v408 = vunpack.c.l.b16 %v157
    %v409 = vunpack.c.h.b16 %v157
    %v410 = vunpack.c.l.b16 %v158
    %v411 = vunpack.c.h.b16 %v158
    %v412 = vunpack.c.l.b16 %v159
    %v413 = vunpack.c.h.b16 %v159
    %v414 = vunpack.c.l.b16 %v160
    %v415 = vunpack.c.h.b16 %v160
    %v416 = vunpack.c.l.b16 %v161
    %v417 = vunpack.c.h.b16 %v161
    %v418 = vunpack.c.l.b16 %v162
    %v419 = vunpack.c.h.b16 %v162
    %v420 = vunpack.c.l.b16 %v163
    %v421 = vunpack.c.h.b16 %v163
    %v422 = vunpack.c.l.b16 %v164
    %v423 = vunpack.c.h.b16 %v164
    %v424 = vunpack.c.l.b16 %v165
    %v425 = vunpack.c.h.b16 %v165
    %v426 = vunpack.c.l.b16 %v166
    %v427 = vunpack.c.h.b16 %v166
    %v428 = vunpack.c.l.b16 %v167
    %v429 = vunpack.c.h.b16 %v167
    %v430 = vunpack.c.l.b16 %v168
    %v431 = vunpack.c.h.b16 %v168
    %v432 = vunpack.c.l.b16 %v169
    %v433 = vunpack.c.h.b16 %v169
    %v434 = vunpack.c.l.b16 %v170
    %v435 = vunpack.c.h.b16 %v170
    %v436 = vunpack.c.l.b16 %v171
    %v437 = vunpack.c.h.b16 %v171
    %v438 = vunpack.c.l.b16 %v172
    %v439 = vunpack.c.h.b16 %v172
    %v440 = vunpack.c.l.b16 %v173
    %v441 = vunpack.c.h.b16 %v173
    %v442 = vunpack.c.l.b16 %v174
    %v443 = vunpack.c.h.b16 %v174
    %v444 = vunpack.c.l.b16 %v175
    %v445 = vunpack.c.h.b16 %v175
    %v446 = vunpack.c.l.b16 %v176
    %v447 = vunpack.c.h.b16 %v176
    %v448 = vunpack.c.l.b16 %v177
    %v449 = vunpack.c.h.b16 %v177
    %v450 = vunpack.c.l.b16 %v178
    %v451 = vunpack.c.h.b16 %v178
    %v452 = vunpack.c.l.b16 %v179
    %v453 = vunpack.c.h.b16 %v179
    %v454 = vunpack.c.l.b16 %v180
    %v455 = vunpack.c.h.b16 %v180
    %v456 = vunpack.c.l.b16 %v181
    %v457 = vunpack.c.h.b16 %v181
    %v458 = vunpack.c.l.b16 %v182
    %v459 = vunpack.c.h.b16 %v182
    %v460 = vunpack.c.l.b16 %v183
    %v461 = vunpack.c.h.b16 %v183
    %v462 = vpack.c.b16 %v336, %v334
    %v463 = vpack.c.b16 %v337, %v335
    %v464 = vpack.c.b16 %v340, %v338
    %v465 = vpack.c.b16 %v341, %v339
    %v466 = vpack.c.b16 %v344, %v342
    %v467 = vpack.c.b16 %v345, %v343
    %v468 = vpack.c.b16 %v348, %v346
    %v469 = vpack.c.b16 %v349, %v347
    %v470 = vpack.c.b16 %v352, %v350
    %v471 = vpack.c.b16 %v353, %v351
    %v472 = vpack.c.b16 %v356, %v354
    %v473 = vpack.c.b16 %v357, %v355
    %v474 = vpack.c.b16 %v360, %v358
    %v475 = vpack.c.b16 %v361, %v359
    %v476 = vpack.c.b16 %v364, %v362
    %v477 = vpack.c.b16 %v365, %v363
    %v478 = vpack.c.b16 %v368, %v366
    %v479 = vpack.c.b16 %v369, %v367
    %v480 = vpack.c.b16 %v372, %v370
    %v481 = vpack.c.b16 %v373, %v371
    %v482 = vpack.c.b16 %v376, %v374
    %v483 = vpack.c.b16 %v377, %v375
    %v484 = vpack.c.b16 %v380, %v378
    %v485 = vpack.c.b16 %v381, %v379
    %v486 = vpack.c.b16 %v384, %v382
    %v487 = vpack.c.b16 %v385, %v383
    %v488 = vpack.c.b16 %v388, %v386
    %v489 = vpack.c.b16 %v389, %v387
    %v490 = vpack.c.b16 %v392, %v390
    %v491 = vpack.c.b16 %v393, %v391
    %v492 = vpack.c.b16 %v396, %v394
    %v493 = vpack.c.b16 %v397, %v395
    %v494 = vpack.c.b16 %v400, %v398
    %v495 = vpack.c.b16 %v401, %v399
    %v496 = vpack.c.b16 %v404, %v402
    %v497 = vpack.c.b16 %v405, %v403
    %v498 = vpack.c.b16 %v408, %v406
    %v499 = vpack.c.b16 %v409, %v407
    %v500 = vpack.c.b16 %v412, %v410
    %v501 = vpack.c.b16 %v413, %v411
    %v502 = vpack.c.b16 %v416, %v414
    %v503 = vpack.c.b16 %v417, %v415
    %v504 = vpack.c.b16 %v420, %v418
    %v505 = vpack.c.b16 %v421, %v419
    %v506 = vpack.c.b16 %v424, %v422
    %v507 = vpack.c.b16 %v425, %v423
    %v508 = vpack.c.b16 %v428, %v426
    %v509 = vpack.c.b16 %v429, %v427
    %v510 = vpack.c.b16 %v432, %v430
    %v511 = vpack.c.b16 %v433, %v431
    %v512 = vpack.c.b16 %v436, %v434
    %v513 = vpack.c.b16 %v437, %v435
    %v514 = vpack.c.b16 %v440, %v438
    %v515 = vpack.c.b16 %v441, %v439
    %v516 = vpack.c.b16 %v444, %v442
    %v517 = vpack.c.b16 %v445, %v443
    %v518 = vpack.c.b16 %v448, %v446
    %v519 = vpack.c.b16 %v449, %v447
    %v520 = vpack.c.b16 %v452, %v450
    %v521 = vpack.c.b16 %v453, %v451
    %v522 = vpack.c.b16 %v456, %v454
    %v523 = vpack.c.b16 %v457, %v455
    %v524 = vpack.c.b16 %v460, %v458
    %v525 = vpack.c.b16 %v461, %v459
    %v612 = vunpack.c.l.b16 %v184
    %v613 = vunpack.c.h.b16 %v184
    %v614 = vunpack.c.l.b16 %v185
    %v615 = vunpack.c.h.b16 %v185
    %v616 = vunpack.c.l.b16 %v186
    %v617 = vunpack.c.h.b16 %v186
    %v618 = vunpack.c.l.b16 %v187
    %v619 = vunpack.c.h.b16 %v187
    %v620 = vunpack.c.l.b16 %v188
    %v621 = vunpack.c.h.b16 %v188
    %v622 = vunpack.c.l.b16 %v189
    %v623 = vunpack.c.h.b16 %v189
    %v624 = vunpack.c.l.b16 %v190
    %v625 = vunpack.c.h.b16 %v190
    %v626 = vunpack.c.l.b16 %v191
    %v627 = vunpack.c.h.b16 %v191
    %v628 = vunpack.c.l.b16 %v192
    %v629 = vunpack.c.h.b16 %v192
    %v630 = vunpack.c.l.b16 %v193
    %v631 = vunpack.c.h.b16 %v193
    %v632 = vunpack.c.l.b16 %v194
    %v633 = vunpack.c.h.b16 %v194
    %v634 = vunpack.c.l.b16 %v195
    %v635 = vunpack.c.h.b16 %v195
    %v636 = vunpack.c.l.b16 %v196
    %v637 = vunpack.c.h.b16 %v196
    %v638 = vunpack.c.l.b16 %v197
    %v639 = vunpack.c.h.b16 %v197
    %v640 = vunpack.c.l.b16 %v198
    %v641 = vunpack.c.h.b16 %v198
    %v642 = vunpack.c.l.b16 %v199
    %v643 = vunpack.c.h.b16 %v199
    %v644 = vunpack.c.l.b16 %v200
    %v645 = vunpack.c.h.b16 %v200
    %v646 = vunpack.c.l.b16 %v201
    %v647 = vunpack.c.h.b16 %v201
    %v648 = vunpack.c.l.b16 %v202
    %v649 = vunpack.c.h.b16 %v202
    %v650 = vunpack.c.l.b16 %v203
    %v651 = vunpack.c.h.b16 %v203
    %v652 = vunpack.c.l.b16 %v204
    %v653 = vunpack.c.h.b16 %v204
    %v654 = vunpack.c.l.b16 %v205
    %v655 = vunpack.c.h.b16 %v205
    %v656 = vunpack.c.l.b16 %v206
    %v657 = vunpack.c.h.b16 %v206
    %v658 = vunpack.c.l.b16 %v207
    %v659 = vunpack.c.h.b16 %v207
    %v660 = vunpack.c.l.b16 %v208
    %v661 = vunpack.c.h.b16 %v208
    %v662 = vunpack.c.l.b16 %v209
    %v663 = vunpack.c.h.b16 %v209
    %v664 = vunpack.c.l.b16 %v210
    %v665 = vunpack.c.h.b16 %v210
    %v666 = vunpack.c.l.b16 %v211
    %v667 = vunpack.c.h.b16 %v211
    %v668 = vunpack.c.l.b16 %v212
    %v669 = vunpack.c.h.b16 %v212
    %v670 = vunpack.c.l.b16 %v213
    %v671 = vunpack.c.h.b16 %v213
    %v672 = vunpack.c.l.b16 %v214
    %v673 = vunpack.c.h.b16 %v214
    %v674 = vunpack.c.l.b16 %v215
    %v675 = vunpack.c.h.b16 %v215
    %v676 = vunpack.c.l.b16 %v216
    %v677 = vunpack.c.h.b16 %v216
    %v678 = vunpack.c.l.b16 %v217
    %v679 = vunpack.c.h.b16 %v217
    %v680 = vunpack.c.l.b16 %v218
    %v681 = vunpack.c.h.b16 %v218
    %v682 = vunpack.c.l.b16 %v219
    %v683 = vunpack.c.h.b16 %v219
    %v684 = vunpack.c.l.b16 %v220
    %v685 = vunpack.c.h.b16 %v220
    %v686 = vunpack.c.l.b16 %v221
    %v687 = vunpack.c.h.b16 %v221
    %v688 = vunpack.c.l.b16 %v222
    %v689 = vunpack.c.h.b16 %v222
    %v690 = vunpack.c.l.b16 %v223
    %v691 = vunpack.c.h.b16 %v223
    %v692 = vunpack.c.l.b16 %v224
    %v693 = vunpack.c.h.b16 %v224
    %v694 = vunpack.c.l.b16 %v225
    %v695 = vunpack.c.h.b16 %v225
    %v696 = vunpack.c.l.b16 %v226
    %v697 = vunpack.c.h.b16 %v226
    %v698 = vunpack.c.l.b16 %v227
    %v699 = vunpack.c.h.b16 %v227
    %v700 = vunpack.c.l.b16 %v228
    %v701 = vunpack.c.h.b16 %v228
    %v702 = vunpack.c.l.b16 %v229
    %v703 = vunpack.c.h.b16 %v229
    %v704 = vunpack.c.l.b16 %v230
    %v705 = vunpack.c.h.b16 %v230
    %v706 = vunpack.c.l.b16 %v231
    %v707 = vunpack.c.h.b16 %v231
    %v708 = vunpack.c.l.b16 %v232
    %v709 = vunpack.c.h.b16 %v232
    %v710 = vunpack.c.l.b16 %v233
    %v711 = vunpack.c.h.b16 %v233
    %v712 = vunpack.c.l.b16 %v234
    %v713 = vunpack.c.h.b16 %v234
    %v714 = vunpack.c.l.b16 %v235
    %v715 = vunpack.c.h.b16 %v235
    %v716 = vunpack.c.l.b16 %v236
    %v717 = vunpack.c.h.b16 %v236
    %v718 = vunpack.c.l.b16 %v237
    %v719 = vunpack.c.h.b16 %v237
    %v720 = vpack.c.b16 %v618, %v612
    %v721 = vpack.c.b16 %v619, %v613
    %v722 = vpack.c.b16 %v620, %v614
    %v723 = vpack.c.b16 %v621, %v615
    %v724 = vpack.c.b16 %v622, %v616
    %v725 = vpack.c.b16 %v623, %v617
    %v726 = vpack.c.b16 %v630, %v624
    %v727 = vpack.c.b16 %v631, %v625
    %v728 = vpack.c.b16 %v632, %v626
    %v729 = vpack.c.b16 %v633, %v627
    %v730 = vpack.c.b16 %v634, %v628
    %v731 = vpack.c.b16 %v635, %v629
    %v732 = vpack.c.b16 %v642, %v636
    %v733 = vpack.c.b16 %v643, %v637
    %v734 = vpack.c.b16 %v644, %v638
    %v735 = vpack.c.b16 %v645, %v639
    %v736 = vpack.c.b16 %v646, %v640
    %v737 = vpack.c.b16 %v647, %v641
    %v738 = vpack.c.b16 %v654, %v648
    %v739 = vpack.c.b16 %v655, %v649
    %v740 = vpack.c.b16 %v656, %v650
    %v741 = vpack.c.b16 %v657, %v651
    %v742 = vpack.c.b16 %v658, %v652
    %v743 = vpack.c.b16 %v659, %v653
    %v744 = vpack.c.b16 %v666, %v660
    %v745 = vpack.c.b16 %v667, %v661
    %v746 = vpack.c.b16 %v668, %v662
    %v747 = vpack.c.b16 %v669, %v663
    %v748 = vpack.c.b16 %v670, %v664
    %v749 = vpack.c.b16 %v671, %v665
    %v750 = vpack.c.b16 %v678, %v672
    %v751 = vpack.c.b16 %v679, %v673
    %v752 = vpack.c.b16 %v680, %v674
    %v753 = vpack.c.b16 %v681, %v675
    %v754 = vpack.c.b16 %v682, %v676
    %v755 = vpack.c.b16 %v683, %v677
    %v756 = vpack.c.b16 %v690, %v684
    %v757 = vpack.c.b16 %v691, %v685
    %v758 = vpack.c.b16 %v692, %v686
    %v759 = vpack.c.b16 %v693, %v687
    %v760 = vpack.c.b16 %v694, %v688
    %v761 = vpack.c.b16 %v695, %v689
    %v762 = vpack.c.b16 %v702, %v696
    %v763 = vpack.c.b16 %v703, %v697
    %v764 = vpack.c.b16 %v704, %v698
    %v765 = vpack.c.b16 %v705, %v699
    %v766 = vpack.c.b16 %v706, %v700
    %v767 = vpack.c.b16 %v707, %v701
    %v768 = vpack.c.b16 %v714, %v708
    %v769 = vpack.c.b16 %v715, %v709
    %v770 = vpack.c.b16 %v716, %v710
    %v771 = vpack.c.b16 %v717, %v711
    %v772 = vpack.c.b16 %v718, %v712
    %v773 = vpack.c.b16 %v719, %v713
    %vm822 = vcmask 97280
    %v824 = vsel %vm822, %v463, 0
    %v827 = vsel %vm822, %v465, 0
    %v830 = vsel %vm822, %v467, 0
    %v833 = vsel %vm822, %v469, 0
    %v836 = vsel %vm822, %v471, 0
    %v839 = vsel %vm822, %v473, 0
    %v842 = vsel %vm822, %v475, 0
    %v845 = vsel %vm822, %v477, 0
    %v848 = vsel %vm822, %v479, 0
    %v851 = vsel %vm822, %v481, 0
    %v854 = vsel %vm822, %v483, 0
    %v857 = vsel %vm822, %v485, 0
    %v860 = vsel %vm822, %v487, 0
    %v863 = vsel %vm822, %v489, 0
    %v866 = vsel %vm822, %v491, 0
    %v869 = vsel %vm822, %v493, 0
    %v872 = vsel %vm822, %v495, 0
    %v875 = vsel %vm822, %v497, 0
    %v878 = vsel %vm822, %v499, 0
    %v881 = vsel %vm822, %v501, 0
    %v884 = vsel %vm822, %v503, 0
    %v887 = vsel %vm822, %v505, 0
    %v890 = vsel %vm822, %v507, 0
    %v893 = vsel %vm822, %v509, 0
    %v896 = vsel %vm822, %v511, 0
    %v899 = vsel %vm822, %v513, 0
    %v902 = vsel %vm822, %v515, 0
    %v905 = vsel %vm822, %v517, 0
    %v908 = vsel %vm822, %v519, 0
    %v911 = vsel %vm822, %v521, 0
    %v914 = vsel %vm822, %v523, 0
    %v917 = vsel %vm822, %v525, 0
    %vm919 = vcmask 1045504
    %v921 = vsel %vm919, %v768, 0
    %v924 = vsel %vm919, %v769, 0
    %v927 = vsel %vm919, %v770, 0
    %v930 = vsel %vm919, %v771, 0
    %v933 = vsel %vm919, %v772, 0
    %v936 = vsel %vm919, %v773, 0
    %938 = vmatprep.subr.bf16.mxu0 %v721
    %939 = vmatpush1.bf16.msra.mxu0 %v720
    %940 = vmatprep.subr.bf16.mxu0 %v727
    %941 = vmatpush1.bf16.msra.mxu0 %v726
    %942 = vmatprep.subr.bf16.mxu0 %v733
    %943 = vmatpush1.bf16.msra.mxu0 %v732
    %944 = vmatprep.subr.bf16.mxu0 %v739
    %945 = vmatpush1.bf16.msra.mxu0 %v738
    %946 = vmatprep.subr.bf16.mxu0 %v745
    %947 = vmatpush1.bf16.msra.mxu0 %v744
    %948 = vmatprep.subr.bf16.mxu0 %v751
    %949 = vmatpush1.bf16.msra.mxu0 %v750
    %950 = vmatprep.subr.bf16.mxu0 %v757
    %951 = vmatpush1.bf16.msra.mxu0 %v756
    %952 = vmatprep.subr.bf16.mxu0 %v763
    %953 = vmatpush1.bf16.msra.mxu0 %v762
    %954 = vmatprep.subr.bf16.mxu0 %v924
    %955 = vmatpush1.bf16.msra.mxu0 %v921
    %956 = vmatprep.subr.bf16.mxu0 0
    %957 = vmatpush1.bf16.msra.mxu0 0
    %958 = vmatprep.subr.bf16.mxu0 0
    %959 = vmatpush1.bf16.msra.mxu0 0
    %960 = vmatprep.subr.bf16.mxu0 0
    %961 = vmatpush1.bf16.msra.mxu0 0
    %962 = vmatprep.subr.bf16.mxu0 0
    %963 = vmatpush1.bf16.msra.mxu0 0
    %964 = vmatprep.subr.bf16.mxu0 0
    %965 = vmatpush1.bf16.msra.mxu0 0
    %966 = vmatprep.subr.bf16.mxu0 0
    %967 = vmatpush1.bf16.msra.mxu0 0
    %968 = vmatprep.subr.bf16.mxu0 0
    %969 = vmatpush1.bf16.msra.mxu0 0
    %970 = vmatprep.mubr.bf16.mxu0 %v824
    %971 = vmatmul.mubr.bf16.gmra.mrb[0].mxu0 %v462
    %v972 = vpop.f32.mrb[0].mxu0
    %v973 = vadd.f32 %v243, %v972
    %v974 = vpop.f32.mrb[0].mxu0
    %v975 = vadd.f32 %v247, %v974
    %v976 = vpop.f32.mrb[0].mxu0
    %v977 = vadd.f32 %v243, %v976
    %v978 = vpop.f32.mrb[0].mxu0
    %v979 = vadd.f32 %v247, %v978
    %980 = vmatprep.mubr.bf16.mxu0 %v827
    %981 = vmatmul.mubr.bf16.gmra.mrb[0].mxu0 %v464
    %v982 = vpop.f32.mrb[0].mxu0
    %v983 = vadd.f32 %v243, %v982
    %v984 = vpop.f32.mrb[0].mxu0
    %v985 = vadd.f32 %v247, %v984
    %v986 = vpop.f32.mrb[0].mxu0
    %v987 = vadd.f32 %v243, %v986
    %v988 = vpop.f32.mrb[0].mxu0
    %v989 = vadd.f32 %v247, %v988
    %990 = vmatprep.mubr.bf16.mxu0 %v830
    %991 = vmatmul.mubr.bf16.gmra.mrb[0].mxu0 %v466
    %v992 = vpop.f32.mrb[0].mxu0
    %v993 = vadd.f32 %v243, %v992
    %v994 = vpop.f32.mrb[0].mxu0
    %v995 = vadd.f32 %v247, %v994
    %v996 = vpop.f32.mrb[0].mxu0
    %v997 = vadd.f32 %v243, %v996
    %v998 = vpop.f32.mrb[0].mxu0
    %v999 = vadd.f32 %v247, %v998
    %1000 = vmatprep.mubr.bf16.mxu0 %v833
    %1001 = vmatmul.mubr.bf16.gmra.mrb[0].mxu0 %v468
    %v1002 = vpop.f32.mrb[0].mxu0
    %v1003 = vadd.f32 %v243, %v1002
    %v1004 = vpop.f32.mrb[0].mxu0
    %v1005 = vadd.f32 %v247, %v1004
    %v1006 = vpop.f32.mrb[0].mxu0
    %v1007 = vadd.f32 %v243, %v1006
    %v1008 = vpop.f32.mrb[0].mxu0
    %v1009 = vadd.f32 %v247, %v1008
    %1010 = vmatprep.mubr.bf16.mxu0 %v836
    %1011 = vmatmul.mubr.bf16.gmra.mrb[0].mxu0 %v470
    %v1012 = vpop.f32.mrb[0].mxu0
    %v1013 = vadd.f32 %v243, %v1012
    %v1014 = vpop.f32.mrb[0].mxu0
    %v1015 = vadd.f32 %v247, %v1014
    %v1016 = vpop.f32.mrb[0].mxu0
    %v1017 = vadd.f32 %v243, %v1016
    %v1018 = vpop.f32.mrb[0].mxu0
    %v1019 = vadd.f32 %v247, %v1018
    %1020 = vmatprep.mubr.bf16.mxu0 %v839
    %1021 = vmatmul.mubr.bf16.gmra.mrb[0].mxu0 %v472
    %v1022 = vpop.f32.mrb[0].mxu0
    %v1023 = vadd.f32 %v243, %v1022
    %v1024 = vpop.f32.mrb[0].mxu0
    %v1025 = vadd.f32 %v247, %v1024
    %v1026 = vpop.f32.mrb[0].mxu0
    %v1027 = vadd.f32 %v243, %v1026
    %v1028 = vpop.f32.mrb[0].mxu0
    %v1029 = vadd.f32 %v247, %v1028
    %1030 = vmatprep.mubr.bf16.mxu0 %v842
    %1031 = vmatmul.mubr.bf16.gmra.mrb[0].mxu0 %v474
    %v1032 = vpop.f32.mrb[0].mxu0
    %v1033 = vadd.f32 %v243, %v1032
    %v1034 = vpop.f32.mrb[0].mxu0
    %v1035 = vadd.f32 %v247, %v1034
    %v1036 = vpop.f32.mrb[0].mxu0
    %v1037 = vadd.f32 %v243, %v1036
    %v1038 = vpop.f32.mrb[0].mxu0
    %v1039 = vadd.f32 %v247, %v1038
    %1040 = vmatprep.mubr.bf16.mxu0 %v845
    %1041 = vmatmul.mubr.bf16.gmra.mrb[0].mxu0 %v476
    %v1042 = vpop.f32.mrb[0].mxu0
    %v1043 = vadd.f32 %v243, %v1042
    %v1044 = vpop.f32.mrb[0].mxu0
    %v1045 = vadd.f32 %v247, %v1044
    %v1046 = vpop.f32.mrb[0].mxu0
    %v1047 = vadd.f32 %v243, %v1046
    %v1048 = vpop.f32.mrb[0].mxu0
    %v1049 = vadd.f32 %v247, %v1048
    %1050 = vmatprep.mubr.bf16.mxu0 %v848
    %1051 = vmatmul.mubr.bf16.gmra.mrb[0].mxu0 %v478
    %v1052 = vpop.f32.mrb[0].mxu0
    %v1053 = vadd.f32 %v243, %v1052
    %v1054 = vpop.f32.mrb[0].mxu0
    %v1055 = vadd.f32 %v247, %v1054
    %v1056 = vpop.f32.mrb[0].mxu0
    %v1057 = vadd.f32 %v243, %v1056
    %v1058 = vpop.f32.mrb[0].mxu0
    %v1059 = vadd.f32 %v247, %v1058
    %1060 = vmatprep.mubr.bf16.mxu0 %v851
    %1061 = vmatmul.mubr.bf16.gmra.mrb[0].mxu0 %v480
    %v1062 = vpop.f32.mrb[0].mxu0
    %v1063 = vadd.f32 %v243, %v1062
    %v1064 = vpop.f32.mrb[0].mxu0
    %v1065 = vadd.f32 %v247, %v1064
    %v1066 = vpop.f32.mrb[0].mxu0
    %v1067 = vadd.f32 %v243, %v1066
    %v1068 = vpop.f32.mrb[0].mxu0
    %v1069 = vadd.f32 %v247, %v1068
    %1070 = vmatprep.mubr.bf16.mxu0 %v854
    %1071 = vmatmul.mubr.bf16.gmra.mrb[0].mxu0 %v482
    %v1072 = vpop.f32.mrb[0].mxu0
    %v1073 = vadd.f32 %v243, %v1072
    %v1074 = vpop.f32.mrb[0].mxu0
    %v1075 = vadd.f32 %v247, %v1074
    %v1076 = vpop.f32.mrb[0].mxu0
    %v1077 = vadd.f32 %v243, %v1076
    %v1078 = vpop.f32.mrb[0].mxu0
    %v1079 = vadd.f32 %v247, %v1078
    %1080 = vmatprep.mubr.bf16.mxu0 %v857
    %1081 = vmatmul.mubr.bf16.gmra.mrb[0].mxu0 %v484
    %v1082 = vpop.f32.mrb[0].mxu0
    %v1083 = vadd.f32 %v243, %v1082
    %v1084 = vpop.f32.mrb[0].mxu0
    %v1085 = vadd.f32 %v247, %v1084
    %v1086 = vpop.f32.mrb[0].mxu0
    %v1087 = vadd.f32 %v243, %v1086
    %v1088 = vpop.f32.mrb[0].mxu0
    %v1089 = vadd.f32 %v247, %v1088
    %1090 = vmatprep.mubr.bf16.mxu0 %v860
    %1091 = vmatmul.mubr.bf16.gmra.mrb[0].mxu0 %v486
    %v1092 = vpop.f32.mrb[0].mxu0
    %v1093 = vadd.f32 %v243, %v1092
    %v1094 = vpop.f32.mrb[0].mxu0
    %v1095 = vadd.f32 %v247, %v1094
    %v1096 = vpop.f32.mrb[0].mxu0
    %v1097 = vadd.f32 %v243, %v1096
    %v1098 = vpop.f32.mrb[0].mxu0
    %v1099 = vadd.f32 %v247, %v1098
    %1100 = vmatprep.mubr.bf16.mxu0 %v863
    %1101 = vmatmul.mubr.bf16.gmra.mrb[0].mxu0 %v488
    %v1102 = vpop.f32.mrb[0].mxu0
    %v1103 = vadd.f32 %v243, %v1102
    %v1104 = vpop.f32.mrb[0].mxu0
    %v1105 = vadd.f32 %v247, %v1104
    %v1106 = vpop.f32.mrb[0].mxu0
    %v1107 = vadd.f32 %v243, %v1106
    %v1108 = vpop.f32.mrb[0].mxu0
    %v1109 = vadd.f32 %v247, %v1108
    %1110 = vmatprep.mubr.bf16.mxu0 %v866
    %1111 = vmatmul.mubr.bf16.gmra.mrb[0].mxu0 %v490
    %v1112 = vpop.f32.mrb[0].mxu0
    %v1113 = vadd.f32 %v243, %v1112
    %v1114 = vpop.f32.mrb[0].mxu0
    %v1115 = vadd.f32 %v247, %v1114
    %v1116 = vpop.f32.mrb[0].mxu0
    %v1117 = vadd.f32 %v243, %v1116
    %v1118 = vpop.f32.mrb[0].mxu0
    %v1119 = vadd.f32 %v247, %v1118
    %1120 = vmatprep.mubr.bf16.mxu0 %v869
    %1121 = vmatmul.mubr.bf16.gmra.mrb[0].mxu0 %v492
    %v1122 = vpop.f32.mrb[0].mxu0
    %v1123 = vadd.f32 %v243, %v1122
    %v1124 = vpop.f32.mrb[0].mxu0
    %v1125 = vadd.f32 %v247, %v1124
    %v1126 = vpop.f32.mrb[0].mxu0
    %v1127 = vadd.f32 %v243, %v1126
    %v1128 = vpop.f32.mrb[0].mxu0
    %v1129 = vadd.f32 %v247, %v1128
    %1130 = vmatprep.mubr.bf16.mxu0 %v872
    %1131 = vmatmul.mubr.bf16.gmra.mrb[0].mxu0 %v494
    %v1132 = vpop.f32.mrb[0].mxu0
    %v1133 = vadd.f32 %v243, %v1132
    %v1134 = vpop.f32.mrb[0].mxu0
    %v1135 = vadd.f32 %v247, %v1134
    %v1136 = vpop.f32.mrb[0].mxu0
    %v1137 = vadd.f32 %v243, %v1136
    %v1138 = vpop.f32.mrb[0].mxu0
    %v1139 = vadd.f32 %v247, %v1138
    %1140 = vmatprep.mubr.bf16.mxu0 %v875
    %1141 = vmatmul.mubr.bf16.gmra.mrb[0].mxu0 %v496
    %v1142 = vpop.f32.mrb[0].mxu0
    %v1143 = vadd.f32 %v243, %v1142
    %v1144 = vpop.f32.mrb[0].mxu0
    %v1145 = vadd.f32 %v247, %v1144
    %v1146 = vpop.f32.mrb[0].mxu0
    %v1147 = vadd.f32 %v243, %v1146
    %v1148 = vpop.f32.mrb[0].mxu0
    %v1149 = vadd.f32 %v247, %v1148
    %1150 = vmatprep.mubr.bf16.mxu0 %v878
    %1151 = vmatmul.mubr.bf16.gmra.mrb[0].mxu0 %v498
    %v1152 = vpop.f32.mrb[0].mxu0
    %v1153 = vadd.f32 %v243, %v1152
    %v1154 = vpop.f32.mrb[0].mxu0
    %v1155 = vadd.f32 %v247, %v1154
    %v1156 = vpop.f32.mrb[0].mxu0
    %v1157 = vadd.f32 %v243, %v1156
    %v1158 = vpop.f32.mrb[0].mxu0
    %v1159 = vadd.f32 %v247, %v1158
    %1160 = vmatprep.mubr.bf16.mxu0 %v881
    %1161 = vmatmul.mubr.bf16.gmra.mrb[0].mxu0 %v500
    %v1162 = vpop.f32.mrb[0].mxu0
    %v1163 = vadd.f32 %v243, %v1162
    %v1164 = vpop.f32.mrb[0].mxu0
    %v1165 = vadd.f32 %v247, %v1164
    %v1166 = vpop.f32.mrb[0].mxu0
    %v1167 = vadd.f32 %v243, %v1166
    %v1168 = vpop.f32.mrb[0].mxu0
    %v1169 = vadd.f32 %v247, %v1168
    %1170 = vmatprep.mubr.bf16.mxu0 %v884
    %1171 = vmatmul.mubr.bf16.gmra.mrb[0].mxu0 %v502
    %v1172 = vpop.f32.mrb[0].mxu0
    %v1173 = vadd.f32 %v243, %v1172
    %v1174 = vpop.f32.mrb[0].mxu0
    %v1175 = vadd.f32 %v247, %v1174
    %v1176 = vpop.f32.mrb[0].mxu0
    %v1177 = vadd.f32 %v243, %v1176
    %v1178 = vpop.f32.mrb[0].mxu0
    %v1179 = vadd.f32 %v247, %v1178
    %1180 = vmatprep.mubr.bf16.mxu0 %v887
    %1181 = vmatmul.mubr.bf16.gmra.mrb[0].mxu0 %v504
    %v1182 = vpop.f32.mrb[0].mxu0
    %v1183 = vadd.f32 %v243, %v1182
    %v1184 = vpop.f32.mrb[0].mxu0
    %v1185 = vadd.f32 %v247, %v1184
    %v1186 = vpop.f32.mrb[0].mxu0
    %v1187 = vadd.f32 %v243, %v1186
    %v1188 = vpop.f32.mrb[0].mxu0
    %v1189 = vadd.f32 %v247, %v1188
    %1190 = vmatprep.mubr.bf16.mxu0 %v890
    %1191 = vmatmul.mubr.bf16.gmra.mrb[0].mxu0 %v506
    %v1192 = vpop.f32.mrb[0].mxu0
    %v1193 = vadd.f32 %v243, %v1192
    %v1194 = vpop.f32.mrb[0].mxu0
    %v1195 = vadd.f32 %v247, %v1194
    %v1196 = vpop.f32.mrb[0].mxu0
    %v1197 = vadd.f32 %v243, %v1196
    %v1198 = vpop.f32.mrb[0].mxu0
    %v1199 = vadd.f32 %v247, %v1198
    %1200 = vmatprep.mubr.bf16.mxu0 %v893
    %1201 = vmatmul.mubr.bf16.gmra.mrb[0].mxu0 %v508
    %v1202 = vpop.f32.mrb[0].mxu0
    %v1203 = vadd.f32 %v243, %v1202
    %v1204 = vpop.f32.mrb[0].mxu0
    %v1205 = vadd.f32 %v247, %v1204
    %v1206 = vpop.f32.mrb[0].mxu0
    %v1207 = vadd.f32 %v243, %v1206
    %v1208 = vpop.f32.mrb[0].mxu0
    %v1209 = vadd.f32 %v247, %v1208
    %1210 = vmatprep.mubr.bf16.mxu0 %v896
    %1211 = vmatmul.mubr.bf16.gmra.mrb[0].mxu0 %v510
    %v1212 = vpop.f32.mrb[0].mxu0
    %v1213 = vadd.f32 %v243, %v1212
    %v1214 = vpop.f32.mrb[0].mxu0
    %v1215 = vadd.f32 %v247, %v1214
    %v1216 = vpop.f32.mrb[0].mxu0
    %v1217 = vadd.f32 %v243, %v1216
    %v1218 = vpop.f32.mrb[0].mxu0
    %v1219 = vadd.f32 %v247, %v1218
    %1220 = vmatprep.mubr.bf16.mxu0 %v899
    %1221 = vmatmul.mubr.bf16.gmra.mrb[0].mxu0 %v512
    %v1222 = vpop.f32.mrb[0].mxu0
    %v1223 = vadd.f32 %v243, %v1222
    %v1224 = vpop.f32.mrb[0].mxu0
    %v1225 = vadd.f32 %v247, %v1224
    %v1226 = vpop.f32.mrb[0].mxu0
    %v1227 = vadd.f32 %v243, %v1226
    %v1228 = vpop.f32.mrb[0].mxu0
    %v1229 = vadd.f32 %v247, %v1228
    %1230 = vmatprep.mubr.bf16.mxu0 %v902
    %1231 = vmatmul.mubr.bf16.gmra.mrb[0].mxu0 %v514
    %v1232 = vpop.f32.mrb[0].mxu0
    %v1233 = vadd.f32 %v243, %v1232
    %v1234 = vpop.f32.mrb[0].mxu0
    %v1235 = vadd.f32 %v247, %v1234
    %v1236 = vpop.f32.mrb[0].mxu0
    %v1237 = vadd.f32 %v243, %v1236
    %v1238 = vpop.f32.mrb[0].mxu0
    %v1239 = vadd.f32 %v247, %v1238
    %1240 = vmatprep.mubr.bf16.mxu0 %v905
    %1241 = vmatmul.mubr.bf16.gmra.mrb[0].mxu0 %v516
    %v1242 = vpop.f32.mrb[0].mxu0
    %v1243 = vadd.f32 %v243, %v1242
    %v1244 = vpop.f32.mrb[0].mxu0
    %v1245 = vadd.f32 %v247, %v1244
    %v1246 = vpop.f32.mrb[0].mxu0
    %v1247 = vadd.f32 %v243, %v1246
    %v1248 = vpop.f32.mrb[0].mxu0
    %v1249 = vadd.f32 %v247, %v1248
    %1250 = vmatprep.mubr.bf16.mxu0 %v908
    %1251 = vmatmul.mubr.bf16.gmra.mrb[0].mxu0 %v518
    %v1252 = vpop.f32.mrb[0].mxu0
    %v1253 = vadd.f32 %v243, %v1252
    %v1254 = vpop.f32.mrb[0].mxu0
    %v1255 = vadd.f32 %v247, %v1254
    %v1256 = vpop.f32.mrb[0].mxu0
    %v1257 = vadd.f32 %v243, %v1256
    %v1258 = vpop.f32.mrb[0].mxu0
    %v1259 = vadd.f32 %v247, %v1258
    %1260 = vmatprep.mubr.bf16.mxu0 %v911
    %1261 = vmatmul.mubr.bf16.gmra.mrb[0].mxu0 %v520
    %v1262 = vpop.f32.mrb[0].mxu0
    %v1263 = vadd.f32 %v243, %v1262
    %v1264 = vpop.f32.mrb[0].mxu0
    %v1265 = vadd.f32 %v247, %v1264
    %v1266 = vpop.f32.mrb[0].mxu0
    %v1267 = vadd.f32 %v243, %v1266
    %v1268 = vpop.f32.mrb[0].mxu0
    %v1269 = vadd.f32 %v247, %v1268
    %1270 = vmatprep.mubr.bf16.mxu0 %v914
    %1271 = vmatmul.mubr.bf16.gmra.mrb[0].mxu0 %v522
    %v1272 = vpop.f32.mrb[0].mxu0
    %v1273 = vadd.f32 %v243, %v1272
    %v1274 = vpop.f32.mrb[0].mxu0
    %v1275 = vadd.f32 %v247, %v1274
    %v1276 = vpop.f32.mrb[0].mxu0
    %v1277 = vadd.f32 %v243, %v1276
    %v1278 = vpop.f32.mrb[0].mxu0
    %v1279 = vadd.f32 %v247, %v1278
    %1280 = vmatprep.mubr.bf16.mxu0 %v917
    %1281 = vmatmul.mubr.bf16.gmra.mrb[0].mxu0 %v524
    %v1282 = vpop.f32.mrb[0].mxu0
    %v1283 = vadd.f32 %v243, %v1282
    %v1284 = vpop.f32.mrb[0].mxu0
    %v1285 = vadd.f32 %v247, %v1284
    %v1286 = vpop.f32.mrb[0].mxu0
    %v1287 = vadd.f32 %v243, %v1286
    %v1288 = vpop.f32.mrb[0].mxu0
    %v1289 = vadd.f32 %v247, %v1288
    %1290 = vdwg.mxu0
    %1291 = vmatprep.subr.bf16.mxu0 %v723
    %1292 = vmatpush1.bf16.msra.mxu0 %v722
    %1293 = vmatprep.subr.bf16.mxu0 %v729
    %1294 = vmatpush1.bf16.msra.mxu0 %v728
    %1295 = vmatprep.subr.bf16.mxu0 %v735
    %1296 = vmatpush1.bf16.msra.mxu0 %v734
    %1297 = vmatprep.subr.bf16.mxu0 %v741
    %1298 = vmatpush1.bf16.msra.mxu0 %v740
    %1299 = vmatprep.subr.bf16.mxu0 %v747
    %1300 = vmatpush1.bf16.msra.mxu0 %v746
    %1301 = vmatprep.subr.bf16.mxu0 %v753
    %1302 = vmatpush1.bf16.msra.mxu0 %v752
    %1303 = vmatprep.subr.bf16.mxu0 %v759
    %1304 = vmatpush1.bf16.msra.mxu0 %v758
    %1305 = vmatprep.subr.bf16.mxu0 %v765
    %1306 = vmatpush1.bf16.msra.mxu0 %v764
    %1307 = vmatprep.subr.bf16.mxu0 %v930
    %1308 = vmatpush1.bf16.msra.mxu0 %v927
    %1309 = vmatprep.subr.bf16.mxu0 0
    %1310 = vmatpush1.bf16.msra.mxu0 0
    %1311 = vmatprep.subr.bf16.mxu0 0
    %1312 = vmatpush1.bf16.msra.mxu0 0
    %1313 = vmatprep.subr.bf16.mxu0 0
    %1314 = vmatpush1.bf16.msra.mxu0 0
    %1315 = vmatprep.subr.bf16.mxu0 0
    %1316 = vmatpush1.bf16.msra.mxu0 0
    %1317 = vmatprep.subr.bf16.mxu0 0
    %1318 = vmatpush1.bf16.msra.mxu0 0
    %1319 = vmatprep.subr.bf16.mxu0 0
    %1320 = vmatpush1.bf16.msra.mxu0 0
    %1321 = vmatprep.subr.bf16.mxu0 0
    %1322 = vmatpush1.bf16.msra.mxu0 0
    %1323 = vmatprep.mubr.bf16.mxu0 %v824
    %1324 = vmatmul.mubr.bf16.gmra.mrb[0].mxu0 %v462
    %v1325 = vpop.f32.mrb[0].mxu0
    %v1326 = vadd.f32 %v251, %v1325
    %v1327 = vpop.f32.mrb[0].mxu0
    %v1328 = vadd.f32 %v255, %v1327
    %v1329 = vpop.f32.mrb[0].mxu0
    %v1330 = vadd.f32 %v251, %v1329
    %v1331 = vpop.f32.mrb[0].mxu0
    %v1332 = vadd.f32 %v255, %v1331
    %1333 = vmatprep.mubr.bf16.mxu0 %v827
    %1334 = vmatmul.mubr.bf16.gmra.mrb[0].mxu0 %v464
    %v1335 = vpop.f32.mrb[0].mxu0
    %v1336 = vadd.f32 %v251, %v1335
    %v1337 = vpop.f32.mrb[0].mxu0
    %v1338 = vadd.f32 %v255, %v1337
    %v1339 = vpop.f32.mrb[0].mxu0
    %v1340 = vadd.f32 %v251, %v1339
    %v1341 = vpop.f32.mrb[0].mxu0
    %v1342 = vadd.f32 %v255, %v1341
    %1343 = vmatprep.mubr.bf16.mxu0 %v830
    %1344 = vmatmul.mubr.bf16.gmra.mrb[0].mxu0 %v466
    %v1345 = vpop.f32.mrb[0].mxu0
    %v1346 = vadd.f32 %v251, %v1345
    %v1347 = vpop.f32.mrb[0].mxu0
    %v1348 = vadd.f32 %v255, %v1347
    %v1349 = vpop.f32.mrb[0].mxu0
    %v1350 = vadd.f32 %v251, %v1349
    %v1351 = vpop.f32.mrb[0].mxu0
    %v1352 = vadd.f32 %v255, %v1351
    %1353 = vmatprep.mubr.bf16.mxu0 %v833
    %1354 = vmatmul.mubr.bf16.gmra.mrb[0].mxu0 %v468
    %v1355 = vpop.f32.mrb[0].mxu0
    %v1356 = vadd.f32 %v251, %v1355
    %v1357 = vpop.f32.mrb[0].mxu0
    %v1358 = vadd.f32 %v255, %v1357
    %v1359 = vpop.f32.mrb[0].mxu0
    %v1360 = vadd.f32 %v251, %v1359
    %v1361 = vpop.f32.mrb[0].mxu0
    %v1362 = vadd.f32 %v255, %v1361
    %1363 = vmatprep.mubr.bf16.mxu0 %v836
    %1364 = vmatmul.mubr.bf16.gmra.mrb[0].mxu0 %v470
    %v1365 = vpop.f32.mrb[0].mxu0
    %v1366 = vadd.f32 %v251, %v1365
    %v1367 = vpop.f32.mrb[0].mxu0
    %v1368 = vadd.f32 %v255, %v1367
    %v1369 = vpop.f32.mrb[0].mxu0
    %v1370 = vadd.f32 %v251, %v1369
    %v1371 = vpop.f32.mrb[0].mxu0
    %v1372 = vadd.f32 %v255, %v1371
    %1373 = vmatprep.mubr.bf16.mxu0 %v839
    %1374 = vmatmul.mubr.bf16.gmra.mrb[0].mxu0 %v472
    %v1375 = vpop.f32.mrb[0].mxu0
    %v1376 = vadd.f32 %v251, %v1375
    %v1377 = vpop.f32.mrb[0].mxu0
    %v1378 = vadd.f32 %v255, %v1377
    %v1379 = vpop.f32.mrb[0].mxu0
    %v1380 = vadd.f32 %v251, %v1379
    %v1381 = vpop.f32.mrb[0].mxu0
    %v1382 = vadd.f32 %v255, %v1381
    %1383 = vmatprep.mubr.bf16.mxu0 %v842
    %1384 = vmatmul.mubr.bf16.gmra.mrb[0].mxu0 %v474
    %v1385 = vpop.f32.mrb[0].mxu0
    %v1386 = vadd.f32 %v251, %v1385
    %v1387 = vpop.f32.mrb[0].mxu0
    %v1388 = vadd.f32 %v255, %v1387
    %v1389 = vpop.f32.mrb[0].mxu0
    %v1390 = vadd.f32 %v251, %v1389
    %v1391 = vpop.f32.mrb[0].mxu0
    %v1392 = vadd.f32 %v255, %v1391
    %1393 = vmatprep.mubr.bf16.mxu0 %v845
    %1394 = vmatmul.mubr.bf16.gmra.mrb[0].mxu0 %v476
    %v1395 = vpop.f32.mrb[0].mxu0
    %v1396 = vadd.f32 %v251, %v1395
    %v1397 = vpop.f32.mrb[0].mxu0
    %v1398 = vadd.f32 %v255, %v1397
    %v1399 = vpop.f32.mrb[0].mxu0
    %v1400 = vadd.f32 %v251, %v1399
    %v1401 = vpop.f32.mrb[0].mxu0
    %v1402 = vadd.f32 %v255, %v1401
    %1403 = vmatprep.mubr.bf16.mxu0 %v848
    %1404 = vmatmul.mubr.bf16.gmra.mrb[0].mxu0 %v478
    %v1405 = vpop.f32.mrb[0].mxu0
    %v1406 = vadd.f32 %v251, %v1405
    %v1407 = vpop.f32.mrb[0].mxu0
    %v1408 = vadd.f32 %v255, %v1407
    %v1409 = vpop.f32.mrb[0].mxu0
    %v1410 = vadd.f32 %v251, %v1409
    %v1411 = vpop.f32.mrb[0].mxu0
    %v1412 = vadd.f32 %v255, %v1411
    %1413 = vmatprep.mubr.bf16.mxu0 %v851
    %1414 = vmatmul.mubr.bf16.gmra.mrb[0].mxu0 %v480
    %v1415 = vpop.f32.mrb[0].mxu0
    %v1416 = vadd.f32 %v251, %v1415
    %v1417 = vpop.f32.mrb[0].mxu0
    %v1418 = vadd.f32 %v255, %v1417
    %v1419 = vpop.f32.mrb[0].mxu0
    %v1420 = vadd.f32 %v251, %v1419
    %v1421 = vpop.f32.mrb[0].mxu0
    %v1422 = vadd.f32 %v255, %v1421
    %1423 = vmatprep.mubr.bf16.mxu0 %v854
    %1424 = vmatmul.mubr.bf16.gmra.mrb[0].mxu0 %v482
    %v1425 = vpop.f32.mrb[0].mxu0
    %v1426 = vadd.f32 %v251, %v1425
    %v1427 = vpop.f32.mrb[0].mxu0
    %v1428 = vadd.f32 %v255, %v1427
    %v1429 = vpop.f32.mrb[0].mxu0
    %v1430 = vadd.f32 %v251, %v1429
    %v1431 = vpop.f32.mrb[0].mxu0
    %v1432 = vadd.f32 %v255, %v1431
    %1433 = vmatprep.mubr.bf16.mxu0 %v857
    %1434 = vmatmul.mubr.bf16.gmra.mrb[0].mxu0 %v484
    %v1435 = vpop.f32.mrb[0].mxu0
    %v1436 = vadd.f32 %v251, %v1435
    %v1437 = vpop.f32.mrb[0].mxu0
    %v1438 = vadd.f32 %v255, %v1437
    %v1439 = vpop.f32.mrb[0].mxu0
    %v1440 = vadd.f32 %v251, %v1439
    %v1441 = vpop.f32.mrb[0].mxu0
    %v1442 = vadd.f32 %v255, %v1441
    %1443 = vmatprep.mubr.bf16.mxu0 %v860
    %1444 = vmatmul.mubr.bf16.gmra.mrb[0].mxu0 %v486
    %v1445 = vpop.f32.mrb[0].mxu0
    %v1446 = vadd.f32 %v251, %v1445
    %v1447 = vpop.f32.mrb[0].mxu0
    %v1448 = vadd.f32 %v255, %v1447
    %v1449 = vpop.f32.mrb[0].mxu0
    %v1450 = vadd.f32 %v251, %v1449
    %v1451 = vpop.f32.mrb[0].mxu0
    %v1452 = vadd.f32 %v255, %v1451
    %1453 = vmatprep.mubr.bf16.mxu0 %v863
    %1454 = vmatmul.mubr.bf16.gmra.mrb[0].mxu0 %v488
    %v1455 = vpop.f32.mrb[0].mxu0
    %v1456 = vadd.f32 %v251, %v1455
    %v1457 = vpop.f32.mrb[0].mxu0
    %v1458 = vadd.f32 %v255, %v1457
    %v1459 = vpop.f32.mrb[0].mxu0
    %v1460 = vadd.f32 %v251, %v1459
    %v1461 = vpop.f32.mrb[0].mxu0
    %v1462 = vadd.f32 %v255, %v1461
    %1463 = vmatprep.mubr.bf16.mxu0 %v866
    %1464 = vmatmul.mubr.bf16.gmra.mrb[0].mxu0 %v490
    %v1465 = vpop.f32.mrb[0].mxu0
    %v1466 = vadd.f32 %v251, %v1465
    %v1467 = vpop.f32.mrb[0].mxu0
    %v1468 = vadd.f32 %v255, %v1467
    %v1469 = vpop.f32.mrb[0].mxu0
    %v1470 = vadd.f32 %v251, %v1469
    %v1471 = vpop.f32.mrb[0].mxu0
    %v1472 = vadd.f32 %v255, %v1471
    %1473 = vmatprep.mubr.bf16.mxu0 %v869
    %1474 = vmatmul.mubr.bf16.gmra.mrb[0].mxu0 %v492
    %v1475 = vpop.f32.mrb[0].mxu0
    %v1476 = vadd.f32 %v251, %v1475
    %v1477 = vpop.f32.mrb[0].mxu0
    %v1478 = vadd.f32 %v255, %v1477
    %v1479 = vpop.f32.mrb[0].mxu0
    %v1480 = vadd.f32 %v251, %v1479
    %v1481 = vpop.f32.mrb[0].mxu0
    %v1482 = vadd.f32 %v255, %v1481
    %1483 = vmatprep.mubr.bf16.mxu0 %v872
    %1484 = vmatmul.mubr.bf16.gmra.mrb[0].mxu0 %v494
    %v1485 = vpop.f32.mrb[0].mxu0
    %v1486 = vadd.f32 %v251, %v1485
    %v1487 = vpop.f32.mrb[0].mxu0
    %v1488 = vadd.f32 %v255, %v1487
    %v1489 = vpop.f32.mrb[0].mxu0
    %v1490 = vadd.f32 %v251, %v1489
    %v1491 = vpop.f32.mrb[0].mxu0
    %v1492 = vadd.f32 %v255, %v1491
    %1493 = vmatprep.mubr.bf16.mxu0 %v875
    %1494 = vmatmul.mubr.bf16.gmra.mrb[0].mxu0 %v496
    %v1495 = vpop.f32.mrb[0].mxu0
    %v1496 = vadd.f32 %v251, %v1495
    %v1497 = vpop.f32.mrb[0].mxu0
    %v1498 = vadd.f32 %v255, %v1497
    %v1499 = vpop.f32.mrb[0].mxu0
    %v1500 = vadd.f32 %v251, %v1499
    %v1501 = vpop.f32.mrb[0].mxu0
    %v1502 = vadd.f32 %v255, %v1501
    %1503 = vmatprep.mubr.bf16.mxu0 %v878
    %1504 = vmatmul.mubr.bf16.gmra.mrb[0].mxu0 %v498
    %v1505 = vpop.f32.mrb[0].mxu0
    %v1506 = vadd.f32 %v251, %v1505
    %v1507 = vpop.f32.mrb[0].mxu0
    %v1508 = vadd.f32 %v255, %v1507
    %v1509 = vpop.f32.mrb[0].mxu0
    %v1510 = vadd.f32 %v251, %v1509
    %v1511 = vpop.f32.mrb[0].mxu0
    %v1512 = vadd.f32 %v255, %v1511
    %1513 = vmatprep.mubr.bf16.mxu0 %v881
    %1514 = vmatmul.mubr.bf16.gmra.mrb[0].mxu0 %v500
    %v1515 = vpop.f32.mrb[0].mxu0
    %v1516 = vadd.f32 %v251, %v1515
    %v1517 = vpop.f32.mrb[0].mxu0
    %v1518 = vadd.f32 %v255, %v1517
    %v1519 = vpop.f32.mrb[0].mxu0
    %v1520 = vadd.f32 %v251, %v1519
    %v1521 = vpop.f32.mrb[0].mxu0
    %v1522 = vadd.f32 %v255, %v1521
    %1523 = vmatprep.mubr.bf16.mxu0 %v884
    %1524 = vmatmul.mubr.bf16.gmra.mrb[0].mxu0 %v502
    %v1525 = vpop.f32.mrb[0].mxu0
    %v1526 = vadd.f32 %v251, %v1525
    %v1527 = vpop.f32.mrb[0].mxu0
    %v1528 = vadd.f32 %v255, %v1527
    %v1529 = vpop.f32.mrb[0].mxu0
    %v1530 = vadd.f32 %v251, %v1529
    %v1531 = vpop.f32.mrb[0].mxu0
    %v1532 = vadd.f32 %v255, %v1531
    %1533 = vmatprep.mubr.bf16.mxu0 %v887
    %1534 = vmatmul.mubr.bf16.gmra.mrb[0].mxu0 %v504
    %v1535 = vpop.f32.mrb[0].mxu0
    %v1536 = vadd.f32 %v251, %v1535
    %v1537 = vpop.f32.mrb[0].mxu0
    %v1538 = vadd.f32 %v255, %v1537
    %v1539 = vpop.f32.mrb[0].mxu0
    %v1540 = vadd.f32 %v251, %v1539
    %v1541 = vpop.f32.mrb[0].mxu0
    %v1542 = vadd.f32 %v255, %v1541
    %1543 = vmatprep.mubr.bf16.mxu0 %v890
    %1544 = vmatmul.mubr.bf16.gmra.mrb[0].mxu0 %v506
    %v1545 = vpop.f32.mrb[0].mxu0
    %v1546 = vadd.f32 %v251, %v1545
    %v1547 = vpop.f32.mrb[0].mxu0
    %v1548 = vadd.f32 %v255, %v1547
    %v1549 = vpop.f32.mrb[0].mxu0
    %v1550 = vadd.f32 %v251, %v1549
    %v1551 = vpop.f32.mrb[0].mxu0
    %v1552 = vadd.f32 %v255, %v1551
    %1553 = vmatprep.mubr.bf16.mxu0 %v893
    %1554 = vmatmul.mubr.bf16.gmra.mrb[0].mxu0 %v508
    %v1555 = vpop.f32.mrb[0].mxu0
    %v1556 = vadd.f32 %v251, %v1555
    %v1557 = vpop.f32.mrb[0].mxu0
    %v1558 = vadd.f32 %v255, %v1557
    %v1559 = vpop.f32.mrb[0].mxu0
    %v1560 = vadd.f32 %v251, %v1559
    %v1561 = vpop.f32.mrb[0].mxu0
    %v1562 = vadd.f32 %v255, %v1561
    %1563 = vmatprep.mubr.bf16.mxu0 %v896
    %1564 = vmatmul.mubr.bf16.gmra.mrb[0].mxu0 %v510
    %v1565 = vpop.f32.mrb[0].mxu0
    %v1566 = vadd.f32 %v251, %v1565
    %v1567 = vpop.f32.mrb[0].mxu0
    %v1568 = vadd.f32 %v255, %v1567
    %v1569 = vpop.f32.mrb[0].mxu0
    %v1570 = vadd.f32 %v251, %v1569
    %v1571 = vpop.f32.mrb[0].mxu0
    %v1572 = vadd.f32 %v255, %v1571
    %1573 = vmatprep.mubr.bf16.mxu0 %v899
    %1574 = vmatmul.mubr.bf16.gmra.mrb[0].mxu0 %v512
    %v1575 = vpop.f32.mrb[0].mxu0
    %v1576 = vadd.f32 %v251, %v1575
    %v1577 = vpop.f32.mrb[0].mxu0
    %v1578 = vadd.f32 %v255, %v1577
    %v1579 = vpop.f32.mrb[0].mxu0
    %v1580 = vadd.f32 %v251, %v1579
    %v1581 = vpop.f32.mrb[0].mxu0
    %v1582 = vadd.f32 %v255, %v1581
    %1583 = vmatprep.mubr.bf16.mxu0 %v902
    %1584 = vmatmul.mubr.bf16.gmra.mrb[0].mxu0 %v514
    %v1585 = vpop.f32.mrb[0].mxu0
    %v1586 = vadd.f32 %v251, %v1585
    %v1587 = vpop.f32.mrb[0].mxu0
    %v1588 = vadd.f32 %v255, %v1587
    %v1589 = vpop.f32.mrb[0].mxu0
    %v1590 = vadd.f32 %v251, %v1589
    %v1591 = vpop.f32.mrb[0].mxu0
    %v1592 = vadd.f32 %v255, %v1591
    %1593 = vmatprep.mubr.bf16.mxu0 %v905
    %1594 = vmatmul.mubr.bf16.gmra.mrb[0].mxu0 %v516
    %v1595 = vpop.f32.mrb[0].mxu0
    %v1596 = vadd.f32 %v251, %v1595
    %v1597 = vpop.f32.mrb[0].mxu0
    %v1598 = vadd.f32 %v255, %v1597
    %v1599 = vpop.f32.mrb[0].mxu0
    %v1600 = vadd.f32 %v251, %v1599
    %v1601 = vpop.f32.mrb[0].mxu0
    %v1602 = vadd.f32 %v255, %v1601
    %1603 = vmatprep.mubr.bf16.mxu0 %v908
    %1604 = vmatmul.mubr.bf16.gmra.mrb[0].mxu0 %v518
    %v1605 = vpop.f32.mrb[0].mxu0
    %v1606 = vadd.f32 %v251, %v1605
    %v1607 = vpop.f32.mrb[0].mxu0
    %v1608 = vadd.f32 %v255, %v1607
    %v1609 = vpop.f32.mrb[0].mxu0
    %v1610 = vadd.f32 %v251, %v1609
    %v1611 = vpop.f32.mrb[0].mxu0
    %v1612 = vadd.f32 %v255, %v1611
    %1613 = vmatprep.mubr.bf16.mxu0 %v911
    %1614 = vmatmul.mubr.bf16.gmra.mrb[0].mxu0 %v520
    %v1615 = vpop.f32.mrb[0].mxu0
    %v1616 = vadd.f32 %v251, %v1615
    %v1617 = vpop.f32.mrb[0].mxu0
    %v1618 = vadd.f32 %v255, %v1617
    %v1619 = vpop.f32.mrb[0].mxu0
    %v1620 = vadd.f32 %v251, %v1619
    %v1621 = vpop.f32.mrb[0].mxu0
    %v1622 = vadd.f32 %v255, %v1621
    %1623 = vmatprep.mubr.bf16.mxu0 %v914
    %1624 = vmatmul.mubr.bf16.gmra.mrb[0].mxu0 %v522
    %v1625 = vpop.f32.mrb[0].mxu0
    %v1626 = vadd.f32 %v251, %v1625
    %v1627 = vpop.f32.mrb[0].mxu0
    %v1628 = vadd.f32 %v255, %v1627
    %v1629 = vpop.f32.mrb[0].mxu0
    %v1630 = vadd.f32 %v251, %v1629
    %v1631 = vpop.f32.mrb[0].mxu0
    %v1632 = vadd.f32 %v255, %v1631
    %1633 = vmatprep.mubr.bf16.mxu0 %v917
    %1634 = vmatmul.mubr.bf16.gmra.mrb[0].mxu0 %v524
    %v1635 = vpop.f32.mrb[0].mxu0
    %v1636 = vadd.f32 %v251, %v1635
    %v1637 = vpop.f32.mrb[0].mxu0
    %v1638 = vadd.f32 %v255, %v1637
    %v1639 = vpop.f32.mrb[0].mxu0
    %v1640 = vadd.f32 %v251, %v1639
    %v1641 = vpop.f32.mrb[0].mxu0
    %v1642 = vadd.f32 %v255, %v1641
    %1643 = vdwg.mxu0
    %1644 = vmatprep.subr.bf16.mxu0 %v725
    %1645 = vmatpush1.bf16.msra.mxu0 %v724
    %1646 = vmatprep.subr.bf16.mxu0 %v731
    %1647 = vmatpush1.bf16.msra.mxu0 %v730
    %1648 = vmatprep.subr.bf16.mxu0 %v737
    %1649 = vmatpush1.bf16.msra.mxu0 %v736
    %1650 = vmatprep.subr.bf16.mxu0 %v743
    %1651 = vmatpush1.bf16.msra.mxu0 %v742
    %1652 = vmatprep.subr.bf16.mxu0 %v749
    %1653 = vmatpush1.bf16.msra.mxu0 %v748
    %1654 = vmatprep.subr.bf16.mxu0 %v755
    %1655 = vmatpush1.bf16.msra.mxu0 %v754
    %1656 = vmatprep.subr.bf16.mxu0 %v761
    %1657 = vmatpush1.bf16.msra.mxu0 %v760
    %1658 = vmatprep.subr.bf16.mxu0 %v767
    %1659 = vmatpush1.bf16.msra.mxu0 %v766
    %1660 = vmatprep.subr.bf16.mxu0 %v936
    %1661 = vmatpush1.bf16.msra.mxu0 %v933
    %1662 = vmatprep.subr.bf16.mxu0 0
    %1663 = vmatpush1.bf16.msra.mxu0 0
    %1664 = vmatprep.subr.bf16.mxu0 0
    %1665 = vmatpush1.bf16.msra.mxu0 0
    %1666 = vmatprep.subr.bf16.mxu0 0
    %1667 = vmatpush1.bf16.msra.mxu0 0
    %1668 = vmatprep.subr.bf16.mxu0 0
    %1669 = vmatpush1.bf16.msra.mxu0 0
    %1670 = vmatprep.subr.bf16.mxu0 0
    %1671 = vmatpush1.bf16.msra.mxu0 0
    %1672 = vmatprep.subr.bf16.mxu0 0
    %1673 = vmatpush1.bf16.msra.mxu0 0
    %1674 = vmatprep.subr.bf16.mxu0 0
    %1675 = vmatpush1.bf16.msra.mxu0 0
    %1676 = vmatprep.mubr.bf16.mxu0 %v824
    %1677 = vmatmul.mubr.bf16.gmra.mrb[0].mxu0 %v462
    %v1678 = vpop.f32.mrb[0].mxu0
    %v1679 = vadd.f32 %v259, %v1678
    %v1680 = vpop.f32.mrb[0].mxu0
    %v1681 = vadd.f32 %v263, %v1680
    %v1682 = vpop.f32.mrb[0].mxu0
    %v1683 = vadd.f32 %v259, %v1682
    %v1684 = vpop.f32.mrb[0].mxu0
    %v1685 = vadd.f32 %v263, %v1684
    %1686 = vmatprep.mubr.bf16.mxu0 %v827
    %1687 = vmatmul.mubr.bf16.gmra.mrb[0].mxu0 %v464
    %v1688 = vpop.f32.mrb[0].mxu0
    %v1689 = vadd.f32 %v259, %v1688
    %v1690 = vpop.f32.mrb[0].mxu0
    %v1691 = vadd.f32 %v263, %v1690
    %v1692 = vpop.f32.mrb[0].mxu0
    %v1693 = vadd.f32 %v259, %v1692
    %v1694 = vpop.f32.mrb[0].mxu0
    %v1695 = vadd.f32 %v263, %v1694
    %1696 = vmatprep.mubr.bf16.mxu0 %v830
    %1697 = vmatmul.mubr.bf16.gmra.mrb[0].mxu0 %v466
    %v1698 = vpop.f32.mrb[0].mxu0
    %v1699 = vadd.f32 %v259, %v1698
    %v1700 = vpop.f32.mrb[0].mxu0
    %v1701 = vadd.f32 %v263, %v1700
    %v1702 = vpop.f32.mrb[0].mxu0
    %v1703 = vadd.f32 %v259, %v1702
    %v1704 = vpop.f32.mrb[0].mxu0
    %v1705 = vadd.f32 %v263, %v1704
    %1706 = vmatprep.mubr.bf16.mxu0 %v833
    %1707 = vmatmul.mubr.bf16.gmra.mrb[0].mxu0 %v468
    %v1708 = vpop.f32.mrb[0].mxu0
    %v1709 = vadd.f32 %v259, %v1708
    %v1710 = vpop.f32.mrb[0].mxu0
    %v1711 = vadd.f32 %v263, %v1710
    %v1712 = vpop.f32.mrb[0].mxu0
    %v1713 = vadd.f32 %v259, %v1712
    %v1714 = vpop.f32.mrb[0].mxu0
    %v1715 = vadd.f32 %v263, %v1714
    %1716 = vmatprep.mubr.bf16.mxu0 %v836
    %1717 = vmatmul.mubr.bf16.gmra.mrb[0].mxu0 %v470
    %v1718 = vpop.f32.mrb[0].mxu0
    %v1719 = vadd.f32 %v259, %v1718
    %v1720 = vpop.f32.mrb[0].mxu0
    %v1721 = vadd.f32 %v263, %v1720
    %v1722 = vpop.f32.mrb[0].mxu0
    %v1723 = vadd.f32 %v259, %v1722
    %v1724 = vpop.f32.mrb[0].mxu0
    %v1725 = vadd.f32 %v263, %v1724
    %1726 = vmatprep.mubr.bf16.mxu0 %v839
    %1727 = vmatmul.mubr.bf16.gmra.mrb[0].mxu0 %v472
    %v1728 = vpop.f32.mrb[0].mxu0
    %v1729 = vadd.f32 %v259, %v1728
    %v1730 = vpop.f32.mrb[0].mxu0
    %v1731 = vadd.f32 %v263, %v1730
    %v1732 = vpop.f32.mrb[0].mxu0
    %v1733 = vadd.f32 %v259, %v1732
    %v1734 = vpop.f32.mrb[0].mxu0
    %v1735 = vadd.f32 %v263, %v1734
    %1736 = vmatprep.mubr.bf16.mxu0 %v842
    %1737 = vmatmul.mubr.bf16.gmra.mrb[0].mxu0 %v474
    %v1738 = vpop.f32.mrb[0].mxu0
    %v1739 = vadd.f32 %v259, %v1738
    %v1740 = vpop.f32.mrb[0].mxu0
    %v1741 = vadd.f32 %v263, %v1740
    %v1742 = vpop.f32.mrb[0].mxu0
    %v1743 = vadd.f32 %v259, %v1742
    %v1744 = vpop.f32.mrb[0].mxu0
    %v1745 = vadd.f32 %v263, %v1744
    %1746 = vmatprep.mubr.bf16.mxu0 %v845
    %1747 = vmatmul.mubr.bf16.gmra.mrb[0].mxu0 %v476
    %v1748 = vpop.f32.mrb[0].mxu0
    %v1749 = vadd.f32 %v259, %v1748
    %v1750 = vpop.f32.mrb[0].mxu0
    %v1751 = vadd.f32 %v263, %v1750
    %v1752 = vpop.f32.mrb[0].mxu0
    %v1753 = vadd.f32 %v259, %v1752
    %v1754 = vpop.f32.mrb[0].mxu0
    %v1755 = vadd.f32 %v263, %v1754
    %1756 = vmatprep.mubr.bf16.mxu0 %v848
    %1757 = vmatmul.mubr.bf16.gmra.mrb[0].mxu0 %v478
    %v1758 = vpop.f32.mrb[0].mxu0
    %v1759 = vadd.f32 %v259, %v1758
    %v1760 = vpop.f32.mrb[0].mxu0
    %v1761 = vadd.f32 %v263, %v1760
    %v1762 = vpop.f32.mrb[0].mxu0
    %v1763 = vadd.f32 %v259, %v1762
    %v1764 = vpop.f32.mrb[0].mxu0
    %v1765 = vadd.f32 %v263, %v1764
    %1766 = vmatprep.mubr.bf16.mxu0 %v851
    %1767 = vmatmul.mubr.bf16.gmra.mrb[0].mxu0 %v480
    %v1768 = vpop.f32.mrb[0].mxu0
    %v1769 = vadd.f32 %v259, %v1768
    %v1770 = vpop.f32.mrb[0].mxu0
    %v1771 = vadd.f32 %v263, %v1770
    %v1772 = vpop.f32.mrb[0].mxu0
    %v1773 = vadd.f32 %v259, %v1772
    %v1774 = vpop.f32.mrb[0].mxu0
    %v1775 = vadd.f32 %v263, %v1774
    %1776 = vmatprep.mubr.bf16.mxu0 %v854
    %1777 = vmatmul.mubr.bf16.gmra.mrb[0].mxu0 %v482
    %v1778 = vpop.f32.mrb[0].mxu0
    %v1779 = vadd.f32 %v259, %v1778
    %v1780 = vpop.f32.mrb[0].mxu0
    %v1781 = vadd.f32 %v263, %v1780
    %v1782 = vpop.f32.mrb[0].mxu0
    %v1783 = vadd.f32 %v259, %v1782
    %v1784 = vpop.f32.mrb[0].mxu0
    %v1785 = vadd.f32 %v263, %v1784
    %1786 = vmatprep.mubr.bf16.mxu0 %v857
    %1787 = vmatmul.mubr.bf16.gmra.mrb[0].mxu0 %v484
    %v1788 = vpop.f32.mrb[0].mxu0
    %v1789 = vadd.f32 %v259, %v1788
    %v1790 = vpop.f32.mrb[0].mxu0
    %v1791 = vadd.f32 %v263, %v1790
    %v1792 = vpop.f32.mrb[0].mxu0
    %v1793 = vadd.f32 %v259, %v1792
    %v1794 = vpop.f32.mrb[0].mxu0
    %v1795 = vadd.f32 %v263, %v1794
    %1796 = vmatprep.mubr.bf16.mxu0 %v860
    %1797 = vmatmul.mubr.bf16.gmra.mrb[0].mxu0 %v486
    %v1798 = vpop.f32.mrb[0].mxu0
    %v1799 = vadd.f32 %v259, %v1798
    %v1800 = vpop.f32.mrb[0].mxu0
    %v1801 = vadd.f32 %v263, %v1800
    %v1802 = vpop.f32.mrb[0].mxu0
    %v1803 = vadd.f32 %v259, %v1802
    %v1804 = vpop.f32.mrb[0].mxu0
    %v1805 = vadd.f32 %v263, %v1804
    %1806 = vmatprep.mubr.bf16.mxu0 %v863
    %1807 = vmatmul.mubr.bf16.gmra.mrb[0].mxu0 %v488
    %v1808 = vpop.f32.mrb[0].mxu0
    %v1809 = vadd.f32 %v259, %v1808
    %v1810 = vpop.f32.mrb[0].mxu0
    %v1811 = vadd.f32 %v263, %v1810
    %v1812 = vpop.f32.mrb[0].mxu0
    %v1813 = vadd.f32 %v259, %v1812
    %v1814 = vpop.f32.mrb[0].mxu0
    %v1815 = vadd.f32 %v263, %v1814
    %1816 = vmatprep.mubr.bf16.mxu0 %v866
    %1817 = vmatmul.mubr.bf16.gmra.mrb[0].mxu0 %v490
    %v1818 = vpop.f32.mrb[0].mxu0
    %v1819 = vadd.f32 %v259, %v1818
    %v1820 = vpop.f32.mrb[0].mxu0
    %v1821 = vadd.f32 %v263, %v1820
    %v1822 = vpop.f32.mrb[0].mxu0
    %v1823 = vadd.f32 %v259, %v1822
    %v1824 = vpop.f32.mrb[0].mxu0
    %v1825 = vadd.f32 %v263, %v1824
    %1826 = vmatprep.mubr.bf16.mxu0 %v869
    %1827 = vmatmul.mubr.bf16.gmra.mrb[0].mxu0 %v492
    %v1828 = vpop.f32.mrb[0].mxu0
    %v1829 = vadd.f32 %v259, %v1828
    %v1830 = vpop.f32.mrb[0].mxu0
    %v1831 = vadd.f32 %v263, %v1830
    %v1832 = vpop.f32.mrb[0].mxu0
    %v1833 = vadd.f32 %v259, %v1832
    %v1834 = vpop.f32.mrb[0].mxu0
    %v1835 = vadd.f32 %v263, %v1834
    %1836 = vmatprep.mubr.bf16.mxu0 %v872
    %1837 = vmatmul.mubr.bf16.gmra.mrb[0].mxu0 %v494
    %v1838 = vpop.f32.mrb[0].mxu0
    %v1839 = vadd.f32 %v259, %v1838
    %v1840 = vpop.f32.mrb[0].mxu0
    %v1841 = vadd.f32 %v263, %v1840
    %v1842 = vpop.f32.mrb[0].mxu0
    %v1843 = vadd.f32 %v259, %v1842
    %v1844 = vpop.f32.mrb[0].mxu0
    %v1845 = vadd.f32 %v263, %v1844
    %1846 = vmatprep.mubr.bf16.mxu0 %v875
    %1847 = vmatmul.mubr.bf16.gmra.mrb[0].mxu0 %v496
    %v1848 = vpop.f32.mrb[0].mxu0
    %v1849 = vadd.f32 %v259, %v1848
    %v1850 = vpop.f32.mrb[0].mxu0
    %v1851 = vadd.f32 %v263, %v1850
    %v1852 = vpop.f32.mrb[0].mxu0
    %v1853 = vadd.f32 %v259, %v1852
    %v1854 = vpop.f32.mrb[0].mxu0
    %v1855 = vadd.f32 %v263, %v1854
    %1856 = vmatprep.mubr.bf16.mxu0 %v878
    %1857 = vmatmul.mubr.bf16.gmra.mrb[0].mxu0 %v498
    %v1858 = vpop.f32.mrb[0].mxu0
    %v1859 = vadd.f32 %v259, %v1858
    %v1860 = vpop.f32.mrb[0].mxu0
    %v1861 = vadd.f32 %v263, %v1860
    %v1862 = vpop.f32.mrb[0].mxu0
    %v1863 = vadd.f32 %v259, %v1862
    %v1864 = vpop.f32.mrb[0].mxu0
    %v1865 = vadd.f32 %v263, %v1864
    %1866 = vmatprep.mubr.bf16.mxu0 %v881
    %1867 = vmatmul.mubr.bf16.gmra.mrb[0].mxu0 %v500
    %v1868 = vpop.f32.mrb[0].mxu0
    %v1869 = vadd.f32 %v259, %v1868
    %v1870 = vpop.f32.mrb[0].mxu0
    %v1871 = vadd.f32 %v263, %v1870
    %v1872 = vpop.f32.mrb[0].mxu0
    %v1873 = vadd.f32 %v259, %v1872
    %v1874 = vpop.f32.mrb[0].mxu0
    %v1875 = vadd.f32 %v263, %v1874
    %1876 = vmatprep.mubr.bf16.mxu0 %v884
    %1877 = vmatmul.mubr.bf16.gmra.mrb[0].mxu0 %v502
    %v1878 = vpop.f32.mrb[0].mxu0
    %v1879 = vadd.f32 %v259, %v1878
    %v1880 = vpop.f32.mrb[0].mxu0
    %v1881 = vadd.f32 %v263, %v1880
    %v1882 = vpop.f32.mrb[0].mxu0
    %v1883 = vadd.f32 %v259, %v1882
    %v1884 = vpop.f32.mrb[0].mxu0
    %v1885 = vadd.f32 %v263, %v1884
    %1886 = vmatprep.mubr.bf16.mxu0 %v887
    %1887 = vmatmul.mubr.bf16.gmra.mrb[0].mxu0 %v504
    %v1888 = vpop.f32.mrb[0].mxu0
    %v1889 = vadd.f32 %v259, %v1888
    %v1890 = vpop.f32.mrb[0].mxu0
    %v1891 = vadd.f32 %v263, %v1890
    %v1892 = vpop.f32.mrb[0].mxu0
    %v1893 = vadd.f32 %v259, %v1892
    %v1894 = vpop.f32.mrb[0].mxu0
    %v1895 = vadd.f32 %v263, %v1894
    %1896 = vmatprep.mubr.bf16.mxu0 %v890
    %1897 = vmatmul.mubr.bf16.gmra.mrb[0].mxu0 %v506
    %v1898 = vpop.f32.mrb[0].mxu0
    %v1899 = vadd.f32 %v259, %v1898
    %v1900 = vpop.f32.mrb[0].mxu0
    %v1901 = vadd.f32 %v263, %v1900
    %v1902 = vpop.f32.mrb[0].mxu0
    %v1903 = vadd.f32 %v259, %v1902
    %v1904 = vpop.f32.mrb[0].mxu0
    %v1905 = vadd.f32 %v263, %v1904
    %1906 = vmatprep.mubr.bf16.mxu0 %v893
    %1907 = vmatmul.mubr.bf16.gmra.mrb[0].mxu0 %v508
    %v1908 = vpop.f32.mrb[0].mxu0
    %v1909 = vadd.f32 %v259, %v1908
    %v1910 = vpop.f32.mrb[0].mxu0
    %v1911 = vadd.f32 %v263, %v1910
    %v1912 = vpop.f32.mrb[0].mxu0
    %v1913 = vadd.f32 %v259, %v1912
    %v1914 = vpop.f32.mrb[0].mxu0
    %v1915 = vadd.f32 %v263, %v1914
    %1916 = vmatprep.mubr.bf16.mxu0 %v896
    %1917 = vmatmul.mubr.bf16.gmra.mrb[0].mxu0 %v510
    %v1918 = vpop.f32.mrb[0].mxu0
    %v1919 = vadd.f32 %v259, %v1918
    %v1920 = vpop.f32.mrb[0].mxu0
    %v1921 = vadd.f32 %v263, %v1920
    %v1922 = vpop.f32.mrb[0].mxu0
    %v1923 = vadd.f32 %v259, %v1922
    %v1924 = vpop.f32.mrb[0].mxu0
    %v1925 = vadd.f32 %v263, %v1924
    %1926 = vmatprep.mubr.bf16.mxu0 %v899
    %1927 = vmatmul.mubr.bf16.gmra.mrb[0].mxu0 %v512
    %v1928 = vpop.f32.mrb[0].mxu0
    %v1929 = vadd.f32 %v259, %v1928
    %v1930 = vpop.f32.mrb[0].mxu0
    %v1931 = vadd.f32 %v263, %v1930
    %v1932 = vpop.f32.mrb[0].mxu0
    %v1933 = vadd.f32 %v259, %v1932
    %v1934 = vpop.f32.mrb[0].mxu0
    %v1935 = vadd.f32 %v263, %v1934
    %1936 = vmatprep.mubr.bf16.mxu0 %v902
    %1937 = vmatmul.mubr.bf16.gmra.mrb[0].mxu0 %v514
    %v1938 = vpop.f32.mrb[0].mxu0
    %v1939 = vadd.f32 %v259, %v1938
    %v1940 = vpop.f32.mrb[0].mxu0
    %v1941 = vadd.f32 %v263, %v1940
    %v1942 = vpop.f32.mrb[0].mxu0
    %v1943 = vadd.f32 %v259, %v1942
    %v1944 = vpop.f32.mrb[0].mxu0
    %v1945 = vadd.f32 %v263, %v1944
    %1946 = vmatprep.mubr.bf16.mxu0 %v905
    %1947 = vmatmul.mubr.bf16.gmra.mrb[0].mxu0 %v516
    %v1948 = vpop.f32.mrb[0].mxu0
    %v1949 = vadd.f32 %v259, %v1948
    %v1950 = vpop.f32.mrb[0].mxu0
    %v1951 = vadd.f32 %v263, %v1950
    %v1952 = vpop.f32.mrb[0].mxu0
    %v1953 = vadd.f32 %v259, %v1952
    %v1954 = vpop.f32.mrb[0].mxu0
    %v1955 = vadd.f32 %v263, %v1954
    %1956 = vmatprep.mubr.bf16.mxu0 %v908
    %1957 = vmatmul.mubr.bf16.gmra.mrb[0].mxu0 %v518
    %v1958 = vpop.f32.mrb[0].mxu0
    %v1959 = vadd.f32 %v259, %v1958
    %v1960 = vpop.f32.mrb[0].mxu0
    %v1961 = vadd.f32 %v263, %v1960
    %v1962 = vpop.f32.mrb[0].mxu0
    %v1963 = vadd.f32 %v259, %v1962
    %v1964 = vpop.f32.mrb[0].mxu0
    %v1965 = vadd.f32 %v263, %v1964
    %1966 = vmatprep.mubr.bf16.mxu0 %v911
    %1967 = vmatmul.mubr.bf16.gmra.mrb[0].mxu0 %v520
    %v1968 = vpop.f32.mrb[0].mxu0
    %v1969 = vadd.f32 %v259, %v1968
    %v1970 = vpop.f32.mrb[0].mxu0
    %v1971 = vadd.f32 %v263, %v1970
    %v1972 = vpop.f32.mrb[0].mxu0
    %v1973 = vadd.f32 %v259, %v1972
    %v1974 = vpop.f32.mrb[0].mxu0
    %v1975 = vadd.f32 %v263, %v1974
    %1976 = vmatprep.mubr.bf16.mxu0 %v914
    %1977 = vmatmul.mubr.bf16.gmra.mrb[0].mxu0 %v522
    %v1978 = vpop.f32.mrb[0].mxu0
    %v1979 = vadd.f32 %v259, %v1978
    %v1980 = vpop.f32.mrb[0].mxu0
    %v1981 = vadd.f32 %v263, %v1980
    %v1982 = vpop.f32.mrb[0].mxu0
    %v1983 = vadd.f32 %v259, %v1982
    %v1984 = vpop.f32.mrb[0].mxu0
    %v1985 = vadd.f32 %v263, %v1984
    %1986 = vmatprep.mubr.bf16.mxu0 %v917
    %1987 = vmatmul.mubr.bf16.gmra.mrb[0].mxu0 %v524
    %v1988 = vpop.f32.mrb[0].mxu0
    %v1989 = vadd.f32 %v259, %v1988
    %v1990 = vpop.f32.mrb[0].mxu0
    %v1991 = vadd.f32 %v263, %v1990
    %v1992 = vpop.f32.mrb[0].mxu0
    %v1993 = vadd.f32 %v259, %v1992
    %v1994 = vpop.f32.mrb[0].mxu0
    %v1995 = vadd.f32 %v263, %v1994
    %1996 = vdwg.mxu0
    %v1997 = vmax.f32 %v973, 0.0
    %v1998 = vmax.f32 %v975, 0.0
    %v1999 = vmax.f32 %v1326, 0.0
    %v2000 = vmax.f32 %v1328, 0.0
    %v2001 = vmax.f32 %v1679, 0.0
    %v2002 = vmax.f32 %v1681, 0.0
    %v2003 = vmax.f32 %v977, 0.0
    %v2004 = vmax.f32 %v979, 0.0
    %v2005 = vmax.f32 %v1330, 0.0
    %v2006 = vmax.f32 %v1332, 0.0
    %v2007 = vmax.f32 %v1683, 0.0
    %v2008 = vmax.f32 %v1685, 0.0
    %v2009 = vmax.f32 %v983, 0.0
    %v2010 = vmax.f32 %v985, 0.0
    %v2011 = vmax.f32 %v1336, 0.0
    %v2012 = vmax.f32 %v1338, 0.0
    %v2013 = vmax.f32 %v1689, 0.0
    %v2014 = vmax.f32 %v1691, 0.0
    %v2015 = vmax.f32 %v987, 0.0
    %v2016 = vmax.f32 %v989, 0.0
    %v2017 = vmax.f32 %v1340, 0.0
    %v2018 = vmax.f32 %v1342, 0.0
    %v2019 = vmax.f32 %v1693, 0.0
    %v2020 = vmax.f32 %v1695, 0.0
    %v2021 = vmax.f32 %v993, 0.0
    %v2022 = vmax.f32 %v995, 0.0
    %v2023 = vmax.f32 %v1346, 0.0
    %v2024 = vmax.f32 %v1348, 0.0
    %v2025 = vmax.f32 %v1699, 0.0
    %v2026 = vmax.f32 %v1701, 0.0
    %v2027 = vmax.f32 %v997, 0.0
    %v2028 = vmax.f32 %v999, 0.0
    %v2029 = vmax.f32 %v1350, 0.0
    %v2030 = vmax.f32 %v1352, 0.0
    %v2031 = vmax.f32 %v1703, 0.0
    %v2032 = vmax.f32 %v1705, 0.0
    %v2033 = vmax.f32 %v1003, 0.0
    %v2034 = vmax.f32 %v1005, 0.0
    %v2035 = vmax.f32 %v1356, 0.0
    %v2036 = vmax.f32 %v1358, 0.0
    %v2037 = vmax.f32 %v1709, 0.0
    %v2038 = vmax.f32 %v1711, 0.0
    %v2039 = vmax.f32 %v1007, 0.0
    %v2040 = vmax.f32 %v1009, 0.0
    %v2041 = vmax.f32 %v1360, 0.0
    %v2042 = vmax.f32 %v1362, 0.0
    %v2043 = vmax.f32 %v1713, 0.0
    %v2044 = vmax.f32 %v1715, 0.0
    %v2045 = vmax.f32 %v1013, 0.0
    %v2046 = vmax.f32 %v1015, 0.0
    %v2047 = vmax.f32 %v1366, 0.0
    %v2048 = vmax.f32 %v1368, 0.0
    %v2049 = vmax.f32 %v1719, 0.0
    %v2050 = vmax.f32 %v1721, 0.0
    %v2051 = vmax.f32 %v1017, 0.0
    %v2052 = vmax.f32 %v1019, 0.0
    %v2053 = vmax.f32 %v1370, 0.0
    %v2054 = vmax.f32 %v1372, 0.0
    %v2055 = vmax.f32 %v1723, 0.0
    %v2056 = vmax.f32 %v1725, 0.0
    %v2057 = vmax.f32 %v1023, 0.0
    %v2058 = vmax.f32 %v1025, 0.0
    %v2059 = vmax.f32 %v1376, 0.0
    %v2060 = vmax.f32 %v1378, 0.0
    %v2061 = vmax.f32 %v1729, 0.0
    %v2062 = vmax.f32 %v1731, 0.0
    %v2063 = vmax.f32 %v1027, 0.0
    %v2064 = vmax.f32 %v1029, 0.0
    %v2065 = vmax.f32 %v1380, 0.0
    %v2066 = vmax.f32 %v1382, 0.0
    %v2067 = vmax.f32 %v1733, 0.0
    %v2068 = vmax.f32 %v1735, 0.0
    %v2069 = vmax.f32 %v1033, 0.0
    %v2070 = vmax.f32 %v1035, 0.0
    %v2071 = vmax.f32 %v1386, 0.0
    %v2072 = vmax.f32 %v1388, 0.0
    %v2073 = vmax.f32 %v1739, 0.0
    %v2074 = vmax.f32 %v1741, 0.0
    %v2075 = vmax.f32 %v1037, 0.0
    %v2076 = vmax.f32 %v1039, 0.0
    %v2077 = vmax.f32 %v1390, 0.0
    %v2078 = vmax.f32 %v1392, 0.0
    %v2079 = vmax.f32 %v1743, 0.0
    %v2080 = vmax.f32 %v1745, 0.0
    %v2081 = vmax.f32 %v1043, 0.0
    %v2082 = vmax.f32 %v1045, 0.0
    %v2083 = vmax.f32 %v1396, 0.0
    %v2084 = vmax.f32 %v1398, 0.0
    %v2085 = vmax.f32 %v1749, 0.0
    %v2086 = vmax.f32 %v1751, 0.0
    %v2087 = vmax.f32 %v1047, 0.0
    %v2088 = vmax.f32 %v1049, 0.0
    %v2089 = vmax.f32 %v1400, 0.0
    %v2090 = vmax.f32 %v1402, 0.0
    %v2091 = vmax.f32 %v1753, 0.0
    %v2092 = vmax.f32 %v1755, 0.0
    %v2093 = vmax.f32 %v1053, 0.0
    %v2094 = vmax.f32 %v1055, 0.0
    %v2095 = vmax.f32 %v1406, 0.0
    %v2096 = vmax.f32 %v1408, 0.0
    %v2097 = vmax.f32 %v1759, 0.0
    %v2098 = vmax.f32 %v1761, 0.0
    %v2099 = vmax.f32 %v1057, 0.0
    %v2100 = vmax.f32 %v1059, 0.0
    %v2101 = vmax.f32 %v1410, 0.0
    %v2102 = vmax.f32 %v1412, 0.0
    %v2103 = vmax.f32 %v1763, 0.0
    %v2104 = vmax.f32 %v1765, 0.0
    %v2105 = vmax.f32 %v1063, 0.0
    %v2106 = vmax.f32 %v1065, 0.0
    %v2107 = vmax.f32 %v1416, 0.0
    %v2108 = vmax.f32 %v1418, 0.0
    %v2109 = vmax.f32 %v1769, 0.0
    %v2110 = vmax.f32 %v1771, 0.0
    %v2111 = vmax.f32 %v1067, 0.0
    %v2112 = vmax.f32 %v1069, 0.0
    %v2113 = vmax.f32 %v1420, 0.0
    %v2114 = vmax.f32 %v1422, 0.0
    %v2115 = vmax.f32 %v1773, 0.0
    %v2116 = vmax.f32 %v1775, 0.0
    %v2117 = vmax.f32 %v1073, 0.0
    %v2118 = vmax.f32 %v1075, 0.0
    %v2119 = vmax.f32 %v1426, 0.0
    %v2120 = vmax.f32 %v1428, 0.0
    %v2121 = vmax.f32 %v1779, 0.0
    %v2122 = vmax.f32 %v1781, 0.0
    %v2123 = vmax.f32 %v1077, 0.0
    %v2124 = vmax.f32 %v1079, 0.0
    %v2125 = vmax.f32 %v1430, 0.0
    %v2126 = vmax.f32 %v1432, 0.0
    %v2127 = vmax.f32 %v1783, 0.0
    %v2128 = vmax.f32 %v1785, 0.0
    %v2129 = vmax.f32 %v1083, 0.0
    %v2130 = vmax.f32 %v1085, 0.0
    %v2131 = vmax.f32 %v1436, 0.0
    %v2132 = vmax.f32 %v1438, 0.0
    %v2133 = vmax.f32 %v1789, 0.0
    %v2134 = vmax.f32 %v1791, 0.0
    %v2135 = vmax.f32 %v1087, 0.0
    %v2136 = vmax.f32 %v1089, 0.0
    %v2137 = vmax.f32 %v1440, 0.0
    %v2138 = vmax.f32 %v1442, 0.0
    %v2139 = vmax.f32 %v1793, 0.0
    %v2140 = vmax.f32 %v1795, 0.0
    %v2141 = vmax.f32 %v1093, 0.0
    %v2142 = vmax.f32 %v1095, 0.0
    %v2143 = vmax.f32 %v1446, 0.0
    %v2144 = vmax.f32 %v1448, 0.0
    %v2145 = vmax.f32 %v1799, 0.0
    %v2146 = vmax.f32 %v1801, 0.0
    %v2147 = vmax.f32 %v1097, 0.0
    %v2148 = vmax.f32 %v1099, 0.0
    %v2149 = vmax.f32 %v1450, 0.0
    %v2150 = vmax.f32 %v1452, 0.0
    %v2151 = vmax.f32 %v1803, 0.0
    %v2152 = vmax.f32 %v1805, 0.0
    %v2153 = vmax.f32 %v1103, 0.0
    %v2154 = vmax.f32 %v1105, 0.0
    %v2155 = vmax.f32 %v1456, 0.0
    %v2156 = vmax.f32 %v1458, 0.0
    %v2157 = vmax.f32 %v1809, 0.0
    %v2158 = vmax.f32 %v1811, 0.0
    %v2159 = vmax.f32 %v1107, 0.0
    %v2160 = vmax.f32 %v1109, 0.0
    %v2161 = vmax.f32 %v1460, 0.0
    %v2162 = vmax.f32 %v1462, 0.0
    %v2163 = vmax.f32 %v1813, 0.0
    %v2164 = vmax.f32 %v1815, 0.0
    %v2165 = vmax.f32 %v1113, 0.0
    %v2166 = vmax.f32 %v1115, 0.0
    %v2167 = vmax.f32 %v1466, 0.0
    %v2168 = vmax.f32 %v1468, 0.0
    %v2169 = vmax.f32 %v1819, 0.0
    %v2170 = vmax.f32 %v1821, 0.0
    %v2171 = vmax.f32 %v1117, 0.0
    %v2172 = vmax.f32 %v1119, 0.0
    %v2173 = vmax.f32 %v1470, 0.0
    %v2174 = vmax.f32 %v1472, 0.0
    %v2175 = vmax.f32 %v1823, 0.0
    %v2176 = vmax.f32 %v1825, 0.0
    %v2177 = vmax.f32 %v1123, 0.0
    %v2178 = vmax.f32 %v1125, 0.0
    %v2179 = vmax.f32 %v1476, 0.0
    %v2180 = vmax.f32 %v1478, 0.0
    %v2181 = vmax.f32 %v1829, 0.0
    %v2182 = vmax.f32 %v1831, 0.0
    %v2183 = vmax.f32 %v1127, 0.0
    %v2184 = vmax.f32 %v1129, 0.0
    %v2185 = vmax.f32 %v1480, 0.0
    %v2186 = vmax.f32 %v1482, 0.0
    %v2187 = vmax.f32 %v1833, 0.0
    %v2188 = vmax.f32 %v1835, 0.0
    %v2189 = vmax.f32 %v1133, 0.0
    %v2190 = vmax.f32 %v1135, 0.0
    %v2191 = vmax.f32 %v1486, 0.0
    %v2192 = vmax.f32 %v1488, 0.0
    %v2193 = vmax.f32 %v1839, 0.0
    %v2194 = vmax.f32 %v1841, 0.0
    %v2195 = vmax.f32 %v1137, 0.0
    %v2196 = vmax.f32 %v1139, 0.0
    %v2197 = vmax.f32 %v1490, 0.0
    %v2198 = vmax.f32 %v1492, 0.0
    %v2199 = vmax.f32 %v1843, 0.0
    %v2200 = vmax.f32 %v1845, 0.0
    %v2201 = vmax.f32 %v1143, 0.0
    %v2202 = vmax.f32 %v1145, 0.0
    %v2203 = vmax.f32 %v1496, 0.0
    %v2204 = vmax.f32 %v1498, 0.0
    %v2205 = vmax.f32 %v1849, 0.0
    %v2206 = vmax.f32 %v1851, 0.0
    %v2207 = vmax.f32 %v1147, 0.0
    %v2208 = vmax.f32 %v1149, 0.0
    %v2209 = vmax.f32 %v1500, 0.0
    %v2210 = vmax.f32 %v1502, 0.0
    %v2211 = vmax.f32 %v1853, 0.0
    %v2212 = vmax.f32 %v1855, 0.0
    %v2213 = vmax.f32 %v1153, 0.0
    %v2214 = vmax.f32 %v1155, 0.0
    %v2215 = vmax.f32 %v1506, 0.0
    %v2216 = vmax.f32 %v1508, 0.0
    %v2217 = vmax.f32 %v1859, 0.0
    %v2218 = vmax.f32 %v1861, 0.0
    %v2219 = vmax.f32 %v1157, 0.0
    %v2220 = vmax.f32 %v1159, 0.0
    %v2221 = vmax.f32 %v1510, 0.0
    %v2222 = vmax.f32 %v1512, 0.0
    %v2223 = vmax.f32 %v1863, 0.0
    %v2224 = vmax.f32 %v1865, 0.0
    %v2225 = vmax.f32 %v1163, 0.0
    %v2226 = vmax.f32 %v1165, 0.0
    %v2227 = vmax.f32 %v1516, 0.0
    %v2228 = vmax.f32 %v1518, 0.0
    %v2229 = vmax.f32 %v1869, 0.0
    %v2230 = vmax.f32 %v1871, 0.0
    %v2231 = vmax.f32 %v1167, 0.0
    %v2232 = vmax.f32 %v1169, 0.0
    %v2233 = vmax.f32 %v1520, 0.0
    %v2234 = vmax.f32 %v1522, 0.0
    %v2235 = vmax.f32 %v1873, 0.0
    %v2236 = vmax.f32 %v1875, 0.0
    %v2237 = vmax.f32 %v1173, 0.0
    %v2238 = vmax.f32 %v1175, 0.0
    %v2239 = vmax.f32 %v1526, 0.0
    %v2240 = vmax.f32 %v1528, 0.0
    %v2241 = vmax.f32 %v1879, 0.0
    %v2242 = vmax.f32 %v1881, 0.0
    %v2243 = vmax.f32 %v1177, 0.0
    %v2244 = vmax.f32 %v1179, 0.0
    %v2245 = vmax.f32 %v1530, 0.0
    %v2246 = vmax.f32 %v1532, 0.0
    %v2247 = vmax.f32 %v1883, 0.0
    %v2248 = vmax.f32 %v1885, 0.0
    %v2249 = vmax.f32 %v1183, 0.0
    %v2250 = vmax.f32 %v1185, 0.0
    %v2251 = vmax.f32 %v1536, 0.0
    %v2252 = vmax.f32 %v1538, 0.0
    %v2253 = vmax.f32 %v1889, 0.0
    %v2254 = vmax.f32 %v1891, 0.0
    %v2255 = vmax.f32 %v1187, 0.0
    %v2256 = vmax.f32 %v1189, 0.0
    %v2257 = vmax.f32 %v1540, 0.0
    %v2258 = vmax.f32 %v1542, 0.0
    %v2259 = vmax.f32 %v1893, 0.0
    %v2260 = vmax.f32 %v1895, 0.0
    %v2261 = vmax.f32 %v1193, 0.0
    %v2262 = vmax.f32 %v1195, 0.0
    %v2263 = vmax.f32 %v1546, 0.0
    %v2264 = vmax.f32 %v1548, 0.0
    %v2265 = vmax.f32 %v1899, 0.0
    %v2266 = vmax.f32 %v1901, 0.0
    %v2267 = vmax.f32 %v1197, 0.0
    %v2268 = vmax.f32 %v1199, 0.0
    %v2269 = vmax.f32 %v1550, 0.0
    %v2270 = vmax.f32 %v1552, 0.0
    %v2271 = vmax.f32 %v1903, 0.0
    %v2272 = vmax.f32 %v1905, 0.0
    %v2273 = vmax.f32 %v1203, 0.0
    %v2274 = vmax.f32 %v1205, 0.0
    %v2275 = vmax.f32 %v1556, 0.0
    %v2276 = vmax.f32 %v1558, 0.0
    %v2277 = vmax.f32 %v1909, 0.0
    %v2278 = vmax.f32 %v1911, 0.0
    %v2279 = vmax.f32 %v1207, 0.0
    %v2280 = vmax.f32 %v1209, 0.0
    %v2281 = vmax.f32 %v1560, 0.0
    %v2282 = vmax.f32 %v1562, 0.0
    %v2283 = vmax.f32 %v1913, 0.0
    %v2284 = vmax.f32 %v1915, 0.0
    %v2285 = vmax.f32 %v1213, 0.0
    %v2286 = vmax.f32 %v1215, 0.0
    %v2287 = vmax.f32 %v1566, 0.0
    %v2288 = vmax.f32 %v1568, 0.0
    %v2289 = vmax.f32 %v1919, 0.0
    %v2290 = vmax.f32 %v1921, 0.0
    %v2291 = vmax.f32 %v1217, 0.0
    %v2292 = vmax.f32 %v1219, 0.0
    %v2293 = vmax.f32 %v1570, 0.0
    %v2294 = vmax.f32 %v1572, 0.0
    %v2295 = vmax.f32 %v1923, 0.0
    %v2296 = vmax.f32 %v1925, 0.0
    %v2297 = vmax.f32 %v1223, 0.0
    %v2298 = vmax.f32 %v1225, 0.0
    %v2299 = vmax.f32 %v1576, 0.0
    %v2300 = vmax.f32 %v1578, 0.0
    %v2301 = vmax.f32 %v1929, 0.0
    %v2302 = vmax.f32 %v1931, 0.0
    %v2303 = vmax.f32 %v1227, 0.0
    %v2304 = vmax.f32 %v1229, 0.0
    %v2305 = vmax.f32 %v1580, 0.0
    %v2306 = vmax.f32 %v1582, 0.0
    %v2307 = vmax.f32 %v1933, 0.0
    %v2308 = vmax.f32 %v1935, 0.0
    %v2309 = vmax.f32 %v1233, 0.0
    %v2310 = vmax.f32 %v1235, 0.0
    %v2311 = vmax.f32 %v1586, 0.0
    %v2312 = vmax.f32 %v1588, 0.0
    %v2313 = vmax.f32 %v1939, 0.0
    %v2314 = vmax.f32 %v1941, 0.0
    %v2315 = vmax.f32 %v1237, 0.0
    %v2316 = vmax.f32 %v1239, 0.0
    %v2317 = vmax.f32 %v1590, 0.0
    %v2318 = vmax.f32 %v1592, 0.0
    %v2319 = vmax.f32 %v1943, 0.0
    %v2320 = vmax.f32 %v1945, 0.0
    %v2321 = vmax.f32 %v1243, 0.0
    %v2322 = vmax.f32 %v1245, 0.0
    %v2323 = vmax.f32 %v1596, 0.0
    %v2324 = vmax.f32 %v1598, 0.0
    %v2325 = vmax.f32 %v1949, 0.0
    %v2326 = vmax.f32 %v1951, 0.0
    %v2327 = vmax.f32 %v1247, 0.0
    %v2328 = vmax.f32 %v1249, 0.0
    %v2329 = vmax.f32 %v1600, 0.0
    %v2330 = vmax.f32 %v1602, 0.0
    %v2331 = vmax.f32 %v1953, 0.0
    %v2332 = vmax.f32 %v1955, 0.0
    %v2333 = vmax.f32 %v1253, 0.0
    %v2334 = vmax.f32 %v1255, 0.0
    %v2335 = vmax.f32 %v1606, 0.0
    %v2336 = vmax.f32 %v1608, 0.0
    %v2337 = vmax.f32 %v1959, 0.0
    %v2338 = vmax.f32 %v1961, 0.0
    %v2339 = vmax.f32 %v1257, 0.0
    %v2340 = vmax.f32 %v1259, 0.0
    %v2341 = vmax.f32 %v1610, 0.0
    %v2342 = vmax.f32 %v1612, 0.0
    %v2343 = vmax.f32 %v1963, 0.0
    %v2344 = vmax.f32 %v1965, 0.0
    %v2345 = vmax.f32 %v1263, 0.0
    %v2346 = vmax.f32 %v1265, 0.0
    %v2347 = vmax.f32 %v1616, 0.0
    %v2348 = vmax.f32 %v1618, 0.0
    %v2349 = vmax.f32 %v1969, 0.0
    %v2350 = vmax.f32 %v1971, 0.0
    %v2351 = vmax.f32 %v1267, 0.0
    %v2352 = vmax.f32 %v1269, 0.0
    %v2353 = vmax.f32 %v1620, 0.0
    %v2354 = vmax.f32 %v1622, 0.0
    %v2355 = vmax.f32 %v1973, 0.0
    %v2356 = vmax.f32 %v1975, 0.0
    %v2357 = vmax.f32 %v1273, 0.0
    %v2358 = vmax.f32 %v1275, 0.0
    %v2359 = vmax.f32 %v1626, 0.0
    %v2360 = vmax.f32 %v1628, 0.0
    %v2361 = vmax.f32 %v1979, 0.0
    %v2362 = vmax.f32 %v1981, 0.0
    %v2363 = vmax.f32 %v1277, 0.0
    %v2364 = vmax.f32 %v1279, 0.0
    %v2365 = vmax.f32 %v1630, 0.0
    %v2366 = vmax.f32 %v1632, 0.0
    %v2367 = vmax.f32 %v1983, 0.0
    %v2368 = vmax.f32 %v1985, 0.0
    %v2369 = vmax.f32 %v1283, 0.0
    %v2370 = vmax.f32 %v1285, 0.0
    %v2371 = vmax.f32 %v1636, 0.0
    %v2372 = vmax.f32 %v1638, 0.0
    %v2373 = vmax.f32 %v1989, 0.0
    %v2374 = vmax.f32 %v1991, 0.0
    %v2375 = vmax.f32 %v1287, 0.0
    %v2376 = vmax.f32 %v1289, 0.0
    %v2377 = vmax.f32 %v1640, 0.0
    %v2378 = vmax.f32 %v1642, 0.0
    %v2379 = vmax.f32 %v1993, 0.0
    %v2380 = vmax.f32 %v1995, 0.0
    %v2381 = vmax.f32 %v1997, %v2000
    %v2382 = vmax.f32 %v1998, %v2001
    %v2383 = vmax.f32 %v1999, %v2002
    %v2384 = vmax.f32 %v2003, %v2006
    %v2385 = vmax.f32 %v2004, %v2007
    %v2386 = vmax.f32 %v2005, %v2008
    %v2387 = vmax.f32 %v2009, %v2012
    %v2388 = vmax.f32 %v2010, %v2013
    %v2389 = vmax.f32 %v2011, %v2014
    %v2390 = vmax.f32 %v2015, %v2018
    %v2391 = vmax.f32 %v2016, %v2019
    %v2392 = vmax.f32 %v2017, %v2020
    %v2393 = vmax.f32 %v2021, %v2024
    %v2394 = vmax.f32 %v2022, %v2025
    %v2395 = vmax.f32 %v2023, %v2026
    %v2396 = vmax.f32 %v2027, %v2030
    %v2397 = vmax.f32 %v2028, %v2031
    %v2398 = vmax.f32 %v2029, %v2032
    %v2399 = vmax.f32 %v2033, %v2036
    %v2400 = vmax.f32 %v2034, %v2037
    %v2401 = vmax.f32 %v2035, %v2038
    %v2402 = vmax.f32 %v2039, %v2042
    %v2403 = vmax.f32 %v2040, %v2043
    %v2404 = vmax.f32 %v2041, %v2044
    %v2405 = vmax.f32 %v2045, %v2048
    %v2406 = vmax.f32 %v2046, %v2049
    %v2407 = vmax.f32 %v2047, %v2050
    %v2408 = vmax.f32 %v2051, %v2054
    %v2409 = vmax.f32 %v2052, %v2055
    %v2410 = vmax.f32 %v2053, %v2056
    %v2411 = vmax.f32 %v2057, %v2060
    %v2412 = vmax.f32 %v2058, %v2061
    %v2413 = vmax.f32 %v2059, %v2062
    %v2414 = vmax.f32 %v2063, %v2066
    %v2415 = vmax.f32 %v2064, %v2067
    %v2416 = vmax.f32 %v2065, %v2068
    %v2417 = vmax.f32 %v2069, %v2072
    %v2418 = vmax.f32 %v2070, %v2073
    %v2419 = vmax.f32 %v2071, %v2074
    %v2420 = vmax.f32 %v2075, %v2078
    %v2421 = vmax.f32 %v2076, %v2079
    %v2422 = vmax.f32 %v2077, %v2080
    %v2423 = vmax.f32 %v2081, %v2084
    %v2424 = vmax.f32 %v2082, %v2085
    %v2425 = vmax.f32 %v2083, %v2086
    %v2426 = vmax.f32 %v2087, %v2090
    %v2427 = vmax.f32 %v2088, %v2091
    %v2428 = vmax.f32 %v2089, %v2092
    %v2429 = vmax.f32 %v2093, %v2096
    %v2430 = vmax.f32 %v2094, %v2097
    %v2431 = vmax.f32 %v2095, %v2098
    %v2432 = vmax.f32 %v2099, %v2102
    %v2433 = vmax.f32 %v2100, %v2103
    %v2434 = vmax.f32 %v2101, %v2104
    %v2435 = vmax.f32 %v2105, %v2108
    %v2436 = vmax.f32 %v2106, %v2109
    %v2437 = vmax.f32 %v2107, %v2110
    %v2438 = vmax.f32 %v2111, %v2114
    %v2439 = vmax.f32 %v2112, %v2115
    %v2440 = vmax.f32 %v2113, %v2116
    %v2441 = vmax.f32 %v2117, %v2120
    %v2442 = vmax.f32 %v2118, %v2121
    %v2443 = vmax.f32 %v2119, %v2122
    %v2444 = vmax.f32 %v2123, %v2126
    %v2445 = vmax.f32 %v2124, %v2127
    %v2446 = vmax.f32 %v2125, %v2128
    %v2447 = vmax.f32 %v2129, %v2132
    %v2448 = vmax.f32 %v2130, %v2133
    %v2449 = vmax.f32 %v2131, %v2134
    %v2450 = vmax.f32 %v2135, %v2138
    %v2451 = vmax.f32 %v2136, %v2139
    %v2452 = vmax.f32 %v2137, %v2140
    %v2453 = vmax.f32 %v2141, %v2144
    %v2454 = vmax.f32 %v2142, %v2145
    %v2455 = vmax.f32 %v2143, %v2146
    %v2456 = vmax.f32 %v2147, %v2150
    %v2457 = vmax.f32 %v2148, %v2151
    %v2458 = vmax.f32 %v2149, %v2152
    %v2459 = vmax.f32 %v2153, %v2156
    %v2460 = vmax.f32 %v2154, %v2157
    %v2461 = vmax.f32 %v2155, %v2158
    %v2462 = vmax.f32 %v2159, %v2162
    %v2463 = vmax.f32 %v2160, %v2163
    %v2464 = vmax.f32 %v2161, %v2164
    %v2465 = vmax.f32 %v2165, %v2168
    %v2466 = vmax.f32 %v2166, %v2169
    %v2467 = vmax.f32 %v2167, %v2170
    %v2468 = vmax.f32 %v2171, %v2174
    %v2469 = vmax.f32 %v2172, %v2175
    %v2470 = vmax.f32 %v2173, %v2176
    %v2471 = vmax.f32 %v2177, %v2180
    %v2472 = vmax.f32 %v2178, %v2181
    %v2473 = vmax.f32 %v2179, %v2182
    %v2474 = vmax.f32 %v2183, %v2186
    %v2475 = vmax.f32 %v2184, %v2187
    %v2476 = vmax.f32 %v2185, %v2188
    %v2477 = vmax.f32 %v2189, %v2192
    %v2478 = vmax.f32 %v2190, %v2193
    %v2479 = vmax.f32 %v2191, %v2194
    %v2480 = vmax.f32 %v2195, %v2198
    %v2481 = vmax.f32 %v2196, %v2199
    %v2482 = vmax.f32 %v2197, %v2200
    %v2483 = vmax.f32 %v2201, %v2204
    %v2484 = vmax.f32 %v2202, %v2205
    %v2485 = vmax.f32 %v2203, %v2206
    %v2486 = vmax.f32 %v2207, %v2210
    %v2487 = vmax.f32 %v2208, %v2211
    %v2488 = vmax.f32 %v2209, %v2212
    %v2489 = vmax.f32 %v2213, %v2216
    %v2490 = vmax.f32 %v2214, %v2217
    %v2491 = vmax.f32 %v2215, %v2218
    %v2492 = vmax.f32 %v2219, %v2222
    %v2493 = vmax.f32 %v2220, %v2223
    %v2494 = vmax.f32 %v2221, %v2224
    %v2495 = vmax.f32 %v2225, %v2228
    %v2496 = vmax.f32 %v2226, %v2229
    %v2497 = vmax.f32 %v2227, %v2230
    %v2498 = vmax.f32 %v2231, %v2234
    %v2499 = vmax.f32 %v2232, %v2235
    %v2500 = vmax.f32 %v2233, %v2236
    %v2501 = vmax.f32 %v2237, %v2240
    %v2502 = vmax.f32 %v2238, %v2241
    %v2503 = vmax.f32 %v2239, %v2242
    %v2504 = vmax.f32 %v2243, %v2246
    %v2505 = vmax.f32 %v2244, %v2247
    %v2506 = vmax.f32 %v2245, %v2248
    %v2507 = vmax.f32 %v2249, %v2252
    %v2508 = vmax.f32 %v2250, %v2253
    %v2509 = vmax.f32 %v2251, %v2254
    %v2510 = vmax.f32 %v2255, %v2258
    %v2511 = vmax.f32 %v2256, %v2259
    %v2512 = vmax.f32 %v2257, %v2260
    %v2513 = vmax.f32 %v2261, %v2264
    %v2514 = vmax.f32 %v2262, %v2265
    %v2515 = vmax.f32 %v2263, %v2266
    %v2516 = vmax.f32 %v2267, %v2270
    %v2517 = vmax.f32 %v2268, %v2271
    %v2518 = vmax.f32 %v2269, %v2272
    %v2519 = vmax.f32 %v2273, %v2276
    %v2520 = vmax.f32 %v2274, %v2277
    %v2521 = vmax.f32 %v2275, %v2278
    %v2522 = vmax.f32 %v2279, %v2282
    %v2523 = vmax.f32 %v2280, %v2283
    %v2524 = vmax.f32 %v2281, %v2284
    %v2525 = vmax.f32 %v2285, %v2288
    %v2526 = vmax.f32 %v2286, %v2289
    %v2527 = vmax.f32 %v2287, %v2290
    %v2528 = vmax.f32 %v2291, %v2294
    %v2529 = vmax.f32 %v2292, %v2295
    %v2530 = vmax.f32 %v2293, %v2296
    %v2531 = vmax.f32 %v2297, %v2300
    %v2532 = vmax.f32 %v2298, %v2301
    %v2533 = vmax.f32 %v2299, %v2302
    %v2534 = vmax.f32 %v2303, %v2306
    %v2535 = vmax.f32 %v2304, %v2307
    %v2536 = vmax.f32 %v2305, %v2308
    %v2537 = vmax.f32 %v2309, %v2312
    %v2538 = vmax.f32 %v2310, %v2313
    %v2539 = vmax.f32 %v2311, %v2314
    %v2540 = vmax.f32 %v2315, %v2318
    %v2541 = vmax.f32 %v2316, %v2319
    %v2542 = vmax.f32 %v2317, %v2320
    %v2543 = vmax.f32 %v2321, %v2324
    %v2544 = vmax.f32 %v2322, %v2325
    %v2545 = vmax.f32 %v2323, %v2326
    %v2546 = vmax.f32 %v2327, %v2330
    %v2547 = vmax.f32 %v2328, %v2331
    %v2548 = vmax.f32 %v2329, %v2332
    %v2549 = vmax.f32 %v2333, %v2336
    %v2550 = vmax.f32 %v2334, %v2337
    %v2551 = vmax.f32 %v2335, %v2338
    %v2552 = vmax.f32 %v2339, %v2342
    %v2553 = vmax.f32 %v2340, %v2343
    %v2554 = vmax.f32 %v2341, %v2344
    %v2555 = vmax.f32 %v2345, %v2348
    %v2556 = vmax.f32 %v2346, %v2349
    %v2557 = vmax.f32 %v2347, %v2350
    %v2558 = vmax.f32 %v2351, %v2354
    %v2559 = vmax.f32 %v2352, %v2355
    %v2560 = vmax.f32 %v2353, %v2356
    %v2561 = vmax.f32 %v2357, %v2360
    %v2562 = vmax.f32 %v2358, %v2361
    %v2563 = vmax.f32 %v2359, %v2362
    %v2564 = vmax.f32 %v2363, %v2366
    %v2565 = vmax.f32 %v2364, %v2367
    %v2566 = vmax.f32 %v2365, %v2368
    %v2567 = vmax.f32 %v2369, %v2372
    %v2568 = vmax.f32 %v2370, %v2373
    %v2569 = vmax.f32 %v2371, %v2374
    %v2570 = vmax.f32 %v2375, %v2378
    %v2571 = vmax.f32 %v2376, %v2379
    %v2572 = vmax.f32 %v2377, %v2380
    %v2573 = vmax.f32 %v2381, %v2387
    %v2574 = vmax.f32 %v2382, %v2388
    %v2575 = vmax.f32 %v2383, %v2389
    %v2576 = vmax.f32 %v2384, %v2390
    %v2577 = vmax.f32 %v2385, %v2391
    %v2578 = vmax.f32 %v2386, %v2392
    %v2579 = vmax.f32 %v2393, %v2399
    %v2580 = vmax.f32 %v2394, %v2400
    %v2581 = vmax.f32 %v2395, %v2401
    %v2582 = vmax.f32 %v2396, %v2402
    %v2583 = vmax.f32 %v2397, %v2403
    %v2584 = vmax.f32 %v2398, %v2404
    %v2585 = vmax.f32 %v2405, %v2411
    %v2586 = vmax.f32 %v2406, %v2412
    %v2587 = vmax.f32 %v2407, %v2413
    %v2588 = vmax.f32 %v2408, %v2414
    %v2589 = vmax.f32 %v2409, %v2415
    %v2590 = vmax.f32 %v2410, %v2416
    %v2591 = vmax.f32 %v2417, %v2423
    %v2592 = vmax.f32 %v2418, %v2424
    %v2593 = vmax.f32 %v2419, %v2425
    %v2594 = vmax.f32 %v2420, %v2426
    %v2595 = vmax.f32 %v2421, %v2427
    %v2596 = vmax.f32 %v2422, %v2428
    %v2597 = vmax.f32 %v2429, %v2435
    %v2598 = vmax.f32 %v2430, %v2436
    %v2599 = vmax.f32 %v2431, %v2437
    %v2600 = vmax.f32 %v2432, %v2438
    %v2601 = vmax.f32 %v2433, %v2439
    %v2602 = vmax.f32 %v2434, %v2440
    %v2603 = vmax.f32 %v2441, %v2447
    %v2604 = vmax.f32 %v2442, %v2448
    %v2605 = vmax.f32 %v2443, %v2449
    %v2606 = vmax.f32 %v2444, %v2450
    %v2607 = vmax.f32 %v2445, %v2451
    %v2608 = vmax.f32 %v2446, %v2452
    %v2609 = vmax.f32 %v2453, %v2459
    %v2610 = vmax.f32 %v2454, %v2460
    %v2611 = vmax.f32 %v2455, %v2461
    %v2612 = vmax.f32 %v2456, %v2462
    %v2613 = vmax.f32 %v2457, %v2463
    %v2614 = vmax.f32 %v2458, %v2464
    %v2615 = vmax.f32 %v2465, %v2471
    %v2616 = vmax.f32 %v2466, %v2472
    %v2617 = vmax.f32 %v2467, %v2473
    %v2618 = vmax.f32 %v2468, %v2474
    %v2619 = vmax.f32 %v2469, %v2475
    %v2620 = vmax.f32 %v2470, %v2476
    %v2621 = vmax.f32 %v2477, %v2483
    %v2622 = vmax.f32 %v2478, %v2484
    %v2623 = vmax.f32 %v2479, %v2485
    %v2624 = vmax.f32 %v2480, %v2486
    %v2625 = vmax.f32 %v2481, %v2487
    %v2626 = vmax.f32 %v2482, %v2488
    %v2627 = vmax.f32 %v2489, %v2495
    %v2628 = vmax.f32 %v2490, %v2496
    %v2629 = vmax.f32 %v2491, %v2497
    %v2630 = vmax.f32 %v2492, %v2498
    %v2631 = vmax.f32 %v2493, %v2499
    %v2632 = vmax.f32 %v2494, %v2500
    %v2633 = vmax.f32 %v2501, %v2507
    %v2634 = vmax.f32 %v2502, %v2508
    %v2635 = vmax.f32 %v2503, %v2509
    %v2636 = vmax.f32 %v2504, %v2510
    %v2637 = vmax.f32 %v2505, %v2511
    %v2638 = vmax.f32 %v2506, %v2512
    %v2639 = vmax.f32 %v2513, %v2519
    %v2640 = vmax.f32 %v2514, %v2520
    %v2641 = vmax.f32 %v2515, %v2521
    %v2642 = vmax.f32 %v2516, %v2522
    %v2643 = vmax.f32 %v2517, %v2523
    %v2644 = vmax.f32 %v2518, %v2524
    %v2645 = vmax.f32 %v2525, %v2531
    %v2646 = vmax.f32 %v2526, %v2532
    %v2647 = vmax.f32 %v2527, %v2533
    %v2648 = vmax.f32 %v2528, %v2534
    %v2649 = vmax.f32 %v2529, %v2535
    %v2650 = vmax.f32 %v2530, %v2536
    %v2651 = vmax.f32 %v2537, %v2543
    %v2652 = vmax.f32 %v2538, %v2544
    %v2653 = vmax.f32 %v2539, %v2545
    %v2654 = vmax.f32 %v2540, %v2546
    %v2655 = vmax.f32 %v2541, %v2547
    %v2656 = vmax.f32 %v2542, %v2548
    %v2657 = vmax.f32 %v2549, %v2555
    %v2658 = vmax.f32 %v2550, %v2556
    %v2659 = vmax.f32 %v2551, %v2557
    %v2660 = vmax.f32 %v2552, %v2558
    %v2661 = vmax.f32 %v2553, %v2559
    %v2662 = vmax.f32 %v2554, %v2560
    %v2663 = vmax.f32 %v2561, %v2567
    %v2664 = vmax.f32 %v2562, %v2568
    %v2665 = vmax.f32 %v2563, %v2569
    %v2666 = vmax.f32 %v2564, %v2570
    %v2667 = vmax.f32 %v2565, %v2571
    %v2668 = vmax.f32 %v2566, %v2572
    %2669 = vst [vmem:[#allocation2] sm:$0xff] %v2573
    %2670 = vst [vmem:[#allocation2 + $0x8] sm:$0xff] %v2574
    %2671 = vst [vmem:[#allocation2 + $0x10] sm:$0xff] %v2575
    %2672 = vst [vmem:[#allocation2 + $0x18] sm:$0xff] %v2576
    %2673 = vst [vmem:[#allocation2 + $0x20] sm:$0xff] %v2577
    %2674 = vst [vmem:[#allocation2 + $0x28] sm:$0xff] %v2578
    %2675 = vst [vmem:[#allocation2 + $0x30] sm:$0xff] %v2579
    %2676 = vst [vmem:[#allocation2 + $0x38] sm:$0xff] %v2580
    %2677 = vst [vmem:[#allocation2 + $0x40] sm:$0xff] %v2581
    %2678 = vst [vmem:[#allocation2 + $0x48] sm:$0xff] %v2582
    %2679 = vst [vmem:[#allocation2 + $0x50] sm:$0xff] %v2583
    %2680 = vst [vmem:[#allocation2 + $0x58] sm:$0xff] %v2584
    %2681 = vst [vmem:[#allocation2 + $0x60] sm:$0xff] %v2585
    %2682 = vst [vmem:[#allocation2 + $0x68] sm:$0xff] %v2586
    %2683 = vst [vmem:[#allocation2 + $0x70] sm:$0xff] %v2587
    %2684 = vst [vmem:[#allocation2 + $0x78] sm:$0xff] %v2588
    %2685 = vst [vmem:[#allocation2 + $0x80] sm:$0xff] %v2589
    %2686 = vst [vmem:[#allocation2 + $0x88] sm:$0xff] %v2590
    %2687 = vst [vmem:[#allocation2 + $0x90] sm:$0xff] %v2591
    %2688 = vst [vmem:[#allocation2 + $0x98] sm:$0xff] %v2592
    %2689 = vst [vmem:[#allocation2 + $0xa0] sm:$0xff] %v2593
    %2690 = vst [vmem:[#allocation2 + $0xa8] sm:$0xff] %v2594
    %2691 = vst [vmem:[#allocation2 + $0xb0] sm:$0xff] %v2595
    %2692 = vst [vmem:[#allocation2 + $0xb8] sm:$0xff] %v2596
    %2693 = vst [vmem:[#allocation2 + $0xc0] sm:$0xff] %v2597
    %2694 = vst [vmem:[#allocation2 + $0xc8] sm:$0xff] %v2598
    %2695 = vst [vmem:[#allocation2 + $0xd0] sm:$0xff] %v2599
    %2696 = vst [vmem:[#allocation2 + $0xd8] sm:$0xff] %v2600
    %2697 = vst [vmem:[#allocation2 + $0xe0] sm:$0xff] %v2601
    %2698 = vst [vmem:[#allocation2 + $0xe8] sm:$0xff] %v2602
    %2699 = vst [vmem:[#allocation2 + $0xf0] sm:$0xff] %v2603
    %2700 = vst [vmem:[#allocation2 + $0xf8] sm:$0xff] %v2604
    %2701 = vst [vmem:[#allocation2 + $0x100] sm:$0xff] %v2605
    %2702 = vst [vmem:[#allocation2 + $0x108] sm:$0xff] %v2606
    %2703 = vst [vmem:[#allocation2 + $0x110] sm:$0xff] %v2607
    %2704 = vst [vmem:[#allocation2 + $0x118] sm:$0xff] %v2608
    %2705 = vst [vmem:[#allocation2 + $0x120] sm:$0xff] %v2609
    %2706 = vst [vmem:[#allocation2 + $0x128] sm:$0xff] %v2610
    %2707 = vst [vmem:[#allocation2 + $0x130] sm:$0xff] %v2611
    %2708 = vst [vmem:[#allocation2 + $0x138] sm:$0xff] %v2612
    %2709 = vst [vmem:[#allocation2 + $0x140] sm:$0xff] %v2613
    %2710 = vst [vmem:[#allocation2 + $0x148] sm:$0xff] %v2614
    %2711 = vst [vmem:[#allocation2 + $0x150] sm:$0xff] %v2615
    %2712 = vst [vmem:[#allocation2 + $0x158] sm:$0xff] %v2616
    %2713 = vst [vmem:[#allocation2 + $0x160] sm:$0xff] %v2617
    %2714 = vst [vmem:[#allocation2 + $0x168] sm:$0xff] %v2618
    %2715 = vst [vmem:[#allocation2 + $0x170] sm:$0xff] %v2619
    %2716 = vst [vmem:[#allocation2 + $0x178] sm:$0xff] %v2620
    %2717 = vst [vmem:[#allocation2 + $0x180] sm:$0xff] %v2621
    %2718 = vst [vmem:[#allocation2 + $0x188] sm:$0xff] %v2622
    %2719 = vst [vmem:[#allocation2 + $0x190] sm:$0xff] %v2623
    %2720 = vst [vmem:[#allocation2 + $0x198] sm:$0xff] %v2624
    %2721 = vst [vmem:[#allocation2 + $0x1a0] sm:$0xff] %v2625
    %2722 = vst [vmem:[#allocation2 + $0x1a8] sm:$0xff] %v2626
    %2723 = vst [vmem:[#allocation2 + $0x1b0] sm:$0xff] %v2627
    %2724 = vst [vmem:[#allocation2 + $0x1b8] sm:$0xff] %v2628
    %2725 = vst [vmem:[#allocation2 + $0x1c0] sm:$0xff] %v2629
    %2726 = vst [vmem:[#allocation2 + $0x1c8] sm:$0xff] %v2630
    %2727 = vst [vmem:[#allocation2 + $0x1d0] sm:$0xff] %v2631
    %2728 = vst [vmem:[#allocation2 + $0x1d8] sm:$0xff] %v2632
    %2729 = vst [vmem:[#allocation2 + $0x1e0] sm:$0xff] %v2633
    %2730 = vst [vmem:[#allocation2 + $0x1e8] sm:$0xff] %v2634
    %2731 = vst [vmem:[#allocation2 + $0x1f0] sm:$0xff] %v2635
    %2732 = vst [vmem:[#allocation2 + $0x1f8] sm:$0xff] %v2636
    %2733 = vst [vmem:[#allocation2 + $0x200] sm:$0xff] %v2637
    %2734 = vst [vmem:[#allocation2 + $0x208] sm:$0xff] %v2638
    %2735 = vst [vmem:[#allocation2 + $0x210] sm:$0xff] %v2639
    %2736 = vst [vmem:[#allocation2 + $0x218] sm:$0xff] %v2640
    %2737 = vst [vmem:[#allocation2 + $0x220] sm:$0xff] %v2641
    %2738 = vst [vmem:[#allocation2 + $0x228] sm:$0xff] %v2642
    %2739 = vst [vmem:[#allocation2 + $0x230] sm:$0xff] %v2643
    %2740 = vst [vmem:[#allocation2 + $0x238] sm:$0xff] %v2644
    %2741 = vst [vmem:[#allocation2 + $0x240] sm:$0xff] %v2645
    %2742 = vst [vmem:[#allocation2 + $0x248] sm:$0xff] %v2646
    %2743 = vst [vmem:[#allocation2 + $0x250] sm:$0xff] %v2647
    %2744 = vst [vmem:[#allocation2 + $0x258] sm:$0xff] %v2648
    %2745 = vst [vmem:[#allocation2 + $0x260] sm:$0xff] %v2649
    %2746 = vst [vmem:[#allocation2 + $0x268] sm:$0xff] %v2650
    %2747 = vst [vmem:[#allocation2 + $0x270] sm:$0xff] %v2651
    %2748 = vst [vmem:[#allocation2 + $0x278] sm:$0xff] %v2652
    %2749 = vst [vmem:[#allocation2 + $0x280] sm:$0xff] %v2653
    %2750 = vst [vmem:[#allocation2 + $0x288] sm:$0xff] %v2654
    %2751 = vst [vmem:[#allocation2 + $0x290] sm:$0xff] %v2655
    %2752 = vst [vmem:[#allocation2 + $0x298] sm:$0xff] %v2656
    %2753 = vst [vmem:[#allocation2 + $0x2a0] sm:$0xff] %v2657
    %2754 = vst [vmem:[#allocation2 + $0x2a8] sm:$0xff] %v2658
    %2755 = vst [vmem:[#allocation2 + $0x2b0] sm:$0xff] %v2659
    %2756 = vst [vmem:[#allocation2 + $0x2b8] sm:$0xff] %v2660
    %2757 = vst [vmem:[#allocation2 + $0x2c0] sm:$0xff] %v2661
    %2758 = vst [vmem:[#allocation2 + $0x2c8] sm:$0xff] %v2662
    %2759 = vst [vmem:[#allocation2 + $0x2d0] sm:$0xff] %v2663
    %2760 = vst [vmem:[#allocation2 + $0x2d8] sm:$0xff] %v2664
    %2761 = vst [vmem:[#allocation2 + $0x2e0] sm:$0xff] %v2665
    %2762 = vst [vmem:[#allocation2 + $0x2e8] sm:$0xff] %v2666
    %2763 = vst [vmem:[#allocation2 + $0x2f0] sm:$0xff] %v2667
    %2764 = vst [vmem:[#allocation2 + $0x2f8] sm:$0xff] %v2668
    %v2765 = vld [vmem:[#allocation2] sm:$0xff]
    %v2766 = vld [vmem:[#allocation2 + $0x8] sm:$0xff]
    %v2767 = vld [vmem:[#allocation2 + $0x10] sm:$0xff]
    %v2768 = vld [vmem:[#allocation2 + $0x30] sm:$0xff]
    %v2769 = vld [vmem:[#allocation2 + $0x38] sm:$0xff]
    %v2770 = vld [vmem:[#allocation2 + $0x40] sm:$0xff]
    %v2771 = vld [vmem:[#allocation2 + $0x60] sm:$0xff]
    %v2772 = vld [vmem:[#allocation2 + $0x68] sm:$0xff]
    %v2773 = vld [vmem:[#allocation2 + $0x70] sm:$0xff]
    %v2774 = vld [vmem:[#allocation2 + $0x90] sm:$0xff]
    %v2775 = vld [vmem:[#allocation2 + $0x98] sm:$0xff]
    %v2776 = vld [vmem:[#allocation2 + $0xa0] sm:$0xff]
    %v2777 = vld [vmem:[#allocation2 + $0xc0] sm:$0xff]
    %v2778 = vld [vmem:[#allocation2 + $0xc8] sm:$0xff]
    %v2779 = vld [vmem:[#allocation2 + $0xd0] sm:$0xff]
    %v2780 = vld [vmem:[#allocation2 + $0xf0] sm:$0xff]
    %v2781 = vld [vmem:[#allocation2 + $0xf8] sm:$0xff]
    %v2782 = vld [vmem:[#allocation2 + $0x100] sm:$0xff]
    %v2783 = vld [vmem:[#allocation2 + $0x120] sm:$0xff]
    %v2784 = vld [vmem:[#allocation2 + $0x128] sm:$0xff]
    %v2785 = vld [vmem:[#allocation2 + $0x130] sm:$0xff]
    %v2786 = vld [vmem:[#allocation2 + $0x150] sm:$0xff]
    %v2787 = vld [vmem:[#allocation2 + $0x158] sm:$0xff]
    %v2788 = vld [vmem:[#allocation2 + $0x160] sm:$0xff]
    %v2789 = vld [vmem:[#allocation2 + $0x180] sm:$0xff]
    %v2790 = vld [vmem:[#allocation2 + $0x188] sm:$0xff]
    %v2791 = vld [vmem:[#allocation2 + $0x190] sm:$0xff]
    %v2792 = vld [vmem:[#allocation2 + $0x1b0] sm:$0xff]
    %v2793 = vld [vmem:[#allocation2 + $0x1b8] sm:$0xff]
    %v2794 = vld [vmem:[#allocation2 + $0x1c0] sm:$0xff]
    %v2795 = vld [vmem:[#allocation2 + $0x1e0] sm:$0xff]
    %v2796 = vld [vmem:[#allocation2 + $0x1e8] sm:$0xff]
    %v2797 = vld [vmem:[#allocation2 + $0x1f0] sm:$0xff]
    %v2798 = vld [vmem:[#allocation2 + $0x210] sm:$0xff]
    %v2799 = vld [vmem:[#allocation2 + $0x218] sm:$0xff]
    %v2800 = vld [vmem:[#allocation2 + $0x220] sm:$0xff]
    %v2801 = vld [vmem:[#allocation2 + $0x240] sm:$0xff]
    %v2802 = vld [vmem:[#allocation2 + $0x248] sm:$0xff]
    %v2803 = vld [vmem:[#allocation2 + $0x250] sm:$0xff]
    %v2804 = vld [vmem:[#allocation2 + $0x270] sm:$0xff]
    %v2805 = vld [vmem:[#allocation2 + $0x278] sm:$0xff]
    %v2806 = vld [vmem:[#allocation2 + $0x280] sm:$0xff]
    %v2807 = vld [vmem:[#allocation2 + $0x2a0] sm:$0xff]
    %v2808 = vld [vmem:[#allocation2 + $0x2a8] sm:$0xff]
    %v2809 = vld [vmem:[#allocation2 + $0x2b0] sm:$0xff]
    %v2810 = vld [vmem:[#allocation2 + $0x2d0] sm:$0xff]
    %v2811 = vld [vmem:[#allocation2 + $0x2d8] sm:$0xff]
    %v2812 = vld [vmem:[#allocation2 + $0x2e0] sm:$0xff]
    %2813 = vst [vmem:[#allocation3] sm:$0xff] %v2765
    %2814 = vst [vmem:[#allocation3 + $0x8] sm:$0xff] %v2766
    %2815 = vst [vmem:[#allocation3 + $0x10] sm:$0xff] %v2767
    %2816 = vst [vmem:[#allocation3 + $0x78] sm:$0xff] %v2768
    %2817 = vst [vmem:[#allocation3 + $0x80] sm:$0xff] %v2769
    %2818 = vst [vmem:[#allocation3 + $0x88] sm:$0xff] %v2770
    %2819 = vst [vmem:[#allocation3 + $0xf0] sm:$0xff] %v2771
    %2820 = vst [vmem:[#allocation3 + $0xf8] sm:$0xff] %v2772
    %2821 = vst [vmem:[#allocation3 + $0x100] sm:$0xff] %v2773
    %2822 = vst [vmem:[#allocation3 + $0x168] sm:$0xff] %v2774
    %2823 = vst [vmem:[#allocation3 + $0x170] sm:$0xff] %v2775
    %2824 = vst [vmem:[#allocation3 + $0x178] sm:$0xff] %v2776
    %2825 = vst [vmem:[#allocation3 + $0x1e0] sm:$0xff] %v2777
    %2826 = vst [vmem:[#allocation3 + $0x1e8] sm:$0xff] %v2778
    %2827 = vst [vmem:[#allocation3 + $0x1f0] sm:$0xff] %v2779
    %2828 = vst [vmem:[#allocation3 + $0x258] sm:$0xff] %v2780
    %2829 = vst [vmem:[#allocation3 + $0x260] sm:$0xff] %v2781
    %2830 = vst [vmem:[#allocation3 + $0x268] sm:$0xff] %v2782
    %2831 = vst [vmem:[#allocation3 + $0x2d0] sm:$0xff] %v2783
    %2832 = vst [vmem:[#allocation3 + $0x2d8] sm:$0xff] %v2784
    %2833 = vst [vmem:[#allocation3 + $0x2e0] sm:$0xff] %v2785
    %2834 = vst [vmem:[#allocation3 + $0x348] sm:$0xff] %v2786
    %2835 = vst [vmem:[#allocation3 + $0x350] sm:$0xff] %v2787
    %2836 = vst [vmem:[#allocation3 + $0x358] sm:$0xff] %v2788
    %2837 = vst [vmem:[#allocation3 + $0x3c0] sm:$0xff] %v2789
    %2838 = vst [vmem:[#allocation3 + $0x3c8] sm:$0xff] %v2790
    %2839 = vst [vmem:[#allocation3 + $0x3d0] sm:$0xff] %v2791
    %2840 = vst [vmem:[#allocation3 + $0x438] sm:$0xff] %v2792
    %2841 = vst [vmem:[#allocation3 + $0x440] sm:$0xff] %v2793
    %2842 = vst [vmem:[#allocation3 + $0x448] sm:$0xff] %v2794
    %2843 = vst [vmem:[#allocation3 + $0x4b0] sm:$0xff] %v2795
    %2844 = vst [vmem:[#allocation3 + $0x4b8] sm:$0xff] %v2796
    %2845 = vst [vmem:[#allocation3 + $0x4c0] sm:$0xff] %v2797
    %2846 = vst [vmem:[#allocation3 + $0x528] sm:$0xff] %v2798
    %2847 = vst [vmem:[#allocation3 + $0x530] sm:$0xff] %v2799
    %2848 = vst [vmem:[#allocation3 + $0x538] sm:$0xff] %v2800
    %2849 = vst [vmem:[#allocation3 + $0x5a0] sm:$0xff] %v2801
    %2850 = vst [vmem:[#allocation3 + $0x5a8] sm:$0xff] %v2802
    %2851 = vst [vmem:[#allocation3 + $0x5b0] sm:$0xff] %v2803
    %2852 = vst [vmem:[#allocation3 + $0x618] sm:$0xff] %v2804
    %2853 = vst [vmem:[#allocation3 + $0x620] sm:$0xff] %v2805
    %2854 = vst [vmem:[#allocation3 + $0x628] sm:$0xff] %v2806
    %2855 = vst [vmem:[#allocation3 + $0x690] sm:$0xff] %v2807
    %2856 = vst [vmem:[#allocation3 + $0x698] sm:$0xff] %v2808
    %2857 = vst [vmem:[#allocation3 + $0x6a0] sm:$0xff] %v2809
    %2858 = vst [vmem:[#allocation3 + $0x708] sm:$0xff] %v2810
    %2859 = vst [vmem:[#allocation3 + $0x710] sm:$0xff] %v2811
    %2860 = vst [vmem:[#allocation3 + $0x718] sm:$0xff] %v2812
    %v2861 = vld [vmem:[#allocation2] sm:$0xfe]
    %v2862 = vld [vmem:[#allocation2 + $0x8] sm:$0xfe]
    %v2863 = vld [vmem:[#allocation2 + $0x10] sm:$0xfe]
    %v2864 = vld [vmem:[#allocation2 + $0x18] sm:$0x1]
    %v2865 = vld [vmem:[#allocation2 + $0x20] sm:$0x1]
    %v2866 = vld [vmem:[#allocation2 + $0x28] sm:$0x1]
    %v2867 = vld [vmem:[#allocation2 + $0x30] sm:$0xfe]
    %v2868 = vld [vmem:[#allocation2 + $0x38] sm:$0xfe]
    %v2869 = vld [vmem:[#allocation2 + $0x40] sm:$0xfe]
    %v2870 = vld [vmem:[#allocation2 + $0x48] sm:$0x1]
    %v2871 = vld [vmem:[#allocation2 + $0x50] sm:$0x1]
    %v2872 = vld [vmem:[#allocation2 + $0x58] sm:$0x1]
    %v2873 = vld [vmem:[#allocation2 + $0x60] sm:$0xfe]
    %v2874 = vld [vmem:[#allocation2 + $0x68] sm:$0xfe]
    %v2875 = vld [vmem:[#allocation2 + $0x70] sm:$0xfe]
    %v2876 = vld [vmem:[#allocation2 + $0x78] sm:$0x1]
    %v2877 = vld [vmem:[#allocation2 + $0x80] sm:$0x1]
    %v2878 = vld [vmem:[#allocation2 + $0x88] sm:$0x1]
    %v2879 = vld [vmem:[#allocation2 + $0x90] sm:$0xfe]
    %v2880 = vld [vmem:[#allocation2 + $0x98] sm:$0xfe]
    %v2881 = vld [vmem:[#allocation2 + $0xa0] sm:$0xfe]
    %v2882 = vld [vmem:[#allocation2 + $0xa8] sm:$0x1]
    %v2883 = vld [vmem:[#allocation2 + $0xb0] sm:$0x1]
    %v2884 = vld [vmem:[#allocation2 + $0xb8] sm:$0x1]
    %v2885 = vld [vmem:[#allocation2 + $0xc0] sm:$0xfe]
    %v2886 = vld [vmem:[#allocation2 + $0xc8] sm:$0xfe]
    %v2887 = vld [vmem:[#allocation2 + $0xd0] sm:$0xfe]
    %v2888 = vld [vmem:[#allocation2 + $0xd8] sm:$0x1]
    %v2889 = vld [vmem:[#allocation2 + $0xe0] sm:$0x1]
    %v2890 = vld [vmem:[#allocation2 + $0xe8] sm:$0x1]
    %v2891 = vld [vmem:[#allocation2 + $0xf0] sm:$0xfe]
    %v2892 = vld [vmem:[#allocation2 + $0xf8] sm:$0xfe]
    %v2893 = vld [vmem:[#allocation2 + $0x100] sm:$0xfe]
    %v2894 = vld [vmem:[#allocation2 + $0x108] sm:$0x1]
    %v2895 = vld [vmem:[#allocation2 + $0x110] sm:$0x1]
    %v2896 = vld [vmem:[#allocation2 + $0x118] sm:$0x1]
    %v2897 = vld [vmem:[#allocation2 + $0x120] sm:$0xfe]
    %v2898 = vld [vmem:[#allocation2 + $0x128] sm:$0xfe]
    %v2899 = vld [vmem:[#allocation2 + $0x130] sm:$0xfe]
    %v2900 = vld [vmem:[#allocation2 + $0x138] sm:$0x1]
    %v2901 = vld [vmem:[#allocation2 + $0x140] sm:$0x1]
    %v2902 = vld [vmem:[#allocation2 + $0x148] sm:$0x1]
    %v2903 = vld [vmem:[#allocation2 + $0x150] sm:$0xfe]
    %v2904 = vld [vmem:[#allocation2 + $0x158] sm:$0xfe]
    %v2905 = vld [vmem:[#allocation2 + $0x160] sm:$0xfe]
    %v2906 = vld [vmem:[#allocation2 + $0x168] sm:$0x1]
    %v2907 = vld [vmem:[#allocation2 + $0x170] sm:$0x1]
    %v2908 = vld [vmem:[#allocation2 + $0x178] sm:$0x1]
    %v2909 = vld [vmem:[#allocation2 + $0x180] sm:$0xfe]
    %v2910 = vld [vmem:[#allocation2 + $0x188] sm:$0xfe]
    %v2911 = vld [vmem:[#allocation2 + $0x190] sm:$0xfe]
    %v2912 = vld [vmem:[#allocation2 + $0x198] sm:$0x1]
    %v2913 = vld [vmem:[#allocation2 + $0x1a0] sm:$0x1]
    %v2914 = vld [vmem:[#allocation2 + $0x1a8] sm:$0x1]
    %v2915 = vld [vmem:[#allocation2 + $0x1b0] sm:$0xfe]
    %v2916 = vld [vmem:[#allocation2 + $0x1b8] sm:$0xfe]
    %v2917 = vld [vmem:[#allocation2 + $0x1c0] sm:$0xfe]
    %v2918 = vld [vmem:[#allocation2 + $0x1c8] sm:$0x1]
    %v2919 = vld [vmem:[#allocation2 + $0x1d0] sm:$0x1]
    %v2920 = vld [vmem:[#allocation2 + $0x1d8] sm:$0x1]
    %v2921 = vld [vmem:[#allocation2 + $0x1e0] sm:$0xfe]
    %v2922 = vld [vmem:[#allocation2 + $0x1e8] sm:$0xfe]
    %v2923 = vld [vmem:[#allocation2 + $0x1f0] sm:$0xfe]
    %v2924 = vld [vmem:[#allocation2 + $0x1f8] sm:$0x1]
    %v2925 = vld [vmem:[#allocation2 + $0x200] sm:$0x1]
    %v2926 = vld [vmem:[#allocation2 + $0x208] sm:$0x1]
    %v2927 = vld [vmem:[#allocation2 + $0x210] sm:$0xfe]
    %v2928 = vld [vmem:[#allocation2 + $0x218] sm:$0xfe]
    %v2929 = vld [vmem:[#allocation2 + $0x220] sm:$0xfe]
    %v2930 = vld [vmem:[#allocation2 + $0x228] sm:$0x1]
    %v2931 = vld [vmem:[#allocation2 + $0x230] sm:$0x1]
    %v2932 = vld [vmem:[#allocation2 + $0x238] sm:$0x1]
    %v2933 = vld [vmem:[#allocation2 + $0x240] sm:$0xfe]
    %v2934 = vld [vmem:[#allocation2 + $0x248] sm:$0xfe]
    %v2935 = vld [vmem:[#allocation2 + $0x250] sm:$0xfe]
    %v2936 = vld [vmem:[#allocation2 + $0x258] sm:$0x1]
    %v2937 = vld [vmem:[#allocation2 + $0x260] sm:$0x1]
    %v2938 = vld [vmem:[#allocation2 + $0x268] sm:$0x1]
    %v2939 = vld [vmem:[#allocation2 + $0x270] sm:$0xfe]
    %v2940 = vld [vmem:[#allocation2 + $0x278] sm:$0xfe]
    %v2941 = vld [vmem:[#allocation2 + $0x280] sm:$0xfe]
    %v2942 = vld [vmem:[#allocation2 + $0x288] sm:$0x1]
    %v2943 = vld [vmem:[#allocation2 + $0x290] sm:$0x1]
    %v2944 = vld [vmem:[#allocation2 + $0x298] sm:$0x1]
    %v2945 = vld [vmem:[#allocation2 + $0x2a0] sm:$0xfe]
    %v2946 = vld [vmem:[#allocation2 + $0x2a8] sm:$0xfe]
    %v2947 = vld [vmem:[#allocation2 + $0x2b0] sm:$0xfe]
    %v2948 = vld [vmem:[#allocation2 + $0x2b8] sm:$0x1]
    %v2949 = vld [vmem:[#allocation2 + $0x2c0] sm:$0x1]
    %v2950 = vld [vmem:[#allocation2 + $0x2c8] sm:$0x1]
    %v2951 = vld [vmem:[#allocation2 + $0x2d0] sm:$0xfe]
    %v2952 = vld [vmem:[#allocation2 + $0x2d8] sm:$0xfe]
    %v2953 = vld [vmem:[#allocation2 + $0x2e0] sm:$0xfe]
    %v2954 = vld [vmem:[#allocation2 + $0x2e8] sm:$0x1]
    %v2955 = vld [vmem:[#allocation2 + $0x2f0] sm:$0x1]
    %v2956 = vld [vmem:[#allocation2 + $0x2f8] sm:$0x1]
    %vm3053 = vcmask 1046528
    %v3054 = vrot.slane %v2861, 1
    %v3055 = vrot.slane %v2864, 1
    %v3056 = vsel %vm3053, %v3054, %v3055
    %v3057 = vrot.slane %v2862, 1
    %v3058 = vrot.slane %v2865, 1
    %v3059 = vsel %vm3053, %v3057, %v3058
    %v3060 = vrot.slane %v2863, 1
    %v3061 = vrot.slane %v2866, 1
    %v3062 = vsel %vm3053, %v3060, %v3061
    %v3063 = vrot.slane %v2867, 1
    %v3064 = vrot.slane %v2870, 1
    %v3065 = vsel %vm3053, %v3063, %v3064
    %v3066 = vrot.slane %v2868, 1
    %v3067 = vrot.slane %v2871, 1
    %v3068 = vsel %vm3053, %v3066, %v3067
    %v3069 = vrot.slane %v2869, 1
    %v3070 = vrot.slane %v2872, 1
    %v3071 = vsel %vm3053, %v3069, %v3070
    %v3072 = vrot.slane %v2873, 1
    %v3073 = vrot.slane %v2876, 1
    %v3074 = vsel %vm3053, %v3072, %v3073
    %v3075 = vrot.slane %v2874, 1
    %v3076 = vrot.slane %v2877, 1
    %v3077 = vsel %vm3053, %v3075, %v3076
    %v3078 = vrot.slane %v2875, 1
    %v3079 = vrot.slane %v2878, 1
    %v3080 = vsel %vm3053, %v3078, %v3079
    %v3081 = vrot.slane %v2879, 1
    %v3082 = vrot.slane %v2882, 1
    %v3083 = vsel %vm3053, %v3081, %v3082
    %v3084 = vrot.slane %v2880, 1
    %v3085 = vrot.slane %v2883, 1
    %v3086 = vsel %vm3053, %v3084, %v3085
    %v3087 = vrot.slane %v2881, 1
    %v3088 = vrot.slane %v2884, 1
    %v3089 = vsel %vm3053, %v3087, %v3088
    %v3090 = vrot.slane %v2885, 1
    %v3091 = vrot.slane %v2888, 1
    %v3092 = vsel %vm3053, %v3090, %v3091
    %v3093 = vrot.slane %v2886, 1
    %v3094 = vrot.slane %v2889, 1
    %v3095 = vsel %vm3053, %v3093, %v3094
    %v3096 = vrot.slane %v2887, 1
    %v3097 = vrot.slane %v2890, 1
    %v3098 = vsel %vm3053, %v3096, %v3097
    %v3099 = vrot.slane %v2891, 1
    %v3100 = vrot.slane %v2894, 1
    %v3101 = vsel %vm3053, %v3099, %v3100
    %v3102 = vrot.slane %v2892, 1
    %v3103 = vrot.slane %v2895, 1
    %v3104 = vsel %vm3053, %v3102, %v3103
    %v3105 = vrot.slane %v2893, 1
    %v3106 = vrot.slane %v2896, 1
    %v3107 = vsel %vm3053, %v3105, %v3106
    %v3108 = vrot.slane %v2897, 1
    %v3109 = vrot.slane %v2900, 1
    %v3110 = vsel %vm3053, %v3108, %v3109
    %v3111 = vrot.slane %v2898, 1
    %v3112 = vrot.slane %v2901, 1
    %v3113 = vsel %vm3053, %v3111, %v3112
    %v3114 = vrot.slane %v2899, 1
    %v3115 = vrot.slane %v2902, 1
    %v3116 = vsel %vm3053, %v3114, %v3115
    %v3117 = vrot.slane %v2903, 1
    %v3118 = vrot.slane %v2906, 1
    %v3119 = vsel %vm3053, %v3117, %v3118
    %v3120 = vrot.slane %v2904, 1
    %v3121 = vrot.slane %v2907, 1
    %v3122 = vsel %vm3053, %v3120, %v3121
    %v3123 = vrot.slane %v2905, 1
    %v3124 = vrot.slane %v2908, 1
    %v3125 = vsel %vm3053, %v3123, %v3124
    %v3126 = vrot.slane %v2909, 1
    %v3127 = vrot.slane %v2912, 1
    %v3128 = vsel %vm3053, %v3126, %v3127
    %v3129 = vrot.slane %v2910, 1
    %v3130 = vrot.slane %v2913, 1
    %v3131 = vsel %vm3053, %v3129, %v3130
    %v3132 = vrot.slane %v2911, 1
    %v3133 = vrot.slane %v2914, 1
    %v3134 = vsel %vm3053, %v3132, %v3133
    %v3135 = vrot.slane %v2915, 1
    %v3136 = vrot.slane %v2918, 1
    %v3137 = vsel %vm3053, %v3135, %v3136
    %v3138 = vrot.slane %v2916, 1
    %v3139 = vrot.slane %v2919, 1
    %v3140 = vsel %vm3053, %v3138, %v3139
    %v3141 = vrot.slane %v2917, 1
    %v3142 = vrot.slane %v2920, 1
    %v3143 = vsel %vm3053, %v3141, %v3142
    %v3144 = vrot.slane %v2921, 1
    %v3145 = vrot.slane %v2924, 1
    %v3146 = vsel %vm3053, %v3144, %v3145
    %v3147 = vrot.slane %v2922, 1
    %v3148 = vrot.slane %v2925, 1
    %v3149 = vsel %vm3053, %v3147, %v3148
    %v3150 = vrot.slane %v2923, 1
    %v3151 = vrot.slane %v2926, 1
    %v3152 = vsel %vm3053, %v3150, %v3151
    %v3153 = vrot.slane %v2927, 1
    %v3154 = vrot.slane %v2930, 1
    %v3155 = vsel %vm3053, %v3153, %v3154
    %v3156 = vrot.slane %v2928, 1
    %v3157 = vrot.slane %v2931, 1
    %v3158 = vsel %vm3053, %v3156, %v3157
    %v3159 = vrot.slane %v2929, 1
    %v3160 = vrot.slane %v2932, 1
    %v3161 = vsel %vm3053, %v3159, %v3160
    %v3162 = vrot.slane %v2933, 1
    %v3163 = vrot.slane %v2936, 1
    %v3164 = vsel %vm3053, %v3162, %v3163
    %v3165 = vrot.slane %v2934, 1
    %v3166 = vrot.slane %v2937, 1
    %v3167 = vsel %vm3053, %v3165, %v3166
    %v3168 = vrot.slane %v2935, 1
    %v3169 = vrot.slane %v2938, 1
    %v3170 = vsel %vm3053, %v3168, %v3169
    %v3171 = vrot.slane %v2939, 1
    %v3172 = vrot.slane %v2942, 1
    %v3173 = vsel %vm3053, %v3171, %v3172
    %v3174 = vrot.slane %v2940, 1
    %v3175 = vrot.slane %v2943, 1
    %v3176 = vsel %vm3053, %v3174, %v3175
    %v3177 = vrot.slane %v2941, 1
    %v3178 = vrot.slane %v2944, 1
    %v3179 = vsel %vm3053, %v3177, %v3178
    %v3180 = vrot.slane %v2945, 1
    %v3181 = vrot.slane %v2948, 1
    %v3182 = vsel %vm3053, %v3180, %v3181
    %v3183 = vrot.slane %v2946, 1
    %v3184 = vrot.slane %v2949, 1
    %v3185 = vsel %vm3053, %v3183, %v3184
    %v3186 = vrot.slane %v2947, 1
    %v3187 = vrot.slane %v2950, 1
    %v3188 = vsel %vm3053, %v3186, %v3187
    %v3189 = vrot.slane %v2951, 1
    %v3190 = vrot.slane %v2954, 1
    %v3191 = vsel %vm3053, %v3189, %v3190
    %v3192 = vrot.slane %v2952, 1
    %v3193 = vrot.slane %v2955, 1
    %v3194 = vsel %vm3053, %v3192, %v3193
    %v3195 = vrot.slane %v2953, 1
    %v3196 = vrot.slane %v2956, 1
    %v3197 = vsel %vm3053, %v3195, %v3196
    %3246 = vst [vmem:[#allocation3 + $0x18] sm:$0xff] %v3056
    %3247 = vst [vmem:[#allocation3 + $0x20] sm:$0xff] %v3059
    %3248 = vst [vmem:[#allocation3 + $0x28] sm:$0xff] %v3062
    %3249 = vst [vmem:[#allocation3 + $0x90] sm:$0xff] %v3065
    %3250 = vst [vmem:[#allocation3 + $0x98] sm:$0xff] %v3068
    %3251 = vst [vmem:[#allocation3 + $0xa0] sm:$0xff] %v3071
    %3252 = vst [vmem:[#allocation3 + $0x108] sm:$0xff] %v3074
    %3253 = vst [vmem:[#allocation3 + $0x110] sm:$0xff] %v3077
    %3254 = vst [vmem:[#allocation3 + $0x118] sm:$0xff] %v3080
    %3255 = vst [vmem:[#allocation3 + $0x180] sm:$0xff] %v3083
    %3256 = vst [vmem:[#allocation3 + $0x188] sm:$0xff] %v3086
    %3257 = vst [vmem:[#allocation3 + $0x190] sm:$0xff] %v3089
    %3258 = vst [vmem:[#allocation3 + $0x1f8] sm:$0xff] %v3092
    %3259 = vst [vmem:[#allocation3 + $0x200] sm:$0xff] %v3095
    %3260 = vst [vmem:[#allocation3 + $0x208] sm:$0xff] %v3098
    %3261 = vst [vmem:[#allocation3 + $0x270] sm:$0xff] %v3101
    %3262 = vst [vmem:[#allocation3 + $0x278] sm:$0xff] %v3104
    %3263 = vst [vmem:[#allocation3 + $0x280] sm:$0xff] %v3107
    %3264 = vst [vmem:[#allocation3 + $0x2e8] sm:$0xff] %v3110
    %3265 = vst [vmem:[#allocation3 + $0x2f0] sm:$0xff] %v3113
    %3266 = vst [vmem:[#allocation3 + $0x2f8] sm:$0xff] %v3116
    %3267 = vst [vmem:[#allocation3 + $0x360] sm:$0xff] %v3119
    %3268 = vst [vmem:[#allocation3 + $0x368] sm:$0xff] %v3122
    %3269 = vst [vmem:[#allocation3 + $0x370] sm:$0xff] %v3125
    %3270 = vst [vmem:[#allocation3 + $0x3d8] sm:$0xff] %v3128
    %3271 = vst [vmem:[#allocation3 + $0x3e0] sm:$0xff] %v3131
    %3272 = vst [vmem:[#allocation3 + $0x3e8] sm:$0xff] %v3134
    %3273 = vst [vmem:[#allocation3 + $0x450] sm:$0xff] %v3137
    %3274 = vst [vmem:[#allocation3 + $0x458] sm:$0xff] %v3140
    %3275 = vst [vmem:[#allocation3 + $0x460] sm:$0xff] %v3143
    %3276 = vst [vmem:[#allocation3 + $0x4c8] sm:$0xff] %v3146
    %3277 = vst [vmem:[#allocation3 + $0x4d0] sm:$0xff] %v3149
    %3278 = vst [vmem:[#allocation3 + $0x4d8] sm:$0xff] %v3152
    %3279 = vst [vmem:[#allocation3 + $0x540] sm:$0xff] %v3155
    %3280 = vst [vmem:[#allocation3 + $0x548] sm:$0xff] %v3158
    %3281 = vst [vmem:[#allocation3 + $0x550] sm:$0xff] %v3161
    %3282 = vst [vmem:[#allocation3 + $0x5b8] sm:$0xff] %v3164
    %3283 = vst [vmem:[#allocation3 + $0x5c0] sm:$0xff] %v3167
    %3284 = vst [vmem:[#allocation3 + $0x5c8] sm:$0xff] %v3170
    %3285 = vst [vmem:[#allocation3 + $0x630] sm:$0xff] %v3173
    %3286 = vst [vmem:[#allocation3 + $0x638] sm:$0xff] %v3176
    %3287 = vst [vmem:[#allocation3 + $0x640] sm:$0xff] %v3179
    %3288 = vst [vmem:[#allocation3 + $0x6a8] sm:$0xff] %v3182
    %3289 = vst [vmem:[#allocation3 + $0x6b0] sm:$0xff] %v3185
    %3290 = vst [vmem:[#allocation3 + $0x6b8] sm:$0xff] %v3188
    %3291 = vst [vmem:[#allocation3 + $0x720] sm:$0xff] %v3191
    %3292 = vst [vmem:[#allocation3 + $0x728] sm:$0xff] %v3194
    %3293 = vst [vmem:[#allocation3 + $0x730] sm:$0xff] %v3197
    %v3294 = vld [vmem:[#allocation2] sm:$0xfc]
    %v3295 = vld [vmem:[#allocation2 + $0x8] sm:$0xfc]
    %v3296 = vld [vmem:[#allocation2 + $0x10] sm:$0xfc]
    %v3297 = vld [vmem:[#allocation2 + $0x18] sm:$0x3]
    %v3298 = vld [vmem:[#allocation2 + $0x20] sm:$0x3]
    %v3299 = vld [vmem:[#allocation2 + $0x28] sm:$0x3]
    %v3300 = vld [vmem:[#allocation2 + $0x30] sm:$0xfc]
    %v3301 = vld [vmem:[#allocation2 + $0x38] sm:$0xfc]
    %v3302 = vld [vmem:[#allocation2 + $0x40] sm:$0xfc]
    %v3303 = vld [vmem:[#allocation2 + $0x48] sm:$0x3]
    %v3304 = vld [vmem:[#allocation2 + $0x50] sm:$0x3]
    %v3305 = vld [vmem:[#allocation2 + $0x58] sm:$0x3]
    %v3306 = vld [vmem:[#allocation2 + $0x60] sm:$0xfc]
    %v3307 = vld [vmem:[#allocation2 + $0x68] sm:$0xfc]
    %v3308 = vld [vmem:[#allocation2 + $0x70] sm:$0xfc]
    %v3309 = vld [vmem:[#allocation2 + $0x78] sm:$0x3]
    %v3310 = vld [vmem:[#allocation2 + $0x80] sm:$0x3]
    %v3311 = vld [vmem:[#allocation2 + $0x88] sm:$0x3]
    %v3312 = vld [vmem:[#allocation2 + $0x90] sm:$0xfc]
    %v3313 = vld [vmem:[#allocation2 + $0x98] sm:$0xfc]
    %v3314 = vld [vmem:[#allocation2 + $0xa0] sm:$0xfc]
    %v3315 = vld [vmem:[#allocation2 + $0xa8] sm:$0x3]
    %v3316 = vld [vmem:[#allocation2 + $0xb0] sm:$0x3]
    %v3317 = vld [vmem:[#allocation2 + $0xb8] sm:$0x3]
    %v3318 = vld [vmem:[#allocation2 + $0xc0] sm:$0xfc]
    %v3319 = vld [vmem:[#allocation2 + $0xc8] sm:$0xfc]
    %v3320 = vld [vmem:[#allocation2 + $0xd0] sm:$0xfc]
    %v3321 = vld [vmem:[#allocation2 + $0xd8] sm:$0x3]
    %v3322 = vld [vmem:[#allocation2 + $0xe0] sm:$0x3]
    %v3323 = vld [vmem:[#allocation2 + $0xe8] sm:$0x3]
    %v3324 = vld [vmem:[#allocation2 + $0xf0] sm:$0xfc]
    %v3325 = vld [vmem:[#allocation2 + $0xf8] sm:$0xfc]
    %v3326 = vld [vmem:[#allocation2 + $0x100] sm:$0xfc]
    %v3327 = vld [vmem:[#allocation2 + $0x108] sm:$0x3]
    %v3328 = vld [vmem:[#allocation2 + $0x110] sm:$0x3]
    %v3329 = vld [vmem:[#allocation2 + $0x118] sm:$0x3]
    %v3330 = vld [vmem:[#allocation2 + $0x120] sm:$0xfc]
    %v3331 = vld [vmem:[#allocation2 + $0x128] sm:$0xfc]
    %v3332 = vld [vmem:[#allocation2 + $0x130] sm:$0xfc]
    %v3333 = vld [vmem:[#allocation2 + $0x138] sm:$0x3]
    %v3334 = vld [vmem:[#allocation2 + $0x140] sm:$0x3]
    %v3335 = vld [vmem:[#allocation2 + $0x148] sm:$0x3]
    %v3336 = vld [vmem:[#allocation2 + $0x150] sm:$0xfc]
    %v3337 = vld [vmem:[#allocation2 + $0x158] sm:$0xfc]
    %v3338 = vld [vmem:[#allocation2 + $0x160] sm:$0xfc]
    %v3339 = vld [vmem:[#allocation2 + $0x168] sm:$0x3]
    %v3340 = vld [vmem:[#allocation2 + $0x170] sm:$0x3]
    %v3341 = vld [vmem:[#allocation2 + $0x178] sm:$0x3]
    %v3342 = vld [vmem:[#allocation2 + $0x180] sm:$0xfc]
    %v3343 = vld [vmem:[#allocation2 + $0x188] sm:$0xfc]
    %v3344 = vld [vmem:[#allocation2 + $0x190] sm:$0xfc]
    %v3345 = vld [vmem:[#allocation2 + $0x198] sm:$0x3]
    %v3346 = vld [vmem:[#allocation2 + $0x1a0] sm:$0x3]
    %v3347 = vld [vmem:[#allocation2 + $0x1a8] sm:$0x3]
    %v3348 = vld [vmem:[#allocation2 + $0x1b0] sm:$0xfc]
    %v3349 = vld [vmem:[#allocation2 + $0x1b8] sm:$0xfc]
    %v3350 = vld [vmem:[#allocation2 + $0x1c0] sm:$0xfc]
    %v3351 = vld [vmem:[#allocation2 + $0x1c8] sm:$0x3]
    %v3352 = vld [vmem:[#allocation2 + $0x1d0] sm:$0x3]
    %v3353 = vld [vmem:[#allocation2 + $0x1d8] sm:$0x3]
    %v3354 = vld [vmem:[#allocation2 + $0x1e0] sm:$0xfc]
    %v3355 = vld [vmem:[#allocation2 + $0x1e8] sm:$0xfc]
    %v3356 = vld [vmem:[#allocation2 + $0x1f0] sm:$0xfc]
    %v3357 = vld [vmem:[#allocation2 + $0x1f8] sm:$0x3]
    %v3358 = vld [vmem:[#allocation2 + $0x200] sm:$0x3]
    %v3359 = vld [vmem:[#allocation2 + $0x208] sm:$0x3]
    %v3360 = vld [vmem:[#allocation2 + $0x210] sm:$0xfc]
    %v3361 = vld [vmem:[#allocation2 + $0x218] sm:$0xfc]
    %v3362 = vld [vmem:[#allocation2 + $0x220] sm:$0xfc]
    %v3363 = vld [vmem:[#allocation2 + $0x228] sm:$0x3]
    %v3364 = vld [vmem:[#allocation2 + $0x230] sm:$0x3]
    %v3365 = vld [vmem:[#allocation2 + $0x238] sm:$0x3]
    %v3366 = vld [vmem:[#allocation2 + $0x240] sm:$0xfc]
    %v3367 = vld [vmem:[#allocation2 + $0x248] sm:$0xfc]
    %v3368 = vld [vmem:[#allocation2 + $0x250] sm:$0xfc]
    %v3369 = vld [vmem:[#allocation2 + $0x258] sm:$0x3]
    %v3370 = vld [vmem:[#allocation2 + $0x260] sm:$0x3]
    %v3371 = vld [vmem:[#allocation2 + $0x268] sm:$0x3]
    %v3372 = vld [vmem:[#allocation2 + $0x270] sm:$0xfc]
    %v3373 = vld [vmem:[#allocation2 + $0x278] sm:$0xfc]
    %v3374 = vld [vmem:[#allocation2 + $0x280] sm:$0xfc]
    %v3375 = vld [vmem:[#allocation2 + $0x288] sm:$0x3]
    %v3376 = vld [vmem:[#allocation2 + $0x290] sm:$0x3]
    %v3377 = vld [vmem:[#allocation2 + $0x298] sm:$0x3]
    %v3378 = vld [vmem:[#allocation2 + $0x2a0] sm:$0xfc]
    %v3379 = vld [vmem:[#allocation2 + $0x2a8] sm:$0xfc]
    %v3380 = vld [vmem:[#allocation2 + $0x2b0] sm:$0xfc]
    %v3381 = vld [vmem:[#allocation2 + $0x2b8] sm:$0x3]
    %v3382 = vld [vmem:[#allocation2 + $0x2c0] sm:$0x3]
    %v3383 = vld [vmem:[#allocation2 + $0x2c8] sm:$0x3]
    %v3384 = vld [vmem:[#allocation2 + $0x2d0] sm:$0xfc]
    %v3385 = vld [vmem:[#allocation2 + $0x2d8] sm:$0xfc]
    %v3386 = vld [vmem:[#allocation2 + $0x2e0] sm:$0xfc]
    %v3387 = vld [vmem:[#allocation2 + $0x2e8] sm:$0x3]
    %v3388 = vld [vmem:[#allocation2 + $0x2f0] sm:$0x3]
    %v3389 = vld [vmem:[#allocation2 + $0x2f8] sm:$0x3]
    %v3486 = vrot.slane %v3294, 2
    %v3487 = vrot.slane %v3297, 2
    %v3488 = vsel %vm919, %v3486, %v3487
    %v3489 = vrot.slane %v3295, 2
    %v3490 = vrot.slane %v3298, 2
    %v3491 = vsel %vm919, %v3489, %v3490
    %v3492 = vrot.slane %v3296, 2
    %v3493 = vrot.slane %v3299, 2
    %v3494 = vsel %vm919, %v3492, %v3493
    %v3495 = vrot.slane %v3300, 2
    %v3496 = vrot.slane %v3303, 2
    %v3497 = vsel %vm919, %v3495, %v3496
    %v3498 = vrot.slane %v3301, 2
    %v3499 = vrot.slane %v3304, 2
    %v3500 = vsel %vm919, %v3498, %v3499
    %v3501 = vrot.slane %v3302, 2
    %v3502 = vrot.slane %v3305, 2
    %v3503 = vsel %vm919, %v3501, %v3502
    %v3504 = vrot.slane %v3306, 2
    %v3505 = vrot.slane %v3309, 2
    %v3506 = vsel %vm919, %v3504, %v3505
    %v3507 = vrot.slane %v3307, 2
    %v3508 = vrot.slane %v3310, 2
    %v3509 = vsel %vm919, %v3507, %v3508
    %v3510 = vrot.slane %v3308, 2
    %v3511 = vrot.slane %v3311, 2
    %v3512 = vsel %vm919, %v3510, %v3511
    %v3513 = vrot.slane %v3312, 2
    %v3514 = vrot.slane %v3315, 2
    %v3515 = vsel %vm919, %v3513, %v3514
    %v3516 = vrot.slane %v3313, 2
    %v3517 = vrot.slane %v3316, 2
    %v3518 = vsel %vm919, %v3516, %v3517
    %v3519 = vrot.slane %v3314, 2
    %v3520 = vrot.slane %v3317, 2
    %v3521 = vsel %vm919, %v3519, %v3520
    %v3522 = vrot.slane %v3318, 2
    %v3523 = vrot.slane %v3321, 2
    %v3524 = vsel %vm919, %v3522, %v3523
    %v3525 = vrot.slane %v3319, 2
    %v3526 = vrot.slane %v3322, 2
    %v3527 = vsel %vm919, %v3525, %v3526
    %v3528 = vrot.slane %v3320, 2
    %v3529 = vrot.slane %v3323, 2
    %v3530 = vsel %vm919, %v3528, %v3529
    %v3531 = vrot.slane %v3324, 2
    %v3532 = vrot.slane %v3327, 2
    %v3533 = vsel %vm919, %v3531, %v3532
    %v3534 = vrot.slane %v3325, 2
    %v3535 = vrot.slane %v3328, 2
    %v3536 = vsel %vm919, %v3534, %v3535
    %v3537 = vrot.slane %v3326, 2
    %v3538 = vrot.slane %v3329, 2
    %v3539 = vsel %vm919, %v3537, %v3538
    %v3540 = vrot.slane %v3330, 2
    %v3541 = vrot.slane %v3333, 2
    %v3542 = vsel %vm919, %v3540, %v3541
    %v3543 = vrot.slane %v3331, 2
    %v3544 = vrot.slane %v3334, 2
    %v3545 = vsel %vm919, %v3543, %v3544
    %v3546 = vrot.slane %v3332, 2
    %v3547 = vrot.slane %v3335, 2
    %v3548 = vsel %vm919, %v3546, %v3547
    %v3549 = vrot.slane %v3336, 2
    %v3550 = vrot.slane %v3339, 2
    %v3551 = vsel %vm919, %v3549, %v3550
    %v3552 = vrot.slane %v3337, 2
    %v3553 = vrot.slane %v3340, 2
    %v3554 = vsel %vm919, %v3552, %v3553
    %v3555 = vrot.slane %v3338, 2
    %v3556 = vrot.slane %v3341, 2
    %v3557 = vsel %vm919, %v3555, %v3556
    %v3558 = vrot.slane %v3342, 2
    %v3559 = vrot.slane %v3345, 2
    %v3560 = vsel %vm919, %v3558, %v3559
    %v3561 = vrot.slane %v3343, 2
    %v3562 = vrot.slane %v3346, 2
    %v3563 = vsel %vm919, %v3561, %v3562
    %v3564 = vrot.slane %v3344, 2
    %v3565 = vrot.slane %v3347, 2
    %v3566 = vsel %vm919, %v3564, %v3565
    %v3567 = vrot.slane %v3348, 2
    %v3568 = vrot.slane %v3351, 2
    %v3569 = vsel %vm919, %v3567, %v3568
    %v3570 = vrot.slane %v3349, 2
    %v3571 = vrot.slane %v3352, 2
    %v3572 = vsel %vm919, %v3570, %v3571
    %v3573 = vrot.slane %v3350, 2
    %v3574 = vrot.slane %v3353, 2
    %v3575 = vsel %vm919, %v3573, %v3574
    %v3576 = vrot.slane %v3354, 2
    %v3577 = vrot.slane %v3357, 2
    %v3578 = vsel %vm919, %v3576, %v3577
    %v3579 = vrot.slane %v3355, 2
    %v3580 = vrot.slane %v3358, 2
    %v3581 = vsel %vm919, %v3579, %v3580
    %v3582 = vrot.slane %v3356, 2
    %v3583 = vrot.slane %v3359, 2
    %v3584 = vsel %vm919, %v3582, %v3583
    %v3585 = vrot.slane %v3360, 2
    %v3586 = vrot.slane %v3363, 2
    %v3587 = vsel %vm919, %v3585, %v3586
    %v3588 = vrot.slane %v3361, 2
    %v3589 = vrot.slane %v3364, 2
    %v3590 = vsel %vm919, %v3588, %v3589
    %v3591 = vrot.slane %v3362, 2
    %v3592 = vrot.slane %v3365, 2
    %v3593 = vsel %vm919, %v3591, %v3592
    %v3594 = vrot.slane %v3366, 2
    %v3595 = vrot.slane %v3369, 2
    %v3596 = vsel %vm919, %v3594, %v3595
    %v3597 = vrot.slane %v3367, 2
    %v3598 = vrot.slane %v3370, 2
    %v3599 = vsel %vm919, %v3597, %v3598
    %v3600 = vrot.slane %v3368, 2
    %v3601 = vrot.slane %v3371, 2
    %v3602 = vsel %vm919, %v3600, %v3601
    %v3603 = vrot.slane %v3372, 2
    %v3604 = vrot.slane %v3375, 2
    %v3605 = vsel %vm919, %v3603, %v3604
    %v3606 = vrot.slane %v3373, 2
    %v3607 = vrot.slane %v3376, 2
    %v3608 = vsel %vm919, %v3606, %v3607
    %v3609 = vrot.slane %v3374, 2
    %v3610 = vrot.slane %v3377, 2
    %v3611 = vsel %vm919, %v3609, %v3610
    %v3612 = vrot.slane %v3378, 2
    %v3613 = vrot.slane %v3381, 2
    %v3614 = vsel %vm919, %v3612, %v3613
    %v3615 = vrot.slane %v3379, 2
    %v3616 = vrot.slane %v3382, 2
    %v3617 = vsel %vm919, %v3615, %v3616
    %v3618 = vrot.slane %v3380, 2
    %v3619 = vrot.slane %v3383, 2
    %v3620 = vsel %vm919, %v3618, %v3619
    %v3621 = vrot.slane %v3384, 2
    %v3622 = vrot.slane %v3387, 2
    %v3623 = vsel %vm919, %v3621, %v3622
    %v3624 = vrot.slane %v3385, 2
    %v3625 = vrot.slane %v3388, 2
    %v3626 = vsel %vm919, %v3624, %v3625
    %v3627 = vrot.slane %v3386, 2
    %v3628 = vrot.slane %v3389, 2
    %v3629 = vsel %vm919, %v3627, %v3628
    %3678 = vst [vmem:[#allocation3 + $0x30] sm:$0xff] %v3488
    %3679 = vst [vmem:[#allocation3 + $0x38] sm:$0xff] %v3491
    %3680 = vst [vmem:[#allocation3 + $0x40] sm:$0xff] %v3494
    %3681 = vst [vmem:[#allocation3 + $0xa8] sm:$0xff] %v3497
    %3682 = vst [vmem:[#allocation3 + $0xb0] sm:$0xff] %v3500
    %3683 = vst [vmem:[#allocation3 + $0xb8] sm:$0xff] %v3503
    %3684 = vst [vmem:[#allocation3 + $0x120] sm:$0xff] %v3506
    %3685 = vst [vmem:[#allocation3 + $0x128] sm:$0xff] %v3509
    %3686 = vst [vmem:[#allocation3 + $0x130] sm:$0xff] %v3512
    %3687 = vst [vmem:[#allocation3 + $0x198] sm:$0xff] %v3515
    %3688 = vst [vmem:[#allocation3 + $0x1a0] sm:$0xff] %v3518
    %3689 = vst [vmem:[#allocation3 + $0x1a8] sm:$0xff] %v3521
    %3690 = vst [vmem:[#allocation3 + $0x210] sm:$0xff] %v3524
    %3691 = vst [vmem:[#allocation3 + $0x218] sm:$0xff] %v3527
    %3692 = vst [vmem:[#allocation3 + $0x220] sm:$0xff] %v3530
    %3693 = vst [vmem:[#allocation3 + $0x288] sm:$0xff] %v3533
    %3694 = vst [vmem:[#allocation3 + $0x290] sm:$0xff] %v3536
    %3695 = vst [vmem:[#allocation3 + $0x298] sm:$0xff] %v3539
    %3696 = vst [vmem:[#allocation3 + $0x300] sm:$0xff] %v3542
    %3697 = vst [vmem:[#allocation3 + $0x308] sm:$0xff] %v3545
    %3698 = vst [vmem:[#allocation3 + $0x310] sm:$0xff] %v3548
    %3699 = vst [vmem:[#allocation3 + $0x378] sm:$0xff] %v3551
    %3700 = vst [vmem:[#allocation3 + $0x380] sm:$0xff] %v3554
    %3701 = vst [vmem:[#allocation3 + $0x388] sm:$0xff] %v3557
    %3702 = vst [vmem:[#allocation3 + $0x3f0] sm:$0xff] %v3560
    %3703 = vst [vmem:[#allocation3 + $0x3f8] sm:$0xff] %v3563
    %3704 = vst [vmem:[#allocation3 + $0x400] sm:$0xff] %v3566
    %3705 = vst [vmem:[#allocation3 + $0x468] sm:$0xff] %v3569
    %3706 = vst [vmem:[#allocation3 + $0x470] sm:$0xff] %v3572
    %3707 = vst [vmem:[#allocation3 + $0x478] sm:$0xff] %v3575
    %3708 = vst [vmem:[#allocation3 + $0x4e0] sm:$0xff] %v3578
    %3709 = vst [vmem:[#allocation3 + $0x4e8] sm:$0xff] %v3581
    %3710 = vst [vmem:[#allocation3 + $0x4f0] sm:$0xff] %v3584
    %3711 = vst [vmem:[#allocation3 + $0x558] sm:$0xff] %v3587
    %3712 = vst [vmem:[#allocation3 + $0x560] sm:$0xff] %v3590
    %3713 = vst [vmem:[#allocation3 + $0x568] sm:$0xff] %v3593
    %3714 = vst [vmem:[#allocation3 + $0x5d0] sm:$0xff] %v3596
    %3715 = vst [vmem:[#allocation3 + $0x5d8] sm:$0xff] %v3599
    %3716 = vst [vmem:[#allocation3 + $0x5e0] sm:$0xff] %v3602
    %3717 = vst [vmem:[#allocation3 + $0x648] sm:$0xff] %v3605
    %3718 = vst [vmem:[#allocation3 + $0x650] sm:$0xff] %v3608
    %3719 = vst [vmem:[#allocation3 + $0x658] sm:$0xff] %v3611
    %3720 = vst [vmem:[#allocation3 + $0x6c0] sm:$0xff] %v3614
    %3721 = vst [vmem:[#allocation3 + $0x6c8] sm:$0xff] %v3617
    %3722 = vst [vmem:[#allocation3 + $0x6d0] sm:$0xff] %v3620
    %3723 = vst [vmem:[#allocation3 + $0x738] sm:$0xff] %v3623
    %3724 = vst [vmem:[#allocation3 + $0x740] sm:$0xff] %v3626
    %3725 = vst [vmem:[#allocation3 + $0x748] sm:$0xff] %v3629
    %v3726 = vld [vmem:[#allocation2] sm:$0xf8]
    %v3727 = vld [vmem:[#allocation2 + $0x8] sm:$0xf8]
    %v3728 = vld [vmem:[#allocation2 + $0x10] sm:$0xf8]
    %v3729 = vld [vmem:[#allocation2 + $0x18] sm:$0x7]
    %v3730 = vld [vmem:[#allocation2 + $0x20] sm:$0x7]
    %v3731 = vld [vmem:[#allocation2 + $0x28] sm:$0x7]
    %v3732 = vld [vmem:[#allocation2 + $0x30] sm:$0xf8]
    %v3733 = vld [vmem:[#allocation2 + $0x38] sm:$0xf8]
    %v3734 = vld [vmem:[#allocation2 + $0x40] sm:$0xf8]
    %v3735 = vld [vmem:[#allocation2 + $0x48] sm:$0x7]
    %v3736 = vld [vmem:[#allocation2 + $0x50] sm:$0x7]
    %v3737 = vld [vmem:[#allocation2 + $0x58] sm:$0x7]
    %v3738 = vld [vmem:[#allocation2 + $0x60] sm:$0xf8]
    %v3739 = vld [vmem:[#allocation2 + $0x68] sm:$0xf8]
    %v3740 = vld [vmem:[#allocation2 + $0x70] sm:$0xf8]
    %v3741 = vld [vmem:[#allocation2 + $0x78] sm:$0x7]
    %v3742 = vld [vmem:[#allocation2 + $0x80] sm:$0x7]
    %v3743 = vld [vmem:[#allocation2 + $0x88] sm:$0x7]
    %v3744 = vld [vmem:[#allocation2 + $0x90] sm:$0xf8]
    %v3745 = vld [vmem:[#allocation2 + $0x98] sm:$0xf8]
    %v3746 = vld [vmem:[#allocation2 + $0xa0] sm:$0xf8]
    %v3747 = vld [vmem:[#allocation2 + $0xa8] sm:$0x7]
    %v3748 = vld [vmem:[#allocation2 + $0xb0] sm:$0x7]
    %v3749 = vld [vmem:[#allocation2 + $0xb8] sm:$0x7]
    %v3750 = vld [vmem:[#allocation2 + $0xc0] sm:$0xf8]
    %v3751 = vld [vmem:[#allocation2 + $0xc8] sm:$0xf8]
    %v3752 = vld [vmem:[#allocation2 + $0xd0] sm:$0xf8]
    %v3753 = vld [vmem:[#allocation2 + $0xd8] sm:$0x7]
    %v3754 = vld [vmem:[#allocation2 + $0xe0] sm:$0x7]
    %v3755 = vld [vmem:[#allocation2 + $0xe8] sm:$0x7]
    %v3756 = vld [vmem:[#allocation2 + $0xf0] sm:$0xf8]
    %v3757 = vld [vmem:[#allocation2 + $0xf8] sm:$0xf8]
    %v3758 = vld [vmem:[#allocation2 + $0x100] sm:$0xf8]
    %v3759 = vld [vmem:[#allocation2 + $0x108] sm:$0x7]
    %v3760 = vld [vmem:[#allocation2 + $0x110] sm:$0x7]
    %v3761 = vld [vmem:[#allocation2 + $0x118] sm:$0x7]
    %v3762 = vld [vmem:[#allocation2 + $0x120] sm:$0xf8]
    %v3763 = vld [vmem:[#allocation2 + $0x128] sm:$0xf8]
    %v3764 = vld [vmem:[#allocation2 + $0x130] sm:$0xf8]
    %v3765 = vld [vmem:[#allocation2 + $0x138] sm:$0x7]
    %v3766 = vld [vmem:[#allocation2 + $0x140] sm:$0x7]
    %v3767 = vld [vmem:[#allocation2 + $0x148] sm:$0x7]
    %v3768 = vld [vmem:[#allocation2 + $0x150] sm:$0xf8]
    %v3769 = vld [vmem:[#allocation2 + $0x158] sm:$0xf8]
    %v3770 = vld [vmem:[#allocation2 + $0x160] sm:$0xf8]
    %v3771 = vld [vmem:[#allocation2 + $0x168] sm:$0x7]
    %v3772 = vld [vmem:[#allocation2 + $0x170] sm:$0x7]
    %v3773 = vld [vmem:[#allocation2 + $0x178] sm:$0x7]
    %v3774 = vld [vmem:[#allocation2 + $0x180] sm:$0xf8]
    %v3775 = vld [vmem:[#allocation2 + $0x188] sm:$0xf8]
    %v3776 = vld [vmem:[#allocation2 + $0x190] sm:$0xf8]
    %v3777 = vld [vmem:[#allocation2 + $0x198] sm:$0x7]
    %v3778 = vld [vmem:[#allocation2 + $0x1a0] sm:$0x7]
    %v3779 = vld [vmem:[#allocation2 + $0x1a8] sm:$0x7]
    %v3780 = vld [vmem:[#allocation2 + $0x1b0] sm:$0xf8]
    %v3781 = vld [vmem:[#allocation2 + $0x1b8] sm:$0xf8]
    %v3782 = vld [vmem:[#allocation2 + $0x1c0] sm:$0xf8]
    %v3783 = vld [vmem:[#allocation2 + $0x1c8] sm:$0x7]
    %v3784 = vld [vmem:[#allocation2 + $0x1d0] sm:$0x7]
    %v3785 = vld [vmem:[#allocation2 + $0x1d8] sm:$0x7]
    %v3786 = vld [vmem:[#allocation2 + $0x1e0] sm:$0xf8]
    %v3787 = vld [vmem:[#allocation2 + $0x1e8] sm:$0xf8]
    %v3788 = vld [vmem:[#allocation2 + $0x1f0] sm:$0xf8]
    %v3789 = vld [vmem:[#allocation2 + $0x1f8] sm:$0x7]
    %v3790 = vld [vmem:[#allocation2 + $0x200] sm:$0x7]
    %v3791 = vld [vmem:[#allocation2 + $0x208] sm:$0x7]
    %v3792 = vld [vmem:[#allocation2 + $0x210] sm:$0xf8]
    %v3793 = vld [vmem:[#allocation2 + $0x218] sm:$0xf8]
    %v3794 = vld [vmem:[#allocation2 + $0x220] sm:$0xf8]
    %v3795 = vld [vmem:[#allocation2 + $0x228] sm:$0x7]
    %v3796 = vld [vmem:[#allocation2 + $0x230] sm:$0x7]
    %v3797 = vld [vmem:[#allocation2 + $0x238] sm:$0x7]
    %v3798 = vld [vmem:[#allocation2 + $0x240] sm:$0xf8]
    %v3799 = vld [vmem:[#allocation2 + $0x248] sm:$0xf8]
    %v3800 = vld [vmem:[#allocation2 + $0x250] sm:$0xf8]
    %v3801 = vld [vmem:[#allocation2 + $0x258] sm:$0x7]
    %v3802 = vld [vmem:[#allocation2 + $0x260] sm:$0x7]
    %v3803 = vld [vmem:[#allocation2 + $0x268] sm:$0x7]
    %v3804 = vld [vmem:[#allocation2 + $0x270] sm:$0xf8]
    %v3805 = vld [vmem:[#allocation2 + $0x278] sm:$0xf8]
    %v3806 = vld [vmem:[#allocation2 + $0x280] sm:$0xf8]
    %v3807 = vld [vmem:[#allocation2 + $0x288] sm:$0x7]
    %v3808 = vld [vmem:[#allocation2 + $0x290] sm:$0x7]
    %v3809 = vld [vmem:[#allocation2 + $0x298] sm:$0x7]
    %v3810 = vld [vmem:[#allocation2 + $0x2a0] sm:$0xf8]
    %v3811 = vld [vmem:[#allocation2 + $0x2a8] sm:$0xf8]
    %v3812 = vld [vmem:[#allocation2 + $0x2b0] sm:$0xf8]
    %v3813 = vld [vmem:[#allocation2 + $0x2b8] sm:$0x7]
    %v3814 = vld [vmem:[#allocation2 + $0x2c0] sm:$0x7]
    %v3815 = vld [vmem:[#allocation2 + $0x2c8] sm:$0x7]
    %v3816 = vld [vmem:[#allocation2 + $0x2d0] sm:$0xf8]
    %v3817 = vld [vmem:[#allocation2 + $0x2d8] sm:$0xf8]
    %v3818 = vld [vmem:[#allocation2 + $0x2e0] sm:$0xf8]
    %v3819 = vld [vmem:[#allocation2 + $0x2e8] sm:$0x7]
    %v3820 = vld [vmem:[#allocation2 + $0x2f0] sm:$0x7]
    %v3821 = vld [vmem:[#allocation2 + $0x2f8] sm:$0x7]
    %vm3918 = vcmask 1044480
    %v3919 = vrot.slane %v3726, 3
    %v3920 = vrot.slane %v3729, 3
    %v3921 = vsel %vm3918, %v3919, %v3920
    %v3922 = vrot.slane %v3727, 3
    %v3923 = vrot.slane %v3730, 3
    %v3924 = vsel %vm3918, %v3922, %v3923
    %v3925 = vrot.slane %v3728, 3
    %v3926 = vrot.slane %v3731, 3
    %v3927 = vsel %vm3918, %v3925, %v3926
    %v3928 = vrot.slane %v3732, 3
    %v3929 = vrot.slane %v3735, 3
    %v3930 = vsel %vm3918, %v3928, %v3929
    %v3931 = vrot.slane %v3733, 3
    %v3932 = vrot.slane %v3736, 3
    %v3933 = vsel %vm3918, %v3931, %v3932
    %v3934 = vrot.slane %v3734, 3
    %v3935 = vrot.slane %v3737, 3
    %v3936 = vsel %vm3918, %v3934, %v3935
    %v3937 = vrot.slane %v3738, 3
    %v3938 = vrot.slane %v3741, 3
    %v3939 = vsel %vm3918, %v3937, %v3938
    %v3940 = vrot.slane %v3739, 3
    %v3941 = vrot.slane %v3742, 3
    %v3942 = vsel %vm3918, %v3940, %v3941
    %v3943 = vrot.slane %v3740, 3
    %v3944 = vrot.slane %v3743, 3
    %v3945 = vsel %vm3918, %v3943, %v3944
    %v3946 = vrot.slane %v3744, 3
    %v3947 = vrot.slane %v3747, 3
    %v3948 = vsel %vm3918, %v3946, %v3947
    %v3949 = vrot.slane %v3745, 3
    %v3950 = vrot.slane %v3748, 3
    %v3951 = vsel %vm3918, %v3949, %v3950
    %v3952 = vrot.slane %v3746, 3
    %v3953 = vrot.slane %v3749, 3
    %v3954 = vsel %vm3918, %v3952, %v3953
    %v3955 = vrot.slane %v3750, 3
    %v3956 = vrot.slane %v3753, 3
    %v3957 = vsel %vm3918, %v3955, %v3956
    %v3958 = vrot.slane %v3751, 3
    %v3959 = vrot.slane %v3754, 3
    %v3960 = vsel %vm3918, %v3958, %v3959
    %v3961 = vrot.slane %v3752, 3
    %v3962 = vrot.slane %v3755, 3
    %v3963 = vsel %vm3918, %v3961, %v3962
    %v3964 = vrot.slane %v3756, 3
    %v3965 = vrot.slane %v3759, 3
    %v3966 = vsel %vm3918, %v3964, %v3965
    %v3967 = vrot.slane %v3757, 3
    %v3968 = vrot.slane %v3760, 3
    %v3969 = vsel %vm3918, %v3967, %v3968
    %v3970 = vrot.slane %v3758, 3
    %v3971 = vrot.slane %v3761, 3
    %v3972 = vsel %vm3918, %v3970, %v3971
    %v3973 = vrot.slane %v3762, 3
    %v3974 = vrot.slane %v3765, 3
    %v3975 = vsel %vm3918, %v3973, %v3974
    %v3976 = vrot.slane %v3763, 3
    %v3977 = vrot.slane %v3766, 3
    %v3978 = vsel %vm3918, %v3976, %v3977
    %v3979 = vrot.slane %v3764, 3
    %v3980 = vrot.slane %v3767, 3
    %v3981 = vsel %vm3918, %v3979, %v3980
    %v3982 = vrot.slane %v3768, 3
    %v3983 = vrot.slane %v3771, 3
    %v3984 = vsel %vm3918, %v3982, %v3983
    %v3985 = vrot.slane %v3769, 3
    %v3986 = vrot.slane %v3772, 3
    %v3987 = vsel %vm3918, %v3985, %v3986
    %v3988 = vrot.slane %v3770, 3
    %v3989 = vrot.slane %v3773, 3
    %v3990 = vsel %vm3918, %v3988, %v3989
    %v3991 = vrot.slane %v3774, 3
    %v3992 = vrot.slane %v3777, 3
    %v3993 = vsel %vm3918, %v3991, %v3992
    %v3994 = vrot.slane %v3775, 3
    %v3995 = vrot.slane %v3778, 3
    %v3996 = vsel %vm3918, %v3994, %v3995
    %v3997 = vrot.slane %v3776, 3
    %v3998 = vrot.slane %v3779, 3
    %v3999 = vsel %vm3918, %v3997, %v3998
    %v4000 = vrot.slane %v3780, 3
    %v4001 = vrot.slane %v3783, 3
    %v4002 = vsel %vm3918, %v4000, %v4001
    %v4003 = vrot.slane %v3781, 3
    %v4004 = vrot.slane %v3784, 3
    %v4005 = vsel %vm3918, %v4003, %v4004
    %v4006 = vrot.slane %v3782, 3
    %v4007 = vrot.slane %v3785, 3
    %v4008 = vsel %vm3918, %v4006, %v4007
    %v4009 = vrot.slane %v3786, 3
    %v4010 = vrot.slane %v3789, 3
    %v4011 = vsel %vm3918, %v4009, %v4010
    %v4012 = vrot.slane %v3787, 3
    %v4013 = vrot.slane %v3790, 3
    %v4014 = vsel %vm3918, %v4012, %v4013
    %v4015 = vrot.slane %v3788, 3
    %v4016 = vrot.slane %v3791, 3
    %v4017 = vsel %vm3918, %v4015, %v4016
    %v4018 = vrot.slane %v3792, 3
    %v4019 = vrot.slane %v3795, 3
    %v4020 = vsel %vm3918, %v4018, %v4019
    %v4021 = vrot.slane %v3793, 3
    %v4022 = vrot.slane %v3796, 3
    %v4023 = vsel %vm3918, %v4021, %v4022
    %v4024 = vrot.slane %v3794, 3
    %v4025 = vrot.slane %v3797, 3
    %v4026 = vsel %vm3918, %v4024, %v4025
    %v4027 = vrot.slane %v3798, 3
    %v4028 = vrot.slane %v3801, 3
    %v4029 = vsel %vm3918, %v4027, %v4028
    %v4030 = vrot.slane %v3799, 3
    %v4031 = vrot.slane %v3802, 3
    %v4032 = vsel %vm3918, %v4030, %v4031
    %v4033 = vrot.slane %v3800, 3
    %v4034 = vrot.slane %v3803, 3
    %v4035 = vsel %vm3918, %v4033, %v4034
    %v4036 = vrot.slane %v3804, 3
    %v4037 = vrot.slane %v3807, 3
    %v4038 = vsel %vm3918, %v4036, %v4037
    %v4039 = vrot.slane %v3805, 3
    %v4040 = vrot.slane %v3808, 3
    %v4041 = vsel %vm3918, %v4039, %v4040
    %v4042 = vrot.slane %v3806, 3
    %v4043 = vrot.slane %v3809, 3
    %v4044 = vsel %vm3918, %v4042, %v4043
    %v4045 = vrot.slane %v3810, 3
    %v4046 = vrot.slane %v3813, 3
    %v4047 = vsel %vm3918, %v4045, %v4046
    %v4048 = vrot.slane %v3811, 3
    %v4049 = vrot.slane %v3814, 3
    %v4050 = vsel %vm3918, %v4048, %v4049
    %v4051 = vrot.slane %v3812, 3
    %v4052 = vrot.slane %v3815, 3
    %v4053 = vsel %vm3918, %v4051, %v4052
    %v4054 = vrot.slane %v3816, 3
    %v4055 = vrot.slane %v3819, 3
    %v4056 = vsel %vm3918, %v4054, %v4055
    %v4057 = vrot.slane %v3817, 3
    %v4058 = vrot.slane %v3820, 3
    %v4059 = vsel %vm3918, %v4057, %v4058
    %v4060 = vrot.slane %v3818, 3
    %v4061 = vrot.slane %v3821, 3
    %v4062 = vsel %vm3918, %v4060, %v4061
    %4111 = vst [vmem:[#allocation3 + $0x48] sm:$0xff] %v3921
    %4112 = vst [vmem:[#allocation3 + $0x50] sm:$0xff] %v3924
    %4113 = vst [vmem:[#allocation3 + $0x58] sm:$0xff] %v3927
    %4114 = vst [vmem:[#allocation3 + $0xc0] sm:$0xff] %v3930
    %4115 = vst [vmem:[#allocation3 + $0xc8] sm:$0xff] %v3933
    %4116 = vst [vmem:[#allocation3 + $0xd0] sm:$0xff] %v3936
    %4117 = vst [vmem:[#allocation3 + $0x138] sm:$0xff] %v3939
    %4118 = vst [vmem:[#allocation3 + $0x140] sm:$0xff] %v3942
    %4119 = vst [vmem:[#allocation3 + $0x148] sm:$0xff] %v3945
    %4120 = vst [vmem:[#allocation3 + $0x1b0] sm:$0xff] %v3948
    %4121 = vst [vmem:[#allocation3 + $0x1b8] sm:$0xff] %v3951
    %4122 = vst [vmem:[#allocation3 + $0x1c0] sm:$0xff] %v3954
    %4123 = vst [vmem:[#allocation3 + $0x228] sm:$0xff] %v3957
    %4124 = vst [vmem:[#allocation3 + $0x230] sm:$0xff] %v3960
    %4125 = vst [vmem:[#allocation3 + $0x238] sm:$0xff] %v3963
    %4126 = vst [vmem:[#allocation3 + $0x2a0] sm:$0xff] %v3966
    %4127 = vst [vmem:[#allocation3 + $0x2a8] sm:$0xff] %v3969
    %4128 = vst [vmem:[#allocation3 + $0x2b0] sm:$0xff] %v3972
    %4129 = vst [vmem:[#allocation3 + $0x318] sm:$0xff] %v3975
    %4130 = vst [vmem:[#allocation3 + $0x320] sm:$0xff] %v3978
    %4131 = vst [vmem:[#allocation3 + $0x328] sm:$0xff] %v3981
    %4132 = vst [vmem:[#allocation3 + $0x390] sm:$0xff] %v3984
    %4133 = vst [vmem:[#allocation3 + $0x398] sm:$0xff] %v3987
    %4134 = vst [vmem:[#allocation3 + $0x3a0] sm:$0xff] %v3990
    %4135 = vst [vmem:[#allocation3 + $0x408] sm:$0xff] %v3993
    %4136 = vst [vmem:[#allocation3 + $0x410] sm:$0xff] %v3996
    %4137 = vst [vmem:[#allocation3 + $0x418] sm:$0xff] %v3999
    %4138 = vst [vmem:[#allocation3 + $0x480] sm:$0xff] %v4002
    %4139 = vst [vmem:[#allocation3 + $0x488] sm:$0xff] %v4005
    %4140 = vst [vmem:[#allocation3 + $0x490] sm:$0xff] %v4008
    %4141 = vst [vmem:[#allocation3 + $0x4f8] sm:$0xff] %v4011
    %4142 = vst [vmem:[#allocation3 + $0x500] sm:$0xff] %v4014
    %4143 = vst [vmem:[#allocation3 + $0x508] sm:$0xff] %v4017
    %4144 = vst [vmem:[#allocation3 + $0x570] sm:$0xff] %v4020
    %4145 = vst [vmem:[#allocation3 + $0x578] sm:$0xff] %v4023
    %4146 = vst [vmem:[#allocation3 + $0x580] sm:$0xff] %v4026
    %4147 = vst [vmem:[#allocation3 + $0x5e8] sm:$0xff] %v4029
    %4148 = vst [vmem:[#allocation3 + $0x5f0] sm:$0xff] %v4032
    %4149 = vst [vmem:[#allocation3 + $0x5f8] sm:$0xff] %v4035
    %4150 = vst [vmem:[#allocation3 + $0x660] sm:$0xff] %v4038
    %4151 = vst [vmem:[#allocation3 + $0x668] sm:$0xff] %v4041
    %4152 = vst [vmem:[#allocation3 + $0x670] sm:$0xff] %v4044
    %4153 = vst [vmem:[#allocation3 + $0x6d8] sm:$0xff] %v4047
    %4154 = vst [vmem:[#allocation3 + $0x6e0] sm:$0xff] %v4050
    %4155 = vst [vmem:[#allocation3 + $0x6e8] sm:$0xff] %v4053
    %4156 = vst [vmem:[#allocation3 + $0x750] sm:$0xff] %v4056
    %4157 = vst [vmem:[#allocation3 + $0x758] sm:$0xff] %v4059
    %4158 = vst [vmem:[#allocation3 + $0x760] sm:$0xff] %v4062
    %v4159 = vld [vmem:[#allocation2] sm:$0xf0]
    %v4160 = vld [vmem:[#allocation2 + $0x8] sm:$0xf0]
    %v4161 = vld [vmem:[#allocation2 + $0x10] sm:$0xf0]
    %v4162 = vld [vmem:[#allocation2 + $0x18] sm:$0xf]
    %v4163 = vld [vmem:[#allocation2 + $0x20] sm:$0xf]
    %v4164 = vld [vmem:[#allocation2 + $0x28] sm:$0xf]
    %v4165 = vld [vmem:[#allocation2 + $0x30] sm:$0xf0]
    %v4166 = vld [vmem:[#allocation2 + $0x38] sm:$0xf0]
    %v4167 = vld [vmem:[#allocation2 + $0x40] sm:$0xf0]
    %v4168 = vld [vmem:[#allocation2 + $0x48] sm:$0xf]
    %v4169 = vld [vmem:[#allocation2 + $0x50] sm:$0xf]
    %v4170 = vld [vmem:[#allocation2 + $0x58] sm:$0xf]
    %v4171 = vld [vmem:[#allocation2 + $0x60] sm:$0xf0]
    %v4172 = vld [vmem:[#allocation2 + $0x68] sm:$0xf0]
    %v4173 = vld [vmem:[#allocation2 + $0x70] sm:$0xf0]
    %v4174 = vld [vmem:[#allocation2 + $0x78] sm:$0xf]
    %v4175 = vld [vmem:[#allocation2 + $0x80] sm:$0xf]
    %v4176 = vld [vmem:[#allocation2 + $0x88] sm:$0xf]
    %v4177 = vld [vmem:[#allocation2 + $0x90] sm:$0xf0]
    %v4178 = vld [vmem:[#allocation2 + $0x98] sm:$0xf0]
    %v4179 = vld [vmem:[#allocation2 + $0xa0] sm:$0xf0]
    %v4180 = vld [vmem:[#allocation2 + $0xa8] sm:$0xf]
    %v4181 = vld [vmem:[#allocation2 + $0xb0] sm:$0xf]
    %v4182 = vld [vmem:[#allocation2 + $0xb8] sm:$0xf]
    %v4183 = vld [vmem:[#allocation2 + $0xc0] sm:$0xf0]
    %v4184 = vld [vmem:[#allocation2 + $0xc8] sm:$0xf0]
    %v4185 = vld [vmem:[#allocation2 + $0xd0] sm:$0xf0]
    %v4186 = vld [vmem:[#allocation2 + $0xd8] sm:$0xf]
    %v4187 = vld [vmem:[#allocation2 + $0xe0] sm:$0xf]
    %v4188 = vld [vmem:[#allocation2 + $0xe8] sm:$0xf]
    %v4189 = vld [vmem:[#allocation2 + $0xf0] sm:$0xf0]
    %v4190 = vld [vmem:[#allocation2 + $0xf8] sm:$0xf0]
    %v4191 = vld [vmem:[#allocation2 + $0x100] sm:$0xf0]
    %v4192 = vld [vmem:[#allocation2 + $0x108] sm:$0xf]
    %v4193 = vld [vmem:[#allocation2 + $0x110] sm:$0xf]
    %v4194 = vld [vmem:[#allocation2 + $0x118] sm:$0xf]
    %v4195 = vld [vmem:[#allocation2 + $0x120] sm:$0xf0]
    %v4196 = vld [vmem:[#allocation2 + $0x128] sm:$0xf0]
    %v4197 = vld [vmem:[#allocation2 + $0x130] sm:$0xf0]
    %v4198 = vld [vmem:[#allocation2 + $0x138] sm:$0xf]
    %v4199 = vld [vmem:[#allocation2 + $0x140] sm:$0xf]
    %v4200 = vld [vmem:[#allocation2 + $0x148] sm:$0xf]
    %v4201 = vld [vmem:[#allocation2 + $0x150] sm:$0xf0]
    %v4202 = vld [vmem:[#allocation2 + $0x158] sm:$0xf0]
    %v4203 = vld [vmem:[#allocation2 + $0x160] sm:$0xf0]
    %v4204 = vld [vmem:[#allocation2 + $0x168] sm:$0xf]
    %v4205 = vld [vmem:[#allocation2 + $0x170] sm:$0xf]
    %v4206 = vld [vmem:[#allocation2 + $0x178] sm:$0xf]
    %v4207 = vld [vmem:[#allocation2 + $0x180] sm:$0xf0]
    %v4208 = vld [vmem:[#allocation2 + $0x188] sm:$0xf0]
    %v4209 = vld [vmem:[#allocation2 + $0x190] sm:$0xf0]
    %v4210 = vld [vmem:[#allocation2 + $0x198] sm:$0xf]
    %v4211 = vld [vmem:[#allocation2 + $0x1a0] sm:$0xf]
    %v4212 = vld [vmem:[#allocation2 + $0x1a8] sm:$0xf]
    %v4213 = vld [vmem:[#allocation2 + $0x1b0] sm:$0xf0]
    %v4214 = vld [vmem:[#allocation2 + $0x1b8] sm:$0xf0]
    %v4215 = vld [vmem:[#allocation2 + $0x1c0] sm:$0xf0]
    %v4216 = vld [vmem:[#allocation2 + $0x1c8] sm:$0xf]
    %v4217 = vld [vmem:[#allocation2 + $0x1d0] sm:$0xf]
    %v4218 = vld [vmem:[#allocation2 + $0x1d8] sm:$0xf]
    %v4219 = vld [vmem:[#allocation2 + $0x1e0] sm:$0xf0]
    %v4220 = vld [vmem:[#allocation2 + $0x1e8] sm:$0xf0]
    %v4221 = vld [vmem:[#allocation2 + $0x1f0] sm:$0xf0]
    %v4222 = vld [vmem:[#allocation2 + $0x1f8] sm:$0xf]
    %v4223 = vld [vmem:[#allocation2 + $0x200] sm:$0xf]
    %v4224 = vld [vmem:[#allocation2 + $0x208] sm:$0xf]
    %v4225 = vld [vmem:[#allocation2 + $0x210] sm:$0xf0]
    %v4226 = vld [vmem:[#allocation2 + $0x218] sm:$0xf0]
    %v4227 = vld [vmem:[#allocation2 + $0x220] sm:$0xf0]
    %v4228 = vld [vmem:[#allocation2 + $0x228] sm:$0xf]
    %v4229 = vld [vmem:[#allocation2 + $0x230] sm:$0xf]
    %v4230 = vld [vmem:[#allocation2 + $0x238] sm:$0xf]
    %v4231 = vld [vmem:[#allocation2 + $0x240] sm:$0xf0]
    %v4232 = vld [vmem:[#allocation2 + $0x248] sm:$0xf0]
    %v4233 = vld [vmem:[#allocation2 + $0x250] sm:$0xf0]
    %v4234 = vld [vmem:[#allocation2 + $0x258] sm:$0xf]
    %v4235 = vld [vmem:[#allocation2 + $0x260] sm:$0xf]
    %v4236 = vld [vmem:[#allocation2 + $0x268] sm:$0xf]
    %v4237 = vld [vmem:[#allocation2 + $0x270] sm:$0xf0]
    %v4238 = vld [vmem:[#allocation2 + $0x278] sm:$0xf0]
    %v4239 = vld [vmem:[#allocation2 + $0x280] sm:$0xf0]
    %v4240 = vld [vmem:[#allocation2 + $0x288] sm:$0xf]
    %v4241 = vld [vmem:[#allocation2 + $0x290] sm:$0xf]
    %v4242 = vld [vmem:[#allocation2 + $0x298] sm:$0xf]
    %v4243 = vld [vmem:[#allocation2 + $0x2a0] sm:$0xf0]
    %v4244 = vld [vmem:[#allocation2 + $0x2a8] sm:$0xf0]
    %v4245 = vld [vmem:[#allocation2 + $0x2b0] sm:$0xf0]
    %v4246 = vld [vmem:[#allocation2 + $0x2b8] sm:$0xf]
    %v4247 = vld [vmem:[#allocation2 + $0x2c0] sm:$0xf]
    %v4248 = vld [vmem:[#allocation2 + $0x2c8] sm:$0xf]
    %v4249 = vld [vmem:[#allocation2 + $0x2d0] sm:$0xf0]
    %v4250 = vld [vmem:[#allocation2 + $0x2d8] sm:$0xf0]
    %v4251 = vld [vmem:[#allocation2 + $0x2e0] sm:$0xf0]
    %v4252 = vld [vmem:[#allocation2 + $0x2e8] sm:$0xf]
    %v4253 = vld [vmem:[#allocation2 + $0x2f0] sm:$0xf]
    %v4254 = vld [vmem:[#allocation2 + $0x2f8] sm:$0xf]
    %vm4351 = vcmask 1043456
    %v4352 = vrot.slane %v4159, 4
    %v4353 = vrot.slane %v4162, 4
    %v4354 = vsel %vm4351, %v4352, %v4353
    %v4355 = vrot.slane %v4160, 4
    %v4356 = vrot.slane %v4163, 4
    %v4357 = vsel %vm4351, %v4355, %v4356
    %v4358 = vrot.slane %v4161, 4
    %v4359 = vrot.slane %v4164, 4
    %v4360 = vsel %vm4351, %v4358, %v4359
    %v4361 = vrot.slane %v4165, 4
    %v4362 = vrot.slane %v4168, 4
    %v4363 = vsel %vm4351, %v4361, %v4362
    %v4364 = vrot.slane %v4166, 4
    %v4365 = vrot.slane %v4169, 4
    %v4366 = vsel %vm4351, %v4364, %v4365
    %v4367 = vrot.slane %v4167, 4
    %v4368 = vrot.slane %v4170, 4
    %v4369 = vsel %vm4351, %v4367, %v4368
    %v4370 = vrot.slane %v4171, 4
    %v4371 = vrot.slane %v4174, 4
    %v4372 = vsel %vm4351, %v4370, %v4371
    %v4373 = vrot.slane %v4172, 4
    %v4374 = vrot.slane %v4175, 4
    %v4375 = vsel %vm4351, %v4373, %v4374
    %v4376 = vrot.slane %v4173, 4
    %v4377 = vrot.slane %v4176, 4
    %v4378 = vsel %vm4351, %v4376, %v4377
    %v4379 = vrot.slane %v4177, 4
    %v4380 = vrot.slane %v4180, 4
    %v4381 = vsel %vm4351, %v4379, %v4380
    %v4382 = vrot.slane %v4178, 4
    %v4383 = vrot.slane %v4181, 4
    %v4384 = vsel %vm4351, %v4382, %v4383
    %v4385 = vrot.slane %v4179, 4
    %v4386 = vrot.slane %v4182, 4
    %v4387 = vsel %vm4351, %v4385, %v4386
    %v4388 = vrot.slane %v4183, 4
    %v4389 = vrot.slane %v4186, 4
    %v4390 = vsel %vm4351, %v4388, %v4389
    %v4391 = vrot.slane %v4184, 4
    %v4392 = vrot.slane %v4187, 4
    %v4393 = vsel %vm4351, %v4391, %v4392
    %v4394 = vrot.slane %v4185, 4
    %v4395 = vrot.slane %v4188, 4
    %v4396 = vsel %vm4351, %v4394, %v4395
    %v4397 = vrot.slane %v4189, 4
    %v4398 = vrot.slane %v4192, 4
    %v4399 = vsel %vm4351, %v4397, %v4398
    %v4400 = vrot.slane %v4190, 4
    %v4401 = vrot.slane %v4193, 4
    %v4402 = vsel %vm4351, %v4400, %v4401
    %v4403 = vrot.slane %v4191, 4
    %v4404 = vrot.slane %v4194, 4
    %v4405 = vsel %vm4351, %v4403, %v4404
    %v4406 = vrot.slane %v4195, 4
    %v4407 = vrot.slane %v4198, 4
    %v4408 = vsel %vm4351, %v4406, %v4407
    %v4409 = vrot.slane %v4196, 4
    %v4410 = vrot.slane %v4199, 4
    %v4411 = vsel %vm4351, %v4409, %v4410
    %v4412 = vrot.slane %v4197, 4
    %v4413 = vrot.slane %v4200, 4
    %v4414 = vsel %vm4351, %v4412, %v4413
    %v4415 = vrot.slane %v4201, 4
    %v4416 = vrot.slane %v4204, 4
    %v4417 = vsel %vm4351, %v4415, %v4416
    %v4418 = vrot.slane %v4202, 4
    %v4419 = vrot.slane %v4205, 4
    %v4420 = vsel %vm4351, %v4418, %v4419
    %v4421 = vrot.slane %v4203, 4
    %v4422 = vrot.slane %v4206, 4
    %v4423 = vsel %vm4351, %v4421, %v4422
    %v4424 = vrot.slane %v4207, 4
    %v4425 = vrot.slane %v4210, 4
    %v4426 = vsel %vm4351, %v4424, %v4425
    %v4427 = vrot.slane %v4208, 4
    %v4428 = vrot.slane %v4211, 4
    %v4429 = vsel %vm4351, %v4427, %v4428
    %v4430 = vrot.slane %v4209, 4
    %v4431 = vrot.slane %v4212, 4
    %v4432 = vsel %vm4351, %v4430, %v4431
    %v4433 = vrot.slane %v4213, 4
    %v4434 = vrot.slane %v4216, 4
    %v4435 = vsel %vm4351, %v4433, %v4434
    %v4436 = vrot.slane %v4214, 4
    %v4437 = vrot.slane %v4217, 4
    %v4438 = vsel %vm4351, %v4436, %v4437
    %v4439 = vrot.slane %v4215, 4
    %v4440 = vrot.slane %v4218, 4
    %v4441 = vsel %vm4351, %v4439, %v4440
    %v4442 = vrot.slane %v4219, 4
    %v4443 = vrot.slane %v4222, 4
    %v4444 = vsel %vm4351, %v4442, %v4443
    %v4445 = vrot.slane %v4220, 4
    %v4446 = vrot.slane %v4223, 4
    %v4447 = vsel %vm4351, %v4445, %v4446
    %v4448 = vrot.slane %v4221, 4
    %v4449 = vrot.slane %v4224, 4
    %v4450 = vsel %vm4351, %v4448, %v4449
    %v4451 = vrot.slane %v4225, 4
    %v4452 = vrot.slane %v4228, 4
    %v4453 = vsel %vm4351, %v4451, %v4452
    %v4454 = vrot.slane %v4226, 4
    %v4455 = vrot.slane %v4229, 4
    %v4456 = vsel %vm4351, %v4454, %v4455
    %v4457 = vrot.slane %v4227, 4
    %v4458 = vrot.slane %v4230, 4
    %v4459 = vsel %vm4351, %v4457, %v4458
    %v4460 = vrot.slane %v4231, 4
    %v4461 = vrot.slane %v4234, 4
    %v4462 = vsel %vm4351, %v4460, %v4461
    %v4463 = vrot.slane %v4232, 4
    %v4464 = vrot.slane %v4235, 4
    %v4465 = vsel %vm4351, %v4463, %v4464
    %v4466 = vrot.slane %v4233, 4
    %v4467 = vrot.slane %v4236, 4
    %v4468 = vsel %vm4351, %v4466, %v4467
    %v4469 = vrot.slane %v4237, 4
    %v4470 = vrot.slane %v4240, 4
    %v4471 = vsel %vm4351, %v4469, %v4470
    %v4472 = vrot.slane %v4238, 4
    %v4473 = vrot.slane %v4241, 4
    %v4474 = vsel %vm4351, %v4472, %v4473
    %v4475 = vrot.slane %v4239, 4
    %v4476 = vrot.slane %v4242, 4
    %v4477 = vsel %vm4351, %v4475, %v4476
    %v4478 = vrot.slane %v4243, 4
    %v4479 = vrot.slane %v4246, 4
    %v4480 = vsel %vm4351, %v4478, %v4479
    %v4481 = vrot.slane %v4244, 4
    %v4482 = vrot.slane %v4247, 4
    %v4483 = vsel %vm4351, %v4481, %v4482
    %v4484 = vrot.slane %v4245, 4
    %v4485 = vrot.slane %v4248, 4
    %v4486 = vsel %vm4351, %v4484, %v4485
    %v4487 = vrot.slane %v4249, 4
    %v4488 = vrot.slane %v4252, 4
    %v4489 = vsel %vm4351, %v4487, %v4488
    %v4490 = vrot.slane %v4250, 4
    %v4491 = vrot.slane %v4253, 4
    %v4492 = vsel %vm4351, %v4490, %v4491
    %v4493 = vrot.slane %v4251, 4
    %v4494 = vrot.slane %v4254, 4
    %v4495 = vsel %vm4351, %v4493, %v4494
    %4544 = vst [vmem:[#allocation3 + $0x60] sm:$0xff] %v4354
    %4545 = vst [vmem:[#allocation3 + $0x68] sm:$0xff] %v4357
    %4546 = vst [vmem:[#allocation3 + $0x70] sm:$0xff] %v4360
    %4547 = vst [vmem:[#allocation3 + $0xd8] sm:$0xff] %v4363
    %4548 = vst [vmem:[#allocation3 + $0xe0] sm:$0xff] %v4366
    %4549 = vst [vmem:[#allocation3 + $0xe8] sm:$0xff] %v4369
    %4550 = vst [vmem:[#allocation3 + $0x150] sm:$0xff] %v4372
    %4551 = vst [vmem:[#allocation3 + $0x158] sm:$0xff] %v4375
    %4552 = vst [vmem:[#allocation3 + $0x160] sm:$0xff] %v4378
    %4553 = vst [vmem:[#allocation3 + $0x1c8] sm:$0xff] %v4381
    %4554 = vst [vmem:[#allocation3 + $0x1d0] sm:$0xff] %v4384
    %4555 = vst [vmem:[#allocation3 + $0x1d8] sm:$0xff] %v4387
    %4556 = vst [vmem:[#allocation3 + $0x240] sm:$0xff] %v4390
    %4557 = vst [vmem:[#allocation3 + $0x248] sm:$0xff] %v4393
    %4558 = vst [vmem:[#allocation3 + $0x250] sm:$0xff] %v4396
    %4559 = vst [vmem:[#allocation3 + $0x2b8] sm:$0xff] %v4399
    %4560 = vst [vmem:[#allocation3 + $0x2c0] sm:$0xff] %v4402
    %4561 = vst [vmem:[#allocation3 + $0x2c8] sm:$0xff] %v4405
    %4562 = vst [vmem:[#allocation3 + $0x330] sm:$0xff] %v4408
    %4563 = vst [vmem:[#allocation3 + $0x338] sm:$0xff] %v4411
    %4564 = vst [vmem:[#allocation3 + $0x340] sm:$0xff] %v4414
    %4565 = vst [vmem:[#allocation3 + $0x3a8] sm:$0xff] %v4417
    %4566 = vst [vmem:[#allocation3 + $0x3b0] sm:$0xff] %v4420
    %4567 = vst [vmem:[#allocation3 + $0x3b8] sm:$0xff] %v4423
    %4568 = vst [vmem:[#allocation3 + $0x420] sm:$0xff] %v4426
    %4569 = vst [vmem:[#allocation3 + $0x428] sm:$0xff] %v4429
    %4570 = vst [vmem:[#allocation3 + $0x430] sm:$0xff] %v4432
    %4571 = vst [vmem:[#allocation3 + $0x498] sm:$0xff] %v4435
    %4572 = vst [vmem:[#allocation3 + $0x4a0] sm:$0xff] %v4438
    %4573 = vst [vmem:[#allocation3 + $0x4a8] sm:$0xff] %v4441
    %4574 = vst [vmem:[#allocation3 + $0x510] sm:$0xff] %v4444
    %4575 = vst [vmem:[#allocation3 + $0x518] sm:$0xff] %v4447
    %4576 = vst [vmem:[#allocation3 + $0x520] sm:$0xff] %v4450
    %4577 = vst [vmem:[#allocation3 + $0x588] sm:$0xff] %v4453
    %4578 = vst [vmem:[#allocation3 + $0x590] sm:$0xff] %v4456
    %4579 = vst [vmem:[#allocation3 + $0x598] sm:$0xff] %v4459
    %4580 = vst [vmem:[#allocation3 + $0x600] sm:$0xff] %v4462
    %4581 = vst [vmem:[#allocation3 + $0x608] sm:$0xff] %v4465
    %4582 = vst [vmem:[#allocation3 + $0x610] sm:$0xff] %v4468
    %4583 = vst [vmem:[#allocation3 + $0x678] sm:$0xff] %v4471
    %4584 = vst [vmem:[#allocation3 + $0x680] sm:$0xff] %v4474
    %4585 = vst [vmem:[#allocation3 + $0x688] sm:$0xff] %v4477
    %4586 = vst [vmem:[#allocation3 + $0x6f0] sm:$0xff] %v4480
    %4587 = vst [vmem:[#allocation3 + $0x6f8] sm:$0xff] %v4483
    %4588 = vst [vmem:[#allocation3 + $0x700] sm:$0xff] %v4486
    %4589 = vst [vmem:[#allocation3 + $0x768] sm:$0xff] %v4489
    %4590 = vst [vmem:[#allocation3 + $0x770] sm:$0xff] %v4492
    %4591 = vst [vmem:[#allocation3 + $0x778] sm:$0xff] %v4495
    %v4592 = vld [vmem:[#allocation3] sm:$0xff]
    %v4593 = vld [vmem:[#allocation3 + $0x8] sm:$0xff]
    %v4594 = vld [vmem:[#allocation3 + $0x10] sm:$0xff]
    %v4595 = vld [vmem:[#allocation3 + $0x18] sm:$0xff]
    %v4596 = vld [vmem:[#allocation3 + $0x20] sm:$0xff]
    %v4597 = vld [vmem:[#allocation3 + $0x28] sm:$0xff]
    %v4598 = vld [vmem:[#allocation3 + $0x30] sm:$0xff]
    %v4599 = vld [vmem:[#allocation3 + $0x38] sm:$0xff]
    %v4600 = vld [vmem:[#allocation3 + $0x40] sm:$0xff]
    %v4601 = vld [vmem:[#allocation3 + $0x48] sm:$0xff]
    %v4602 = vld [vmem:[#allocation3 + $0x50] sm:$0xff]
    %v4603 = vld [vmem:[#allocation3 + $0x58] sm:$0xff]
    %v4604 = vld [vmem:[#allocation3 + $0x60] sm:$0xff]
    %v4605 = vld [vmem:[#allocation3 + $0x68] sm:$0xff]
    %v4606 = vld [vmem:[#allocation3 + $0x70] sm:$0xff]
    %v4607 = vld [vmem:[#allocation3 + $0x78] sm:$0xff]
    %v4608 = vld [vmem:[#allocation3 + $0x80] sm:$0xff]
    %v4609 = vld [vmem:[#allocation3 + $0x88] sm:$0xff]
    %v4610 = vld [vmem:[#allocation3 + $0x90] sm:$0xff]
    %v4611 = vld [vmem:[#allocation3 + $0x98] sm:$0xff]
    %v4612 = vld [vmem:[#allocation3 + $0xa0] sm:$0xff]
    %v4613 = vld [vmem:[#allocation3 + $0xa8] sm:$0xff]
    %v4614 = vld [vmem:[#allocation3 + $0xb0] sm:$0xff]
    %v4615 = vld [vmem:[#allocation3 + $0xb8] sm:$0xff]
    %v4616 = vld [vmem:[#allocation3 + $0xc0] sm:$0xff]
    %v4617 = vld [vmem:[#allocation3 + $0xc8] sm:$0xff]
    %v4618 = vld [vmem:[#allocation3 + $0xd0] sm:$0xff]
    %v4619 = vld [vmem:[#allocation3 + $0xd8] sm:$0xff]
    %v4620 = vld [vmem:[#allocation3 + $0xe0] sm:$0xff]
    %v4621 = vld [vmem:[#allocation3 + $0xe8] sm:$0xff]
    %v4622 = vld [vmem:[#allocation3 + $0xf0] sm:$0xff]
    %v4623 = vld [vmem:[#allocation3 + $0xf8] sm:$0xff]
    %v4624 = vld [vmem:[#allocation3 + $0x100] sm:$0xff]
    %v4625 = vld [vmem:[#allocation3 + $0x108] sm:$0xff]
    %v4626 = vld [vmem:[#allocation3 + $0x110] sm:$0xff]
    %v4627 = vld [vmem:[#allocation3 + $0x118] sm:$0xff]
    %v4628 = vld [vmem:[#allocation3 + $0x120] sm:$0xff]
    %v4629 = vld [vmem:[#allocation3 + $0x128] sm:$0xff]
    %v4630 = vld [vmem:[#allocation3 + $0x130] sm:$0xff]
    %v4631 = vld [vmem:[#allocation3 + $0x138] sm:$0xff]
    %v4632 = vld [vmem:[#allocation3 + $0x140] sm:$0xff]
    %v4633 = vld [vmem:[#allocation3 + $0x148] sm:$0xff]
    %v4634 = vld [vmem:[#allocation3 + $0x150] sm:$0xff]
    %v4635 = vld [vmem:[#allocation3 + $0x158] sm:$0xff]
    %v4636 = vld [vmem:[#allocation3 + $0x160] sm:$0xff]
    %v4637 = vld [vmem:[#allocation3 + $0x168] sm:$0xff]
    %v4638 = vld [vmem:[#allocation3 + $0x170] sm:$0xff]
    %v4639 = vld [vmem:[#allocation3 + $0x178] sm:$0xff]
    %v4640 = vld [vmem:[#allocation3 + $0x180] sm:$0xff]
    %v4641 = vld [vmem:[#allocation3 + $0x188] sm:$0xff]
    %v4642 = vld [vmem:[#allocation3 + $0x190] sm:$0xff]
    %v4643 = vld [vmem:[#allocation3 + $0x198] sm:$0xff]
    %v4644 = vld [vmem:[#allocation3 + $0x1a0] sm:$0xff]
    %v4645 = vld [vmem:[#allocation3 + $0x1a8] sm:$0xff]
    %v4646 = vld [vmem:[#allocation3 + $0x1b0] sm:$0xff]
    %v4647 = vld [vmem:[#allocation3 + $0x1b8] sm:$0xff]
    %v4648 = vld [vmem:[#allocation3 + $0x1c0] sm:$0xff]
    %v4649 = vld [vmem:[#allocation3 + $0x1c8] sm:$0xff]
    %v4650 = vld [vmem:[#allocation3 + $0x1d0] sm:$0xff]
    %v4651 = vld [vmem:[#allocation3 + $0x1d8] sm:$0xff]
    %v4652 = vld [vmem:[#allocation3 + $0x1e0] sm:$0xff]
    %v4653 = vld [vmem:[#allocation3 + $0x1e8] sm:$0xff]
    %v4654 = vld [vmem:[#allocation3 + $0x1f0] sm:$0xff]
    %v4655 = vld [vmem:[#allocation3 + $0x1f8] sm:$0xff]
    %v4656 = vld [vmem:[#allocation3 + $0x200] sm:$0xff]
    %v4657 = vld [vmem:[#allocation3 + $0x208] sm:$0xff]
    %v4658 = vld [vmem:[#allocation3 + $0x210] sm:$0xff]
    %v4659 = vld [vmem:[#allocation3 + $0x218] sm:$0xff]
    %v4660 = vld [vmem:[#allocation3 + $0x220] sm:$0xff]
    %v4661 = vld [vmem:[#allocation3 + $0x228] sm:$0xff]
    %v4662 = vld [vmem:[#allocation3 + $0x230] sm:$0xff]
    %v4663 = vld [vmem:[#allocation3 + $0x238] sm:$0xff]
    %v4664 = vld [vmem:[#allocation3 + $0x240] sm:$0xff]
    %v4665 = vld [vmem:[#allocation3 + $0x248] sm:$0xff]
    %v4666 = vld [vmem:[#allocation3 + $0x250] sm:$0xff]
    %v4667 = vld [vmem:[#allocation3 + $0x258] sm:$0xff]
    %v4668 = vld [vmem:[#allocation3 + $0x260] sm:$0xff]
    %v4669 = vld [vmem:[#allocation3 + $0x268] sm:$0xff]
    %v4670 = vld [vmem:[#allocation3 + $0x270] sm:$0xff]
    %v4671 = vld [vmem:[#allocation3 + $0x278] sm:$0xff]
    %v4672 = vld [vmem:[#allocation3 + $0x280] sm:$0xff]
    %v4673 = vld [vmem:[#allocation3 + $0x288] sm:$0xff]
    %v4674 = vld [vmem:[#allocation3 + $0x290] sm:$0xff]
    %v4675 = vld [vmem:[#allocation3 + $0x298] sm:$0xff]
    %v4676 = vld [vmem:[#allocation3 + $0x2a0] sm:$0xff]
    %v4677 = vld [vmem:[#allocation3 + $0x2a8] sm:$0xff]
    %v4678 = vld [vmem:[#allocation3 + $0x2b0] sm:$0xff]
    %v4679 = vld [vmem:[#allocation3 + $0x2b8] sm:$0xff]
    %v4680 = vld [vmem:[#allocation3 + $0x2c0] sm:$0xff]
    %v4681 = vld [vmem:[#allocation3 + $0x2c8] sm:$0xff]
    %v4682 = vld [vmem:[#allocation3 + $0x2d0] sm:$0xff]
    %v4683 = vld [vmem:[#allocation3 + $0x2d8] sm:$0xff]
    %v4684 = vld [vmem:[#allocation3 + $0x2e0] sm:$0xff]
    %v4685 = vld [vmem:[#allocation3 + $0x2e8] sm:$0xff]
    %v4686 = vld [vmem:[#allocation3 + $0x2f0] sm:$0xff]
    %v4687 = vld [vmem:[#allocation3 + $0x2f8] sm:$0xff]
    %v4688 = vld [vmem:[#allocation3 + $0x300] sm:$0xff]
    %v4689 = vld [vmem:[#allocation3 + $0x308] sm:$0xff]
    %v4690 = vld [vmem:[#allocation3 + $0x310] sm:$0xff]
    %v4691 = vld [vmem:[#allocation3 + $0x318] sm:$0xff]
    %v4692 = vld [vmem:[#allocation3 + $0x320] sm:$0xff]
    %v4693 = vld [vmem:[#allocation3 + $0x328] sm:$0xff]
    %v4694 = vld [vmem:[#allocation3 + $0x330] sm:$0xff]
    %v4695 = vld [vmem:[#allocation3 + $0x338] sm:$0xff]
    %v4696 = vld [vmem:[#allocation3 + $0x340] sm:$0xff]
    %v4697 = vld [vmem:[#allocation3 + $0x348] sm:$0xff]
    %v4698 = vld [vmem:[#allocation3 + $0x350] sm:$0xff]
    %v4699 = vld [vmem:[#allocation3 + $0x358] sm:$0xff]
    %v4700 = vld [vmem:[#allocation3 + $0x360] sm:$0xff]
    %v4701 = vld [vmem:[#allocation3 + $0x368] sm:$0xff]
    %v4702 = vld [vmem:[#allocation3 + $0x370] sm:$0xff]
    %v4703 = vld [vmem:[#allocation3 + $0x378] sm:$0xff]
    %v4704 = vld [vmem:[#allocation3 + $0x380] sm:$0xff]
    %v4705 = vld [vmem:[#allocation3 + $0x388] sm:$0xff]
    %v4706 = vld [vmem:[#allocation3 + $0x390] sm:$0xff]
    %v4707 = vld [vmem:[#allocation3 + $0x398] sm:$0xff]
    %v4708 = vld [vmem:[#allocation3 + $0x3a0] sm:$0xff]
    %v4709 = vld [vmem:[#allocation3 + $0x3a8] sm:$0xff]
    %v4710 = vld [vmem:[#allocation3 + $0x3b0] sm:$0xff]
    %v4711 = vld [vmem:[#allocation3 + $0x3b8] sm:$0xff]
    %v4712 = vld [vmem:[#allocation3 + $0x3c0] sm:$0xff]
    %v4713 = vld [vmem:[#allocation3 + $0x3c8] sm:$0xff]
    %v4714 = vld [vmem:[#allocation3 + $0x3d0] sm:$0xff]
    %v4715 = vld [vmem:[#allocation3 + $0x3d8] sm:$0xff]
    %v4716 = vld [vmem:[#allocation3 + $0x3e0] sm:$0xff]
    %v4717 = vld [vmem:[#allocation3 + $0x3e8] sm:$0xff]
    %v4718 = vld [vmem:[#allocation3 + $0x3f0] sm:$0xff]
    %v4719 = vld [vmem:[#allocation3 + $0x3f8] sm:$0xff]
    %v4720 = vld [vmem:[#allocation3 + $0x400] sm:$0xff]
    %v4721 = vld [vmem:[#allocation3 + $0x408] sm:$0xff]
    %v4722 = vld [vmem:[#allocation3 + $0x410] sm:$0xff]
    %v4723 = vld [vmem:[#allocation3 + $0x418] sm:$0xff]
    %v4724 = vld [vmem:[#allocation3 + $0x420] sm:$0xff]
    %v4725 = vld [vmem:[#allocation3 + $0x428] sm:$0xff]
    %v4726 = vld [vmem:[#allocation3 + $0x430] sm:$0xff]
    %v4727 = vld [vmem:[#allocation3 + $0x438] sm:$0xff]
    %v4728 = vld [vmem:[#allocation3 + $0x440] sm:$0xff]
    %v4729 = vld [vmem:[#allocation3 + $0x448] sm:$0xff]
    %v4730 = vld [vmem:[#allocation3 + $0x450] sm:$0xff]
    %v4731 = vld [vmem:[#allocation3 + $0x458] sm:$0xff]
    %v4732 = vld [vmem:[#allocation3 + $0x460] sm:$0xff]
    %v4733 = vld [vmem:[#allocation3 + $0x468] sm:$0xff]
    %v4734 = vld [vmem:[#allocation3 + $0x470] sm:$0xff]
    %v4735 = vld [vmem:[#allocation3 + $0x478] sm:$0xff]
    %v4736 = vld [vmem:[#allocation3 + $0x480] sm:$0xff]
    %v4737 = vld [vmem:[#allocation3 + $0x488] sm:$0xff]
    %v4738 = vld [vmem:[#allocation3 + $0x490] sm:$0xff]
    %v4739 = vld [vmem:[#allocation3 + $0x498] sm:$0xff]
    %v4740 = vld [vmem:[#allocation3 + $0x4a0] sm:$0xff]
    %v4741 = vld [vmem:[#allocation3 + $0x4a8] sm:$0xff]
    %v4742 = vld [vmem:[#allocation3 + $0x4b0] sm:$0xff]
    %v4743 = vld [vmem:[#allocation3 + $0x4b8] sm:$0xff]
    %v4744 = vld [vmem:[#allocation3 + $0x4c0] sm:$0xff]
    %v4745 = vld [vmem:[#allocation3 + $0x4c8] sm:$0xff]
    %v4746 = vld [vmem:[#allocation3 + $0x4d0] sm:$0xff]
    %v4747 = vld [vmem:[#allocation3 + $0x4d8] sm:$0xff]
    %v4748 = vld [vmem:[#allocation3 + $0x4e0] sm:$0xff]
    %v4749 = vld [vmem:[#allocation3 + $0x4e8] sm:$0xff]
    %v4750 = vld [vmem:[#allocation3 + $0x4f0] sm:$0xff]
    %v4751 = vld [vmem:[#allocation3 + $0x4f8] sm:$0xff]
    %v4752 = vld [vmem:[#allocation3 + $0x500] sm:$0xff]
    %v4753 = vld [vmem:[#allocation3 + $0x508] sm:$0xff]
    %v4754 = vld [vmem:[#allocation3 + $0x510] sm:$0xff]
    %v4755 = vld [vmem:[#allocation3 + $0x518] sm:$0xff]
    %v4756 = vld [vmem:[#allocation3 + $0x520] sm:$0xff]
    %v4757 = vld [vmem:[#allocation3 + $0x528] sm:$0xff]
    %v4758 = vld [vmem:[#allocation3 + $0x530] sm:$0xff]
    %v4759 = vld [vmem:[#allocation3 + $0x538] sm:$0xff]
    %v4760 = vld [vmem:[#allocation3 + $0x540] sm:$0xff]
    %v4761 = vld [vmem:[#allocation3 + $0x548] sm:$0xff]
    %v4762 = vld [vmem:[#allocation3 + $0x550] sm:$0xff]
    %v4763 = vld [vmem:[#allocation3 + $0x558] sm:$0xff]
    %v4764 = vld [vmem:[#allocation3 + $0x560] sm:$0xff]
    %v4765 = vld [vmem:[#allocation3 + $0x568] sm:$0xff]
    %v4766 = vld [vmem:[#allocation3 + $0x570] sm:$0xff]
    %v4767 = vld [vmem:[#allocation3 + $0x578] sm:$0xff]
    %v4768 = vld [vmem:[#allocation3 + $0x580] sm:$0xff]
    %v4769 = vld [vmem:[#allocation3 + $0x588] sm:$0xff]
    %v4770 = vld [vmem:[#allocation3 + $0x590] sm:$0xff]
    %v4771 = vld [vmem:[#allocation3 + $0x598] sm:$0xff]
    %v4772 = vld [vmem:[#allocation3 + $0x5a0] sm:$0xff]
    %v4773 = vld [vmem:[#allocation3 + $0x5a8] sm:$0xff]
    %v4774 = vld [vmem:[#allocation3 + $0x5b0] sm:$0xff]
    %v4775 = vld [vmem:[#allocation3 + $0x5b8] sm:$0xff]
    %v4776 = vld [vmem:[#allocation3 + $0x5c0] sm:$0xff]
    %v4777 = vld [vmem:[#allocation3 + $0x5c8] sm:$0xff]
    %v4778 = vld [vmem:[#allocation3 + $0x5d0] sm:$0xff]
    %v4779 = vld [vmem:[#allocation3 + $0x5d8] sm:$0xff]
    %v4780 = vld [vmem:[#allocation3 + $0x5e0] sm:$0xff]
    %v4781 = vld [vmem:[#allocation3 + $0x5e8] sm:$0xff]
    %v4782 = vld [vmem:[#allocation3 + $0x5f0] sm:$0xff]
    %v4783 = vld [vmem:[#allocation3 + $0x5f8] sm:$0xff]
    %v4784 = vld [vmem:[#allocation3 + $0x600] sm:$0xff]
    %v4785 = vld [vmem:[#allocation3 + $0x608] sm:$0xff]
    %v4786 = vld [vmem:[#allocation3 + $0x610] sm:$0xff]
    %v4787 = vld [vmem:[#allocation3 + $0x618] sm:$0xff]
    %v4788 = vld [vmem:[#allocation3 + $0x620] sm:$0xff]
    %v4789 = vld [vmem:[#allocation3 + $0x628] sm:$0xff]
    %v4790 = vld [vmem:[#allocation3 + $0x630] sm:$0xff]
    %v4791 = vld [vmem:[#allocation3 + $0x638] sm:$0xff]
    %v4792 = vld [vmem:[#allocation3 + $0x640] sm:$0xff]
    %v4793 = vld [vmem:[#allocation3 + $0x648] sm:$0xff]
    %v4794 = vld [vmem:[#allocation3 + $0x650] sm:$0xff]
    %v4795 = vld [vmem:[#allocation3 + $0x658] sm:$0xff]
    %v4796 = vld [vmem:[#allocation3 + $0x660] sm:$0xff]
    %v4797 = vld [vmem:[#allocation3 + $0x668] sm:$0xff]
    %v4798 = vld [vmem:[#allocation3 + $0x670] sm:$0xff]
    %v4799 = vld [vmem:[#allocation3 + $0x678] sm:$0xff]
    %v4800 = vld [vmem:[#allocation3 + $0x680] sm:$0xff]
    %v4801 = vld [vmem:[#allocation3 + $0x688] sm:$0xff]
    %v4802 = vld [vmem:[#allocation3 + $0x690] sm:$0xff]
    %v4803 = vld [vmem:[#allocation3 + $0x698] sm:$0xff]
    %v4804 = vld [vmem:[#allocation3 + $0x6a0] sm:$0xff]
    %v4805 = vld [vmem:[#allocation3 + $0x6a8] sm:$0xff]
    %v4806 = vld [vmem:[#allocation3 + $0x6b0] sm:$0xff]
    %v4807 = vld [vmem:[#allocation3 + $0x6b8] sm:$0xff]
    %v4808 = vld [vmem:[#allocation3 + $0x6c0] sm:$0xff]
    %v4809 = vld [vmem:[#allocation3 + $0x6c8] sm:$0xff]
    %v4810 = vld [vmem:[#allocation3 + $0x6d0] sm:$0xff]
    %v4811 = vld [vmem:[#allocation3 + $0x6d8] sm:$0xff]
    %v4812 = vld [vmem:[#allocation3 + $0x6e0] sm:$0xff]
    %v4813 = vld [vmem:[#allocation3 + $0x6e8] sm:$0xff]
    %v4814 = vld [vmem:[#allocation3 + $0x6f0] sm:$0xff]
    %v4815 = vld [vmem:[#allocation3 + $0x6f8] sm:$0xff]
    %v4816 = vld [vmem:[#allocation3 + $0x700] sm:$0xff]
    %v4817 = vld [vmem:[#allocation3 + $0x708] sm:$0xff]
    %v4818 = vld [vmem:[#allocation3 + $0x710] sm:$0xff]
    %v4819 = vld [vmem:[#allocation3 + $0x718] sm:$0xff]
    %v4820 = vld [vmem:[#allocation3 + $0x720] sm:$0xff]
    %v4821 = vld [vmem:[#allocation3 + $0x728] sm:$0xff]
    %v4822 = vld [vmem:[#allocation3 + $0x730] sm:$0xff]
    %v4823 = vld [vmem:[#allocation3 + $0x738] sm:$0xff]
    %v4824 = vld [vmem:[#allocation3 + $0x740] sm:$0xff]
    %v4825 = vld [vmem:[#allocation3 + $0x748] sm:$0xff]
    %v4826 = vld [vmem:[#allocation3 + $0x750] sm:$0xff]
    %v4827 = vld [vmem:[#allocation3 + $0x758] sm:$0xff]
    %v4828 = vld [vmem:[#allocation3 + $0x760] sm:$0xff]
    %v4829 = vld [vmem:[#allocation3 + $0x768] sm:$0xff]
    %v4830 = vld [vmem:[#allocation3 + $0x770] sm:$0xff]
    %v4831 = vld [vmem:[#allocation3 + $0x778] sm:$0xff]
    %v4832 = vpack.c.bf16 %v4607, %v4592
    %v4833 = vpack.c.bf16 %v4608, %v4593
    %v4834 = vpack.c.bf16 %v4609, %v4594
    %v4835 = vpack.c.bf16 %v4610, %v4595
    %v4836 = vpack.c.bf16 %v4611, %v4596
    %v4837 = vpack.c.bf16 %v4612, %v4597
    %v4838 = vpack.c.bf16 %v4613, %v4598
    %v4839 = vpack.c.bf16 %v4614, %v4599
    %v4840 = vpack.c.bf16 %v4615, %v4600
    %v4841 = vpack.c.bf16 %v4616, %v4601
    %v4842 = vpack.c.bf16 %v4617, %v4602
    %v4843 = vpack.c.bf16 %v4618, %v4603
    %v4844 = vpack.c.bf16 %v4619, %v4604
    %v4845 = vpack.c.bf16 %v4620, %v4605
    %v4846 = vpack.c.bf16 %v4621, %v4606
    %v4847 = vpack.c.bf16 %v4637, %v4622
    %v4848 = vpack.c.bf16 %v4638, %v4623
    %v4849 = vpack.c.bf16 %v4639, %v4624
    %v4850 = vpack.c.bf16 %v4640, %v4625
    %v4851 = vpack.c.bf16 %v4641, %v4626
    %v4852 = vpack.c.bf16 %v4642, %v4627
    %v4853 = vpack.c.bf16 %v4643, %v4628
    %v4854 = vpack.c.bf16 %v4644, %v4629
    %v4855 = vpack.c.bf16 %v4645, %v4630
    %v4856 = vpack.c.bf16 %v4646, %v4631
    %v4857 = vpack.c.bf16 %v4647, %v4632
    %v4858 = vpack.c.bf16 %v4648, %v4633
    %v4859 = vpack.c.bf16 %v4649, %v4634
    %v4860 = vpack.c.bf16 %v4650, %v4635
    %v4861 = vpack.c.bf16 %v4651, %v4636
    %v4862 = vpack.c.bf16 %v4667, %v4652
    %v4863 = vpack.c.bf16 %v4668, %v4653
    %v4864 = vpack.c.bf16 %v4669, %v4654
    %v4865 = vpack.c.bf16 %v4670, %v4655
    %v4866 = vpack.c.bf16 %v4671, %v4656
    %v4867 = vpack.c.bf16 %v4672, %v4657
    %v4868 = vpack.c.bf16 %v4673, %v4658
    %v4869 = vpack.c.bf16 %v4674, %v4659
    %v4870 = vpack.c.bf16 %v4675, %v4660
    %v4871 = vpack.c.bf16 %v4676, %v4661
    %v4872 = vpack.c.bf16 %v4677, %v4662
    %v4873 = vpack.c.bf16 %v4678, %v4663
    %v4874 = vpack.c.bf16 %v4679, %v4664
    %v4875 = vpack.c.bf16 %v4680, %v4665
    %v4876 = vpack.c.bf16 %v4681, %v4666
    %v4877 = vpack.c.bf16 %v4697, %v4682
    %v4878 = vpack.c.bf16 %v4698, %v4683
    %v4879 = vpack.c.bf16 %v4699, %v4684
    %v4880 = vpack.c.bf16 %v4700, %v4685
    %v4881 = vpack.c.bf16 %v4701, %v4686
    %v4882 = vpack.c.bf16 %v4702, %v4687
    %v4883 = vpack.c.bf16 %v4703, %v4688
    %v4884 = vpack.c.bf16 %v4704, %v4689
    %v4885 = vpack.c.bf16 %v4705, %v4690
    %v4886 = vpack.c.bf16 %v4706, %v4691
    %v4887 = vpack.c.bf16 %v4707, %v4692
    %v4888 = vpack.c.bf16 %v4708, %v4693
    %v4889 = vpack.c.bf16 %v4709, %v4694
    %v4890 = vpack.c.bf16 %v4710, %v4695
    %v4891 = vpack.c.bf16 %v4711, %v4696
    %v4892 = vpack.c.bf16 %v4727, %v4712
    %v4893 = vpack.c.bf16 %v4728, %v4713
    %v4894 = vpack.c.bf16 %v4729, %v4714
    %v4895 = vpack.c.bf16 %v4730, %v4715
    %v4896 = vpack.c.bf16 %v4731, %v4716
    %v4897 = vpack.c.bf16 %v4732, %v4717
    %v4898 = vpack.c.bf16 %v4733, %v4718
    %v4899 = vpack.c.bf16 %v4734, %v4719
    %v4900 = vpack.c.bf16 %v4735, %v4720
    %v4901 = vpack.c.bf16 %v4736, %v4721
    %v4902 = vpack.c.bf16 %v4737, %v4722
    %v4903 = vpack.c.bf16 %v4738, %v4723
    %v4904 = vpack.c.bf16 %v4739, %v4724
    %v4905 = vpack.c.bf16 %v4740, %v4725
    %v4906 = vpack.c.bf16 %v4741, %v4726
    %v4907 = vpack.c.bf16 %v4757, %v4742
    %v4908 = vpack.c.bf16 %v4758, %v4743
    %v4909 = vpack.c.bf16 %v4759, %v4744
    %v4910 = vpack.c.bf16 %v4760, %v4745
    %v4911 = vpack.c.bf16 %v4761, %v4746
    %v4912 = vpack.c.bf16 %v4762, %v4747
    %v4913 = vpack.c.bf16 %v4763, %v4748
    %v4914 = vpack.c.bf16 %v4764, %v4749
    %v4915 = vpack.c.bf16 %v4765, %v4750
    %v4916 = vpack.c.bf16 %v4766, %v4751
    %v4917 = vpack.c.bf16 %v4767, %v4752
    %v4918 = vpack.c.bf16 %v4768, %v4753
    %v4919 = vpack.c.bf16 %v4769, %v4754
    %v4920 = vpack.c.bf16 %v4770, %v4755
    %v4921 = vpack.c.bf16 %v4771, %v4756
    %v4922 = vpack.c.bf16 %v4787, %v4772
    %v4923 = vpack.c.bf16 %v4788, %v4773
    %v4924 = vpack.c.bf16 %v4789, %v4774
    %v4925 = vpack.c.bf16 %v4790, %v4775
    %v4926 = vpack.c.bf16 %v4791, %v4776
    %v4927 = vpack.c.bf16 %v4792, %v4777
    %v4928 = vpack.c.bf16 %v4793, %v4778
    %v4929 = vpack.c.bf16 %v4794, %v4779
    %v4930 = vpack.c.bf16 %v4795, %v4780
    %v4931 = vpack.c.bf16 %v4796, %v4781
    %v4932 = vpack.c.bf16 %v4797, %v4782
    %v4933 = vpack.c.bf16 %v4798, %v4783
    %v4934 = vpack.c.bf16 %v4799, %v4784
    %v4935 = vpack.c.bf16 %v4800, %v4785
    %v4936 = vpack.c.bf16 %v4801, %v4786
    %v4937 = vpack.c.bf16 %v4817, %v4802
    %v4938 = vpack.c.bf16 %v4818, %v4803
    %v4939 = vpack.c.bf16 %v4819, %v4804
    %v4940 = vpack.c.bf16 %v4820, %v4805
    %v4941 = vpack.c.bf16 %v4821, %v4806
    %v4942 = vpack.c.bf16 %v4822, %v4807
    %v4943 = vpack.c.bf16 %v4823, %v4808
    %v4944 = vpack.c.bf16 %v4824, %v4809
    %v4945 = vpack.c.bf16 %v4825, %v4810
    %v4946 = vpack.c.bf16 %v4826, %v4811
    %v4947 = vpack.c.bf16 %v4827, %v4812
    %v4948 = vpack.c.bf16 %v4828, %v4813
    %v4949 = vpack.c.bf16 %v4829, %v4814
    %v4950 = vpack.c.bf16 %v4830, %v4815
    %v4951 = vpack.c.bf16 %v4831, %v4816
    %v4952 = vld [vmem:[#allocation9] sm:$0xff]
    %v4953 = vld [vmem:[#allocation9 + $0x8] sm:$0xff]
    %v4954 = vld [vmem:[#allocation9 + $0x10] sm:$0xff]
    %v4955 = vld [vmem:[#allocation9 + $0x18] sm:$0xff]
    %v4956 = vld [vmem:[#allocation9 + $0x20] sm:$0xff]
    %v4957 = vld [vmem:[#allocation9 + $0x28] sm:$0xff]
    %v4958 = vld [vmem:[#allocation9 + $0x30] sm:$0xff]
    %v4959 = vld [vmem:[#allocation9 + $0x38] sm:$0xff]
    %v4960 = vld [vmem:[#allocation9 + $0x40] sm:$0xff]
    %v4961 = vld [vmem:[#allocation9 + $0x48] sm:$0xff]
    %v4962 = vld [vmem:[#allocation9 + $0x50] sm:$0xff]
    %v4963 = vld [vmem:[#allocation9 + $0x58] sm:$0xff]
    %v4964 = vld [vmem:[#allocation9 + $0x60] sm:$0xff]
    %v4965 = vld [vmem:[#allocation9 + $0x68] sm:$0xff]
    %v4966 = vld [vmem:[#allocation9 + $0x70] sm:$0xff]
    %v4967 = vld [vmem:[#allocation9 + $0x78] sm:$0xff]
    %v4968 = vld [vmem:[#allocation9 + $0x80] sm:$0xff]
    %v4969 = vld [vmem:[#allocation9 + $0x88] sm:$0xff]
    %v4970 = vld [vmem:[#allocation9 + $0x90] sm:$0xff]
    %v4971 = vld [vmem:[#allocation9 + $0x98] sm:$0xff]
    %v4972 = vld [vmem:[#allocation9 + $0xa0] sm:$0xff]
    %v4973 = vld [vmem:[#allocation9 + $0xa8] sm:$0xff]
    %v4974 = vld [vmem:[#allocation9 + $0xb0] sm:$0xff]
    %v4975 = vld [vmem:[#allocation9 + $0xb8] sm:$0xff]
    %v4976 = vld [vmem:[#allocation9 + $0xc0] sm:$0xff]
    %v4977 = vld [vmem:[#allocation9 + $0xc8] sm:$0xff]
    %v4978 = vld [vmem:[#allocation9 + $0xd0] sm:$0xff]
    %v4979 = vld [vmem:[#allocation9 + $0xd8] sm:$0xff]
    %v4980 = vld [vmem:[#allocation9 + $0xe0] sm:$0xff]
    %v4981 = vld [vmem:[#allocation9 + $0xe8] sm:$0xff]
    %v4982 = vld [vmem:[#allocation9 + $0xf0] sm:$0xff]
    %v4983 = vld [vmem:[#allocation9 + $0xf8] sm:$0xff]
    %v4984 = vld [vmem:[#allocation9 + $0x100] sm:$0xff]
    %v4985 = vld [vmem:[#allocation9 + $0x108] sm:$0xff]
    %v4986 = vld [vmem:[#allocation9 + $0x110] sm:$0xff]
    %v4987 = vld [vmem:[#allocation9 + $0x118] sm:$0xff]
    %v4988 = vld [vmem:[#allocation9 + $0x120] sm:$0xff]
    %v4989 = vld [vmem:[#allocation9 + $0x128] sm:$0xff]
    %v4990 = vld [vmem:[#allocation9 + $0x130] sm:$0xff]
    %v4991 = vld [vmem:[#allocation9 + $0x138] sm:$0xff]
    %v4992 = vld [vmem:[#allocation9 + $0x140] sm:$0xff]
    %v4993 = vld [vmem:[#allocation9 + $0x148] sm:$0xff]
    %v4994 = vld [vmem:[#allocation9 + $0x150] sm:$0xff]
    %v4995 = vld [vmem:[#allocation9 + $0x158] sm:$0xff]
    %v4996 = vld [vmem:[#allocation9 + $0x160] sm:$0xff]
    %v4997 = vld [vmem:[#allocation9 + $0x168] sm:$0xff]
    %v4998 = vld [vmem:[#allocation9 + $0x170] sm:$0xff]
    %v4999 = vld [vmem:[#allocation9 + $0x178] sm:$0xff]
    %v5000 = vld [vmem:[#allocation9 + $0x180] sm:$0xff]
    %v5001 = vld [vmem:[#allocation9 + $0x188] sm:$0xff]
    %v5002 = vld [vmem:[#allocation9 + $0x190] sm:$0xff]
    %v5003 = vld [vmem:[#allocation9 + $0x198] sm:$0xff]
    %v5004 = vld [vmem:[#allocation9 + $0x1a0] sm:$0xff]
    %v5005 = vld [vmem:[#allocation9 + $0x1a8] sm:$0xff]
    %v5006 = vld [vmem:[#allocation9 + $0x1b0] sm:$0xff]
    %v5007 = vld [vmem:[#allocation9 + $0x1b8] sm:$0xff]
    %v5008 = vld [vmem:[#allocation9 + $0x1c0] sm:$0xff]
    %v5009 = vld [vmem:[#allocation9 + $0x1c8] sm:$0xff]
    %v5010 = vld [vmem:[#allocation9 + $0x1d0] sm:$0xff]
    %v5011 = vld [vmem:[#allocation9 + $0x1d8] sm:$0xff]
    %v5012 = vld [vmem:[#allocation9 + $0x1e0] sm:$0xff]
    %v5013 = vld [vmem:[#allocation9 + $0x1e8] sm:$0xff]
    %v5014 = vld [vmem:[#allocation9 + $0x1f0] sm:$0xff]
    %v5015 = vld [vmem:[#allocation9 + $0x1f8] sm:$0xff]
    %v5016 = vld [vmem:[#allocation9 + $0x200] sm:$0xff]
    %v5017 = vld [vmem:[#allocation9 + $0x208] sm:$0xff]
    %v5018 = vld [vmem:[#allocation9 + $0x210] sm:$0xff]
    %v5019 = vld [vmem:[#allocation9 + $0x218] sm:$0xff]
    %v5020 = vld [vmem:[#allocation9 + $0x220] sm:$0xff]
    %v5021 = vld [vmem:[#allocation9 + $0x228] sm:$0xff]
    %v5022 = vld [vmem:[#allocation9 + $0x230] sm:$0xff]
    %v5023 = vld [vmem:[#allocation9 + $0x238] sm:$0xff]
    %v5024 = vld [vmem:[#allocation9 + $0x240] sm:$0xff]
    %v5025 = vld [vmem:[#allocation9 + $0x248] sm:$0xff]
    %v5026 = vld [vmem:[#allocation9 + $0x250] sm:$0xff]
    %v5027 = vld [vmem:[#allocation9 + $0x258] sm:$0xff]
    %v5028 = vld [vmem:[#allocation9 + $0x260] sm:$0xff]
    %v5029 = vld [vmem:[#allocation9 + $0x268] sm:$0xff]
    %v5030 = vld [vmem:[#allocation9 + $0x270] sm:$0xff]
    %v5031 = vld [vmem:[#allocation9 + $0x278] sm:$0xff]
    %v5032 = vld [vmem:[#allocation9 + $0x280] sm:$0xff]
    %v5033 = vld [vmem:[#allocation9 + $0x288] sm:$0xff]
    %v5034 = vld [vmem:[#allocation9 + $0x290] sm:$0xff]
    %v5035 = vld [vmem:[#allocation9 + $0x298] sm:$0xff]
    %v5036 = vld [vmem:[#allocation9 + $0x2a0] sm:$0xff]
    %v5037 = vld [vmem:[#allocation9 + $0x2a8] sm:$0xff]
    %v5038 = vld [vmem:[#allocation9 + $0x2b0] sm:$0xff]
    %v5039 = vld [vmem:[#allocation9 + $0x2b8] sm:$0xff]
    %v5040 = vld [vmem:[#allocation9 + $0x2c0] sm:$0xff]
    %v5041 = vld [vmem:[#allocation9 + $0x2c8] sm:$0xff]
    %v5042 = vld [vmem:[#allocation9 + $0x2d0] sm:$0xff]
    %v5043 = vld [vmem:[#allocation9 + $0x2d8] sm:$0xff]
    %v5044 = vld [vmem:[#allocation9 + $0x2e0] sm:$0xff]
    %v5045 = vld [vmem:[#allocation9 + $0x2e8] sm:$0xff]
    %v5046 = vld [vmem:[#allocation9 + $0x2f0] sm:$0xff]
    %v5047 = vld [vmem:[#allocation9 + $0x2f8] sm:$0xff]
    %v5048 = vld [vmem:[#allocation9 + $0x300] sm:$0xff]
    %v5049 = vld [vmem:[#allocation9 + $0x308] sm:$0xff]
    %v5050 = vld [vmem:[#allocation9 + $0x310] sm:$0xff]
    %v5051 = vld [vmem:[#allocation9 + $0x318] sm:$0xff]
    %v5052 = vld [vmem:[#allocation9 + $0x320] sm:$0xff]
    %v5053 = vld [vmem:[#allocation9 + $0x328] sm:$0xff]
    %v5054 = vld [vmem:[#allocation9 + $0x330] sm:$0xff]
    %v5055 = vld [vmem:[#allocation9 + $0x338] sm:$0xff]
    %v5056 = vld [vmem:[#allocation9 + $0x340] sm:$0xff]
    %v5057 = vld [vmem:[#allocation9 + $0x348] sm:$0xff]
    %v5058 = vld [vmem:[#allocation9 + $0x350] sm:$0xff]
    %v5059 = vld [vmem:[#allocation9 + $0x358] sm:$0xff]
    %v5060 = vld [vmem:[#allocation9 + $0x360] sm:$0xff]
    %v5061 = vld [vmem:[#allocation9 + $0x368] sm:$0xff]
    %v5062 = vld [vmem:[#allocation9 + $0x370] sm:$0xff]
    %v5063 = vld [vmem:[#allocation9 + $0x378] sm:$0xff]
    %v5064 = vld [vmem:[#allocation9 + $0x380] sm:$0xff]
    %v5065 = vld [vmem:[#allocation9 + $0x388] sm:$0xff]
    %v5066 = vld [vmem:[#allocation9 + $0x390] sm:$0xff]
    %v5067 = vld [vmem:[#allocation9 + $0x398] sm:$0xff]
    %v5068 = vld [vmem:[#allocation9 + $0x3a0] sm:$0xff]
    %v5069 = vld [vmem:[#allocation9 + $0x3a8] sm:$0xff]
    %v5070 = vld [vmem:[#allocation9 + $0x3b0] sm:$0xff]
    %v5071 = vld [vmem:[#allocation9 + $0x3b8] sm:$0xff]
    %v5072 = vld [vmem:[#allocation9 + $0x3c0] sm:$0xff]
    %v5073 = vld [vmem:[#allocation9 + $0x3c8] sm:$0xff]
    %v5074 = vld [vmem:[#allocation9 + $0x3d0] sm:$0xff]
    %v5075 = vld [vmem:[#allocation9 + $0x3d8] sm:$0xff]
    %v5076 = vld [vmem:[#allocation9 + $0x3e0] sm:$0xff]
    %v5077 = vld [vmem:[#allocation9 + $0x3e8] sm:$0xff]
    %v5078 = vld [vmem:[#allocation9 + $0x3f0] sm:$0xff]
    %v5079 = vld [vmem:[#allocation9 + $0x3f8] sm:$0xff]
    %v5080 = vld [vmem:[#allocation9 + $0x400] sm:$0xff]
    %v5081 = vld [vmem:[#allocation9 + $0x408] sm:$0xff]
    %v5082 = vld [vmem:[#allocation9 + $0x410] sm:$0xff]
    %v5083 = vld [vmem:[#allocation9 + $0x418] sm:$0xff]
    %v5084 = vld [vmem:[#allocation9 + $0x420] sm:$0xff]
    %v5085 = vld [vmem:[#allocation9 + $0x428] sm:$0xff]
    %v5086 = vld [vmem:[#allocation9 + $0x430] sm:$0xff]
    %v5087 = vld [vmem:[#allocation9 + $0x438] sm:$0xff]
    %v5088 = vld [vmem:[#allocation9 + $0x440] sm:$0xff]
    %v5089 = vld [vmem:[#allocation9 + $0x448] sm:$0xff]
    %v5090 = vld [vmem:[#allocation9 + $0x450] sm:$0xff]
    %v5091 = vld [vmem:[#allocation9 + $0x458] sm:$0xff]
    %v5092 = vld [vmem:[#allocation9 + $0x460] sm:$0xff]
    %v5093 = vld [vmem:[#allocation9 + $0x468] sm:$0xff]
    %v5094 = vld [vmem:[#allocation9 + $0x470] sm:$0xff]
    %v5095 = vld [vmem:[#allocation9 + $0x478] sm:$0xff]
    %v5096 = vld [vmem:[#allocation9 + $0x480] sm:$0xff]
    %v5097 = vld [vmem:[#allocation9 + $0x488] sm:$0xff]
    %v5098 = vld [vmem:[#allocation9 + $0x490] sm:$0xff]
    %v5099 = vld [vmem:[#allocation9 + $0x498] sm:$0xff]
    %v5100 = vld [vmem:[#allocation9 + $0x4a0] sm:$0xff]
    %v5101 = vld [vmem:[#allocation9 + $0x4a8] sm:$0xff]
    %v5102 = vld [vmem:[#allocation9 + $0x4b0] sm:$0xff]
    %v5103 = vld [vmem:[#allocation9 + $0x4b8] sm:$0xff]
    %v5104 = vld [vmem:[#allocation9 + $0x4c0] sm:$0xff]
    %v5105 = vld [vmem:[#allocation9 + $0x4c8] sm:$0xff]
    %v5106 = vld [vmem:[#allocation9 + $0x4d0] sm:$0xff]
    %v5107 = vld [vmem:[#allocation9 + $0x4d8] sm:$0xff]
    %v5108 = vld [vmem:[#allocation9 + $0x4e0] sm:$0xff]
    %v5109 = vld [vmem:[#allocation9 + $0x4e8] sm:$0xff]
    %v5110 = vld [vmem:[#allocation9 + $0x4f0] sm:$0xff]
    %v5111 = vld [vmem:[#allocation9 + $0x4f8] sm:$0xff]
    %v5112 = vld [vmem:[#allocation9 + $0x500] sm:$0xff]
    %v5113 = vld [vmem:[#allocation9 + $0x508] sm:$0xff]
    %v5114 = vld [vmem:[#allocation9 + $0x510] sm:$0xff]
    %v5115 = vld [vmem:[#allocation9 + $0x518] sm:$0xff]
    %v5116 = vld [vmem:[#allocation9 + $0x520] sm:$0xff]
    %v5117 = vld [vmem:[#allocation9 + $0x528] sm:$0xff]
    %v5118 = vld [vmem:[#allocation9 + $0x530] sm:$0xff]
    %v5119 = vld [vmem:[#allocation9 + $0x538] sm:$0xff]
    %v5120 = vld [vmem:[#allocation9 + $0x540] sm:$0xff]
    %v5121 = vld [vmem:[#allocation9 + $0x548] sm:$0xff]
    %v5122 = vld [vmem:[#allocation9 + $0x550] sm:$0xff]
    %v5123 = vld [vmem:[#allocation9 + $0x558] sm:$0xff]
    %v5124 = vld [vmem:[#allocation9 + $0x560] sm:$0xff]
    %v5125 = vld [vmem:[#allocation9 + $0x568] sm:$0xff]
    %v5126 = vld [vmem:[#allocation9 + $0x570] sm:$0xff]
    %v5127 = vld [vmem:[#allocation9 + $0x578] sm:$0xff]
    %v5128 = vld [vmem:[#allocation9 + $0x580] sm:$0xff]
    %v5129 = vld [vmem:[#allocation9 + $0x588] sm:$0xff]
    %v5130 = vld [vmem:[#allocation9 + $0x590] sm:$0xff]
    %v5131 = vld [vmem:[#allocation9 + $0x598] sm:$0xff]
    %v5132 = vld [vmem:[#allocation9 + $0x5a0] sm:$0xff]
    %v5133 = vld [vmem:[#allocation9 + $0x5a8] sm:$0xff]
    %v5134 = vld [vmem:[#allocation9 + $0x5b0] sm:$0xff]
    %v5135 = vld [vmem:[#allocation9 + $0x5b8] sm:$0xff]
    %v5136 = vld [vmem:[#allocation9 + $0x5c0] sm:$0xff]
    %v5137 = vld [vmem:[#allocation9 + $0x5c8] sm:$0xff]
    %v5138 = vld [vmem:[#allocation9 + $0x5d0] sm:$0xff]
    %v5139 = vld [vmem:[#allocation9 + $0x5d8] sm:$0xff]
    %v5140 = vld [vmem:[#allocation9 + $0x5e0] sm:$0xff]
    %v5141 = vld [vmem:[#allocation9 + $0x5e8] sm:$0xff]
    %v5142 = vld [vmem:[#allocation9 + $0x5f0] sm:$0xff]
    %v5143 = vld [vmem:[#allocation9 + $0x5f8] sm:$0xff]
    %v5144 = vld [vmem:[#allocation9 + $0x600] sm:$0xff]
    %v5145 = vld [vmem:[#allocation9 + $0x608] sm:$0xff]
    %v5146 = vld [vmem:[#allocation9 + $0x610] sm:$0xff]
    %v5147 = vld [vmem:[#allocation9 + $0x618] sm:$0xff]
    %v5148 = vld [vmem:[#allocation9 + $0x620] sm:$0xff]
    %v5149 = vld [vmem:[#allocation9 + $0x628] sm:$0xff]
    %v5150 = vld [vmem:[#allocation9 + $0x630] sm:$0xff]
    %v5151 = vld [vmem:[#allocation9 + $0x638] sm:$0xff]
    %v5152 = vld [vmem:[#allocation9 + $0x640] sm:$0xff]
    %v5153 = vld [vmem:[#allocation9 + $0x648] sm:$0xff]
    %v5154 = vld [vmem:[#allocation9 + $0x650] sm:$0xff]
    %v5155 = vld [vmem:[#allocation9 + $0x658] sm:$0xff]
    %v5156 = vld [vmem:[#allocation9 + $0x660] sm:$0xff]
    %v5157 = vld [vmem:[#allocation9 + $0x668] sm:$0xff]
    %v5158 = vld [vmem:[#allocation9 + $0x670] sm:$0xff]
    %v5159 = vld [vmem:[#allocation9 + $0x678] sm:$0xff]
    %v5160 = vld [vmem:[#allocation9 + $0x680] sm:$0xff]
    %v5161 = vld [vmem:[#allocation9 + $0x688] sm:$0xff]
    %v5162 = vld [vmem:[#allocation9 + $0x690] sm:$0xff]
    %v5163 = vld [vmem:[#allocation9 + $0x698] sm:$0xff]
    %v5164 = vld [vmem:[#allocation9 + $0x6a0] sm:$0xff]
    %v5165 = vld [vmem:[#allocation9 + $0x6a8] sm:$0xff]
    %v5166 = vld [vmem:[#allocation9 + $0x6b0] sm:$0xff]
    %v5167 = vld [vmem:[#allocation9 + $0x6b8] sm:$0xff]
    %v5168 = vld [vmem:[#allocation9 + $0x6c0] sm:$0xff]
    %v5169 = vld [vmem:[#allocation9 + $0x6c8] sm:$0xff]
    %v5170 = vld [vmem:[#allocation9 + $0x6d0] sm:$0xff]
    %v5171 = vld [vmem:[#allocation9 + $0x6d8] sm:$0xff]
    %v5172 = vld [vmem:[#allocation9 + $0x6e0] sm:$0xff]
    %v5173 = vld [vmem:[#allocation9 + $0x6e8] sm:$0xff]
    %v5174 = vld [vmem:[#allocation9 + $0x6f0] sm:$0xff]
    %v5175 = vld [vmem:[#allocation9 + $0x6f8] sm:$0xff]
    %v5176 = vld [vmem:[#allocation9 + $0x700] sm:$0xff]
    %v5177 = vld [vmem:[#allocation9 + $0x708] sm:$0xff]
    %v5178 = vld [vmem:[#allocation9 + $0x710] sm:$0xff]
    %v5179 = vld [vmem:[#allocation9 + $0x718] sm:$0xff]
    %v5180 = vld [vmem:[#allocation9 + $0x720] sm:$0xff]
    %v5181 = vld [vmem:[#allocation9 + $0x728] sm:$0xff]
    %v5182 = vld [vmem:[#allocation9 + $0x730] sm:$0xff]
    %v5183 = vld [vmem:[#allocation9 + $0x738] sm:$0xff]
    %v5184 = vld [vmem:[#allocation9 + $0x740] sm:$0xff]
    %v5185 = vld [vmem:[#allocation9 + $0x748] sm:$0xff]
    %v5186 = vld [vmem:[#allocation9 + $0x750] sm:$0xff]
    %v5187 = vld [vmem:[#allocation9 + $0x758] sm:$0xff]
    %v5188 = vld [vmem:[#allocation9 + $0x760] sm:$0xff]
    %v5189 = vld [vmem:[#allocation9 + $0x768] sm:$0xff]
    %v5190 = vld [vmem:[#allocation9 + $0x770] sm:$0xff]
    %v5191 = vld [vmem:[#allocation9 + $0x778] sm:$0xff]
    %v5192 = vld [vmem:[#allocation9 + $0x780] sm:$0xff]
    %v5193 = vld [vmem:[#allocation9 + $0x788] sm:$0xff]
    %v5194 = vld [vmem:[#allocation9 + $0x790] sm:$0xff]
    %v5195 = vld [vmem:[#allocation9 + $0x798] sm:$0xff]
    %v5196 = vld [vmem:[#allocation9 + $0x7a0] sm:$0xff]
    %v5197 = vld [vmem:[#allocation9 + $0x7a8] sm:$0xff]
    %v5198 = vld [vmem:[#allocation9 + $0x7b0] sm:$0xff]
    %v5199 = vld [vmem:[#allocation9 + $0x7b8] sm:$0xff]
    %v5200 = vld [vmem:[#allocation9 + $0x7c0] sm:$0xff]
    %v5201 = vld [vmem:[#allocation9 + $0x7c8] sm:$0xff]
    %v5202 = vld [vmem:[#allocation9 + $0x7d0] sm:$0xff]
    %v5203 = vld [vmem:[#allocation9 + $0x7d8] sm:$0xff]
    %v5204 = vld [vmem:[#allocation9 + $0x7e0] sm:$0xff]
    %v5205 = vld [vmem:[#allocation9 + $0x7e8] sm:$0xff]
    %v5206 = vld [vmem:[#allocation9 + $0x7f0] sm:$0xff]
    %v5207 = vld [vmem:[#allocation9 + $0x7f8] sm:$0xff]
    %v5208 = vld [vmem:[#allocation9 + $0x800] sm:$0xff]
    %v5209 = vld [vmem:[#allocation9 + $0x808] sm:$0xff]
    %v5210 = vld [vmem:[#allocation9 + $0x810] sm:$0xff]
    %v5211 = vld [vmem:[#allocation9 + $0x818] sm:$0xff]
    %v5212 = vld [vmem:[#allocation9 + $0x820] sm:$0xff]
    %v5213 = vld [vmem:[#allocation9 + $0x828] sm:$0xff]
    %v5214 = vld [vmem:[#allocation9 + $0x830] sm:$0xff]
    %v5215 = vld [vmem:[#allocation9 + $0x838] sm:$0xff]
    %v5216 = vld [vmem:[#allocation9 + $0x840] sm:$0xff]
    %v5217 = vld [vmem:[#allocation9 + $0x848] sm:$0xff]
    %v5218 = vld [vmem:[#allocation9 + $0x850] sm:$0xff]
    %v5219 = vld [vmem:[#allocation9 + $0x858] sm:$0xff]
    %v5220 = vld [vmem:[#allocation9 + $0x860] sm:$0xff]
    %v5221 = vld [vmem:[#allocation9 + $0x868] sm:$0xff]
    %v5222 = vld [vmem:[#allocation9 + $0x870] sm:$0xff]
    %v5223 = vld [vmem:[#allocation9 + $0x878] sm:$0xff]
    %v5224 = vld [vmem:[#allocation9 + $0x880] sm:$0xff]
    %v5225 = vld [vmem:[#allocation9 + $0x888] sm:$0xff]
    %v5226 = vld [vmem:[#allocation9 + $0x890] sm:$0xff]
    %v5227 = vld [vmem:[#allocation9 + $0x898] sm:$0xff]
    %v5228 = vld [vmem:[#allocation9 + $0x8a0] sm:$0xff]
    %v5229 = vld [vmem:[#allocation9 + $0x8a8] sm:$0xff]
    %v5230 = vld [vmem:[#allocation9 + $0x8b0] sm:$0xff]
    %v5231 = vld [vmem:[#allocation9 + $0x8b8] sm:$0xff]
    %v5232 = vld [vmem:[#allocation9 + $0x8c0] sm:$0xff]
    %v5233 = vld [vmem:[#allocation9 + $0x8c8] sm:$0xff]
    %v5234 = vld [vmem:[#allocation9 + $0x8d0] sm:$0xff]
    %v5235 = vld [vmem:[#allocation9 + $0x8d8] sm:$0xff]
    %v5236 = vld [vmem:[#allocation9 + $0x8e0] sm:$0xff]
    %v5237 = vld [vmem:[#allocation9 + $0x8e8] sm:$0xff]
    %v5238 = vld [vmem:[#allocation9 + $0x8f0] sm:$0xff]
    %v5239 = vld [vmem:[#allocation9 + $0x8f8] sm:$0xff]
    %v5240 = vld [vmem:[#allocation9 + $0x900] sm:$0xff]
    %v5241 = vld [vmem:[#allocation9 + $0x908] sm:$0xff]
    %v5242 = vld [vmem:[#allocation9 + $0x910] sm:$0xff]
    %v5243 = vld [vmem:[#allocation9 + $0x918] sm:$0xff]
    %v5244 = vld [vmem:[#allocation9 + $0x920] sm:$0xff]
    %v5245 = vld [vmem:[#allocation9 + $0x928] sm:$0xff]
    %v5246 = vld [vmem:[#allocation9 + $0x930] sm:$0xff]
    %v5247 = vld [vmem:[#allocation9 + $0x938] sm:$0xff]
    %v5248 = vld [vmem:[#allocation9 + $0x940] sm:$0xff]
    %v5249 = vld [vmem:[#allocation9 + $0x948] sm:$0xff]
    %v5250 = vld [vmem:[#allocation9 + $0x950] sm:$0xff]
    %v5251 = vld [vmem:[#allocation9 + $0x958] sm:$0xff]
    %v5252 = vld [vmem:[#allocation9 + $0x960] sm:$0xff]
    %v5253 = vld [vmem:[#allocation9 + $0x968] sm:$0xff]
    %v5254 = vld [vmem:[#allocation9 + $0x970] sm:$0xff]
    %v5255 = vld [vmem:[#allocation9 + $0x978] sm:$0xff]
    %v5256 = vld [vmem:[#allocation9 + $0x980] sm:$0xff]
    %v5257 = vld [vmem:[#allocation9 + $0x988] sm:$0xff]
    %v5258 = vld [vmem:[#allocation9 + $0x990] sm:$0xff]
    %v5259 = vld [vmem:[#allocation9 + $0x998] sm:$0xff]
    %v5260 = vld [vmem:[#allocation9 + $0x9a0] sm:$0xff]
    %v5261 = vld [vmem:[#allocation9 + $0x9a8] sm:$0xff]
    %v5262 = vld [vmem:[#allocation9 + $0x9b0] sm:$0xff]
    %v5263 = vld [vmem:[#allocation9 + $0x9b8] sm:$0xff]
    %v5264 = vld [vmem:[#allocation9 + $0x9c0] sm:$0xff]
    %v5265 = vld [vmem:[#allocation9 + $0x9c8] sm:$0xff]
    %v5266 = vld [vmem:[#allocation9 + $0x9d0] sm:$0xff]
    %v5267 = vld [vmem:[#allocation9 + $0x9d8] sm:$0xff]
    %v5268 = vld [vmem:[#allocation9 + $0x9e0] sm:$0xff]
    %v5269 = vld [vmem:[#allocation9 + $0x9e8] sm:$0xff]
    %v5270 = vld [vmem:[#allocation9 + $0x9f0] sm:$0xff]
    %v5271 = vld [vmem:[#allocation9 + $0x9f8] sm:$0xff]
    %v5272 = vld [vmem:[#allocation9 + $0xa00] sm:$0xff]
    %v5273 = vld [vmem:[#allocation9 + $0xa08] sm:$0xff]
    %v5274 = vld [vmem:[#allocation9 + $0xa10] sm:$0xff]
    %v5275 = vld [vmem:[#allocation9 + $0xa18] sm:$0xff]
    %v5276 = vld [vmem:[#allocation9 + $0xa20] sm:$0xff]
    %v5277 = vld [vmem:[#allocation9 + $0xa28] sm:$0xff]
    %v5278 = vld [vmem:[#allocation9 + $0xa30] sm:$0xff]
    %v5279 = vld [vmem:[#allocation9 + $0xa38] sm:$0xff]
    %v5280 = vld [vmem:[#allocation9 + $0xa40] sm:$0xff]
    %v5281 = vld [vmem:[#allocation9 + $0xa48] sm:$0xff]
    %v5282 = vld [vmem:[#allocation9 + $0xa50] sm:$0xff]
    %v5283 = vld [vmem:[#allocation9 + $0xa58] sm:$0xff]
    %v5284 = vld [vmem:[#allocation9 + $0xa60] sm:$0xff]
    %v5285 = vld [vmem:[#allocation9 + $0xa68] sm:$0xff]
    %v5286 = vld [vmem:[#allocation9 + $0xa70] sm:$0xff]
    %v5287 = vld [vmem:[#allocation9 + $0xa78] sm:$0xff]
    %v5288 = vld [vmem:[#allocation9 + $0xa80] sm:$0xff]
    %v5289 = vld [vmem:[#allocation9 + $0xa88] sm:$0xff]
    %v5290 = vld [vmem:[#allocation9 + $0xa90] sm:$0xff]
    %v5291 = vld [vmem:[#allocation9 + $0xa98] sm:$0xff]
    %v5292 = vld [vmem:[#allocation9 + $0xaa0] sm:$0xff]
    %v5293 = vld [vmem:[#allocation9 + $0xaa8] sm:$0xff]
    %v5294 = vld [vmem:[#allocation9 + $0xab0] sm:$0xff]
    %v5295 = vld [vmem:[#allocation9 + $0xab8] sm:$0xff]
    %v5296 = vld [vmem:[#allocation9 + $0xac0] sm:$0xff]
    %v5297 = vld [vmem:[#allocation9 + $0xac8] sm:$0xff]
    %v5298 = vld [vmem:[#allocation9 + $0xad0] sm:$0xff]
    %v5299 = vld [vmem:[#allocation9 + $0xad8] sm:$0xff]
    %v5300 = vld [vmem:[#allocation9 + $0xae0] sm:$0xff]
    %v5301 = vld [vmem:[#allocation9 + $0xae8] sm:$0xff]
    %v5302 = vld [vmem:[#allocation9 + $0xaf0] sm:$0xff]
    %v5303 = vld [vmem:[#allocation9 + $0xaf8] sm:$0xff]
    %v5304 = vld [vmem:[#allocation9 + $0xb00] sm:$0xff]
    %v5305 = vld [vmem:[#allocation9 + $0xb08] sm:$0xff]
    %v5306 = vld [vmem:[#allocation9 + $0xb10] sm:$0xff]
    %v5307 = vld [vmem:[#allocation9 + $0xb18] sm:$0xff]
    %v5308 = vld [vmem:[#allocation9 + $0xb20] sm:$0xff]
    %v5309 = vld [vmem:[#allocation9 + $0xb28] sm:$0xff]
    %v5310 = vld [vmem:[#allocation9 + $0xb30] sm:$0xff]
    %v5311 = vld [vmem:[#allocation9 + $0xb38] sm:$0xff]
    %v5312 = vld [vmem:[#allocation9 + $0xb40] sm:$0xff]
    %v5313 = vld [vmem:[#allocation9 + $0xb48] sm:$0xff]
    %v5314 = vld [vmem:[#allocation9 + $0xb50] sm:$0xff]
    %v5315 = vld [vmem:[#allocation9 + $0xb58] sm:$0xff]
    %v5316 = vld [vmem:[#allocation9 + $0xb60] sm:$0xff]
    %v5317 = vld [vmem:[#allocation9 + $0xb68] sm:$0xff]
    %v5318 = vld [vmem:[#allocation9 + $0xb70] sm:$0xff]
    %v5319 = vld [vmem:[#allocation9 + $0xb78] sm:$0xff]
    %v5320 = vld [vmem:[#allocation9 + $0xb80] sm:$0xff]
    %v5321 = vld [vmem:[#allocation9 + $0xb88] sm:$0xff]
    %v5322 = vld [vmem:[#allocation9 + $0xb90] sm:$0xff]
    %v5323 = vld [vmem:[#allocation9 + $0xb98] sm:$0xff]
    %v5324 = vld [vmem:[#allocation9 + $0xba0] sm:$0xff]
    %v5325 = vld [vmem:[#allocation9 + $0xba8] sm:$0xff]
    %v5326 = vld [vmem:[#allocation9 + $0xbb0] sm:$0xff]
    %v5327 = vld [vmem:[#allocation9 + $0xbb8] sm:$0xff]
    %v5328 = vld [vmem:[#allocation9 + $0xbc0] sm:$0xff]
    %v5329 = vld [vmem:[#allocation9 + $0xbc8] sm:$0xff]
    %v5330 = vld [vmem:[#allocation9 + $0xbd0] sm:$0xff]
    %v5331 = vld [vmem:[#allocation9 + $0xbd8] sm:$0xff]
    %v5332 = vld [vmem:[#allocation9 + $0xbe0] sm:$0xff]
    %v5333 = vld [vmem:[#allocation9 + $0xbe8] sm:$0xff]
    %v5334 = vld [vmem:[#allocation9 + $0xbf0] sm:$0xff]
    %v5335 = vld [vmem:[#allocation9 + $0xbf8] sm:$0xff]
    %v5336 = vld [vmem:[#allocation9 + $0xc00] sm:$0xff]
    %v5337 = vld [vmem:[#allocation9 + $0xc08] sm:$0xff]
    %v5338 = vld [vmem:[#allocation9 + $0xc10] sm:$0xff]
    %v5339 = vld [vmem:[#allocation9 + $0xc18] sm:$0xff]
    %v5340 = vld [vmem:[#allocation9 + $0xc20] sm:$0xff]
    %v5341 = vld [vmem:[#allocation9 + $0xc28] sm:$0xff]
    %v5342 = vld [vmem:[#allocation9 + $0xc30] sm:$0xff]
    %v5343 = vld [vmem:[#allocation9 + $0xc38] sm:$0xff]
    %v5344 = vld [vmem:[#allocation9 + $0xc40] sm:$0xff]
    %v5345 = vld [vmem:[#allocation9 + $0xc48] sm:$0xff]
    %v5346 = vld [vmem:[#allocation9 + $0xc50] sm:$0xff]
    %v5347 = vld [vmem:[#allocation9 + $0xc58] sm:$0xff]
    %v5348 = vld [vmem:[#allocation9 + $0xc60] sm:$0xff]
    %v5349 = vld [vmem:[#allocation9 + $0xc68] sm:$0xff]
    %v5350 = vld [vmem:[#allocation9 + $0xc70] sm:$0xff]
    %v5351 = vld [vmem:[#allocation9 + $0xc78] sm:$0xff]
    %v5352 = vld [vmem:[#allocation9 + $0xc80] sm:$0xff]
    %v5353 = vld [vmem:[#allocation9 + $0xc88] sm:$0xff]
    %v5354 = vld [vmem:[#allocation9 + $0xc90] sm:$0xff]
    %v5355 = vld [vmem:[#allocation9 + $0xc98] sm:$0xff]
    %v5356 = vld [vmem:[#allocation9 + $0xca0] sm:$0xff]
    %v5357 = vld [vmem:[#allocation9 + $0xca8] sm:$0xff]
    %v5358 = vld [vmem:[#allocation9 + $0xcb0] sm:$0xff]
    %v5359 = vld [vmem:[#allocation9 + $0xcb8] sm:$0xff]
    %v5360 = vld [vmem:[#allocation9 + $0xcc0] sm:$0xff]
    %v5361 = vld [vmem:[#allocation9 + $0xcc8] sm:$0xff]
    %v5362 = vld [vmem:[#allocation9 + $0xcd0] sm:$0xff]
    %v5363 = vld [vmem:[#allocation9 + $0xcd8] sm:$0xff]
    %v5364 = vld [vmem:[#allocation9 + $0xce0] sm:$0xff]
    %v5365 = vld [vmem:[#allocation9 + $0xce8] sm:$0xff]
    %v5366 = vld [vmem:[#allocation9 + $0xcf0] sm:$0xff]
    %v5367 = vld [vmem:[#allocation9 + $0xcf8] sm:$0xff]
    %v5368 = vld [vmem:[#allocation9 + $0xd00] sm:$0xff]
    %v5369 = vld [vmem:[#allocation9 + $0xd08] sm:$0xff]
    %v5370 = vld [vmem:[#allocation9 + $0xd10] sm:$0xff]
    %v5371 = vld [vmem:[#allocation9 + $0xd18] sm:$0xff]
    %v5372 = vld [vmem:[#allocation9 + $0xd20] sm:$0xff]
    %v5373 = vld [vmem:[#allocation9 + $0xd28] sm:$0xff]
    %v5374 = vld [vmem:[#allocation9 + $0xd30] sm:$0xff]
    %v5375 = vld [vmem:[#allocation9 + $0xd38] sm:$0xff]
    %v5376 = vld [vmem:[#allocation9 + $0xd40] sm:$0xff]
    %v5377 = vld [vmem:[#allocation9 + $0xd48] sm:$0xff]
    %v5378 = vld [vmem:[#allocation9 + $0xd50] sm:$0xff]
    %v5379 = vld [vmem:[#allocation9 + $0xd58] sm:$0xff]
    %v5380 = vld [vmem:[#allocation9 + $0xd60] sm:$0xff]
    %v5381 = vld [vmem:[#allocation9 + $0xd68] sm:$0xff]
    %v5382 = vld [vmem:[#allocation9 + $0xd70] sm:$0xff]
    %v5383 = vld [vmem:[#allocation9 + $0xd78] sm:$0xff]
    %v5384 = vld [vmem:[#allocation9 + $0xd80] sm:$0xff]
    %v5385 = vld [vmem:[#allocation9 + $0xd88] sm:$0xff]
    %v5386 = vld [vmem:[#allocation9 + $0xd90] sm:$0xff]
    %v5387 = vld [vmem:[#allocation9 + $0xd98] sm:$0xff]
    %v5388 = vld [vmem:[#allocation9 + $0xda0] sm:$0xff]
    %v5389 = vld [vmem:[#allocation9 + $0xda8] sm:$0xff]
    %v5390 = vld [vmem:[#allocation9 + $0xdb0] sm:$0xff]
    %v5391 = vld [vmem:[#allocation9 + $0xdb8] sm:$0xff]
    %v5392 = vld [vmem:[#allocation9 + $0xdc0] sm:$0xff]
    %v5393 = vld [vmem:[#allocation9 + $0xdc8] sm:$0xff]
    %v5394 = vld [vmem:[#allocation9 + $0xdd0] sm:$0xff]
    %v5395 = vld [vmem:[#allocation9 + $0xdd8] sm:$0xff]
    %v5396 = vld [vmem:[#allocation9 + $0xde0] sm:$0xff]
    %v5397 = vld [vmem:[#allocation9 + $0xde8] sm:$0xff]
    %v5398 = vld [vmem:[#allocation9 + $0xdf0] sm:$0xff]
    %v5399 = vld [vmem:[#allocation9 + $0xdf8] sm:$0xff]
    %v5400 = vld [vmem:[#allocation9 + $0xe00] sm:$0xff]
    %v5401 = vld [vmem:[#allocation9 + $0xe08] sm:$0xff]
    %v5402 = vld [vmem:[#allocation9 + $0xe10] sm:$0xff]
    %v5403 = vld [vmem:[#allocation9 + $0xe18] sm:$0xff]
    %v5404 = vld [vmem:[#allocation9 + $0xe20] sm:$0xff]
    %v5405 = vld [vmem:[#allocation9 + $0xe28] sm:$0xff]
    %v5406 = vld [vmem:[#allocation9 + $0xe30] sm:$0xff]
    %v5407 = vld [vmem:[#allocation9 + $0xe38] sm:$0xff]
    %v5408 = vld [vmem:[#allocation9 + $0xe40] sm:$0xff]
    %v5409 = vld [vmem:[#allocation9 + $0xe48] sm:$0xff]
    %v5410 = vld [vmem:[#allocation9 + $0xe50] sm:$0xff]
    %v5411 = vld [vmem:[#allocation9 + $0xe58] sm:$0xff]
    %v5412 = vld [vmem:[#allocation9 + $0xe60] sm:$0xff]
    %v5413 = vld [vmem:[#allocation9 + $0xe68] sm:$0xff]
    %v5414 = vld [vmem:[#allocation9 + $0xe70] sm:$0xff]
    %v5415 = vld [vmem:[#allocation9 + $0xe78] sm:$0xff]
    %v5416 = vld [vmem:[#allocation9 + $0xe80] sm:$0xff]
    %v5417 = vld [vmem:[#allocation9 + $0xe88] sm:$0xff]
    %v5418 = vld [vmem:[#allocation9 + $0xe90] sm:$0xff]
    %v5419 = vld [vmem:[#allocation9 + $0xe98] sm:$0xff]
    %v5420 = vld [vmem:[#allocation9 + $0xea0] sm:$0xff]
    %v5421 = vld [vmem:[#allocation9 + $0xea8] sm:$0xff]
    %v5422 = vld [vmem:[#allocation9 + $0xeb0] sm:$0xff]
    %v5423 = vld [vmem:[#allocation9 + $0xeb8] sm:$0xff]
    %v5424 = vld [vmem:[#allocation9 + $0xec0] sm:$0xff]
    %v5425 = vld [vmem:[#allocation9 + $0xec8] sm:$0xff]
    %v5426 = vld [vmem:[#allocation9 + $0xed0] sm:$0xff]
    %v5427 = vld [vmem:[#allocation9 + $0xed8] sm:$0xff]
    %v5428 = vld [vmem:[#allocation9 + $0xee0] sm:$0xff]
    %v5429 = vld [vmem:[#allocation9 + $0xee8] sm:$0xff]
    %v5430 = vld [vmem:[#allocation9 + $0xef0] sm:$0xff]
    %v5431 = vld [vmem:[#allocation9 + $0xef8] sm:$0xff]
    %v5432 = vld [vmem:[#allocation10] sm:$0xf]
    %v5434 = vlaneseq
    %v5435 = vshrl.u32 %v5434, 7
    %v5436 = vsub.s32 0, %v5435
    %v5437 = vrot.slane %v5432, %v5436
    %v5438 = vlaneseq
    %v5439 = vshrl.u32 %v5438, 7
    %v5440 = vsub.s32 1, %v5439
    %v5441 = vrot.slane %v5432, %v5440
    %v5442 = vlaneseq
    %v5443 = vshrl.u32 %v5442, 7
    %v5444 = vsub.s32 2, %v5443
    %v5445 = vrot.slane %v5432, %v5444
    %v5446 = vlaneseq
    %v5447 = vshrl.u32 %v5446, 7
    %v5448 = vsub.s32 3, %v5447
    %v5449 = vrot.slane %v5432, %v5448
    %v5934 = vunpack.c.l.b16 %v4952
    %v5935 = vunpack.c.h.b16 %v4952
    %v5936 = vunpack.c.l.b16 %v4953
    %v5937 = vunpack.c.h.b16 %v4953
    %v5938 = vunpack.c.l.b16 %v4954
    %v5939 = vunpack.c.h.b16 %v4954
    %v5940 = vunpack.c.l.b16 %v4955
    %v5941 = vunpack.c.h.b16 %v4955
    %v5942 = vunpack.c.l.b16 %v4956
    %v5943 = vunpack.c.h.b16 %v4956
    %v5944 = vunpack.c.l.b16 %v4957
    %v5945 = vunpack.c.h.b16 %v4957
    %v5946 = vunpack.c.l.b16 %v4958
    %v5947 = vunpack.c.h.b16 %v4958
    %v5948 = vunpack.c.l.b16 %v4959
    %v5949 = vunpack.c.h.b16 %v4959
    %v5950 = vunpack.c.l.b16 %v4960
    %v5951 = vunpack.c.h.b16 %v4960
    %v5952 = vunpack.c.l.b16 %v4961
    %v5953 = vunpack.c.h.b16 %v4961
    %v5954 = vunpack.c.l.b16 %v4962
    %v5955 = vunpack.c.h.b16 %v4962
    %v5956 = vunpack.c.l.b16 %v4963
    %v5957 = vunpack.c.h.b16 %v4963
    %v5958 = vunpack.c.l.b16 %v4964
    %v5959 = vunpack.c.h.b16 %v4964
    %v5960 = vunpack.c.l.b16 %v4965
    %v5961 = vunpack.c.h.b16 %v4965
    %v5962 = vunpack.c.l.b16 %v4966
    %v5963 = vunpack.c.h.b16 %v4966
    %v5964 = vunpack.c.l.b16 %v4967
    %v5965 = vunpack.c.h.b16 %v4967
    %v5966 = vunpack.c.l.b16 %v4968
    %v5967 = vunpack.c.h.b16 %v4968
    %v5968 = vunpack.c.l.b16 %v4969
    %v5969 = vunpack.c.h.b16 %v4969
    %v5970 = vunpack.c.l.b16 %v4970
    %v5971 = vunpack.c.h.b16 %v4970
    %v5972 = vunpack.c.l.b16 %v4971
    %v5973 = vunpack.c.h.b16 %v4971
    %v5974 = vunpack.c.l.b16 %v4972
    %v5975 = vunpack.c.h.b16 %v4972
    %v5976 = vunpack.c.l.b16 %v4973
    %v5977 = vunpack.c.h.b16 %v4973
    %v5978 = vunpack.c.l.b16 %v4974
    %v5979 = vunpack.c.h.b16 %v4974
    %v5980 = vunpack.c.l.b16 %v4975
    %v5981 = vunpack.c.h.b16 %v4975
    %v5982 = vunpack.c.l.b16 %v4976
    %v5983 = vunpack.c.h.b16 %v4976
    %v5984 = vunpack.c.l.b16 %v4977
    %v5985 = vunpack.c.h.b16 %v4977
    %v5986 = vunpack.c.l.b16 %v4978
    %v5987 = vunpack.c.h.b16 %v4978
    %v5988 = vunpack.c.l.b16 %v4979
    %v5989 = vunpack.c.h.b16 %v4979
    %v5990 = vunpack.c.l.b16 %v4980
    %v5991 = vunpack.c.h.b16 %v4980
    %v5992 = vunpack.c.l.b16 %v4981
    %v5993 = vunpack.c.h.b16 %v4981
    %v5994 = vunpack.c.l.b16 %v4982
    %v5995 = vunpack.c.h.b16 %v4982
    %v5996 = vunpack.c.l.b16 %v4983
    %v5997 = vunpack.c.h.b16 %v4983
    %v5998 = vunpack.c.l.b16 %v4984
    %v5999 = vunpack.c.h.b16 %v4984
    %v6000 = vunpack.c.l.b16 %v4985
    %v6001 = vunpack.c.h.b16 %v4985
    %v6002 = vunpack.c.l.b16 %v4986
    %v6003 = vunpack.c.h.b16 %v4986
    %v6004 = vunpack.c.l.b16 %v4987
    %v6005 = vunpack.c.h.b16 %v4987
    %v6006 = vunpack.c.l.b16 %v4988
    %v6007 = vunpack.c.h.b16 %v4988
    %v6008 = vunpack.c.l.b16 %v4989
    %v6009 = vunpack.c.h.b16 %v4989
    %v6010 = vunpack.c.l.b16 %v4990
    %v6011 = vunpack.c.h.b16 %v4990
    %v6012 = vunpack.c.l.b16 %v4991
    %v6013 = vunpack.c.h.b16 %v4991
    %v6014 = vunpack.c.l.b16 %v4992
    %v6015 = vunpack.c.h.b16 %v4992
    %v6016 = vunpack.c.l.b16 %v4993
    %v6017 = vunpack.c.h.b16 %v4993
    %v6018 = vunpack.c.l.b16 %v4994
    %v6019 = vunpack.c.h.b16 %v4994
    %v6020 = vunpack.c.l.b16 %v4995
    %v6021 = vunpack.c.h.b16 %v4995
    %v6022 = vunpack.c.l.b16 %v4996
    %v6023 = vunpack.c.h.b16 %v4996
    %v6024 = vunpack.c.l.b16 %v4997
    %v6025 = vunpack.c.h.b16 %v4997
    %v6026 = vunpack.c.l.b16 %v4998
    %v6027 = vunpack.c.h.b16 %v4998
    %v6028 = vunpack.c.l.b16 %v4999
    %v6029 = vunpack.c.h.b16 %v4999
    %v6030 = vunpack.c.l.b16 %v5000
    %v6031 = vunpack.c.h.b16 %v5000
    %v6032 = vunpack.c.l.b16 %v5001
    %v6033 = vunpack.c.h.b16 %v5001
    %v6034 = vunpack.c.l.b16 %v5002
    %v6035 = vunpack.c.h.b16 %v5002
    %v6036 = vunpack.c.l.b16 %v5003
    %v6037 = vunpack.c.h.b16 %v5003
    %v6038 = vunpack.c.l.b16 %v5004
    %v6039 = vunpack.c.h.b16 %v5004
    %v6040 = vunpack.c.l.b16 %v5005
    %v6041 = vunpack.c.h.b16 %v5005
    %v6042 = vunpack.c.l.b16 %v5006
    %v6043 = vunpack.c.h.b16 %v5006
    %v6044 = vunpack.c.l.b16 %v5007
    %v6045 = vunpack.c.h.b16 %v5007
    %v6046 = vunpack.c.l.b16 %v5008
    %v6047 = vunpack.c.h.b16 %v5008
    %v6048 = vunpack.c.l.b16 %v5009
    %v6049 = vunpack.c.h.b16 %v5009
    %v6050 = vunpack.c.l.b16 %v5010
    %v6051 = vunpack.c.h.b16 %v5010
    %v6052 = vunpack.c.l.b16 %v5011
    %v6053 = vunpack.c.h.b16 %v5011
    %v6054 = vunpack.c.l.b16 %v5012
    %v6055 = vunpack.c.h.b16 %v5012
    %v6056 = vunpack.c.l.b16 %v5013
    %v6057 = vunpack.c.h.b16 %v5013
    %v6058 = vunpack.c.l.b16 %v5014
    %v6059 = vunpack.c.h.b16 %v5014
    %v6060 = vunpack.c.l.b16 %v5015
    %v6061 = vunpack.c.h.b16 %v5015
    %v6062 = vunpack.c.l.b16 %v5016
    %v6063 = vunpack.c.h.b16 %v5016
    %v6064 = vunpack.c.l.b16 %v5017
    %v6065 = vunpack.c.h.b16 %v5017
    %v6066 = vunpack.c.l.b16 %v5018
    %v6067 = vunpack.c.h.b16 %v5018
    %v6068 = vunpack.c.l.b16 %v5019
    %v6069 = vunpack.c.h.b16 %v5019
    %v6070 = vunpack.c.l.b16 %v5020
    %v6071 = vunpack.c.h.b16 %v5020
    %v6072 = vunpack.c.l.b16 %v5021
    %v6073 = vunpack.c.h.b16 %v5021
    %v6074 = vunpack.c.l.b16 %v5022
    %v6075 = vunpack.c.h.b16 %v5022
    %v6076 = vunpack.c.l.b16 %v5023
    %v6077 = vunpack.c.h.b16 %v5023
    %v6078 = vunpack.c.l.b16 %v5024
    %v6079 = vunpack.c.h.b16 %v5024
    %v6080 = vunpack.c.l.b16 %v5025
    %v6081 = vunpack.c.h.b16 %v5025
    %v6082 = vunpack.c.l.b16 %v5026
    %v6083 = vunpack.c.h.b16 %v5026
    %v6084 = vunpack.c.l.b16 %v5027
    %v6085 = vunpack.c.h.b16 %v5027
    %v6086 = vunpack.c.l.b16 %v5028
    %v6087 = vunpack.c.h.b16 %v5028
    %v6088 = vunpack.c.l.b16 %v5029
    %v6089 = vunpack.c.h.b16 %v5029
    %v6090 = vunpack.c.l.b16 %v5030
    %v6091 = vunpack.c.h.b16 %v5030
    %v6092 = vunpack.c.l.b16 %v5031
    %v6093 = vunpack.c.h.b16 %v5031
    %v6094 = vunpack.c.l.b16 %v5032
    %v6095 = vunpack.c.h.b16 %v5032
    %v6096 = vunpack.c.l.b16 %v5033
    %v6097 = vunpack.c.h.b16 %v5033
    %v6098 = vunpack.c.l.b16 %v5034
    %v6099 = vunpack.c.h.b16 %v5034
    %v6100 = vunpack.c.l.b16 %v5035
    %v6101 = vunpack.c.h.b16 %v5035
    %v6102 = vunpack.c.l.b16 %v5036
    %v6103 = vunpack.c.h.b16 %v5036
    %v6104 = vunpack.c.l.b16 %v5037
    %v6105 = vunpack.c.h.b16 %v5037
    %v6106 = vunpack.c.l.b16 %v5038
    %v6107 = vunpack.c.h.b16 %v5038
    %v6108 = vunpack.c.l.b16 %v5039
    %v6109 = vunpack.c.h.b16 %v5039
    %v6110 = vunpack.c.l.b16 %v5040
    %v6111 = vunpack.c.h.b16 %v5040
    %v6112 = vunpack.c.l.b16 %v5041
    %v6113 = vunpack.c.h.b16 %v5041
    %v6114 = vunpack.c.l.b16 %v5042
    %v6115 = vunpack.c.h.b16 %v5042
    %v6116 = vunpack.c.l.b16 %v5043
    %v6117 = vunpack.c.h.b16 %v5043
    %v6118 = vunpack.c.l.b16 %v5044
    %v6119 = vunpack.c.h.b16 %v5044
    %v6120 = vunpack.c.l.b16 %v5045
    %v6121 = vunpack.c.h.b16 %v5045
    %v6122 = vunpack.c.l.b16 %v5046
    %v6123 = vunpack.c.h.b16 %v5046
    %v6124 = vunpack.c.l.b16 %v5047
    %v6125 = vunpack.c.h.b16 %v5047
    %v6126 = vunpack.c.l.b16 %v5048
    %v6127 = vunpack.c.h.b16 %v5048
    %v6128 = vunpack.c.l.b16 %v5049
    %v6129 = vunpack.c.h.b16 %v5049
    %v6130 = vunpack.c.l.b16 %v5050
    %v6131 = vunpack.c.h.b16 %v5050
    %v6132 = vunpack.c.l.b16 %v5051
    %v6133 = vunpack.c.h.b16 %v5051
    %v6134 = vunpack.c.l.b16 %v5052
    %v6135 = vunpack.c.h.b16 %v5052
    %v6136 = vunpack.c.l.b16 %v5053
    %v6137 = vunpack.c.h.b16 %v5053
    %v6138 = vunpack.c.l.b16 %v5054
    %v6139 = vunpack.c.h.b16 %v5054
    %v6140 = vunpack.c.l.b16 %v5055
    %v6141 = vunpack.c.h.b16 %v5055
    %v6142 = vunpack.c.l.b16 %v5056
    %v6143 = vunpack.c.h.b16 %v5056
    %v6144 = vunpack.c.l.b16 %v5057
    %v6145 = vunpack.c.h.b16 %v5057
    %v6146 = vunpack.c.l.b16 %v5058
    %v6147 = vunpack.c.h.b16 %v5058
    %v6148 = vunpack.c.l.b16 %v5059
    %v6149 = vunpack.c.h.b16 %v5059
    %v6150 = vunpack.c.l.b16 %v5060
    %v6151 = vunpack.c.h.b16 %v5060
    %v6152 = vunpack.c.l.b16 %v5061
    %v6153 = vunpack.c.h.b16 %v5061
    %v6154 = vunpack.c.l.b16 %v5062
    %v6155 = vunpack.c.h.b16 %v5062
    %v6156 = vunpack.c.l.b16 %v5063
    %v6157 = vunpack.c.h.b16 %v5063
    %v6158 = vunpack.c.l.b16 %v5064
    %v6159 = vunpack.c.h.b16 %v5064
    %v6160 = vunpack.c.l.b16 %v5065
    %v6161 = vunpack.c.h.b16 %v5065
    %v6162 = vunpack.c.l.b16 %v5066
    %v6163 = vunpack.c.h.b16 %v5066
    %v6164 = vunpack.c.l.b16 %v5067
    %v6165 = vunpack.c.h.b16 %v5067
    %v6166 = vunpack.c.l.b16 %v5068
    %v6167 = vunpack.c.h.b16 %v5068
    %v6168 = vunpack.c.l.b16 %v5069
    %v6169 = vunpack.c.h.b16 %v5069
    %v6170 = vunpack.c.l.b16 %v5070
    %v6171 = vunpack.c.h.b16 %v5070
    %v6172 = vunpack.c.l.b16 %v5071
    %v6173 = vunpack.c.h.b16 %v5071
    %v6174 = vunpack.c.l.b16 %v5072
    %v6175 = vunpack.c.h.b16 %v5072
    %v6176 = vunpack.c.l.b16 %v5073
    %v6177 = vunpack.c.h.b16 %v5073
    %v6178 = vunpack.c.l.b16 %v5074
    %v6179 = vunpack.c.h.b16 %v5074
    %v6180 = vunpack.c.l.b16 %v5075
    %v6181 = vunpack.c.h.b16 %v5075
    %v6182 = vunpack.c.l.b16 %v5076
    %v6183 = vunpack.c.h.b16 %v5076
    %v6184 = vunpack.c.l.b16 %v5077
    %v6185 = vunpack.c.h.b16 %v5077
    %v6186 = vunpack.c.l.b16 %v5078
    %v6187 = vunpack.c.h.b16 %v5078
    %v6188 = vunpack.c.l.b16 %v5079
    %v6189 = vunpack.c.h.b16 %v5079
    %v6190 = vunpack.c.l.b16 %v5080
    %v6191 = vunpack.c.h.b16 %v5080
    %v6192 = vunpack.c.l.b16 %v5081
    %v6193 = vunpack.c.h.b16 %v5081
    %v6194 = vunpack.c.l.b16 %v5082
    %v6195 = vunpack.c.h.b16 %v5082
    %v6196 = vunpack.c.l.b16 %v5083
    %v6197 = vunpack.c.h.b16 %v5083
    %v6198 = vunpack.c.l.b16 %v5084
    %v6199 = vunpack.c.h.b16 %v5084
    %v6200 = vunpack.c.l.b16 %v5085
    %v6201 = vunpack.c.h.b16 %v5085
    %v6202 = vunpack.c.l.b16 %v5086
    %v6203 = vunpack.c.h.b16 %v5086
    %v6204 = vunpack.c.l.b16 %v5087
    %v6205 = vunpack.c.h.b16 %v5087
    %v6206 = vunpack.c.l.b16 %v5088
    %v6207 = vunpack.c.h.b16 %v5088
    %v6208 = vunpack.c.l.b16 %v5089
    %v6209 = vunpack.c.h.b16 %v5089
    %v6210 = vunpack.c.l.b16 %v5090
    %v6211 = vunpack.c.h.b16 %v5090
    %v6212 = vunpack.c.l.b16 %v5091
    %v6213 = vunpack.c.h.b16 %v5091
    %v6214 = vunpack.c.l.b16 %v5092
    %v6215 = vunpack.c.h.b16 %v5092
    %v6216 = vunpack.c.l.b16 %v5093
    %v6217 = vunpack.c.h.b16 %v5093
    %v6218 = vunpack.c.l.b16 %v5094
    %v6219 = vunpack.c.h.b16 %v5094
    %v6220 = vunpack.c.l.b16 %v5095
    %v6221 = vunpack.c.h.b16 %v5095
    %v6222 = vunpack.c.l.b16 %v5096
    %v6223 = vunpack.c.h.b16 %v5096
    %v6224 = vunpack.c.l.b16 %v5097
    %v6225 = vunpack.c.h.b16 %v5097
    %v6226 = vunpack.c.l.b16 %v5098
    %v6227 = vunpack.c.h.b16 %v5098
    %v6228 = vunpack.c.l.b16 %v5099
    %v6229 = vunpack.c.h.b16 %v5099
    %v6230 = vunpack.c.l.b16 %v5100
    %v6231 = vunpack.c.h.b16 %v5100
    %v6232 = vunpack.c.l.b16 %v5101
    %v6233 = vunpack.c.h.b16 %v5101
    %v6234 = vunpack.c.l.b16 %v5102
    %v6235 = vunpack.c.h.b16 %v5102
    %v6236 = vunpack.c.l.b16 %v5103
    %v6237 = vunpack.c.h.b16 %v5103
    %v6238 = vunpack.c.l.b16 %v5104
    %v6239 = vunpack.c.h.b16 %v5104
    %v6240 = vunpack.c.l.b16 %v5105
    %v6241 = vunpack.c.h.b16 %v5105
    %v6242 = vunpack.c.l.b16 %v5106
    %v6243 = vunpack.c.h.b16 %v5106
    %v6244 = vunpack.c.l.b16 %v5107
    %v6245 = vunpack.c.h.b16 %v5107
    %v6246 = vunpack.c.l.b16 %v5108
    %v6247 = vunpack.c.h.b16 %v5108
    %v6248 = vunpack.c.l.b16 %v5109
    %v6249 = vunpack.c.h.b16 %v5109
    %v6250 = vunpack.c.l.b16 %v5110
    %v6251 = vunpack.c.h.b16 %v5110
    %v6252 = vunpack.c.l.b16 %v5111
    %v6253 = vunpack.c.h.b16 %v5111
    %v6254 = vunpack.c.l.b16 %v5112
    %v6255 = vunpack.c.h.b16 %v5112
    %v6256 = vunpack.c.l.b16 %v5113
    %v6257 = vunpack.c.h.b16 %v5113
    %v6258 = vunpack.c.l.b16 %v5114
    %v6259 = vunpack.c.h.b16 %v5114
    %v6260 = vunpack.c.l.b16 %v5115
    %v6261 = vunpack.c.h.b16 %v5115
    %v6262 = vunpack.c.l.b16 %v5116
    %v6263 = vunpack.c.h.b16 %v5116
    %v6264 = vunpack.c.l.b16 %v5117
    %v6265 = vunpack.c.h.b16 %v5117
    %v6266 = vunpack.c.l.b16 %v5118
    %v6267 = vunpack.c.h.b16 %v5118
    %v6268 = vunpack.c.l.b16 %v5119
    %v6269 = vunpack.c.h.b16 %v5119
    %v6270 = vunpack.c.l.b16 %v5120
    %v6271 = vunpack.c.h.b16 %v5120
    %v6272 = vunpack.c.l.b16 %v5121
    %v6273 = vunpack.c.h.b16 %v5121
    %v6274 = vunpack.c.l.b16 %v5122
    %v6275 = vunpack.c.h.b16 %v5122
    %v6276 = vunpack.c.l.b16 %v5123
    %v6277 = vunpack.c.h.b16 %v5123
    %v6278 = vunpack.c.l.b16 %v5124
    %v6279 = vunpack.c.h.b16 %v5124
    %v6280 = vunpack.c.l.b16 %v5125
    %v6281 = vunpack.c.h.b16 %v5125
    %v6282 = vunpack.c.l.b16 %v5126
    %v6283 = vunpack.c.h.b16 %v5126
    %v6284 = vunpack.c.l.b16 %v5127
    %v6285 = vunpack.c.h.b16 %v5127
    %v6286 = vunpack.c.l.b16 %v5128
    %v6287 = vunpack.c.h.b16 %v5128
    %v6288 = vunpack.c.l.b16 %v5129
    %v6289 = vunpack.c.h.b16 %v5129
    %v6290 = vunpack.c.l.b16 %v5130
    %v6291 = vunpack.c.h.b16 %v5130
    %v6292 = vunpack.c.l.b16 %v5131
    %v6293 = vunpack.c.h.b16 %v5131
    %v6294 = vunpack.c.l.b16 %v5132
    %v6295 = vunpack.c.h.b16 %v5132
    %v6296 = vunpack.c.l.b16 %v5133
    %v6297 = vunpack.c.h.b16 %v5133
    %v6298 = vunpack.c.l.b16 %v5134
    %v6299 = vunpack.c.h.b16 %v5134
    %v6300 = vunpack.c.l.b16 %v5135
    %v6301 = vunpack.c.h.b16 %v5135
    %v6302 = vunpack.c.l.b16 %v5136
    %v6303 = vunpack.c.h.b16 %v5136
    %v6304 = vunpack.c.l.b16 %v5137
    %v6305 = vunpack.c.h.b16 %v5137
    %v6306 = vunpack.c.l.b16 %v5138
    %v6307 = vunpack.c.h.b16 %v5138
    %v6308 = vunpack.c.l.b16 %v5139
    %v6309 = vunpack.c.h.b16 %v5139
    %v6310 = vunpack.c.l.b16 %v5140
    %v6311 = vunpack.c.h.b16 %v5140
    %v6312 = vunpack.c.l.b16 %v5141
    %v6313 = vunpack.c.h.b16 %v5141
    %v6314 = vunpack.c.l.b16 %v5142
    %v6315 = vunpack.c.h.b16 %v5142
    %v6316 = vunpack.c.l.b16 %v5143
    %v6317 = vunpack.c.h.b16 %v5143
    %v6318 = vunpack.c.l.b16 %v5144
    %v6319 = vunpack.c.h.b16 %v5144
    %v6320 = vunpack.c.l.b16 %v5145
    %v6321 = vunpack.c.h.b16 %v5145
    %v6322 = vunpack.c.l.b16 %v5146
    %v6323 = vunpack.c.h.b16 %v5146
    %v6324 = vunpack.c.l.b16 %v5147
    %v6325 = vunpack.c.h.b16 %v5147
    %v6326 = vunpack.c.l.b16 %v5148
    %v6327 = vunpack.c.h.b16 %v5148
    %v6328 = vunpack.c.l.b16 %v5149
    %v6329 = vunpack.c.h.b16 %v5149
    %v6330 = vunpack.c.l.b16 %v5150
    %v6331 = vunpack.c.h.b16 %v5150
    %v6332 = vunpack.c.l.b16 %v5151
    %v6333 = vunpack.c.h.b16 %v5151
    %v6334 = vunpack.c.l.b16 %v5152
    %v6335 = vunpack.c.h.b16 %v5152
    %v6336 = vunpack.c.l.b16 %v5153
    %v6337 = vunpack.c.h.b16 %v5153
    %v6338 = vunpack.c.l.b16 %v5154
    %v6339 = vunpack.c.h.b16 %v5154
    %v6340 = vunpack.c.l.b16 %v5155
    %v6341 = vunpack.c.h.b16 %v5155
    %v6342 = vunpack.c.l.b16 %v5156
    %v6343 = vunpack.c.h.b16 %v5156
    %v6344 = vunpack.c.l.b16 %v5157
    %v6345 = vunpack.c.h.b16 %v5157
    %v6346 = vunpack.c.l.b16 %v5158
    %v6347 = vunpack.c.h.b16 %v5158
    %v6348 = vunpack.c.l.b16 %v5159
    %v6349 = vunpack.c.h.b16 %v5159
    %v6350 = vunpack.c.l.b16 %v5160
    %v6351 = vunpack.c.h.b16 %v5160
    %v6352 = vunpack.c.l.b16 %v5161
    %v6353 = vunpack.c.h.b16 %v5161
    %v6354 = vunpack.c.l.b16 %v5162
    %v6355 = vunpack.c.h.b16 %v5162
    %v6356 = vunpack.c.l.b16 %v5163
    %v6357 = vunpack.c.h.b16 %v5163
    %v6358 = vunpack.c.l.b16 %v5164
    %v6359 = vunpack.c.h.b16 %v5164
    %v6360 = vunpack.c.l.b16 %v5165
    %v6361 = vunpack.c.h.b16 %v5165
    %v6362 = vunpack.c.l.b16 %v5166
    %v6363 = vunpack.c.h.b16 %v5166
    %v6364 = vunpack.c.l.b16 %v5167
    %v6365 = vunpack.c.h.b16 %v5167
    %v6366 = vunpack.c.l.b16 %v5168
    %v6367 = vunpack.c.h.b16 %v5168
    %v6368 = vunpack.c.l.b16 %v5169
    %v6369 = vunpack.c.h.b16 %v5169
    %v6370 = vunpack.c.l.b16 %v5170
    %v6371 = vunpack.c.h.b16 %v5170
    %v6372 = vunpack.c.l.b16 %v5171
    %v6373 = vunpack.c.h.b16 %v5171
    %v6374 = vunpack.c.l.b16 %v5172
    %v6375 = vunpack.c.h.b16 %v5172
    %v6376 = vunpack.c.l.b16 %v5173
    %v6377 = vunpack.c.h.b16 %v5173
    %v6378 = vunpack.c.l.b16 %v5174
    %v6379 = vunpack.c.h.b16 %v5174
    %v6380 = vunpack.c.l.b16 %v5175
    %v6381 = vunpack.c.h.b16 %v5175
    %v6382 = vunpack.c.l.b16 %v5176
    %v6383 = vunpack.c.h.b16 %v5176
    %v6384 = vunpack.c.l.b16 %v5177
    %v6385 = vunpack.c.h.b16 %v5177
    %v6386 = vunpack.c.l.b16 %v5178
    %v6387 = vunpack.c.h.b16 %v5178
    %v6388 = vunpack.c.l.b16 %v5179
    %v6389 = vunpack.c.h.b16 %v5179
    %v6390 = vunpack.c.l.b16 %v5180
    %v6391 = vunpack.c.h.b16 %v5180
    %v6392 = vunpack.c.l.b16 %v5181
    %v6393 = vunpack.c.h.b16 %v5181
    %v6394 = vunpack.c.l.b16 %v5182
    %v6395 = vunpack.c.h.b16 %v5182
    %v6396 = vunpack.c.l.b16 %v5183
    %v6397 = vunpack.c.h.b16 %v5183
    %v6398 = vunpack.c.l.b16 %v5184
    %v6399 = vunpack.c.h.b16 %v5184
    %v6400 = vunpack.c.l.b16 %v5185
    %v6401 = vunpack.c.h.b16 %v5185
    %v6402 = vunpack.c.l.b16 %v5186
    %v6403 = vunpack.c.h.b16 %v5186
    %v6404 = vunpack.c.l.b16 %v5187
    %v6405 = vunpack.c.h.b16 %v5187
    %v6406 = vunpack.c.l.b16 %v5188
    %v6407 = vunpack.c.h.b16 %v5188
    %v6408 = vunpack.c.l.b16 %v5189
    %v6409 = vunpack.c.h.b16 %v5189
    %v6410 = vunpack.c.l.b16 %v5190
    %v6411 = vunpack.c.h.b16 %v5190
    %v6412 = vunpack.c.l.b16 %v5191
    %v6413 = vunpack.c.h.b16 %v5191
    %v6414 = vunpack.c.l.b16 %v5192
    %v6415 = vunpack.c.h.b16 %v5192
    %v6416 = vunpack.c.l.b16 %v5193
    %v6417 = vunpack.c.h.b16 %v5193
    %v6418 = vunpack.c.l.b16 %v5194
    %v6419 = vunpack.c.h.b16 %v5194
    %v6420 = vunpack.c.l.b16 %v5195
    %v6421 = vunpack.c.h.b16 %v5195
    %v6422 = vunpack.c.l.b16 %v5196
    %v6423 = vunpack.c.h.b16 %v5196
    %v6424 = vunpack.c.l.b16 %v5197
    %v6425 = vunpack.c.h.b16 %v5197
    %v6426 = vunpack.c.l.b16 %v5198
    %v6427 = vunpack.c.h.b16 %v5198
    %v6428 = vunpack.c.l.b16 %v5199
    %v6429 = vunpack.c.h.b16 %v5199
    %v6430 = vunpack.c.l.b16 %v5200
    %v6431 = vunpack.c.h.b16 %v5200
    %v6432 = vunpack.c.l.b16 %v5201
    %v6433 = vunpack.c.h.b16 %v5201
    %v6434 = vunpack.c.l.b16 %v5202
    %v6435 = vunpack.c.h.b16 %v5202
    %v6436 = vunpack.c.l.b16 %v5203
    %v6437 = vunpack.c.h.b16 %v5203
    %v6438 = vunpack.c.l.b16 %v5204
    %v6439 = vunpack.c.h.b16 %v5204
    %v6440 = vunpack.c.l.b16 %v5205
    %v6441 = vunpack.c.h.b16 %v5205
    %v6442 = vunpack.c.l.b16 %v5206
    %v6443 = vunpack.c.h.b16 %v5206
    %v6444 = vunpack.c.l.b16 %v5207
    %v6445 = vunpack.c.h.b16 %v5207
    %v6446 = vunpack.c.l.b16 %v5208
    %v6447 = vunpack.c.h.b16 %v5208
    %v6448 = vunpack.c.l.b16 %v5209
    %v6449 = vunpack.c.h.b16 %v5209
    %v6450 = vunpack.c.l.b16 %v5210
    %v6451 = vunpack.c.h.b16 %v5210
    %v6452 = vunpack.c.l.b16 %v5211
    %v6453 = vunpack.c.h.b16 %v5211
    %v6454 = vunpack.c.l.b16 %v5212
    %v6455 = vunpack.c.h.b16 %v5212
    %v6456 = vunpack.c.l.b16 %v5213
    %v6457 = vunpack.c.h.b16 %v5213
    %v6458 = vunpack.c.l.b16 %v5214
    %v6459 = vunpack.c.h.b16 %v5214
    %v6460 = vunpack.c.l.b16 %v5215
    %v6461 = vunpack.c.h.b16 %v5215
    %v6462 = vunpack.c.l.b16 %v5216
    %v6463 = vunpack.c.h.b16 %v5216
    %v6464 = vunpack.c.l.b16 %v5217
    %v6465 = vunpack.c.h.b16 %v5217
    %v6466 = vunpack.c.l.b16 %v5218
    %v6467 = vunpack.c.h.b16 %v5218
    %v6468 = vunpack.c.l.b16 %v5219
    %v6469 = vunpack.c.h.b16 %v5219
    %v6470 = vunpack.c.l.b16 %v5220
    %v6471 = vunpack.c.h.b16 %v5220
    %v6472 = vunpack.c.l.b16 %v5221
    %v6473 = vunpack.c.h.b16 %v5221
    %v6474 = vunpack.c.l.b16 %v5222
    %v6475 = vunpack.c.h.b16 %v5222
    %v6476 = vunpack.c.l.b16 %v5223
    %v6477 = vunpack.c.h.b16 %v5223
    %v6478 = vunpack.c.l.b16 %v5224
    %v6479 = vunpack.c.h.b16 %v5224
    %v6480 = vunpack.c.l.b16 %v5225
    %v6481 = vunpack.c.h.b16 %v5225
    %v6482 = vunpack.c.l.b16 %v5226
    %v6483 = vunpack.c.h.b16 %v5226
    %v6484 = vunpack.c.l.b16 %v5227
    %v6485 = vunpack.c.h.b16 %v5227
    %v6486 = vunpack.c.l.b16 %v5228
    %v6487 = vunpack.c.h.b16 %v5228
    %v6488 = vunpack.c.l.b16 %v5229
    %v6489 = vunpack.c.h.b16 %v5229
    %v6490 = vunpack.c.l.b16 %v5230
    %v6491 = vunpack.c.h.b16 %v5230
    %v6492 = vunpack.c.l.b16 %v5231
    %v6493 = vunpack.c.h.b16 %v5231
    %v6494 = vunpack.c.l.b16 %v5232
    %v6495 = vunpack.c.h.b16 %v5232
    %v6496 = vunpack.c.l.b16 %v5233
    %v6497 = vunpack.c.h.b16 %v5233
    %v6498 = vunpack.c.l.b16 %v5234
    %v6499 = vunpack.c.h.b16 %v5234
    %v6500 = vunpack.c.l.b16 %v5235
    %v6501 = vunpack.c.h.b16 %v5235
    %v6502 = vunpack.c.l.b16 %v5236
    %v6503 = vunpack.c.h.b16 %v5236
    %v6504 = vunpack.c.l.b16 %v5237
    %v6505 = vunpack.c.h.b16 %v5237
    %v6506 = vunpack.c.l.b16 %v5238
    %v6507 = vunpack.c.h.b16 %v5238
    %v6508 = vunpack.c.l.b16 %v5239
    %v6509 = vunpack.c.h.b16 %v5239
    %v6510 = vunpack.c.l.b16 %v5240
    %v6511 = vunpack.c.h.b16 %v5240
    %v6512 = vunpack.c.l.b16 %v5241
    %v6513 = vunpack.c.h.b16 %v5241
    %v6514 = vunpack.c.l.b16 %v5242
    %v6515 = vunpack.c.h.b16 %v5242
    %v6516 = vunpack.c.l.b16 %v5243
    %v6517 = vunpack.c.h.b16 %v5243
    %v6518 = vunpack.c.l.b16 %v5244
    %v6519 = vunpack.c.h.b16 %v5244
    %v6520 = vunpack.c.l.b16 %v5245
    %v6521 = vunpack.c.h.b16 %v5245
    %v6522 = vunpack.c.l.b16 %v5246
    %v6523 = vunpack.c.h.b16 %v5246
    %v6524 = vunpack.c.l.b16 %v5247
    %v6525 = vunpack.c.h.b16 %v5247
    %v6526 = vunpack.c.l.b16 %v5248
    %v6527 = vunpack.c.h.b16 %v5248
    %v6528 = vunpack.c.l.b16 %v5249
    %v6529 = vunpack.c.h.b16 %v5249
    %v6530 = vunpack.c.l.b16 %v5250
    %v6531 = vunpack.c.h.b16 %v5250
    %v6532 = vunpack.c.l.b16 %v5251
    %v6533 = vunpack.c.h.b16 %v5251
    %v6534 = vunpack.c.l.b16 %v5252
    %v6535 = vunpack.c.h.b16 %v5252
    %v6536 = vunpack.c.l.b16 %v5253
    %v6537 = vunpack.c.h.b16 %v5253
    %v6538 = vunpack.c.l.b16 %v5254
    %v6539 = vunpack.c.h.b16 %v5254
    %v6540 = vunpack.c.l.b16 %v5255
    %v6541 = vunpack.c.h.b16 %v5255
    %v6542 = vunpack.c.l.b16 %v5256
    %v6543 = vunpack.c.h.b16 %v5256
    %v6544 = vunpack.c.l.b16 %v5257
    %v6545 = vunpack.c.h.b16 %v5257
    %v6546 = vunpack.c.l.b16 %v5258
    %v6547 = vunpack.c.h.b16 %v5258
    %v6548 = vunpack.c.l.b16 %v5259
    %v6549 = vunpack.c.h.b16 %v5259
    %v6550 = vunpack.c.l.b16 %v5260
    %v6551 = vunpack.c.h.b16 %v5260
    %v6552 = vunpack.c.l.b16 %v5261
    %v6553 = vunpack.c.h.b16 %v5261
    %v6554 = vunpack.c.l.b16 %v5262
    %v6555 = vunpack.c.h.b16 %v5262
    %v6556 = vunpack.c.l.b16 %v5263
    %v6557 = vunpack.c.h.b16 %v5263
    %v6558 = vunpack.c.l.b16 %v5264
    %v6559 = vunpack.c.h.b16 %v5264
    %v6560 = vunpack.c.l.b16 %v5265
    %v6561 = vunpack.c.h.b16 %v5265
    %v6562 = vunpack.c.l.b16 %v5266
    %v6563 = vunpack.c.h.b16 %v5266
    %v6564 = vunpack.c.l.b16 %v5267
    %v6565 = vunpack.c.h.b16 %v5267
    %v6566 = vunpack.c.l.b16 %v5268
    %v6567 = vunpack.c.h.b16 %v5268
    %v6568 = vunpack.c.l.b16 %v5269
    %v6569 = vunpack.c.h.b16 %v5269
    %v6570 = vunpack.c.l.b16 %v5270
    %v6571 = vunpack.c.h.b16 %v5270
    %v6572 = vunpack.c.l.b16 %v5271
    %v6573 = vunpack.c.h.b16 %v5271
    %v6574 = vunpack.c.l.b16 %v5272
    %v6575 = vunpack.c.h.b16 %v5272
    %v6576 = vunpack.c.l.b16 %v5273
    %v6577 = vunpack.c.h.b16 %v5273
    %v6578 = vunpack.c.l.b16 %v5274
    %v6579 = vunpack.c.h.b16 %v5274
    %v6580 = vunpack.c.l.b16 %v5275
    %v6581 = vunpack.c.h.b16 %v5275
    %v6582 = vunpack.c.l.b16 %v5276
    %v6583 = vunpack.c.h.b16 %v5276
    %v6584 = vunpack.c.l.b16 %v5277
    %v6585 = vunpack.c.h.b16 %v5277
    %v6586 = vunpack.c.l.b16 %v5278
    %v6587 = vunpack.c.h.b16 %v5278
    %v6588 = vunpack.c.l.b16 %v5279
    %v6589 = vunpack.c.h.b16 %v5279
    %v6590 = vunpack.c.l.b16 %v5280
    %v6591 = vunpack.c.h.b16 %v5280
    %v6592 = vunpack.c.l.b16 %v5281
    %v6593 = vunpack.c.h.b16 %v5281
    %v6594 = vunpack.c.l.b16 %v5282
    %v6595 = vunpack.c.h.b16 %v5282
    %v6596 = vunpack.c.l.b16 %v5283
    %v6597 = vunpack.c.h.b16 %v5283
    %v6598 = vunpack.c.l.b16 %v5284
    %v6599 = vunpack.c.h.b16 %v5284
    %v6600 = vunpack.c.l.b16 %v5285
    %v6601 = vunpack.c.h.b16 %v5285
    %v6602 = vunpack.c.l.b16 %v5286
    %v6603 = vunpack.c.h.b16 %v5286
    %v6604 = vunpack.c.l.b16 %v5287
    %v6605 = vunpack.c.h.b16 %v5287
    %v6606 = vunpack.c.l.b16 %v5288
    %v6607 = vunpack.c.h.b16 %v5288
    %v6608 = vunpack.c.l.b16 %v5289
    %v6609 = vunpack.c.h.b16 %v5289
    %v6610 = vunpack.c.l.b16 %v5290
    %v6611 = vunpack.c.h.b16 %v5290
    %v6612 = vunpack.c.l.b16 %v5291
    %v6613 = vunpack.c.h.b16 %v5291
    %v6614 = vunpack.c.l.b16 %v5292
    %v6615 = vunpack.c.h.b16 %v5292
    %v6616 = vunpack.c.l.b16 %v5293
    %v6617 = vunpack.c.h.b16 %v5293
    %v6618 = vunpack.c.l.b16 %v5294
    %v6619 = vunpack.c.h.b16 %v5294
    %v6620 = vunpack.c.l.b16 %v5295
    %v6621 = vunpack.c.h.b16 %v5295
    %v6622 = vunpack.c.l.b16 %v5296
    %v6623 = vunpack.c.h.b16 %v5296
    %v6624 = vunpack.c.l.b16 %v5297
    %v6625 = vunpack.c.h.b16 %v5297
    %v6626 = vunpack.c.l.b16 %v5298
    %v6627 = vunpack.c.h.b16 %v5298
    %v6628 = vunpack.c.l.b16 %v5299
    %v6629 = vunpack.c.h.b16 %v5299
    %v6630 = vunpack.c.l.b16 %v5300
    %v6631 = vunpack.c.h.b16 %v5300
    %v6632 = vunpack.c.l.b16 %v5301
    %v6633 = vunpack.c.h.b16 %v5301
    %v6634 = vunpack.c.l.b16 %v5302
    %v6635 = vunpack.c.h.b16 %v5302
    %v6636 = vunpack.c.l.b16 %v5303
    %v6637 = vunpack.c.h.b16 %v5303
    %v6638 = vunpack.c.l.b16 %v5304
    %v6639 = vunpack.c.h.b16 %v5304
    %v6640 = vunpack.c.l.b16 %v5305
    %v6641 = vunpack.c.h.b16 %v5305
    %v6642 = vunpack.c.l.b16 %v5306
    %v6643 = vunpack.c.h.b16 %v5306
    %v6644 = vunpack.c.l.b16 %v5307
    %v6645 = vunpack.c.h.b16 %v5307
    %v6646 = vunpack.c.l.b16 %v5308
    %v6647 = vunpack.c.h.b16 %v5308
    %v6648 = vunpack.c.l.b16 %v5309
    %v6649 = vunpack.c.h.b16 %v5309
    %v6650 = vunpack.c.l.b16 %v5310
    %v6651 = vunpack.c.h.b16 %v5310
    %v6652 = vunpack.c.l.b16 %v5311
    %v6653 = vunpack.c.h.b16 %v5311
    %v6654 = vunpack.c.l.b16 %v5312
    %v6655 = vunpack.c.h.b16 %v5312
    %v6656 = vunpack.c.l.b16 %v5313
    %v6657 = vunpack.c.h.b16 %v5313
    %v6658 = vunpack.c.l.b16 %v5314
    %v6659 = vunpack.c.h.b16 %v5314
    %v6660 = vunpack.c.l.b16 %v5315
    %v6661 = vunpack.c.h.b16 %v5315
    %v6662 = vunpack.c.l.b16 %v5316
    %v6663 = vunpack.c.h.b16 %v5316
    %v6664 = vunpack.c.l.b16 %v5317
    %v6665 = vunpack.c.h.b16 %v5317
    %v6666 = vunpack.c.l.b16 %v5318
    %v6667 = vunpack.c.h.b16 %v5318
    %v6668 = vunpack.c.l.b16 %v5319
    %v6669 = vunpack.c.h.b16 %v5319
    %v6670 = vunpack.c.l.b16 %v5320
    %v6671 = vunpack.c.h.b16 %v5320
    %v6672 = vunpack.c.l.b16 %v5321
    %v6673 = vunpack.c.h.b16 %v5321
    %v6674 = vunpack.c.l.b16 %v5322
    %v6675 = vunpack.c.h.b16 %v5322
    %v6676 = vunpack.c.l.b16 %v5323
    %v6677 = vunpack.c.h.b16 %v5323
    %v6678 = vunpack.c.l.b16 %v5324
    %v6679 = vunpack.c.h.b16 %v5324
    %v6680 = vunpack.c.l.b16 %v5325
    %v6681 = vunpack.c.h.b16 %v5325
    %v6682 = vunpack.c.l.b16 %v5326
    %v6683 = vunpack.c.h.b16 %v5326
    %v6684 = vunpack.c.l.b16 %v5327
    %v6685 = vunpack.c.h.b16 %v5327
    %v6686 = vunpack.c.l.b16 %v5328
    %v6687 = vunpack.c.h.b16 %v5328
    %v6688 = vunpack.c.l.b16 %v5329
    %v6689 = vunpack.c.h.b16 %v5329
    %v6690 = vunpack.c.l.b16 %v5330
    %v6691 = vunpack.c.h.b16 %v5330
    %v6692 = vunpack.c.l.b16 %v5331
    %v6693 = vunpack.c.h.b16 %v5331
    %v6694 = vunpack.c.l.b16 %v5332
    %v6695 = vunpack.c.h.b16 %v5332
    %v6696 = vunpack.c.l.b16 %v5333
    %v6697 = vunpack.c.h.b16 %v5333
    %v6698 = vunpack.c.l.b16 %v5334
    %v6699 = vunpack.c.h.b16 %v5334
    %v6700 = vunpack.c.l.b16 %v5335
    %v6701 = vunpack.c.h.b16 %v5335
    %v6702 = vunpack.c.l.b16 %v5336
    %v6703 = vunpack.c.h.b16 %v5336
    %v6704 = vunpack.c.l.b16 %v5337
    %v6705 = vunpack.c.h.b16 %v5337
    %v6706 = vunpack.c.l.b16 %v5338
    %v6707 = vunpack.c.h.b16 %v5338
    %v6708 = vunpack.c.l.b16 %v5339
    %v6709 = vunpack.c.h.b16 %v5339
    %v6710 = vunpack.c.l.b16 %v5340
    %v6711 = vunpack.c.h.b16 %v5340
    %v6712 = vunpack.c.l.b16 %v5341
    %v6713 = vunpack.c.h.b16 %v5341
    %v6714 = vunpack.c.l.b16 %v5342
    %v6715 = vunpack.c.h.b16 %v5342
    %v6716 = vunpack.c.l.b16 %v5343
    %v6717 = vunpack.c.h.b16 %v5343
    %v6718 = vunpack.c.l.b16 %v5344
    %v6719 = vunpack.c.h.b16 %v5344
    %v6720 = vunpack.c.l.b16 %v5345
    %v6721 = vunpack.c.h.b16 %v5345
    %v6722 = vunpack.c.l.b16 %v5346
    %v6723 = vunpack.c.h.b16 %v5346
    %v6724 = vunpack.c.l.b16 %v5347
    %v6725 = vunpack.c.h.b16 %v5347
    %v6726 = vunpack.c.l.b16 %v5348
    %v6727 = vunpack.c.h.b16 %v5348
    %v6728 = vunpack.c.l.b16 %v5349
    %v6729 = vunpack.c.h.b16 %v5349
    %v6730 = vunpack.c.l.b16 %v5350
    %v6731 = vunpack.c.h.b16 %v5350
    %v6732 = vunpack.c.l.b16 %v5351
    %v6733 = vunpack.c.h.b16 %v5351
    %v6734 = vunpack.c.l.b16 %v5352
    %v6735 = vunpack.c.h.b16 %v5352
    %v6736 = vunpack.c.l.b16 %v5353
    %v6737 = vunpack.c.h.b16 %v5353
    %v6738 = vunpack.c.l.b16 %v5354
    %v6739 = vunpack.c.h.b16 %v5354
    %v6740 = vunpack.c.l.b16 %v5355
    %v6741 = vunpack.c.h.b16 %v5355
    %v6742 = vunpack.c.l.b16 %v5356
    %v6743 = vunpack.c.h.b16 %v5356
    %v6744 = vunpack.c.l.b16 %v5357
    %v6745 = vunpack.c.h.b16 %v5357
    %v6746 = vunpack.c.l.b16 %v5358
    %v6747 = vunpack.c.h.b16 %v5358
    %v6748 = vunpack.c.l.b16 %v5359
    %v6749 = vunpack.c.h.b16 %v5359
    %v6750 = vunpack.c.l.b16 %v5360
    %v6751 = vunpack.c.h.b16 %v5360
    %v6752 = vunpack.c.l.b16 %v5361
    %v6753 = vunpack.c.h.b16 %v5361
    %v6754 = vunpack.c.l.b16 %v5362
    %v6755 = vunpack.c.h.b16 %v5362
    %v6756 = vunpack.c.l.b16 %v5363
    %v6757 = vunpack.c.h.b16 %v5363
    %v6758 = vunpack.c.l.b16 %v5364
    %v6759 = vunpack.c.h.b16 %v5364
    %v6760 = vunpack.c.l.b16 %v5365
    %v6761 = vunpack.c.h.b16 %v5365
    %v6762 = vunpack.c.l.b16 %v5366
    %v6763 = vunpack.c.h.b16 %v5366
    %v6764 = vunpack.c.l.b16 %v5367
    %v6765 = vunpack.c.h.b16 %v5367
    %v6766 = vunpack.c.l.b16 %v5368
    %v6767 = vunpack.c.h.b16 %v5368
    %v6768 = vunpack.c.l.b16 %v5369
    %v6769 = vunpack.c.h.b16 %v5369
    %v6770 = vunpack.c.l.b16 %v5370
    %v6771 = vunpack.c.h.b16 %v5370
    %v6772 = vunpack.c.l.b16 %v5371
    %v6773 = vunpack.c.h.b16 %v5371
    %v6774 = vunpack.c.l.b16 %v5372
    %v6775 = vunpack.c.h.b16 %v5372
    %v6776 = vunpack.c.l.b16 %v5373
    %v6777 = vunpack.c.h.b16 %v5373
    %v6778 = vunpack.c.l.b16 %v5374
    %v6779 = vunpack.c.h.b16 %v5374
    %v6780 = vunpack.c.l.b16 %v5375
    %v6781 = vunpack.c.h.b16 %v5375
    %v6782 = vunpack.c.l.b16 %v5376
    %v6783 = vunpack.c.h.b16 %v5376
    %v6784 = vunpack.c.l.b16 %v5377
    %v6785 = vunpack.c.h.b16 %v5377
    %v6786 = vunpack.c.l.b16 %v5378
    %v6787 = vunpack.c.h.b16 %v5378
    %v6788 = vunpack.c.l.b16 %v5379
    %v6789 = vunpack.c.h.b16 %v5379
    %v6790 = vunpack.c.l.b16 %v5380
    %v6791 = vunpack.c.h.b16 %v5380
    %v6792 = vunpack.c.l.b16 %v5381
    %v6793 = vunpack.c.h.b16 %v5381
    %v6794 = vunpack.c.l.b16 %v5382
    %v6795 = vunpack.c.h.b16 %v5382
    %v6796 = vunpack.c.l.b16 %v5383
    %v6797 = vunpack.c.h.b16 %v5383
    %v6798 = vunpack.c.l.b16 %v5384
    %v6799 = vunpack.c.h.b16 %v5384
    %v6800 = vunpack.c.l.b16 %v5385
    %v6801 = vunpack.c.h.b16 %v5385
    %v6802 = vunpack.c.l.b16 %v5386
    %v6803 = vunpack.c.h.b16 %v5386
    %v6804 = vunpack.c.l.b16 %v5387
    %v6805 = vunpack.c.h.b16 %v5387
    %v6806 = vunpack.c.l.b16 %v5388
    %v6807 = vunpack.c.h.b16 %v5388
    %v6808 = vunpack.c.l.b16 %v5389
    %v6809 = vunpack.c.h.b16 %v5389
    %v6810 = vunpack.c.l.b16 %v5390
    %v6811 = vunpack.c.h.b16 %v5390
    %v6812 = vunpack.c.l.b16 %v5391
    %v6813 = vunpack.c.h.b16 %v5391
    %v6814 = vunpack.c.l.b16 %v5392
    %v6815 = vunpack.c.h.b16 %v5392
    %v6816 = vunpack.c.l.b16 %v5393
    %v6817 = vunpack.c.h.b16 %v5393
    %v6818 = vunpack.c.l.b16 %v5394
    %v6819 = vunpack.c.h.b16 %v5394
    %v6820 = vunpack.c.l.b16 %v5395
    %v6821 = vunpack.c.h.b16 %v5395
    %v6822 = vunpack.c.l.b16 %v5396
    %v6823 = vunpack.c.h.b16 %v5396
    %v6824 = vunpack.c.l.b16 %v5397
    %v6825 = vunpack.c.h.b16 %v5397
    %v6826 = vunpack.c.l.b16 %v5398
    %v6827 = vunpack.c.h.b16 %v5398
    %v6828 = vunpack.c.l.b16 %v5399
    %v6829 = vunpack.c.h.b16 %v5399
    %v6830 = vunpack.c.l.b16 %v5400
    %v6831 = vunpack.c.h.b16 %v5400
    %v6832 = vunpack.c.l.b16 %v5401
    %v6833 = vunpack.c.h.b16 %v5401
    %v6834 = vunpack.c.l.b16 %v5402
    %v6835 = vunpack.c.h.b16 %v5402
    %v6836 = vunpack.c.l.b16 %v5403
    %v6837 = vunpack.c.h.b16 %v5403
    %v6838 = vunpack.c.l.b16 %v5404
    %v6839 = vunpack.c.h.b16 %v5404
    %v6840 = vunpack.c.l.b16 %v5405
    %v6841 = vunpack.c.h.b16 %v5405
    %v6842 = vunpack.c.l.b16 %v5406
    %v6843 = vunpack.c.h.b16 %v5406
    %v6844 = vunpack.c.l.b16 %v5407
    %v6845 = vunpack.c.h.b16 %v5407
    %v6846 = vunpack.c.l.b16 %v5408
    %v6847 = vunpack.c.h.b16 %v5408
    %v6848 = vunpack.c.l.b16 %v5409
    %v6849 = vunpack.c.h.b16 %v5409
    %v6850 = vunpack.c.l.b16 %v5410
    %v6851 = vunpack.c.h.b16 %v5410
    %v6852 = vunpack.c.l.b16 %v5411
    %v6853 = vunpack.c.h.b16 %v5411
    %v6854 = vunpack.c.l.b16 %v5412
    %v6855 = vunpack.c.h.b16 %v5412
    %v6856 = vunpack.c.l.b16 %v5413
    %v6857 = vunpack.c.h.b16 %v5413
    %v6858 = vunpack.c.l.b16 %v5414
    %v6859 = vunpack.c.h.b16 %v5414
    %v6860 = vunpack.c.l.b16 %v5415
    %v6861 = vunpack.c.h.b16 %v5415
    %v6862 = vunpack.c.l.b16 %v5416
    %v6863 = vunpack.c.h.b16 %v5416
    %v6864 = vunpack.c.l.b16 %v5417
    %v6865 = vunpack.c.h.b16 %v5417
    %v6866 = vunpack.c.l.b16 %v5418
    %v6867 = vunpack.c.h.b16 %v5418
    %v6868 = vunpack.c.l.b16 %v5419
    %v6869 = vunpack.c.h.b16 %v5419
    %v6870 = vunpack.c.l.b16 %v5420
    %v6871 = vunpack.c.h.b16 %v5420
    %v6872 = vunpack.c.l.b16 %v5421
    %v6873 = vunpack.c.h.b16 %v5421
    %v6874 = vunpack.c.l.b16 %v5422
    %v6875 = vunpack.c.h.b16 %v5422
    %v6876 = vunpack.c.l.b16 %v5423
    %v6877 = vunpack.c.h.b16 %v5423
    %v6878 = vunpack.c.l.b16 %v5424
    %v6879 = vunpack.c.h.b16 %v5424
    %v6880 = vunpack.c.l.b16 %v5425
    %v6881 = vunpack.c.h.b16 %v5425
    %v6882 = vunpack.c.l.b16 %v5426
    %v6883 = vunpack.c.h.b16 %v5426
    %v6884 = vunpack.c.l.b16 %v5427
    %v6885 = vunpack.c.h.b16 %v5427
    %v6886 = vunpack.c.l.b16 %v5428
    %v6887 = vunpack.c.h.b16 %v5428
    %v6888 = vunpack.c.l.b16 %v5429
    %v6889 = vunpack.c.h.b16 %v5429
    %v6890 = vunpack.c.l.b16 %v5430
    %v6891 = vunpack.c.h.b16 %v5430
    %v6892 = vunpack.c.l.b16 %v5431
    %v6893 = vunpack.c.h.b16 %v5431
    %v6894 = vpack.c.b16 %v5938, %v5934
    %v6895 = vpack.c.b16 %v5939, %v5935
    %v6896 = vpack.c.b16 %v5940, %v5936
    %v6897 = vpack.c.b16 %v5941, %v5937
    %v6898 = vpack.c.b16 %v5946, %v5942
    %v6899 = vpack.c.b16 %v5947, %v5943
    %v6900 = vpack.c.b16 %v5948, %v5944
    %v6901 = vpack.c.b16 %v5949, %v5945
    %v6902 = vpack.c.b16 %v5954, %v5950
    %v6903 = vpack.c.b16 %v5955, %v5951
    %v6904 = vpack.c.b16 %v5956, %v5952
    %v6905 = vpack.c.b16 %v5957, %v5953
    %v6906 = vpack.c.b16 %v5962, %v5958
    %v6907 = vpack.c.b16 %v5963, %v5959
    %v6908 = vpack.c.b16 %v5964, %v5960
    %v6909 = vpack.c.b16 %v5965, %v5961
    %v6910 = vpack.c.b16 %v5970, %v5966
    %v6911 = vpack.c.b16 %v5971, %v5967
    %v6912 = vpack.c.b16 %v5972, %v5968
    %v6913 = vpack.c.b16 %v5973, %v5969
    %v6914 = vpack.c.b16 %v5978, %v5974
    %v6915 = vpack.c.b16 %v5979, %v5975
    %v6916 = vpack.c.b16 %v5980, %v5976
    %v6917 = vpack.c.b16 %v5981, %v5977
    %v6918 = vpack.c.b16 %v5986, %v5982
    %v6919 = vpack.c.b16 %v5987, %v5983
    %v6920 = vpack.c.b16 %v5988, %v5984
    %v6921 = vpack.c.b16 %v5989, %v5985
    %v6922 = vpack.c.b16 %v5994, %v5990
    %v6923 = vpack.c.b16 %v5995, %v5991
    %v6924 = vpack.c.b16 %v5996, %v5992
    %v6925 = vpack.c.b16 %v5997, %v5993
    %v6926 = vpack.c.b16 %v6002, %v5998
    %v6927 = vpack.c.b16 %v6003, %v5999
    %v6928 = vpack.c.b16 %v6004, %v6000
    %v6929 = vpack.c.b16 %v6005, %v6001
    %v6930 = vpack.c.b16 %v6010, %v6006
    %v6931 = vpack.c.b16 %v6011, %v6007
    %v6932 = vpack.c.b16 %v6012, %v6008
    %v6933 = vpack.c.b16 %v6013, %v6009
    %v6934 = vpack.c.b16 %v6018, %v6014
    %v6935 = vpack.c.b16 %v6019, %v6015
    %v6936 = vpack.c.b16 %v6020, %v6016
    %v6937 = vpack.c.b16 %v6021, %v6017
    %v6938 = vpack.c.b16 %v6026, %v6022
    %v6939 = vpack.c.b16 %v6027, %v6023
    %v6940 = vpack.c.b16 %v6028, %v6024
    %v6941 = vpack.c.b16 %v6029, %v6025
    %v6942 = vpack.c.b16 %v6034, %v6030
    %v6943 = vpack.c.b16 %v6035, %v6031
    %v6944 = vpack.c.b16 %v6036, %v6032
    %v6945 = vpack.c.b16 %v6037, %v6033
    %v6946 = vpack.c.b16 %v6042, %v6038
    %v6947 = vpack.c.b16 %v6043, %v6039
    %v6948 = vpack.c.b16 %v6044, %v6040
    %v6949 = vpack.c.b16 %v6045, %v6041
    %v6950 = vpack.c.b16 %v6050, %v6046
    %v6951 = vpack.c.b16 %v6051, %v6047
    %v6952 = vpack.c.b16 %v6052, %v6048
    %v6953 = vpack.c.b16 %v6053, %v6049
    %v6954 = vpack.c.b16 %v6058, %v6054
    %v6955 = vpack.c.b16 %v6059, %v6055
    %v6956 = vpack.c.b16 %v6060, %v6056
    %v6957 = vpack.c.b16 %v6061, %v6057
    %v6958 = vpack.c.b16 %v6066, %v6062
    %v6959 = vpack.c.b16 %v6067, %v6063
    %v6960 = vpack.c.b16 %v6068, %v6064
    %v6961 = vpack.c.b16 %v6069, %v6065
    %v6962 = vpack.c.b16 %v6074, %v6070
    %v6963 = vpack.c.b16 %v6075, %v6071
    %v6964 = vpack.c.b16 %v6076, %v6072
    %v6965 = vpack.c.b16 %v6077, %v6073
    %v6966 = vpack.c.b16 %v6082, %v6078
    %v6967 = vpack.c.b16 %v6083, %v6079
    %v6968 = vpack.c.b16 %v6084, %v6080
    %v6969 = vpack.c.b16 %v6085, %v6081
    %v6970 = vpack.c.b16 %v6090, %v6086
    %v6971 = vpack.c.b16 %v6091, %v6087
    %v6972 = vpack.c.b16 %v6092, %v6088
    %v6973 = vpack.c.b16 %v6093, %v6089
    %v6974 = vpack.c.b16 %v6098, %v6094
    %v6975 = vpack.c.b16 %v6099, %v6095
    %v6976 = vpack.c.b16 %v6100, %v6096
    %v6977 = vpack.c.b16 %v6101, %v6097
    %v6978 = vpack.c.b16 %v6106, %v6102
    %v6979 = vpack.c.b16 %v6107, %v6103
    %v6980 = vpack.c.b16 %v6108, %v6104
    %v6981 = vpack.c.b16 %v6109, %v6105
    %v6982 = vpack.c.b16 %v6114, %v6110
    %v6983 = vpack.c.b16 %v6115, %v6111
    %v6984 = vpack.c.b16 %v6116, %v6112
    %v6985 = vpack.c.b16 %v6117, %v6113
    %v6986 = vpack.c.b16 %v6122, %v6118
    %v6987 = vpack.c.b16 %v6123, %v6119
    %v6988 = vpack.c.b16 %v6124, %v6120
    %v6989 = vpack.c.b16 %v6125, %v6121
    %v6990 = vpack.c.b16 %v6130, %v6126
    %v6991 = vpack.c.b16 %v6131, %v6127
    %v6992 = vpack.c.b16 %v6132, %v6128
    %v6993 = vpack.c.b16 %v6133, %v6129
    %v6994 = vpack.c.b16 %v6138, %v6134
    %v6995 = vpack.c.b16 %v6139, %v6135
    %v6996 = vpack.c.b16 %v6140, %v6136
    %v6997 = vpack.c.b16 %v6141, %v6137
    %v6998 = vpack.c.b16 %v6146, %v6142
    %v6999 = vpack.c.b16 %v6147, %v6143
    %v7000 = vpack.c.b16 %v6148, %v6144
    %v7001 = vpack.c.b16 %v6149, %v6145
    %v7002 = vpack.c.b16 %v6154, %v6150
    %v7003 = vpack.c.b16 %v6155, %v6151
    %v7004 = vpack.c.b16 %v6156, %v6152
    %v7005 = vpack.c.b16 %v6157, %v6153
    %v7006 = vpack.c.b16 %v6162, %v6158
    %v7007 = vpack.c.b16 %v6163, %v6159
    %v7008 = vpack.c.b16 %v6164, %v6160
    %v7009 = vpack.c.b16 %v6165, %v6161
    %v7010 = vpack.c.b16 %v6170, %v6166
    %v7011 = vpack.c.b16 %v6171, %v6167
    %v7012 = vpack.c.b16 %v6172, %v6168
    %v7013 = vpack.c.b16 %v6173, %v6169
    %v7014 = vpack.c.b16 %v6178, %v6174
    %v7015 = vpack.c.b16 %v6179, %v6175
    %v7016 = vpack.c.b16 %v6180, %v6176
    %v7017 = vpack.c.b16 %v6181, %v6177
    %v7018 = vpack.c.b16 %v6186, %v6182
    %v7019 = vpack.c.b16 %v6187, %v6183
    %v7020 = vpack.c.b16 %v6188, %v6184
    %v7021 = vpack.c.b16 %v6189, %v6185
    %v7022 = vpack.c.b16 %v6194, %v6190
    %v7023 = vpack.c.b16 %v6195, %v6191
    %v7024 = vpack.c.b16 %v6196, %v6192
    %v7025 = vpack.c.b16 %v6197, %v6193
    %v7026 = vpack.c.b16 %v6202, %v6198
    %v7027 = vpack.c.b16 %v6203, %v6199
    %v7028 = vpack.c.b16 %v6204, %v6200
    %v7029 = vpack.c.b16 %v6205, %v6201
    %v7030 = vpack.c.b16 %v6210, %v6206
    %v7031 = vpack.c.b16 %v6211, %v6207
    %v7032 = vpack.c.b16 %v6212, %v6208
    %v7033 = vpack.c.b16 %v6213, %v6209
    %v7034 = vpack.c.b16 %v6218, %v6214
    %v7035 = vpack.c.b16 %v6219, %v6215
    %v7036 = vpack.c.b16 %v6220, %v6216
    %v7037 = vpack.c.b16 %v6221, %v6217
    %v7038 = vpack.c.b16 %v6226, %v6222
    %v7039 = vpack.c.b16 %v6227, %v6223
    %v7040 = vpack.c.b16 %v6228, %v6224
    %v7041 = vpack.c.b16 %v6229, %v6225
    %v7042 = vpack.c.b16 %v6234, %v6230
    %v7043 = vpack.c.b16 %v6235, %v6231
    %v7044 = vpack.c.b16 %v6236, %v6232
    %v7045 = vpack.c.b16 %v6237, %v6233
    %v7046 = vpack.c.b16 %v6242, %v6238
    %v7047 = vpack.c.b16 %v6243, %v6239
    %v7048 = vpack.c.b16 %v6244, %v6240
    %v7049 = vpack.c.b16 %v6245, %v6241
    %v7050 = vpack.c.b16 %v6250, %v6246
    %v7051 = vpack.c.b16 %v6251, %v6247
    %v7052 = vpack.c.b16 %v6252, %v6248
    %v7053 = vpack.c.b16 %v6253, %v6249
    %v7054 = vpack.c.b16 %v6258, %v6254
    %v7055 = vpack.c.b16 %v6259, %v6255
    %v7056 = vpack.c.b16 %v6260, %v6256
    %v7057 = vpack.c.b16 %v6261, %v6257
    %v7058 = vpack.c.b16 %v6266, %v6262
    %v7059 = vpack.c.b16 %v6267, %v6263
    %v7060 = vpack.c.b16 %v6268, %v6264
    %v7061 = vpack.c.b16 %v6269, %v6265
    %v7062 = vpack.c.b16 %v6274, %v6270
    %v7063 = vpack.c.b16 %v6275, %v6271
    %v7064 = vpack.c.b16 %v6276, %v6272
    %v7065 = vpack.c.b16 %v6277, %v6273
    %v7066 = vpack.c.b16 %v6282, %v6278
    %v7067 = vpack.c.b16 %v6283, %v6279
    %v7068 = vpack.c.b16 %v6284, %v6280
    %v7069 = vpack.c.b16 %v6285, %v6281
    %v7070 = vpack.c.b16 %v6290, %v6286
    %v7071 = vpack.c.b16 %v6291, %v6287
    %v7072 = vpack.c.b16 %v6292, %v6288
    %v7073 = vpack.c.b16 %v6293, %v6289
    %v7074 = vpack.c.b16 %v6298, %v6294
    %v7075 = vpack.c.b16 %v6299, %v6295
    %v7076 = vpack.c.b16 %v6300, %v6296
    %v7077 = vpack.c.b16 %v6301, %v6297
    %v7078 = vpack.c.b16 %v6306, %v6302
    %v7079 = vpack.c.b16 %v6307, %v6303
    %v7080 = vpack.c.b16 %v6308, %v6304
    %v7081 = vpack.c.b16 %v6309, %v6305
    %v7082 = vpack.c.b16 %v6314, %v6310
    %v7083 = vpack.c.b16 %v6315, %v6311
    %v7084 = vpack.c.b16 %v6316, %v6312
    %v7085 = vpack.c.b16 %v6317, %v6313
    %v7086 = vpack.c.b16 %v6322, %v6318
    %v7087 = vpack.c.b16 %v6323, %v6319
    %v7088 = vpack.c.b16 %v6324, %v6320
    %v7089 = vpack.c.b16 %v6325, %v6321
    %v7090 = vpack.c.b16 %v6330, %v6326
    %v7091 = vpack.c.b16 %v6331, %v6327
    %v7092 = vpack.c.b16 %v6332, %v6328
    %v7093 = vpack.c.b16 %v6333, %v6329
    %v7094 = vpack.c.b16 %v6338, %v6334
    %v7095 = vpack.c.b16 %v6339, %v6335
    %v7096 = vpack.c.b16 %v6340, %v6336
    %v7097 = vpack.c.b16 %v6341, %v6337
    %v7098 = vpack.c.b16 %v6346, %v6342
    %v7099 = vpack.c.b16 %v6347, %v6343
    %v7100 = vpack.c.b16 %v6348, %v6344
    %v7101 = vpack.c.b16 %v6349, %v6345
    %v7102 = vpack.c.b16 %v6354, %v6350
    %v7103 = vpack.c.b16 %v6355, %v6351
    %v7104 = vpack.c.b16 %v6356, %v6352
    %v7105 = vpack.c.b16 %v6357, %v6353
    %v7106 = vpack.c.b16 %v6362, %v6358
    %v7107 = vpack.c.b16 %v6363, %v6359
    %v7108 = vpack.c.b16 %v6364, %v6360
    %v7109 = vpack.c.b16 %v6365, %v6361
    %v7110 = vpack.c.b16 %v6370, %v6366
    %v7111 = vpack.c.b16 %v6371, %v6367
    %v7112 = vpack.c.b16 %v6372, %v6368
    %v7113 = vpack.c.b16 %v6373, %v6369
    %v7114 = vpack.c.b16 %v6378, %v6374
    %v7115 = vpack.c.b16 %v6379, %v6375
    %v7116 = vpack.c.b16 %v6380, %v6376
    %v7117 = vpack.c.b16 %v6381, %v6377
    %v7118 = vpack.c.b16 %v6386, %v6382
    %v7119 = vpack.c.b16 %v6387, %v6383
    %v7120 = vpack.c.b16 %v6388, %v6384
    %v7121 = vpack.c.b16 %v6389, %v6385
    %v7122 = vpack.c.b16 %v6394, %v6390
    %v7123 = vpack.c.b16 %v6395, %v6391
    %v7124 = vpack.c.b16 %v6396, %v6392
    %v7125 = vpack.c.b16 %v6397, %v6393
    %v7126 = vpack.c.b16 %v6402, %v6398
    %v7127 = vpack.c.b16 %v6403, %v6399
    %v7128 = vpack.c.b16 %v6404, %v6400
    %v7129 = vpack.c.b16 %v6405, %v6401
    %v7130 = vpack.c.b16 %v6410, %v6406
    %v7131 = vpack.c.b16 %v6411, %v6407
    %v7132 = vpack.c.b16 %v6412, %v6408
    %v7133 = vpack.c.b16 %v6413, %v6409
    %v7134 = vpack.c.b16 %v6418, %v6414
    %v7135 = vpack.c.b16 %v6419, %v6415
    %v7136 = vpack.c.b16 %v6420, %v6416
    %v7137 = vpack.c.b16 %v6421, %v6417
    %v7138 = vpack.c.b16 %v6426, %v6422
    %v7139 = vpack.c.b16 %v6427, %v6423
    %v7140 = vpack.c.b16 %v6428, %v6424
    %v7141 = vpack.c.b16 %v6429, %v6425
    %v7142 = vpack.c.b16 %v6434, %v6430
    %v7143 = vpack.c.b16 %v6435, %v6431
    %v7144 = vpack.c.b16 %v6436, %v6432
    %v7145 = vpack.c.b16 %v6437, %v6433
    %v7146 = vpack.c.b16 %v6442, %v6438
    %v7147 = vpack.c.b16 %v6443, %v6439
    %v7148 = vpack.c.b16 %v6444, %v6440
    %v7149 = vpack.c.b16 %v6445, %v6441
    %v7150 = vpack.c.b16 %v6450, %v6446
    %v7151 = vpack.c.b16 %v6451, %v6447
    %v7152 = vpack.c.b16 %v6452, %v6448
    %v7153 = vpack.c.b16 %v6453, %v6449
    %v7154 = vpack.c.b16 %v6458, %v6454
    %v7155 = vpack.c.b16 %v6459, %v6455
    %v7156 = vpack.c.b16 %v6460, %v6456
    %v7157 = vpack.c.b16 %v6461, %v6457
    %v7158 = vpack.c.b16 %v6466, %v6462
    %v7159 = vpack.c.b16 %v6467, %v6463
    %v7160 = vpack.c.b16 %v6468, %v6464
    %v7161 = vpack.c.b16 %v6469, %v6465
    %v7162 = vpack.c.b16 %v6474, %v6470
    %v7163 = vpack.c.b16 %v6475, %v6471
    %v7164 = vpack.c.b16 %v6476, %v6472
    %v7165 = vpack.c.b16 %v6477, %v6473
    %v7166 = vpack.c.b16 %v6482, %v6478
    %v7167 = vpack.c.b16 %v6483, %v6479
    %v7168 = vpack.c.b16 %v6484, %v6480
    %v7169 = vpack.c.b16 %v6485, %v6481
    %v7170 = vpack.c.b16 %v6490, %v6486
    %v7171 = vpack.c.b16 %v6491, %v6487
    %v7172 = vpack.c.b16 %v6492, %v6488
    %v7173 = vpack.c.b16 %v6493, %v6489
    %v7174 = vpack.c.b16 %v6498, %v6494
    %v7175 = vpack.c.b16 %v6499, %v6495
    %v7176 = vpack.c.b16 %v6500, %v6496
    %v7177 = vpack.c.b16 %v6501, %v6497
    %v7178 = vpack.c.b16 %v6506, %v6502
    %v7179 = vpack.c.b16 %v6507, %v6503
    %v7180 = vpack.c.b16 %v6508, %v6504
    %v7181 = vpack.c.b16 %v6509, %v6505
    %v7182 = vpack.c.b16 %v6514, %v6510
    %v7183 = vpack.c.b16 %v6515, %v6511
    %v7184 = vpack.c.b16 %v6516, %v6512
    %v7185 = vpack.c.b16 %v6517, %v6513
    %v7186 = vpack.c.b16 %v6522, %v6518
    %v7187 = vpack.c.b16 %v6523, %v6519
    %v7188 = vpack.c.b16 %v6524, %v6520
    %v7189 = vpack.c.b16 %v6525, %v6521
    %v7190 = vpack.c.b16 %v6530, %v6526
    %v7191 = vpack.c.b16 %v6531, %v6527
    %v7192 = vpack.c.b16 %v6532, %v6528
    %v7193 = vpack.c.b16 %v6533, %v6529
    %v7194 = vpack.c.b16 %v6538, %v6534
    %v7195 = vpack.c.b16 %v6539, %v6535
    %v7196 = vpack.c.b16 %v6540, %v6536
    %v7197 = vpack.c.b16 %v6541, %v6537
    %v7198 = vpack.c.b16 %v6546, %v6542
    %v7199 = vpack.c.b16 %v6547, %v6543
    %v7200 = vpack.c.b16 %v6548, %v6544
    %v7201 = vpack.c.b16 %v6549, %v6545
    %v7202 = vpack.c.b16 %v6554, %v6550
    %v7203 = vpack.c.b16 %v6555, %v6551
    %v7204 = vpack.c.b16 %v6556, %v6552
    %v7205 = vpack.c.b16 %v6557, %v6553
    %v7206 = vpack.c.b16 %v6562, %v6558
    %v7207 = vpack.c.b16 %v6563, %v6559
    %v7208 = vpack.c.b16 %v6564, %v6560
    %v7209 = vpack.c.b16 %v6565, %v6561
    %v7210 = vpack.c.b16 %v6570, %v6566
    %v7211 = vpack.c.b16 %v6571, %v6567
    %v7212 = vpack.c.b16 %v6572, %v6568
    %v7213 = vpack.c.b16 %v6573, %v6569
    %v7214 = vpack.c.b16 %v6578, %v6574
    %v7215 = vpack.c.b16 %v6579, %v6575
    %v7216 = vpack.c.b16 %v6580, %v6576
    %v7217 = vpack.c.b16 %v6581, %v6577
    %v7218 = vpack.c.b16 %v6586, %v6582
    %v7219 = vpack.c.b16 %v6587, %v6583
    %v7220 = vpack.c.b16 %v6588, %v6584
    %v7221 = vpack.c.b16 %v6589, %v6585
    %v7222 = vpack.c.b16 %v6594, %v6590
    %v7223 = vpack.c.b16 %v6595, %v6591
    %v7224 = vpack.c.b16 %v6596, %v6592
    %v7225 = vpack.c.b16 %v6597, %v6593
    %v7226 = vpack.c.b16 %v6602, %v6598
    %v7227 = vpack.c.b16 %v6603, %v6599
    %v7228 = vpack.c.b16 %v6604, %v6600
    %v7229 = vpack.c.b16 %v6605, %v6601
    %v7230 = vpack.c.b16 %v6610, %v6606
    %v7231 = vpack.c.b16 %v6611, %v6607
    %v7232 = vpack.c.b16 %v6612, %v6608
    %v7233 = vpack.c.b16 %v6613, %v6609
    %v7234 = vpack.c.b16 %v6618, %v6614
    %v7235 = vpack.c.b16 %v6619, %v6615
    %v7236 = vpack.c.b16 %v6620, %v6616
    %v7237 = vpack.c.b16 %v6621, %v6617
    %v7238 = vpack.c.b16 %v6626, %v6622
    %v7239 = vpack.c.b16 %v6627, %v6623
    %v7240 = vpack.c.b16 %v6628, %v6624
    %v7241 = vpack.c.b16 %v6629, %v6625
    %v7242 = vpack.c.b16 %v6634, %v6630
    %v7243 = vpack.c.b16 %v6635, %v6631
    %v7244 = vpack.c.b16 %v6636, %v6632
    %v7245 = vpack.c.b16 %v6637, %v6633
    %v7246 = vpack.c.b16 %v6642, %v6638
    %v7247 = vpack.c.b16 %v6643, %v6639
    %v7248 = vpack.c.b16 %v6644, %v6640
    %v7249 = vpack.c.b16 %v6645, %v6641
    %v7250 = vpack.c.b16 %v6650, %v6646
    %v7251 = vpack.c.b16 %v6651, %v6647
    %v7252 = vpack.c.b16 %v6652, %v6648
    %v7253 = vpack.c.b16 %v6653, %v6649
    %v7254 = vpack.c.b16 %v6658, %v6654
    %v7255 = vpack.c.b16 %v6659, %v6655
    %v7256 = vpack.c.b16 %v6660, %v6656
    %v7257 = vpack.c.b16 %v6661, %v6657
    %v7258 = vpack.c.b16 %v6666, %v6662
    %v7259 = vpack.c.b16 %v6667, %v6663
    %v7260 = vpack.c.b16 %v6668, %v6664
    %v7261 = vpack.c.b16 %v6669, %v6665
    %v7262 = vpack.c.b16 %v6674, %v6670
    %v7263 = vpack.c.b16 %v6675, %v6671
    %v7264 = vpack.c.b16 %v6676, %v6672
    %v7265 = vpack.c.b16 %v6677, %v6673
    %v7266 = vpack.c.b16 %v6682, %v6678
    %v7267 = vpack.c.b16 %v6683, %v6679
    %v7268 = vpack.c.b16 %v6684, %v6680
    %v7269 = vpack.c.b16 %v6685, %v6681
    %v7270 = vpack.c.b16 %v6690, %v6686
    %v7271 = vpack.c.b16 %v6691, %v6687
    %v7272 = vpack.c.b16 %v6692, %v6688
    %v7273 = vpack.c.b16 %v6693, %v6689
    %v7274 = vpack.c.b16 %v6698, %v6694
    %v7275 = vpack.c.b16 %v6699, %v6695
    %v7276 = vpack.c.b16 %v6700, %v6696
    %v7277 = vpack.c.b16 %v6701, %v6697
    %v7278 = vpack.c.b16 %v6706, %v6702
    %v7279 = vpack.c.b16 %v6707, %v6703
    %v7280 = vpack.c.b16 %v6708, %v6704
    %v7281 = vpack.c.b16 %v6709, %v6705
    %v7282 = vpack.c.b16 %v6714, %v6710
    %v7283 = vpack.c.b16 %v6715, %v6711
    %v7284 = vpack.c.b16 %v6716, %v6712
    %v7285 = vpack.c.b16 %v6717, %v6713
    %v7286 = vpack.c.b16 %v6722, %v6718
    %v7287 = vpack.c.b16 %v6723, %v6719
    %v7288 = vpack.c.b16 %v6724, %v6720
    %v7289 = vpack.c.b16 %v6725, %v6721
    %v7290 = vpack.c.b16 %v6730, %v6726
    %v7291 = vpack.c.b16 %v6731, %v6727
    %v7292 = vpack.c.b16 %v6732, %v6728
    %v7293 = vpack.c.b16 %v6733, %v6729
    %v7294 = vpack.c.b16 %v6738, %v6734
    %v7295 = vpack.c.b16 %v6739, %v6735
    %v7296 = vpack.c.b16 %v6740, %v6736
    %v7297 = vpack.c.b16 %v6741, %v6737
    %v7298 = vpack.c.b16 %v6746, %v6742
    %v7299 = vpack.c.b16 %v6747, %v6743
    %v7300 = vpack.c.b16 %v6748, %v6744
    %v7301 = vpack.c.b16 %v6749, %v6745
    %v7302 = vpack.c.b16 %v6754, %v6750
    %v7303 = vpack.c.b16 %v6755, %v6751
    %v7304 = vpack.c.b16 %v6756, %v6752
    %v7305 = vpack.c.b16 %v6757, %v6753
    %v7306 = vpack.c.b16 %v6762, %v6758
    %v7307 = vpack.c.b16 %v6763, %v6759
    %v7308 = vpack.c.b16 %v6764, %v6760
    %v7309 = vpack.c.b16 %v6765, %v6761
    %v7310 = vpack.c.b16 %v6770, %v6766
    %v7311 = vpack.c.b16 %v6771, %v6767
    %v7312 = vpack.c.b16 %v6772, %v6768
    %v7313 = vpack.c.b16 %v6773, %v6769
    %v7314 = vpack.c.b16 %v6778, %v6774
    %v7315 = vpack.c.b16 %v6779, %v6775
    %v7316 = vpack.c.b16 %v6780, %v6776
    %v7317 = vpack.c.b16 %v6781, %v6777
    %v7318 = vpack.c.b16 %v6786, %v6782
    %v7319 = vpack.c.b16 %v6787, %v6783
    %v7320 = vpack.c.b16 %v6788, %v6784
    %v7321 = vpack.c.b16 %v6789, %v6785
    %v7322 = vpack.c.b16 %v6794, %v6790
    %v7323 = vpack.c.b16 %v6795, %v6791
    %v7324 = vpack.c.b16 %v6796, %v6792
    %v7325 = vpack.c.b16 %v6797, %v6793
    %v7326 = vpack.c.b16 %v6802, %v6798
    %v7327 = vpack.c.b16 %v6803, %v6799
    %v7328 = vpack.c.b16 %v6804, %v6800
    %v7329 = vpack.c.b16 %v6805, %v6801
    %v7330 = vpack.c.b16 %v6810, %v6806
    %v7331 = vpack.c.b16 %v6811, %v6807
    %v7332 = vpack.c.b16 %v6812, %v6808
    %v7333 = vpack.c.b16 %v6813, %v6809
    %v7334 = vpack.c.b16 %v6818, %v6814
    %v7335 = vpack.c.b16 %v6819, %v6815
    %v7336 = vpack.c.b16 %v6820, %v6816
    %v7337 = vpack.c.b16 %v6821, %v6817
    %v7338 = vpack.c.b16 %v6826, %v6822
    %v7339 = vpack.c.b16 %v6827, %v6823
    %v7340 = vpack.c.b16 %v6828, %v6824
    %v7341 = vpack.c.b16 %v6829, %v6825
    %v7342 = vpack.c.b16 %v6834, %v6830
    %v7343 = vpack.c.b16 %v6835, %v6831
    %v7344 = vpack.c.b16 %v6836, %v6832
    %v7345 = vpack.c.b16 %v6837, %v6833
    %v7346 = vpack.c.b16 %v6842, %v6838
    %v7347 = vpack.c.b16 %v6843, %v6839
    %v7348 = vpack.c.b16 %v6844, %v6840
    %v7349 = vpack.c.b16 %v6845, %v6841
    %v7350 = vpack.c.b16 %v6850, %v6846
    %v7351 = vpack.c.b16 %v6851, %v6847
    %v7352 = vpack.c.b16 %v6852, %v6848
    %v7353 = vpack.c.b16 %v6853, %v6849
    %v7354 = vpack.c.b16 %v6858, %v6854
    %v7355 = vpack.c.b16 %v6859, %v6855
    %v7356 = vpack.c.b16 %v6860, %v6856
    %v7357 = vpack.c.b16 %v6861, %v6857
    %v7358 = vpack.c.b16 %v6866, %v6862
    %v7359 = vpack.c.b16 %v6867, %v6863
    %v7360 = vpack.c.b16 %v6868, %v6864
    %v7361 = vpack.c.b16 %v6869, %v6865
    %v7362 = vpack.c.b16 %v6874, %v6870
    %v7363 = vpack.c.b16 %v6875, %v6871
    %v7364 = vpack.c.b16 %v6876, %v6872
    %v7365 = vpack.c.b16 %v6877, %v6873
    %v7366 = vpack.c.b16 %v6882, %v6878
    %v7367 = vpack.c.b16 %v6883, %v6879
    %v7368 = vpack.c.b16 %v6884, %v6880
    %v7369 = vpack.c.b16 %v6885, %v6881
    %v7370 = vpack.c.b16 %v6890, %v6886
    %v7371 = vpack.c.b16 %v6891, %v6887
    %v7372 = vpack.c.b16 %v6892, %v6888
    %v7373 = vpack.c.b16 %v6893, %v6889
    %7854 = vmatprep.subr.bf16.mxu0 %v6895
    %7855 = vmatpush1.bf16.msra.mxu0 %v6894
    %7856 = vmatprep.subr.bf16.mxu0 %v6899
    %7857 = vmatpush1.bf16.msra.mxu0 %v6898
    %7858 = vmatprep.subr.bf16.mxu0 %v6903
    %7859 = vmatpush1.bf16.msra.mxu0 %v6902
    %7860 = vmatprep.subr.bf16.mxu0 %v6907
    %7861 = vmatpush1.bf16.msra.mxu0 %v6906
    %7862 = vmatprep.subr.bf16.mxu0 %v6911
    %7863 = vmatpush1.bf16.msra.mxu0 %v6910
    %7864 = vmatprep.subr.bf16.mxu0 %v6915
    %7865 = vmatpush1.bf16.msra.mxu0 %v6914
    %7866 = vmatprep.subr.bf16.mxu0 %v6919
    %7867 = vmatpush1.bf16.msra.mxu0 %v6918
    %7868 = vmatprep.subr.bf16.mxu0 %v6923
    %7869 = vmatpush1.bf16.msra.mxu0 %v6922
    %7870 = vmatprep.subr.bf16.mxu0 %v6927
    %7871 = vmatpush1.bf16.msra.mxu0 %v6926
    %7872 = vmatprep.subr.bf16.mxu0 %v6931
    %7873 = vmatpush1.bf16.msra.mxu0 %v6930
    %7874 = vmatprep.subr.bf16.mxu0 %v6935
    %7875 = vmatpush1.bf16.msra.mxu0 %v6934
    %7876 = vmatprep.subr.bf16.mxu0 %v6939
    %7877 = vmatpush1.bf16.msra.mxu0 %v6938
    %7878 = vmatprep.subr.bf16.mxu0 %v6943
    %7879 = vmatpush1.bf16.msra.mxu0 %v6942
    %7880 = vmatprep.subr.bf16.mxu0 %v6947
    %7881 = vmatpush1.bf16.msra.mxu0 %v6946
    %7882 = vmatprep.subr.bf16.mxu0 %v6951
    %7883 = vmatpush1.bf16.msra.mxu0 %v6950
    %7884 = vmatprep.subr.bf16.mxu0 %v6955
    %7885 = vmatpush1.bf16.msra.mxu0 %v6954
    %7886 = vmatprep.mubr.bf16.mxu0 %v4833
    %7887 = vmatmul.mubr.bf16.gmra.mrb[0].mxu0 %v4832
    %v7888 = vpop.f32.mrb[0].mxu0
    %v7889 = vadd.f32 %v5437, %v7888
    %v7890 = vpop.f32.mrb[0].mxu0
    %v7891 = vadd.f32 %v5441, %v7890
    %v7892 = vpop.f32.mrb[0].mxu0
    %v7893 = vadd.f32 %v5437, %v7892
    %v7894 = vpop.f32.mrb[0].mxu0
    %v7895 = vadd.f32 %v5441, %v7894
    %7896 = vmatprep.mubr.bf16.mxu0 %v4848
    %7897 = vmatmul.mubr.bf16.gmra.mrb[0].mxu0 %v4847
    %v7898 = vpop.f32.mrb[0].mxu0
    %v7899 = vadd.f32 %v5437, %v7898
    %v7900 = vpop.f32.mrb[0].mxu0
    %v7901 = vadd.f32 %v5441, %v7900
    %v7902 = vpop.f32.mrb[0].mxu0
    %v7903 = vadd.f32 %v5437, %v7902
    %v7904 = vpop.f32.mrb[0].mxu0
    %v7905 = vadd.f32 %v5441, %v7904
    %7906 = vmatprep.mubr.bf16.mxu0 %v4863
    %7907 = vmatmul.mubr.bf16.gmra.mrb[0].mxu0 %v4862
    %v7908 = vpop.f32.mrb[0].mxu0
    %v7909 = vadd.f32 %v5437, %v7908
    %v7910 = vpop.f32.mrb[0].mxu0
    %v7911 = vadd.f32 %v5441, %v7910
    %v7912 = vpop.f32.mrb[0].mxu0
    %v7913 = vadd.f32 %v5437, %v7912
    %v7914 = vpop.f32.mrb[0].mxu0
    %v7915 = vadd.f32 %v5441, %v7914
    %7916 = vmatprep.mubr.bf16.mxu0 %v4878
    %7917 = vmatmul.mubr.bf16.gmra.mrb[0].mxu0 %v4877
    %v7918 = vpop.f32.mrb[0].mxu0
    %v7919 = vadd.f32 %v5437, %v7918
    %v7920 = vpop.f32.mrb[0].mxu0
    %v7921 = vadd.f32 %v5441, %v7920
    %v7922 = vpop.f32.mrb[0].mxu0
    %v7923 = vadd.f32 %v5437, %v7922
    %v7924 = vpop.f32.mrb[0].mxu0
    %v7925 = vadd.f32 %v5441, %v7924
    %7926 = vmatprep.mubr.bf16.mxu0 %v4893
    %7927 = vmatmul.mubr.bf16.gmra.mrb[0].mxu0 %v4892
    %v7928 = vpop.f32.mrb[0].mxu0
    %v7929 = vadd.f32 %v5437, %v7928
    %v7930 = vpop.f32.mrb[0].mxu0
    %v7931 = vadd.f32 %v5441, %v7930
    %v7932 = vpop.f32.mrb[0].mxu0
    %v7933 = vadd.f32 %v5437, %v7932
    %v7934 = vpop.f32.mrb[0].mxu0
    %v7935 = vadd.f32 %v5441, %v7934
    %7936 = vmatprep.mubr.bf16.mxu0 %v4908
    %7937 = vmatmul.mubr.bf16.gmra.mrb[0].mxu0 %v4907
    %v7938 = vpop.f32.mrb[0].mxu0
    %v7939 = vadd.f32 %v5437, %v7938
    %v7940 = vpop.f32.mrb[0].mxu0
    %v7941 = vadd.f32 %v5441, %v7940
    %v7942 = vpop.f32.mrb[0].mxu0
    %v7943 = vadd.f32 %v5437, %v7942
    %v7944 = vpop.f32.mrb[0].mxu0
    %v7945 = vadd.f32 %v5441, %v7944
    %7946 = vmatprep.mubr.bf16.mxu0 %v4923
    %7947 = vmatmul.mubr.bf16.gmra.mrb[0].mxu0 %v4922
    %v7948 = vpop.f32.mrb[0].mxu0
    %v7949 = vadd.f32 %v5437, %v7948
    %v7950 = vpop.f32.mrb[0].mxu0
    %v7951 = vadd.f32 %v5441, %v7950
    %v7952 = vpop.f32.mrb[0].mxu0
    %v7953 = vadd.f32 %v5437, %v7952
    %v7954 = vpop.f32.mrb[0].mxu0
    %v7955 = vadd.f32 %v5441, %v7954
    %7956 = vmatprep.mubr.bf16.mxu0 %v4938
    %7957 = vmatmul.mubr.bf16.gmra.mrb[0].mxu0 %v4937
    %v7958 = vpop.f32.mrb[0].mxu0
    %v7959 = vadd.f32 %v5437, %v7958
    %v7960 = vpop.f32.mrb[0].mxu0
    %v7961 = vadd.f32 %v5441, %v7960
    %v7962 = vpop.f32.mrb[0].mxu0
    %v7963 = vadd.f32 %v5437, %v7962
    %v7964 = vpop.f32.mrb[0].mxu0
    %v7965 = vadd.f32 %v5441, %v7964
    %7966 = vdwg.mxu0
    %7967 = vmatprep.subr.bf16.mxu0 %v6959
    %7968 = vmatpush1.bf16.msra.mxu0 %v6958
    %7969 = vmatprep.subr.bf16.mxu0 %v6963
    %7970 = vmatpush1.bf16.msra.mxu0 %v6962
    %7971 = vmatprep.subr.bf16.mxu0 %v6967
    %7972 = vmatpush1.bf16.msra.mxu0 %v6966
    %7973 = vmatprep.subr.bf16.mxu0 %v6971
    %7974 = vmatpush1.bf16.msra.mxu0 %v6970
    %7975 = vmatprep.subr.bf16.mxu0 %v6975
    %7976 = vmatpush1.bf16.msra.mxu0 %v6974
    %7977 = vmatprep.subr.bf16.mxu0 %v6979
    %7978 = vmatpush1.bf16.msra.mxu0 %v6978
    %7979 = vmatprep.subr.bf16.mxu0 %v6983
    %7980 = vmatpush1.bf16.msra.mxu0 %v6982
    %7981 = vmatprep.subr.bf16.mxu0 %v6987
    %7982 = vmatpush1.bf16.msra.mxu0 %v6986
    %7983 = vmatprep.subr.bf16.mxu0 %v6991
    %7984 = vmatpush1.bf16.msra.mxu0 %v6990
    %7985 = vmatprep.subr.bf16.mxu0 %v6995
    %7986 = vmatpush1.bf16.msra.mxu0 %v6994
    %7987 = vmatprep.subr.bf16.mxu0 %v6999
    %7988 = vmatpush1.bf16.msra.mxu0 %v6998
    %7989 = vmatprep.subr.bf16.mxu0 %v7003
    %7990 = vmatpush1.bf16.msra.mxu0 %v7002
    %7991 = vmatprep.subr.bf16.mxu0 %v7007
    %7992 = vmatpush1.bf16.msra.mxu0 %v7006
    %7993 = vmatprep.subr.bf16.mxu0 %v7011
    %7994 = vmatpush1.bf16.msra.mxu0 %v7010
    %7995 = vmatprep.subr.bf16.mxu0 %v7015
    %7996 = vmatpush1.bf16.msra.mxu0 %v7014
    %7997 = vmatprep.subr.bf16.mxu0 %v7019
    %7998 = vmatpush1.bf16.msra.mxu0 %v7018
    %7999 = vmatprep.mubr.bf16.mxu0 %v4835
    %8000 = vmatmul.mubr.bf16.gmra.mrb[0].mxu0 %v4834
    %v8001 = vpop.f32.mrb[0].mxu0
    %v8002 = vadd.f32 %v7889, %v8001
    %v8003 = vpop.f32.mrb[0].mxu0
    %v8004 = vadd.f32 %v7891, %v8003
    %v8005 = vpop.f32.mrb[0].mxu0
    %v8006 = vadd.f32 %v7893, %v8005
    %v8007 = vpop.f32.mrb[0].mxu0
    %v8008 = vadd.f32 %v7895, %v8007
    %8009 = vmatprep.mubr.bf16.mxu0 %v4850
    %8010 = vmatmul.mubr.bf16.gmra.mrb[0].mxu0 %v4849
    %v8011 = vpop.f32.mrb[0].mxu0
    %v8012 = vadd.f32 %v7899, %v8011
    %v8013 = vpop.f32.mrb[0].mxu0
    %v8014 = vadd.f32 %v7901, %v8013
    %v8015 = vpop.f32.mrb[0].mxu0
    %v8016 = vadd.f32 %v7903, %v8015
    %v8017 = vpop.f32.mrb[0].mxu0
    %v8018 = vadd.f32 %v7905, %v8017
    %8019 = vmatprep.mubr.bf16.mxu0 %v4865
    %8020 = vmatmul.mubr.bf16.gmra.mrb[0].mxu0 %v4864
    %v8021 = vpop.f32.mrb[0].mxu0
    %v8022 = vadd.f32 %v7909, %v8021
    %v8023 = vpop.f32.mrb[0].mxu0
    %v8024 = vadd.f32 %v7911, %v8023
    %v8025 = vpop.f32.mrb[0].mxu0
    %v8026 = vadd.f32 %v7913, %v8025
    %v8027 = vpop.f32.mrb[0].mxu0
    %v8028 = vadd.f32 %v7915, %v8027
    %8029 = vmatprep.mubr.bf16.mxu0 %v4880
    %8030 = vmatmul.mubr.bf16.gmra.mrb[0].mxu0 %v4879
    %v8031 = vpop.f32.mrb[0].mxu0
    %v8032 = vadd.f32 %v7919, %v8031
    %v8033 = vpop.f32.mrb[0].mxu0
    %v8034 = vadd.f32 %v7921, %v8033
    %v8035 = vpop.f32.mrb[0].mxu0
    %v8036 = vadd.f32 %v7923, %v8035
    %v8037 = vpop.f32.mrb[0].mxu0
    %v8038 = vadd.f32 %v7925, %v8037
    %8039 = vmatprep.mubr.bf16.mxu0 %v4895
    %8040 = vmatmul.mubr.bf16.gmra.mrb[0].mxu0 %v4894
    %v8041 = vpop.f32.mrb[0].mxu0
    %v8042 = vadd.f32 %v7929, %v8041
    %v8043 = vpop.f32.mrb[0].mxu0
    %v8044 = vadd.f32 %v7931, %v8043
    %v8045 = vpop.f32.mrb[0].mxu0
    %v8046 = vadd.f32 %v7933, %v8045
    %v8047 = vpop.f32.mrb[0].mxu0
    %v8048 = vadd.f32 %v7935, %v8047
    %8049 = vmatprep.mubr.bf16.mxu0 %v4910
    %8050 = vmatmul.mubr.bf16.gmra.mrb[0].mxu0 %v4909
    %v8051 = vpop.f32.mrb[0].mxu0
    %v8052 = vadd.f32 %v7939, %v8051
    %v8053 = vpop.f32.mrb[0].mxu0
    %v8054 = vadd.f32 %v7941, %v8053
    %v8055 = vpop.f32.mrb[0].mxu0
    %v8056 = vadd.f32 %v7943, %v8055
    %v8057 = vpop.f32.mrb[0].mxu0
    %v8058 = vadd.f32 %v7945, %v8057
    %8059 = vmatprep.mubr.bf16.mxu0 %v4925
    %8060 = vmatmul.mubr.bf16.gmra.mrb[0].mxu0 %v4924
    %v8061 = vpop.f32.mrb[0].mxu0
    %v8062 = vadd.f32 %v7949, %v8061
    %v8063 = vpop.f32.mrb[0].mxu0
    %v8064 = vadd.f32 %v7951, %v8063
    %v8065 = vpop.f32.mrb[0].mxu0
    %v8066 = vadd.f32 %v7953, %v8065
    %v8067 = vpop.f32.mrb[0].mxu0
    %v8068 = vadd.f32 %v7955, %v8067
    %8069 = vmatprep.mubr.bf16.mxu0 %v4940
    %8070 = vmatmul.mubr.bf16.gmra.mrb[0].mxu0 %v4939
    %v8071 = vpop.f32.mrb[0].mxu0
    %v8072 = vadd.f32 %v7959, %v8071
    %v8073 = vpop.f32.mrb[0].mxu0
    %v8074 = vadd.f32 %v7961, %v8073
    %v8075 = vpop.f32.mrb[0].mxu0
    %v8076 = vadd.f32 %v7963, %v8075
    %v8077 = vpop.f32.mrb[0].mxu0
    %v8078 = vadd.f32 %v7965, %v8077
    %8079 = vdwg.mxu0
    %8080 = vmatprep.subr.bf16.mxu0 %v7023
    %8081 = vmatpush1.bf16.msra.mxu0 %v7022
    %8082 = vmatprep.subr.bf16.mxu0 %v7027
    %8083 = vmatpush1.bf16.msra.mxu0 %v7026
    %8084 = vmatprep.subr.bf16.mxu0 %v7031
    %8085 = vmatpush1.bf16.msra.mxu0 %v7030
    %8086 = vmatprep.subr.bf16.mxu0 %v7035
    %8087 = vmatpush1.bf16.msra.mxu0 %v7034
    %8088 = vmatprep.subr.bf16.mxu0 %v7039
    %8089 = vmatpush1.bf16.msra.mxu0 %v7038
    %8090 = vmatprep.subr.bf16.mxu0 %v7043
    %8091 = vmatpush1.bf16.msra.mxu0 %v7042
    %8092 = vmatprep.subr.bf16.mxu0 %v7047
    %8093 = vmatpush1.bf16.msra.mxu0 %v7046
    %8094 = vmatprep.subr.bf16.mxu0 %v7051
    %8095 = vmatpush1.bf16.msra.mxu0 %v7050
    %8096 = vmatprep.subr.bf16.mxu0 %v7055
    %8097 = vmatpush1.bf16.msra.mxu0 %v7054
    %8098 = vmatprep.subr.bf16.mxu0 %v7059
    %8099 = vmatpush1.bf16.msra.mxu0 %v7058
    %8100 = vmatprep.subr.bf16.mxu0 %v7063
    %8101 = vmatpush1.bf16.msra.mxu0 %v7062
    %8102 = vmatprep.subr.bf16.mxu0 %v7067
    %8103 = vmatpush1.bf16.msra.mxu0 %v7066
    %8104 = vmatprep.subr.bf16.mxu0 %v7071
    %8105 = vmatpush1.bf16.msra.mxu0 %v7070
    %8106 = vmatprep.subr.bf16.mxu0 %v7075
    %8107 = vmatpush1.bf16.msra.mxu0 %v7074
    %8108 = vmatprep.subr.bf16.mxu0 %v7079
    %8109 = vmatpush1.bf16.msra.mxu0 %v7078
    %8110 = vmatprep.subr.bf16.mxu0 %v7083
    %8111 = vmatpush1.bf16.msra.mxu0 %v7082
    %8112 = vmatprep.mubr.bf16.mxu0 %v4837
    %8113 = vmatmul.mubr.bf16.gmra.mrb[0].mxu0 %v4836
    %v8114 = vpop.f32.mrb[0].mxu0
    %v8115 = vadd.f32 %v8002, %v8114
    %v8116 = vpop.f32.mrb[0].mxu0
    %v8117 = vadd.f32 %v8004, %v8116
    %v8118 = vpop.f32.mrb[0].mxu0
    %v8119 = vadd.f32 %v8006, %v8118
    %v8120 = vpop.f32.mrb[0].mxu0
    %v8121 = vadd.f32 %v8008, %v8120
    %8122 = vmatprep.mubr.bf16.mxu0 %v4852
    %8123 = vmatmul.mubr.bf16.gmra.mrb[0].mxu0 %v4851
    %v8124 = vpop.f32.mrb[0].mxu0
    %v8125 = vadd.f32 %v8012, %v8124
    %v8126 = vpop.f32.mrb[0].mxu0
    %v8127 = vadd.f32 %v8014, %v8126
    %v8128 = vpop.f32.mrb[0].mxu0
    %v8129 = vadd.f32 %v8016, %v8128
    %v8130 = vpop.f32.mrb[0].mxu0
    %v8131 = vadd.f32 %v8018, %v8130
    %8132 = vmatprep.mubr.bf16.mxu0 %v4867
    %8133 = vmatmul.mubr.bf16.gmra.mrb[0].mxu0 %v4866
    %v8134 = vpop.f32.mrb[0].mxu0
    %v8135 = vadd.f32 %v8022, %v8134
    %v8136 = vpop.f32.mrb[0].mxu0
    %v8137 = vadd.f32 %v8024, %v8136
    %v8138 = vpop.f32.mrb[0].mxu0
    %v8139 = vadd.f32 %v8026, %v8138
    %v8140 = vpop.f32.mrb[0].mxu0
    %v8141 = vadd.f32 %v8028, %v8140
    %8142 = vmatprep.mubr.bf16.mxu0 %v4882
    %8143 = vmatmul.mubr.bf16.gmra.mrb[0].mxu0 %v4881
    %v8144 = vpop.f32.mrb[0].mxu0
    %v8145 = vadd.f32 %v8032, %v8144
    %v8146 = vpop.f32.mrb[0].mxu0
    %v8147 = vadd.f32 %v8034, %v8146
    %v8148 = vpop.f32.mrb[0].mxu0
    %v8149 = vadd.f32 %v8036, %v8148
    %v8150 = vpop.f32.mrb[0].mxu0
    %v8151 = vadd.f32 %v8038, %v8150
    %8152 = vmatprep.mubr.bf16.mxu0 %v4897
    %8153 = vmatmul.mubr.bf16.gmra.mrb[0].mxu0 %v4896
    %v8154 = vpop.f32.mrb[0].mxu0
    %v8155 = vadd.f32 %v8042, %v8154
    %v8156 = vpop.f32.mrb[0].mxu0
    %v8157 = vadd.f32 %v8044, %v8156
    %v8158 = vpop.f32.mrb[0].mxu0
    %v8159 = vadd.f32 %v8046, %v8158
    %v8160 = vpop.f32.mrb[0].mxu0
    %v8161 = vadd.f32 %v8048, %v8160
    %8162 = vmatprep.mubr.bf16.mxu0 %v4912
    %8163 = vmatmul.mubr.bf16.gmra.mrb[0].mxu0 %v4911
    %v8164 = vpop.f32.mrb[0].mxu0
    %v8165 = vadd.f32 %v8052, %v8164
    %v8166 = vpop.f32.mrb[0].mxu0
    %v8167 = vadd.f32 %v8054, %v8166
    %v8168 = vpop.f32.mrb[0].mxu0
    %v8169 = vadd.f32 %v8056, %v8168
    %v8170 = vpop.f32.mrb[0].mxu0
    %v8171 = vadd.f32 %v8058, %v8170
    %8172 = vmatprep.mubr.bf16.mxu0 %v4927
    %8173 = vmatmul.mubr.bf16.gmra.mrb[0].mxu0 %v4926
    %v8174 = vpop.f32.mrb[0].mxu0
    %v8175 = vadd.f32 %v8062, %v8174
    %v8176 = vpop.f32.mrb[0].mxu0
    %v8177 = vadd.f32 %v8064, %v8176
    %v8178 = vpop.f32.mrb[0].mxu0
    %v8179 = vadd.f32 %v8066, %v8178
    %v8180 = vpop.f32.mrb[0].mxu0
    %v8181 = vadd.f32 %v8068, %v8180
    %8182 = vmatprep.mubr.bf16.mxu0 %v4942
    %8183 = vmatmul.mubr.bf16.gmra.mrb[0].mxu0 %v4941
    %v8184 = vpop.f32.mrb[0].mxu0
    %v8185 = vadd.f32 %v8072, %v8184
    %v8186 = vpop.f32.mrb[0].mxu0
    %v8187 = vadd.f32 %v8074, %v8186
    %v8188 = vpop.f32.mrb[0].mxu0
    %v8189 = vadd.f32 %v8076, %v8188
    %v8190 = vpop.f32.mrb[0].mxu0
    %v8191 = vadd.f32 %v8078, %v8190
    %8192 = vdwg.mxu0
    %8193 = vmatprep.subr.bf16.mxu0 %v7087
    %8194 = vmatpush1.bf16.msra.mxu0 %v7086
    %8195 = vmatprep.subr.bf16.mxu0 %v7091
    %8196 = vmatpush1.bf16.msra.mxu0 %v7090
    %8197 = vmatprep.subr.bf16.mxu0 %v7095
    %8198 = vmatpush1.bf16.msra.mxu0 %v7094
    %8199 = vmatprep.subr.bf16.mxu0 %v7099
    %8200 = vmatpush1.bf16.msra.mxu0 %v7098
    %8201 = vmatprep.subr.bf16.mxu0 %v7103
    %8202 = vmatpush1.bf16.msra.mxu0 %v7102
    %8203 = vmatprep.subr.bf16.mxu0 %v7107
    %8204 = vmatpush1.bf16.msra.mxu0 %v7106
    %8205 = vmatprep.subr.bf16.mxu0 %v7111
    %8206 = vmatpush1.bf16.msra.mxu0 %v7110
    %8207 = vmatprep.subr.bf16.mxu0 %v7115
    %8208 = vmatpush1.bf16.msra.mxu0 %v7114
    %8209 = vmatprep.subr.bf16.mxu0 %v7119
    %8210 = vmatpush1.bf16.msra.mxu0 %v7118
    %8211 = vmatprep.subr.bf16.mxu0 %v7123
    %8212 = vmatpush1.bf16.msra.mxu0 %v7122
    %8213 = vmatprep.subr.bf16.mxu0 %v7127
    %8214 = vmatpush1.bf16.msra.mxu0 %v7126
    %8215 = vmatprep.subr.bf16.mxu0 %v7131
    %8216 = vmatpush1.bf16.msra.mxu0 %v7130
    %8217 = vmatprep.subr.bf16.mxu0 %v7135
    %8218 = vmatpush1.bf16.msra.mxu0 %v7134
    %8219 = vmatprep.subr.bf16.mxu0 %v7139
    %8220 = vmatpush1.bf16.msra.mxu0 %v7138
    %8221 = vmatprep.subr.bf16.mxu0 %v7143
    %8222 = vmatpush1.bf16.msra.mxu0 %v7142
    %8223 = vmatprep.subr.bf16.mxu0 %v7147
    %8224 = vmatpush1.bf16.msra.mxu0 %v7146
    %8225 = vmatprep.mubr.bf16.mxu0 %v4839
    %8226 = vmatmul.mubr.bf16.gmra.mrb[0].mxu0 %v4838
    %v8227 = vpop.f32.mrb[0].mxu0
    %v8228 = vadd.f32 %v8115, %v8227
    %v8229 = vpop.f32.mrb[0].mxu0
    %v8230 = vadd.f32 %v8117, %v8229
    %v8231 = vpop.f32.mrb[0].mxu0
    %v8232 = vadd.f32 %v8119, %v8231
    %v8233 = vpop.f32.mrb[0].mxu0
    %v8234 = vadd.f32 %v8121, %v8233
    %8235 = vmatprep.mubr.bf16.mxu0 %v4854
    %8236 = vmatmul.mubr.bf16.gmra.mrb[0].mxu0 %v4853
    %v8237 = vpop.f32.mrb[0].mxu0
    %v8238 = vadd.f32 %v8125, %v8237
    %v8239 = vpop.f32.mrb[0].mxu0
    %v8240 = vadd.f32 %v8127, %v8239
    %v8241 = vpop.f32.mrb[0].mxu0
    %v8242 = vadd.f32 %v8129, %v8241
    %v8243 = vpop.f32.mrb[0].mxu0
    %v8244 = vadd.f32 %v8131, %v8243
    %8245 = vmatprep.mubr.bf16.mxu0 %v4869
    %8246 = vmatmul.mubr.bf16.gmra.mrb[0].mxu0 %v4868
    %v8247 = vpop.f32.mrb[0].mxu0
    %v8248 = vadd.f32 %v8135, %v8247
    %v8249 = vpop.f32.mrb[0].mxu0
    %v8250 = vadd.f32 %v8137, %v8249
    %v8251 = vpop.f32.mrb[0].mxu0
    %v8252 = vadd.f32 %v8139, %v8251
    %v8253 = vpop.f32.mrb[0].mxu0
    %v8254 = vadd.f32 %v8141, %v8253
    %8255 = vmatprep.mubr.bf16.mxu0 %v4884
    %8256 = vmatmul.mubr.bf16.gmra.mrb[0].mxu0 %v4883
    %v8257 = vpop.f32.mrb[0].mxu0
    %v8258 = vadd.f32 %v8145, %v8257
    %v8259 = vpop.f32.mrb[0].mxu0
    %v8260 = vadd.f32 %v8147, %v8259
    %v8261 = vpop.f32.mrb[0].mxu0
    %v8262 = vadd.f32 %v8149, %v8261
    %v8263 = vpop.f32.mrb[0].mxu0
    %v8264 = vadd.f32 %v8151, %v8263
    %8265 = vmatprep.mubr.bf16.mxu0 %v4899
    %8266 = vmatmul.mubr.bf16.gmra.mrb[0].mxu0 %v4898
    %v8267 = vpop.f32.mrb[0].mxu0
    %v8268 = vadd.f32 %v8155, %v8267
    %v8269 = vpop.f32.mrb[0].mxu0
    %v8270 = vadd.f32 %v8157, %v8269
    %v8271 = vpop.f32.mrb[0].mxu0
    %v8272 = vadd.f32 %v8159, %v8271
    %v8273 = vpop.f32.mrb[0].mxu0
    %v8274 = vadd.f32 %v8161, %v8273
    %8275 = vmatprep.mubr.bf16.mxu0 %v4914
    %8276 = vmatmul.mubr.bf16.gmra.mrb[0].mxu0 %v4913
    %v8277 = vpop.f32.mrb[0].mxu0
    %v8278 = vadd.f32 %v8165, %v8277
    %v8279 = vpop.f32.mrb[0].mxu0
    %v8280 = vadd.f32 %v8167, %v8279
    %v8281 = vpop.f32.mrb[0].mxu0
    %v8282 = vadd.f32 %v8169, %v8281
    %v8283 = vpop.f32.mrb[0].mxu0
    %v8284 = vadd.f32 %v8171, %v8283
    %8285 = vmatprep.mubr.bf16.mxu0 %v4929
    %8286 = vmatmul.mubr.bf16.gmra.mrb[0].mxu0 %v4928
    %v8287 = vpop.f32.mrb[0].mxu0
    %v8288 = vadd.f32 %v8175, %v8287
    %v8289 = vpop.f32.mrb[0].mxu0
    %v8290 = vadd.f32 %v8177, %v8289
    %v8291 = vpop.f32.mrb[0].mxu0
    %v8292 = vadd.f32 %v8179, %v8291
    %v8293 = vpop.f32.mrb[0].mxu0
    %v8294 = vadd.f32 %v8181, %v8293
    %8295 = vmatprep.mubr.bf16.mxu0 %v4944
    %8296 = vmatmul.mubr.bf16.gmra.mrb[0].mxu0 %v4943
    %v8297 = vpop.f32.mrb[0].mxu0
    %v8298 = vadd.f32 %v8185, %v8297
    %v8299 = vpop.f32.mrb[0].mxu0
    %v8300 = vadd.f32 %v8187, %v8299
    %v8301 = vpop.f32.mrb[0].mxu0
    %v8302 = vadd.f32 %v8189, %v8301
    %v8303 = vpop.f32.mrb[0].mxu0
    %v8304 = vadd.f32 %v8191, %v8303
    %8305 = vdwg.mxu0
    %8306 = vmatprep.subr.bf16.mxu0 %v7151
    %8307 = vmatpush1.bf16.msra.mxu0 %v7150
    %8308 = vmatprep.subr.bf16.mxu0 %v7155
    %8309 = vmatpush1.bf16.msra.mxu0 %v7154
    %8310 = vmatprep.subr.bf16.mxu0 %v7159
    %8311 = vmatpush1.bf16.msra.mxu0 %v7158
    %8312 = vmatprep.subr.bf16.mxu0 %v7163
    %8313 = vmatpush1.bf16.msra.mxu0 %v7162
    %8314 = vmatprep.subr.bf16.mxu0 %v7167
    %8315 = vmatpush1.bf16.msra.mxu0 %v7166
    %8316 = vmatprep.subr.bf16.mxu0 %v7171
    %8317 = vmatpush1.bf16.msra.mxu0 %v7170
    %8318 = vmatprep.subr.bf16.mxu0 %v7175
    %8319 = vmatpush1.bf16.msra.mxu0 %v7174
    %8320 = vmatprep.subr.bf16.mxu0 %v7179
    %8321 = vmatpush1.bf16.msra.mxu0 %v7178
    %8322 = vmatprep.subr.bf16.mxu0 %v7183
    %8323 = vmatpush1.bf16.msra.mxu0 %v7182
    %8324 = vmatprep.subr.bf16.mxu0 %v7187
    %8325 = vmatpush1.bf16.msra.mxu0 %v7186
    %8326 = vmatprep.subr.bf16.mxu0 %v7191
    %8327 = vmatpush1.bf16.msra.mxu0 %v7190
    %8328 = vmatprep.subr.bf16.mxu0 %v7195
    %8329 = vmatpush1.bf16.msra.mxu0 %v7194
    %8330 = vmatprep.subr.bf16.mxu0 %v7199
    %8331 = vmatpush1.bf16.msra.mxu0 %v7198
    %8332 = vmatprep.subr.bf16.mxu0 %v7203
    %8333 = vmatpush1.bf16.msra.mxu0 %v7202
    %8334 = vmatprep.subr.bf16.mxu0 %v7207
    %8335 = vmatpush1.bf16.msra.mxu0 %v7206
    %8336 = vmatprep.subr.bf16.mxu0 %v7211
    %8337 = vmatpush1.bf16.msra.mxu0 %v7210
    %8338 = vmatprep.mubr.bf16.mxu0 %v4841
    %8339 = vmatmul.mubr.bf16.gmra.mrb[0].mxu0 %v4840
    %v8340 = vpop.f32.mrb[0].mxu0
    %v8341 = vadd.f32 %v8228, %v8340
    %v8342 = vpop.f32.mrb[0].mxu0
    %v8343 = vadd.f32 %v8230, %v8342
    %v8344 = vpop.f32.mrb[0].mxu0
    %v8345 = vadd.f32 %v8232, %v8344
    %v8346 = vpop.f32.mrb[0].mxu0
    %v8347 = vadd.f32 %v8234, %v8346
    %8348 = vmatprep.mubr.bf16.mxu0 %v4856
    %8349 = vmatmul.mubr.bf16.gmra.mrb[0].mxu0 %v4855
    %v8350 = vpop.f32.mrb[0].mxu0
    %v8351 = vadd.f32 %v8238, %v8350
    %v8352 = vpop.f32.mrb[0].mxu0
    %v8353 = vadd.f32 %v8240, %v8352
    %v8354 = vpop.f32.mrb[0].mxu0
    %v8355 = vadd.f32 %v8242, %v8354
    %v8356 = vpop.f32.mrb[0].mxu0
    %v8357 = vadd.f32 %v8244, %v8356
    %8358 = vmatprep.mubr.bf16.mxu0 %v4871
    %8359 = vmatmul.mubr.bf16.gmra.mrb[0].mxu0 %v4870
    %v8360 = vpop.f32.mrb[0].mxu0
    %v8361 = vadd.f32 %v8248, %v8360
    %v8362 = vpop.f32.mrb[0].mxu0
    %v8363 = vadd.f32 %v8250, %v8362
    %v8364 = vpop.f32.mrb[0].mxu0
    %v8365 = vadd.f32 %v8252, %v8364
    %v8366 = vpop.f32.mrb[0].mxu0
    %v8367 = vadd.f32 %v8254, %v8366
    %8368 = vmatprep.mubr.bf16.mxu0 %v4886
    %8369 = vmatmul.mubr.bf16.gmra.mrb[0].mxu0 %v4885
    %v8370 = vpop.f32.mrb[0].mxu0
    %v8371 = vadd.f32 %v8258, %v8370
    %v8372 = vpop.f32.mrb[0].mxu0
    %v8373 = vadd.f32 %v8260, %v8372
    %v8374 = vpop.f32.mrb[0].mxu0
    %v8375 = vadd.f32 %v8262, %v8374
    %v8376 = vpop.f32.mrb[0].mxu0
    %v8377 = vadd.f32 %v8264, %v8376
    %8378 = vmatprep.mubr.bf16.mxu0 %v4901
    %8379 = vmatmul.mubr.bf16.gmra.mrb[0].mxu0 %v4900
    %v8380 = vpop.f32.mrb[0].mxu0
    %v8381 = vadd.f32 %v8268, %v8380
    %v8382 = vpop.f32.mrb[0].mxu0
    %v8383 = vadd.f32 %v8270, %v8382
    %v8384 = vpop.f32.mrb[0].mxu0
    %v8385 = vadd.f32 %v8272, %v8384
    %v8386 = vpop.f32.mrb[0].mxu0
    %v8387 = vadd.f32 %v8274, %v8386
    %8388 = vmatprep.mubr.bf16.mxu0 %v4916
    %8389 = vmatmul.mubr.bf16.gmra.mrb[0].mxu0 %v4915
    %v8390 = vpop.f32.mrb[0].mxu0
    %v8391 = vadd.f32 %v8278, %v8390
    %v8392 = vpop.f32.mrb[0].mxu0
    %v8393 = vadd.f32 %v8280, %v8392
    %v8394 = vpop.f32.mrb[0].mxu0
    %v8395 = vadd.f32 %v8282, %v8394
    %v8396 = vpop.f32.mrb[0].mxu0
    %v8397 = vadd.f32 %v8284, %v8396
    %8398 = vmatprep.mubr.bf16.mxu0 %v4931
    %8399 = vmatmul.mubr.bf16.gmra.mrb[0].mxu0 %v4930
    %v8400 = vpop.f32.mrb[0].mxu0
    %v8401 = vadd.f32 %v8288, %v8400
    %v8402 = vpop.f32.mrb[0].mxu0
    %v8403 = vadd.f32 %v8290, %v8402
    %v8404 = vpop.f32.mrb[0].mxu0
    %v8405 = vadd.f32 %v8292, %v8404
    %v8406 = vpop.f32.mrb[0].mxu0
    %v8407 = vadd.f32 %v8294, %v8406
    %8408 = vmatprep.mubr.bf16.mxu0 %v4946
    %8409 = vmatmul.mubr.bf16.gmra.mrb[0].mxu0 %v4945
    %v8410 = vpop.f32.mrb[0].mxu0
    %v8411 = vadd.f32 %v8298, %v8410
    %v8412 = vpop.f32.mrb[0].mxu0
    %v8413 = vadd.f32 %v8300, %v8412
    %v8414 = vpop.f32.mrb[0].mxu0
    %v8415 = vadd.f32 %v8302, %v8414
    %v8416 = vpop.f32.mrb[0].mxu0
    %v8417 = vadd.f32 %v8304, %v8416
    %8418 = vdwg.mxu0
    %8419 = vmatprep.subr.bf16.mxu0 %v7215
    %8420 = vmatpush1.bf16.msra.mxu0 %v7214
    %8421 = vmatprep.subr.bf16.mxu0 %v7219
    %8422 = vmatpush1.bf16.msra.mxu0 %v7218
    %8423 = vmatprep.subr.bf16.mxu0 %v7223
    %8424 = vmatpush1.bf16.msra.mxu0 %v7222
    %8425 = vmatprep.subr.bf16.mxu0 %v7227
    %8426 = vmatpush1.bf16.msra.mxu0 %v7226
    %8427 = vmatprep.subr.bf16.mxu0 %v7231
    %8428 = vmatpush1.bf16.msra.mxu0 %v7230
    %8429 = vmatprep.subr.bf16.mxu0 %v7235
    %8430 = vmatpush1.bf16.msra.mxu0 %v7234
    %8431 = vmatprep.subr.bf16.mxu0 %v7239
    %8432 = vmatpush1.bf16.msra.mxu0 %v7238
    %8433 = vmatprep.subr.bf16.mxu0 %v7243
    %8434 = vmatpush1.bf16.msra.mxu0 %v7242
    %8435 = vmatprep.subr.bf16.mxu0 %v7247
    %8436 = vmatpush1.bf16.msra.mxu0 %v7246
    %8437 = vmatprep.subr.bf16.mxu0 %v7251
    %8438 = vmatpush1.bf16.msra.mxu0 %v7250
    %8439 = vmatprep.subr.bf16.mxu0 %v7255
    %8440 = vmatpush1.bf16.msra.mxu0 %v7254
    %8441 = vmatprep.subr.bf16.mxu0 %v7259
    %8442 = vmatpush1.bf16.msra.mxu0 %v7258
    %8443 = vmatprep.subr.bf16.mxu0 %v7263
    %8444 = vmatpush1.bf16.msra.mxu0 %v7262
    %8445 = vmatprep.subr.bf16.mxu0 %v7267
    %8446 = vmatpush1.bf16.msra.mxu0 %v7266
    %8447 = vmatprep.subr.bf16.mxu0 %v7271
    %8448 = vmatpush1.bf16.msra.mxu0 %v7270
    %8449 = vmatprep.subr.bf16.mxu0 %v7275
    %8450 = vmatpush1.bf16.msra.mxu0 %v7274
    %8451 = vmatprep.mubr.bf16.mxu0 %v4843
    %8452 = vmatmul.mubr.bf16.gmra.mrb[0].mxu0 %v4842
    %v8453 = vpop.f32.mrb[0].mxu0
    %v8454 = vadd.f32 %v8341, %v8453
    %v8455 = vpop.f32.mrb[0].mxu0
    %v8456 = vadd.f32 %v8343, %v8455
    %v8457 = vpop.f32.mrb[0].mxu0
    %v8458 = vadd.f32 %v8345, %v8457
    %v8459 = vpop.f32.mrb[0].mxu0
    %v8460 = vadd.f32 %v8347, %v8459
    %8461 = vmatprep.mubr.bf16.mxu0 %v4858
    %8462 = vmatmul.mubr.bf16.gmra.mrb[0].mxu0 %v4857
    %v8463 = vpop.f32.mrb[0].mxu0
    %v8464 = vadd.f32 %v8351, %v8463
    %v8465 = vpop.f32.mrb[0].mxu0
    %v8466 = vadd.f32 %v8353, %v8465
    %v8467 = vpop.f32.mrb[0].mxu0
    %v8468 = vadd.f32 %v8355, %v8467
    %v8469 = vpop.f32.mrb[0].mxu0
    %v8470 = vadd.f32 %v8357, %v8469
    %8471 = vmatprep.mubr.bf16.mxu0 %v4873
    %8472 = vmatmul.mubr.bf16.gmra.mrb[0].mxu0 %v4872
    %v8473 = vpop.f32.mrb[0].mxu0
    %v8474 = vadd.f32 %v8361, %v8473
    %v8475 = vpop.f32.mrb[0].mxu0
    %v8476 = vadd.f32 %v8363, %v8475
    %v8477 = vpop.f32.mrb[0].mxu0
    %v8478 = vadd.f32 %v8365, %v8477
    %v8479 = vpop.f32.mrb[0].mxu0
    %v8480 = vadd.f32 %v8367, %v8479
    %8481 = vmatprep.mubr.bf16.mxu0 %v4888
    %8482 = vmatmul.mubr.bf16.gmra.mrb[0].mxu0 %v4887
    %v8483 = vpop.f32.mrb[0].mxu0
    %v8484 = vadd.f32 %v8371, %v8483
    %v8485 = vpop.f32.mrb[0].mxu0
    %v8486 = vadd.f32 %v8373, %v8485
    %v8487 = vpop.f32.mrb[0].mxu0
    %v8488 = vadd.f32 %v8375, %v8487
    %v8489 = vpop.f32.mrb[0].mxu0
    %v8490 = vadd.f32 %v8377, %v8489
    %8491 = vmatprep.mubr.bf16.mxu0 %v4903
    %8492 = vmatmul.mubr.bf16.gmra.mrb[0].mxu0 %v4902
    %v8493 = vpop.f32.mrb[0].mxu0
    %v8494 = vadd.f32 %v8381, %v8493
    %v8495 = vpop.f32.mrb[0].mxu0
    %v8496 = vadd.f32 %v8383, %v8495
    %v8497 = vpop.f32.mrb[0].mxu0
    %v8498 = vadd.f32 %v8385, %v8497
    %v8499 = vpop.f32.mrb[0].mxu0
    %v8500 = vadd.f32 %v8387, %v8499
    %8501 = vmatprep.mubr.bf16.mxu0 %v4918
    %8502 = vmatmul.mubr.bf16.gmra.mrb[0].mxu0 %v4917
    %v8503 = vpop.f32.mrb[0].mxu0
    %v8504 = vadd.f32 %v8391, %v8503
    %v8505 = vpop.f32.mrb[0].mxu0
    %v8506 = vadd.f32 %v8393, %v8505
    %v8507 = vpop.f32.mrb[0].mxu0
    %v8508 = vadd.f32 %v8395, %v8507
    %v8509 = vpop.f32.mrb[0].mxu0
    %v8510 = vadd.f32 %v8397, %v8509
    %8511 = vmatprep.mubr.bf16.mxu0 %v4933
    %8512 = vmatmul.mubr.bf16.gmra.mrb[0].mxu0 %v4932
    %v8513 = vpop.f32.mrb[0].mxu0
    %v8514 = vadd.f32 %v8401, %v8513
    %v8515 = vpop.f32.mrb[0].mxu0
    %v8516 = vadd.f32 %v8403, %v8515
    %v8517 = vpop.f32.mrb[0].mxu0
    %v8518 = vadd.f32 %v8405, %v8517
    %v8519 = vpop.f32.mrb[0].mxu0
    %v8520 = vadd.f32 %v8407, %v8519
    %8521 = vmatprep.mubr.bf16.mxu0 %v4948
    %8522 = vmatmul.mubr.bf16.gmra.mrb[0].mxu0 %v4947
    %v8523 = vpop.f32.mrb[0].mxu0
    %v8524 = vadd.f32 %v8411, %v8523
    %v8525 = vpop.f32.mrb[0].mxu0
    %v8526 = vadd.f32 %v8413, %v8525
    %v8527 = vpop.f32.mrb[0].mxu0
    %v8528 = vadd.f32 %v8415, %v8527
    %v8529 = vpop.f32.mrb[0].mxu0
    %v8530 = vadd.f32 %v8417, %v8529
    %8531 = vdwg.mxu0
    %8532 = vmatprep.subr.bf16.mxu0 %v7279
    %8533 = vmatpush1.bf16.msra.mxu0 %v7278
    %8534 = vmatprep.subr.bf16.mxu0 %v7283
    %8535 = vmatpush1.bf16.msra.mxu0 %v7282
    %8536 = vmatprep.subr.bf16.mxu0 %v7287
    %8537 = vmatpush1.bf16.msra.mxu0 %v7286
    %8538 = vmatprep.subr.bf16.mxu0 %v7291
    %8539 = vmatpush1.bf16.msra.mxu0 %v7290
    %8540 = vmatprep.subr.bf16.mxu0 %v7295
    %8541 = vmatpush1.bf16.msra.mxu0 %v7294
    %8542 = vmatprep.subr.bf16.mxu0 %v7299
    %8543 = vmatpush1.bf16.msra.mxu0 %v7298
    %8544 = vmatprep.subr.bf16.mxu0 %v7303
    %8545 = vmatpush1.bf16.msra.mxu0 %v7302
    %8546 = vmatprep.subr.bf16.mxu0 %v7307
    %8547 = vmatpush1.bf16.msra.mxu0 %v7306
    %8548 = vmatprep.subr.bf16.mxu0 %v7311
    %8549 = vmatpush1.bf16.msra.mxu0 %v7310
    %8550 = vmatprep.subr.bf16.mxu0 %v7315
    %8551 = vmatpush1.bf16.msra.mxu0 %v7314
    %8552 = vmatprep.subr.bf16.mxu0 %v7319
    %8553 = vmatpush1.bf16.msra.mxu0 %v7318
    %8554 = vmatprep.subr.bf16.mxu0 %v7323
    %8555 = vmatpush1.bf16.msra.mxu0 %v7322
    %8556 = vmatprep.subr.bf16.mxu0 %v7327
    %8557 = vmatpush1.bf16.msra.mxu0 %v7326
    %8558 = vmatprep.subr.bf16.mxu0 %v7331
    %8559 = vmatpush1.bf16.msra.mxu0 %v7330
    %8560 = vmatprep.subr.bf16.mxu0 %v7335
    %8561 = vmatpush1.bf16.msra.mxu0 %v7334
    %8562 = vmatprep.subr.bf16.mxu0 %v7339
    %8563 = vmatpush1.bf16.msra.mxu0 %v7338
    %8564 = vmatprep.mubr.bf16.mxu0 %v4845
    %8565 = vmatmul.mubr.bf16.gmra.mrb[0].mxu0 %v4844
    %v8566 = vpop.f32.mrb[0].mxu0
    %v8567 = vadd.f32 %v8454, %v8566
    %v8568 = vpop.f32.mrb[0].mxu0
    %v8569 = vadd.f32 %v8456, %v8568
    %v8570 = vpop.f32.mrb[0].mxu0
    %v8571 = vadd.f32 %v8458, %v8570
    %v8572 = vpop.f32.mrb[0].mxu0
    %v8573 = vadd.f32 %v8460, %v8572
    %8574 = vmatprep.mubr.bf16.mxu0 %v4860
    %8575 = vmatmul.mubr.bf16.gmra.mrb[0].mxu0 %v4859
    %v8576 = vpop.f32.mrb[0].mxu0
    %v8577 = vadd.f32 %v8464, %v8576
    %v8578 = vpop.f32.mrb[0].mxu0
    %v8579 = vadd.f32 %v8466, %v8578
    %v8580 = vpop.f32.mrb[0].mxu0
    %v8581 = vadd.f32 %v8468, %v8580
    %v8582 = vpop.f32.mrb[0].mxu0
    %v8583 = vadd.f32 %v8470, %v8582
    %8584 = vmatprep.mubr.bf16.mxu0 %v4875
    %8585 = vmatmul.mubr.bf16.gmra.mrb[0].mxu0 %v4874
    %v8586 = vpop.f32.mrb[0].mxu0
    %v8587 = vadd.f32 %v8474, %v8586
    %v8588 = vpop.f32.mrb[0].mxu0
    %v8589 = vadd.f32 %v8476, %v8588
    %v8590 = vpop.f32.mrb[0].mxu0
    %v8591 = vadd.f32 %v8478, %v8590
    %v8592 = vpop.f32.mrb[0].mxu0
    %v8593 = vadd.f32 %v8480, %v8592
    %8594 = vmatprep.mubr.bf16.mxu0 %v4890
    %8595 = vmatmul.mubr.bf16.gmra.mrb[0].mxu0 %v4889
    %v8596 = vpop.f32.mrb[0].mxu0
    %v8597 = vadd.f32 %v8484, %v8596
    %v8598 = vpop.f32.mrb[0].mxu0
    %v8599 = vadd.f32 %v8486, %v8598
    %v8600 = vpop.f32.mrb[0].mxu0
    %v8601 = vadd.f32 %v8488, %v8600
    %v8602 = vpop.f32.mrb[0].mxu0
    %v8603 = vadd.f32 %v8490, %v8602
    %8604 = vmatprep.mubr.bf16.mxu0 %v4905
    %8605 = vmatmul.mubr.bf16.gmra.mrb[0].mxu0 %v4904
    %v8606 = vpop.f32.mrb[0].mxu0
    %v8607 = vadd.f32 %v8494, %v8606
    %v8608 = vpop.f32.mrb[0].mxu0
    %v8609 = vadd.f32 %v8496, %v8608
    %v8610 = vpop.f32.mrb[0].mxu0
    %v8611 = vadd.f32 %v8498, %v8610
    %v8612 = vpop.f32.mrb[0].mxu0
    %v8613 = vadd.f32 %v8500, %v8612
    %8614 = vmatprep.mubr.bf16.mxu0 %v4920
    %8615 = vmatmul.mubr.bf16.gmra.mrb[0].mxu0 %v4919
    %v8616 = vpop.f32.mrb[0].mxu0
    %v8617 = vadd.f32 %v8504, %v8616
    %v8618 = vpop.f32.mrb[0].mxu0
    %v8619 = vadd.f32 %v8506, %v8618
    %v8620 = vpop.f32.mrb[0].mxu0
    %v8621 = vadd.f32 %v8508, %v8620
    %v8622 = vpop.f32.mrb[0].mxu0
    %v8623 = vadd.f32 %v8510, %v8622
    %8624 = vmatprep.mubr.bf16.mxu0 %v4935
    %8625 = vmatmul.mubr.bf16.gmra.mrb[0].mxu0 %v4934
    %v8626 = vpop.f32.mrb[0].mxu0
    %v8627 = vadd.f32 %v8514, %v8626
    %v8628 = vpop.f32.mrb[0].mxu0
    %v8629 = vadd.f32 %v8516, %v8628
    %v8630 = vpop.f32.mrb[0].mxu0
    %v8631 = vadd.f32 %v8518, %v8630
    %v8632 = vpop.f32.mrb[0].mxu0
    %v8633 = vadd.f32 %v8520, %v8632
    %8634 = vmatprep.mubr.bf16.mxu0 %v4950
    %8635 = vmatmul.mubr.bf16.gmra.mrb[0].mxu0 %v4949
    %v8636 = vpop.f32.mrb[0].mxu0
    %v8637 = vadd.f32 %v8524, %v8636
    %v8638 = vpop.f32.mrb[0].mxu0
    %v8639 = vadd.f32 %v8526, %v8638
    %v8640 = vpop.f32.mrb[0].mxu0
    %v8641 = vadd.f32 %v8528, %v8640
    %v8642 = vpop.f32.mrb[0].mxu0
    %v8643 = vadd.f32 %v8530, %v8642
    %8644 = vdwg.mxu0
    %8645 = vmatprep.subr.bf16.mxu0 %v7343
    %8646 = vmatpush1.bf16.msra.mxu0 %v7342
    %8647 = vmatprep.subr.bf16.mxu0 %v7347
    %8648 = vmatpush1.bf16.msra.mxu0 %v7346
    %8649 = vmatprep.subr.bf16.mxu0 %v7351
    %8650 = vmatpush1.bf16.msra.mxu0 %v7350
    %8651 = vmatprep.subr.bf16.mxu0 %v7355
    %8652 = vmatpush1.bf16.msra.mxu0 %v7354
    %8653 = vmatprep.subr.bf16.mxu0 %v7359
    %8654 = vmatpush1.bf16.msra.mxu0 %v7358
    %8655 = vmatprep.subr.bf16.mxu0 %v7363
    %8656 = vmatpush1.bf16.msra.mxu0 %v7362
    %8657 = vmatprep.subr.bf16.mxu0 %v7367
    %8658 = vmatpush1.bf16.msra.mxu0 %v7366
    %8659 = vmatprep.subr.bf16.mxu0 %v7371
    %8660 = vmatpush1.bf16.msra.mxu0 %v7370
    %8661 = vmatprep.subr.bf16.mxu0 0
    %8662 = vmatpush1.bf16.msra.mxu0 0
    %8663 = vmatprep.subr.bf16.mxu0 0
    %8664 = vmatpush1.bf16.msra.mxu0 0
    %8665 = vmatprep.subr.bf16.mxu0 0
    %8666 = vmatpush1.bf16.msra.mxu0 0
    %8667 = vmatprep.subr.bf16.mxu0 0
    %8668 = vmatpush1.bf16.msra.mxu0 0
    %8669 = vmatprep.subr.bf16.mxu0 0
    %8670 = vmatpush1.bf16.msra.mxu0 0
    %8671 = vmatprep.subr.bf16.mxu0 0
    %8672 = vmatpush1.bf16.msra.mxu0 0
    %8673 = vmatprep.subr.bf16.mxu0 0
    %8674 = vmatpush1.bf16.msra.mxu0 0
    %8675 = vmatprep.subr.bf16.mxu0 0
    %8676 = vmatpush1.bf16.msra.mxu0 0
    %8677 = vmatprep.mubr.bf16.mxu0 0
    %8678 = vmatmul.mubr.bf16.gmra.mrb[0].mxu0 %v4846
    %v8679 = vpop.f32.mrb[0].mxu0
    %v8680 = vadd.f32 %v8567, %v8679
    %v8681 = vpop.f32.mrb[0].mxu0
    %v8682 = vadd.f32 %v8569, %v8681
    %v8683 = vpop.f32.mrb[0].mxu0
    %v8684 = vadd.f32 %v8571, %v8683
    %v8685 = vpop.f32.mrb[0].mxu0
    %v8686 = vadd.f32 %v8573, %v8685
    %8687 = vmatprep.mubr.bf16.mxu0 0
    %8688 = vmatmul.mubr.bf16.gmra.mrb[0].mxu0 %v4861
    %v8689 = vpop.f32.mrb[0].mxu0
    %v8690 = vadd.f32 %v8577, %v8689
    %v8691 = vpop.f32.mrb[0].mxu0
    %v8692 = vadd.f32 %v8579, %v8691
    %v8693 = vpop.f32.mrb[0].mxu0
    %v8694 = vadd.f32 %v8581, %v8693
    %v8695 = vpop.f32.mrb[0].mxu0
    %v8696 = vadd.f32 %v8583, %v8695
    %8697 = vmatprep.mubr.bf16.mxu0 0
    %8698 = vmatmul.mubr.bf16.gmra.mrb[0].mxu0 %v4876
    %v8699 = vpop.f32.mrb[0].mxu0
    %v8700 = vadd.f32 %v8587, %v8699
    %v8701 = vpop.f32.mrb[0].mxu0
    %v8702 = vadd.f32 %v8589, %v8701
    %v8703 = vpop.f32.mrb[0].mxu0
    %v8704 = vadd.f32 %v8591, %v8703
    %v8705 = vpop.f32.mrb[0].mxu0
    %v8706 = vadd.f32 %v8593, %v8705
    %8707 = vmatprep.mubr.bf16.mxu0 0
    %8708 = vmatmul.mubr.bf16.gmra.mrb[0].mxu0 %v4891
    %v8709 = vpop.f32.mrb[0].mxu0
    %v8710 = vadd.f32 %v8597, %v8709
    %v8711 = vpop.f32.mrb[0].mxu0
    %v8712 = vadd.f32 %v8599, %v8711
    %v8713 = vpop.f32.mrb[0].mxu0
    %v8714 = vadd.f32 %v8601, %v8713
    %v8715 = vpop.f32.mrb[0].mxu0
    %v8716 = vadd.f32 %v8603, %v8715
    %8717 = vmatprep.mubr.bf16.mxu0 0
    %8718 = vmatmul.mubr.bf16.gmra.mrb[0].mxu0 %v4906
    %v8719 = vpop.f32.mrb[0].mxu0
    %v8720 = vadd.f32 %v8607, %v8719
    %v8721 = vpop.f32.mrb[0].mxu0
    %v8722 = vadd.f32 %v8609, %v8721
    %v8723 = vpop.f32.mrb[0].mxu0
    %v8724 = vadd.f32 %v8611, %v8723
    %v8725 = vpop.f32.mrb[0].mxu0
    %v8726 = vadd.f32 %v8613, %v8725
    %8727 = vmatprep.mubr.bf16.mxu0 0
    %8728 = vmatmul.mubr.bf16.gmra.mrb[0].mxu0 %v4921
    %v8729 = vpop.f32.mrb[0].mxu0
    %v8730 = vadd.f32 %v8617, %v8729
    %v8731 = vpop.f32.mrb[0].mxu0
    %v8732 = vadd.f32 %v8619, %v8731
    %v8733 = vpop.f32.mrb[0].mxu0
    %v8734 = vadd.f32 %v8621, %v8733
    %v8735 = vpop.f32.mrb[0].mxu0
    %v8736 = vadd.f32 %v8623, %v8735
    %8737 = vmatprep.mubr.bf16.mxu0 0
    %8738 = vmatmul.mubr.bf16.gmra.mrb[0].mxu0 %v4936
    %v8739 = vpop.f32.mrb[0].mxu0
    %v8740 = vadd.f32 %v8627, %v8739
    %v8741 = vpop.f32.mrb[0].mxu0
    %v8742 = vadd.f32 %v8629, %v8741
    %v8743 = vpop.f32.mrb[0].mxu0
    %v8744 = vadd.f32 %v8631, %v8743
    %v8745 = vpop.f32.mrb[0].mxu0
    %v8746 = vadd.f32 %v8633, %v8745
    %8747 = vmatprep.mubr.bf16.mxu0 0
    %8748 = vmatmul.mubr.bf16.gmra.mrb[0].mxu0 %v4951
    %v8749 = vpop.f32.mrb[0].mxu0
    %v8750 = vadd.f32 %v8637, %v8749
    %v8751 = vpop.f32.mrb[0].mxu0
    %v8752 = vadd.f32 %v8639, %v8751
    %v8753 = vpop.f32.mrb[0].mxu0
    %v8754 = vadd.f32 %v8641, %v8753
    %v8755 = vpop.f32.mrb[0].mxu0
    %v8756 = vadd.f32 %v8643, %v8755
    %8757 = vdwg.mxu0
    %8758 = vmatprep.subr.bf16.mxu0 %v6897
    %8759 = vmatpush1.bf16.msra.mxu0 %v6896
    %8760 = vmatprep.subr.bf16.mxu0 %v6901
    %8761 = vmatpush1.bf16.msra.mxu0 %v6900
    %8762 = vmatprep.subr.bf16.mxu0 %v6905
    %8763 = vmatpush1.bf16.msra.mxu0 %v6904
    %8764 = vmatprep.subr.bf16.mxu0 %v6909
    %8765 = vmatpush1.bf16.msra.mxu0 %v6908
    %8766 = vmatprep.subr.bf16.mxu0 %v6913
    %8767 = vmatpush1.bf16.msra.mxu0 %v6912
    %8768 = vmatprep.subr.bf16.mxu0 %v6917
    %8769 = vmatpush1.bf16.msra.mxu0 %v6916
    %8770 = vmatprep.subr.bf16.mxu0 %v6921
    %8771 = vmatpush1.bf16.msra.mxu0 %v6920
    %8772 = vmatprep.subr.bf16.mxu0 %v6925
    %8773 = vmatpush1.bf16.msra.mxu0 %v6924
    %8774 = vmatprep.subr.bf16.mxu0 %v6929
    %8775 = vmatpush1.bf16.msra.mxu0 %v6928
    %8776 = vmatprep.subr.bf16.mxu0 %v6933
    %8777 = vmatpush1.bf16.msra.mxu0 %v6932
    %8778 = vmatprep.subr.bf16.mxu0 %v6937
    %8779 = vmatpush1.bf16.msra.mxu0 %v6936
    %8780 = vmatprep.subr.bf16.mxu0 %v6941
    %8781 = vmatpush1.bf16.msra.mxu0 %v6940
    %8782 = vmatprep.subr.bf16.mxu0 %v6945
    %8783 = vmatpush1.bf16.msra.mxu0 %v6944
    %8784 = vmatprep.subr.bf16.mxu0 %v6949
    %8785 = vmatpush1.bf16.msra.mxu0 %v6948
    %8786 = vmatprep.subr.bf16.mxu0 %v6953
    %8787 = vmatpush1.bf16.msra.mxu0 %v6952
    %8788 = vmatprep.subr.bf16.mxu0 %v6957
    %8789 = vmatpush1.bf16.msra.mxu0 %v6956
    %8790 = vmatprep.mubr.bf16.mxu0 %v4833
    %8791 = vmatmul.mubr.bf16.gmra.mrb[0].mxu0 %v4832
    %v8792 = vpop.f32.mrb[0].mxu0
    %v8793 = vadd.f32 %v5445, %v8792
    %v8794 = vpop.f32.mrb[0].mxu0
    %v8795 = vadd.f32 %v5449, %v8794
    %v8796 = vpop.f32.mrb[0].mxu0
    %v8797 = vadd.f32 %v5445, %v8796
    %v8798 = vpop.f32.mrb[0].mxu0
    %v8799 = vadd.f32 %v5449, %v8798
    %8800 = vmatprep.mubr.bf16.mxu0 %v4848
    %8801 = vmatmul.mubr.bf16.gmra.mrb[0].mxu0 %v4847
    %v8802 = vpop.f32.mrb[0].mxu0
    %v8803 = vadd.f32 %v5445, %v8802
    %v8804 = vpop.f32.mrb[0].mxu0
    %v8805 = vadd.f32 %v5449, %v8804
    %v8806 = vpop.f32.mrb[0].mxu0
    %v8807 = vadd.f32 %v5445, %v8806
    %v8808 = vpop.f32.mrb[0].mxu0
    %v8809 = vadd.f32 %v5449, %v8808
    %8810 = vmatprep.mubr.bf16.mxu0 %v4863
    %8811 = vmatmul.mubr.bf16.gmra.mrb[0].mxu0 %v4862
    %v8812 = vpop.f32.mrb[0].mxu0
    %v8813 = vadd.f32 %v5445, %v8812
    %v8814 = vpop.f32.mrb[0].mxu0
    %v8815 = vadd.f32 %v5449, %v8814
    %v8816 = vpop.f32.mrb[0].mxu0
    %v8817 = vadd.f32 %v5445, %v8816
    %v8818 = vpop.f32.mrb[0].mxu0
    %v8819 = vadd.f32 %v5449, %v8818
    %8820 = vmatprep.mubr.bf16.mxu0 %v4878
    %8821 = vmatmul.mubr.bf16.gmra.mrb[0].mxu0 %v4877
    %v8822 = vpop.f32.mrb[0].mxu0
    %v8823 = vadd.f32 %v5445, %v8822
    %v8824 = vpop.f32.mrb[0].mxu0
    %v8825 = vadd.f32 %v5449, %v8824
    %v8826 = vpop.f32.mrb[0].mxu0
    %v8827 = vadd.f32 %v5445, %v8826
    %v8828 = vpop.f32.mrb[0].mxu0
    %v8829 = vadd.f32 %v5449, %v8828
    %8830 = vmatprep.mubr.bf16.mxu0 %v4893
    %8831 = vmatmul.mubr.bf16.gmra.mrb[0].mxu0 %v4892
    %v8832 = vpop.f32.mrb[0].mxu0
    %v8833 = vadd.f32 %v5445, %v8832
    %v8834 = vpop.f32.mrb[0].mxu0
    %v8835 = vadd.f32 %v5449, %v8834
    %v8836 = vpop.f32.mrb[0].mxu0
    %v8837 = vadd.f32 %v5445, %v8836
    %v8838 = vpop.f32.mrb[0].mxu0
    %v8839 = vadd.f32 %v5449, %v8838
    %8840 = vmatprep.mubr.bf16.mxu0 %v4908
    %8841 = vmatmul.mubr.bf16.gmra.mrb[0].mxu0 %v4907
    %v8842 = vpop.f32.mrb[0].mxu0
    %v8843 = vadd.f32 %v5445, %v8842
    %v8844 = vpop.f32.mrb[0].mxu0
    %v8845 = vadd.f32 %v5449, %v8844
    %v8846 = vpop.f32.mrb[0].mxu0
    %v8847 = vadd.f32 %v5445, %v8846
    %v8848 = vpop.f32.mrb[0].mxu0
    %v8849 = vadd.f32 %v5449, %v8848
    %8850 = vmatprep.mubr.bf16.mxu0 %v4923
    %8851 = vmatmul.mubr.bf16.gmra.mrb[0].mxu0 %v4922
    %v8852 = vpop.f32.mrb[0].mxu0
    %v8853 = vadd.f32 %v5445, %v8852
    %v8854 = vpop.f32.mrb[0].mxu0
    %v8855 = vadd.f32 %v5449, %v8854
    %v8856 = vpop.f32.mrb[0].mxu0
    %v8857 = vadd.f32 %v5445, %v8856
    %v8858 = vpop.f32.mrb[0].mxu0
    %v8859 = vadd.f32 %v5449, %v8858
    %8860 = vmatprep.mubr.bf16.mxu0 %v4938
    %8861 = vmatmul.mubr.bf16.gmra.mrb[0].mxu0 %v4937
    %v8862 = vpop.f32.mrb[0].mxu0
    %v8863 = vadd.f32 %v5445, %v8862
    %v8864 = vpop.f32.mrb[0].mxu0
    %v8865 = vadd.f32 %v5449, %v8864
    %v8866 = vpop.f32.mrb[0].mxu0
    %v8867 = vadd.f32 %v5445, %v8866
    %v8868 = vpop.f32.mrb[0].mxu0
    %v8869 = vadd.f32 %v5449, %v8868
    %8870 = vdwg.mxu0
    %8871 = vmatprep.subr.bf16.mxu0 %v6961
    %8872 = vmatpush1.bf16.msra.mxu0 %v6960
    %8873 = vmatprep.subr.bf16.mxu0 %v6965
    %8874 = vmatpush1.bf16.msra.mxu0 %v6964
    %8875 = vmatprep.subr.bf16.mxu0 %v6969
    %8876 = vmatpush1.bf16.msra.mxu0 %v6968
    %8877 = vmatprep.subr.bf16.mxu0 %v6973
    %8878 = vmatpush1.bf16.msra.mxu0 %v6972
    %8879 = vmatprep.subr.bf16.mxu0 %v6977
    %8880 = vmatpush1.bf16.msra.mxu0 %v6976
    %8881 = vmatprep.subr.bf16.mxu0 %v6981
    %8882 = vmatpush1.bf16.msra.mxu0 %v6980
    %8883 = vmatprep.subr.bf16.mxu0 %v6985
    %8884 = vmatpush1.bf16.msra.mxu0 %v6984
    %8885 = vmatprep.subr.bf16.mxu0 %v6989
    %8886 = vmatpush1.bf16.msra.mxu0 %v6988
    %8887 = vmatprep.subr.bf16.mxu0 %v6993
    %8888 = vmatpush1.bf16.msra.mxu0 %v6992
    %8889 = vmatprep.subr.bf16.mxu0 %v6997
    %8890 = vmatpush1.bf16.msra.mxu0 %v6996
    %8891 = vmatprep.subr.bf16.mxu0 %v7001
    %8892 = vmatpush1.bf16.msra.mxu0 %v7000
    %8893 = vmatprep.subr.bf16.mxu0 %v7005
    %8894 = vmatpush1.bf16.msra.mxu0 %v7004
    %8895 = vmatprep.subr.bf16.mxu0 %v7009
    %8896 = vmatpush1.bf16.msra.mxu0 %v7008
    %8897 = vmatprep.subr.bf16.mxu0 %v7013
    %8898 = vmatpush1.bf16.msra.mxu0 %v7012
    %8899 = vmatprep.subr.bf16.mxu0 %v7017
    %8900 = vmatpush1.bf16.msra.mxu0 %v7016
    %8901 = vmatprep.subr.bf16.mxu0 %v7021
    %8902 = vmatpush1.bf16.msra.mxu0 %v7020
    %8903 = vmatprep.mubr.bf16.mxu0 %v4835
    %8904 = vmatmul.mubr.bf16.gmra.mrb[0].mxu0 %v4834
    %v8905 = vpop.f32.mrb[0].mxu0
    %v8906 = vadd.f32 %v8793, %v8905
    %v8907 = vpop.f32.mrb[0].mxu0
    %v8908 = vadd.f32 %v8795, %v8907
    %v8909 = vpop.f32.mrb[0].mxu0
    %v8910 = vadd.f32 %v8797, %v8909
    %v8911 = vpop.f32.mrb[0].mxu0
    %v8912 = vadd.f32 %v8799, %v8911
    %8913 = vmatprep.mubr.bf16.mxu0 %v4850
    %8914 = vmatmul.mubr.bf16.gmra.mrb[0].mxu0 %v4849
    %v8915 = vpop.f32.mrb[0].mxu0
    %v8916 = vadd.f32 %v8803, %v8915
    %v8917 = vpop.f32.mrb[0].mxu0
    %v8918 = vadd.f32 %v8805, %v8917
    %v8919 = vpop.f32.mrb[0].mxu0
    %v8920 = vadd.f32 %v8807, %v8919
    %v8921 = vpop.f32.mrb[0].mxu0
    %v8922 = vadd.f32 %v8809, %v8921
    %8923 = vmatprep.mubr.bf16.mxu0 %v4865
    %8924 = vmatmul.mubr.bf16.gmra.mrb[0].mxu0 %v4864
    %v8925 = vpop.f32.mrb[0].mxu0
    %v8926 = vadd.f32 %v8813, %v8925
    %v8927 = vpop.f32.mrb[0].mxu0
    %v8928 = vadd.f32 %v8815, %v8927
    %v8929 = vpop.f32.mrb[0].mxu0
    %v8930 = vadd.f32 %v8817, %v8929
    %v8931 = vpop.f32.mrb[0].mxu0
    %v8932 = vadd.f32 %v8819, %v8931
    %8933 = vmatprep.mubr.bf16.mxu0 %v4880
    %8934 = vmatmul.mubr.bf16.gmra.mrb[0].mxu0 %v4879
    %v8935 = vpop.f32.mrb[0].mxu0
    %v8936 = vadd.f32 %v8823, %v8935
    %v8937 = vpop.f32.mrb[0].mxu0
    %v8938 = vadd.f32 %v8825, %v8937
    %v8939 = vpop.f32.mrb[0].mxu0
    %v8940 = vadd.f32 %v8827, %v8939
    %v8941 = vpop.f32.mrb[0].mxu0
    %v8942 = vadd.f32 %v8829, %v8941
    %8943 = vmatprep.mubr.bf16.mxu0 %v4895
    %8944 = vmatmul.mubr.bf16.gmra.mrb[0].mxu0 %v4894
    %v8945 = vpop.f32.mrb[0].mxu0
    %v8946 = vadd.f32 %v8833, %v8945
    %v8947 = vpop.f32.mrb[0].mxu0
    %v8948 = vadd.f32 %v8835, %v8947
    %v8949 = vpop.f32.mrb[0].mxu0
    %v8950 = vadd.f32 %v8837, %v8949
    %v8951 = vpop.f32.mrb[0].mxu0
    %v8952 = vadd.f32 %v8839, %v8951
    %8953 = vmatprep.mubr.bf16.mxu0 %v4910
    %8954 = vmatmul.mubr.bf16.gmra.mrb[0].mxu0 %v4909
    %v8955 = vpop.f32.mrb[0].mxu0
    %v8956 = vadd.f32 %v8843, %v8955
    %v8957 = vpop.f32.mrb[0].mxu0
    %v8958 = vadd.f32 %v8845, %v8957
    %v8959 = vpop.f32.mrb[0].mxu0
    %v8960 = vadd.f32 %v8847, %v8959
    %v8961 = vpop.f32.mrb[0].mxu0
    %v8962 = vadd.f32 %v8849, %v8961
    %8963 = vmatprep.mubr.bf16.mxu0 %v4925
    %8964 = vmatmul.mubr.bf16.gmra.mrb[0].mxu0 %v4924
    %v8965 = vpop.f32.mrb[0].mxu0
    %v8966 = vadd.f32 %v8853, %v8965
    %v8967 = vpop.f32.mrb[0].mxu0
    %v8968 = vadd.f32 %v8855, %v8967
    %v8969 = vpop.f32.mrb[0].mxu0
    %v8970 = vadd.f32 %v8857, %v8969
    %v8971 = vpop.f32.mrb[0].mxu0
    %v8972 = vadd.f32 %v8859, %v8971
    %8973 = vmatprep.mubr.bf16.mxu0 %v4940
    %8974 = vmatmul.mubr.bf16.gmra.mrb[0].mxu0 %v4939
    %v8975 = vpop.f32.mrb[0].mxu0
    %v8976 = vadd.f32 %v8863, %v8975
    %v8977 = vpop.f32.mrb[0].mxu0
    %v8978 = vadd.f32 %v8865, %v8977
    %v8979 = vpop.f32.mrb[0].mxu0
    %v8980 = vadd.f32 %v8867, %v8979
    %v8981 = vpop.f32.mrb[0].mxu0
    %v8982 = vadd.f32 %v8869, %v8981
    %8983 = vdwg.mxu0
    %8984 = vmatprep.subr.bf16.mxu0 %v7025
    %8985 = vmatpush1.bf16.msra.mxu0 %v7024
    %8986 = vmatprep.subr.bf16.mxu0 %v7029
    %8987 = vmatpush1.bf16.msra.mxu0 %v7028
    %8988 = vmatprep.subr.bf16.mxu0 %v7033
    %8989 = vmatpush1.bf16.msra.mxu0 %v7032
    %8990 = vmatprep.subr.bf16.mxu0 %v7037
    %8991 = vmatpush1.bf16.msra.mxu0 %v7036
    %8992 = vmatprep.subr.bf16.mxu0 %v7041
    %8993 = vmatpush1.bf16.msra.mxu0 %v7040
    %8994 = vmatprep.subr.bf16.mxu0 %v7045
    %8995 = vmatpush1.bf16.msra.mxu0 %v7044
    %8996 = vmatprep.subr.bf16.mxu0 %v7049
    %8997 = vmatpush1.bf16.msra.mxu0 %v7048
    %8998 = vmatprep.subr.bf16.mxu0 %v7053
    %8999 = vmatpush1.bf16.msra.mxu0 %v7052
    %9000 = vmatprep.subr.bf16.mxu0 %v7057
    %9001 = vmatpush1.bf16.msra.mxu0 %v7056
    %9002 = vmatprep.subr.bf16.mxu0 %v7061
    %9003 = vmatpush1.bf16.msra.mxu0 %v7060
    %9004 = vmatprep.subr.bf16.mxu0 %v7065
    %9005 = vmatpush1.bf16.msra.mxu0 %v7064
    %9006 = vmatprep.subr.bf16.mxu0 %v7069
    %9007 = vmatpush1.bf16.msra.mxu0 %v7068
    %9008 = vmatprep.subr.bf16.mxu0 %v7073
    %9009 = vmatpush1.bf16.msra.mxu0 %v7072
    %9010 = vmatprep.subr.bf16.mxu0 %v7077
    %9011 = vmatpush1.bf16.msra.mxu0 %v7076
    %9012 = vmatprep.subr.bf16.mxu0 %v7081
    %9013 = vmatpush1.bf16.msra.mxu0 %v7080
    %9014 = vmatprep.subr.bf16.mxu0 %v7085
    %9015 = vmatpush1.bf16.msra.mxu0 %v7084
    %9016 = vmatprep.mubr.bf16.mxu0 %v4837
    %9017 = vmatmul.mubr.bf16.gmra.mrb[0].mxu0 %v4836
    %v9018 = vpop.f32.mrb[0].mxu0
    %v9019 = vadd.f32 %v8906, %v9018
    %v9020 = vpop.f32.mrb[0].mxu0
    %v9021 = vadd.f32 %v8908, %v9020
    %v9022 = vpop.f32.mrb[0].mxu0
    %v9023 = vadd.f32 %v8910, %v9022
    %v9024 = vpop.f32.mrb[0].mxu0
    %v9025 = vadd.f32 %v8912, %v9024
    %9026 = vmatprep.mubr.bf16.mxu0 %v4852
    %9027 = vmatmul.mubr.bf16.gmra.mrb[0].mxu0 %v4851
    %v9028 = vpop.f32.mrb[0].mxu0
    %v9029 = vadd.f32 %v8916, %v9028
    %v9030 = vpop.f32.mrb[0].mxu0
    %v9031 = vadd.f32 %v8918, %v9030
    %v9032 = vpop.f32.mrb[0].mxu0
    %v9033 = vadd.f32 %v8920, %v9032
    %v9034 = vpop.f32.mrb[0].mxu0
    %v9035 = vadd.f32 %v8922, %v9034
    %9036 = vmatprep.mubr.bf16.mxu0 %v4867
    %9037 = vmatmul.mubr.bf16.gmra.mrb[0].mxu0 %v4866
    %v9038 = vpop.f32.mrb[0].mxu0
    %v9039 = vadd.f32 %v8926, %v9038
    %v9040 = vpop.f32.mrb[0].mxu0
    %v9041 = vadd.f32 %v8928, %v9040
    %v9042 = vpop.f32.mrb[0].mxu0
    %v9043 = vadd.f32 %v8930, %v9042
    %v9044 = vpop.f32.mrb[0].mxu0
    %v9045 = vadd.f32 %v8932, %v9044
    %9046 = vmatprep.mubr.bf16.mxu0 %v4882
    %9047 = vmatmul.mubr.bf16.gmra.mrb[0].mxu0 %v4881
    %v9048 = vpop.f32.mrb[0].mxu0
    %v9049 = vadd.f32 %v8936, %v9048
    %v9050 = vpop.f32.mrb[0].mxu0
    %v9051 = vadd.f32 %v8938, %v9050
    %v9052 = vpop.f32.mrb[0].mxu0
    %v9053 = vadd.f32 %v8940, %v9052
    %v9054 = vpop.f32.mrb[0].mxu0
    %v9055 = vadd.f32 %v8942, %v9054
    %9056 = vmatprep.mubr.bf16.mxu0 %v4897
    %9057 = vmatmul.mubr.bf16.gmra.mrb[0].mxu0 %v4896
    %v9058 = vpop.f32.mrb[0].mxu0
    %v9059 = vadd.f32 %v8946, %v9058
    %v9060 = vpop.f32.mrb[0].mxu0
    %v9061 = vadd.f32 %v8948, %v9060
    %v9062 = vpop.f32.mrb[0].mxu0
    %v9063 = vadd.f32 %v8950, %v9062
    %v9064 = vpop.f32.mrb[0].mxu0
    %v9065 = vadd.f32 %v8952, %v9064
    %9066 = vmatprep.mubr.bf16.mxu0 %v4912
    %9067 = vmatmul.mubr.bf16.gmra.mrb[0].mxu0 %v4911
    %v9068 = vpop.f32.mrb[0].mxu0
    %v9069 = vadd.f32 %v8956, %v9068
    %v9070 = vpop.f32.mrb[0].mxu0
    %v9071 = vadd.f32 %v8958, %v9070
    %v9072 = vpop.f32.mrb[0].mxu0
    %v9073 = vadd.f32 %v8960, %v9072
    %v9074 = vpop.f32.mrb[0].mxu0
    %v9075 = vadd.f32 %v8962, %v9074
    %9076 = vmatprep.mubr.bf16.mxu0 %v4927
    %9077 = vmatmul.mubr.bf16.gmra.mrb[0].mxu0 %v4926
    %v9078 = vpop.f32.mrb[0].mxu0
    %v9079 = vadd.f32 %v8966, %v9078
    %v9080 = vpop.f32.mrb[0].mxu0
    %v9081 = vadd.f32 %v8968, %v9080
    %v9082 = vpop.f32.mrb[0].mxu0
    %v9083 = vadd.f32 %v8970, %v9082
    %v9084 = vpop.f32.mrb[0].mxu0
    %v9085 = vadd.f32 %v8972, %v9084
    %9086 = vmatprep.mubr.bf16.mxu0 %v4942
    %9087 = vmatmul.mubr.bf16.gmra.mrb[0].mxu0 %v4941
    %v9088 = vpop.f32.mrb[0].mxu0
    %v9089 = vadd.f32 %v8976, %v9088
    %v9090 = vpop.f32.mrb[0].mxu0
    %v9091 = vadd.f32 %v8978, %v9090
    %v9092 = vpop.f32.mrb[0].mxu0
    %v9093 = vadd.f32 %v8980, %v9092
    %v9094 = vpop.f32.mrb[0].mxu0
    %v9095 = vadd.f32 %v8982, %v9094
    %9096 = vdwg.mxu0
    %9097 = vmatprep.subr.bf16.mxu0 %v7089
    %9098 = vmatpush1.bf16.msra.mxu0 %v7088
    %9099 = vmatprep.subr.bf16.mxu0 %v7093
    %9100 = vmatpush1.bf16.msra.mxu0 %v7092
    %9101 = vmatprep.subr.bf16.mxu0 %v7097
    %9102 = vmatpush1.bf16.msra.mxu0 %v7096
    %9103 = vmatprep.subr.bf16.mxu0 %v7101
    %9104 = vmatpush1.bf16.msra.mxu0 %v7100
    %9105 = vmatprep.subr.bf16.mxu0 %v7105
    %9106 = vmatpush1.bf16.msra.mxu0 %v7104
    %9107 = vmatprep.subr.bf16.mxu0 %v7109
    %9108 = vmatpush1.bf16.msra.mxu0 %v7108
    %9109 = vmatprep.subr.bf16.mxu0 %v7113
    %9110 = vmatpush1.bf16.msra.mxu0 %v7112
    %9111 = vmatprep.subr.bf16.mxu0 %v7117
    %9112 = vmatpush1.bf16.msra.mxu0 %v7116
    %9113 = vmatprep.subr.bf16.mxu0 %v7121
    %9114 = vmatpush1.bf16.msra.mxu0 %v7120
    %9115 = vmatprep.subr.bf16.mxu0 %v7125
    %9116 = vmatpush1.bf16.msra.mxu0 %v7124
    %9117 = vmatprep.subr.bf16.mxu0 %v7129
    %9118 = vmatpush1.bf16.msra.mxu0 %v7128
    %9119 = vmatprep.subr.bf16.mxu0 %v7133
    %9120 = vmatpush1.bf16.msra.mxu0 %v7132
    %9121 = vmatprep.subr.bf16.mxu0 %v7137
    %9122 = vmatpush1.bf16.msra.mxu0 %v7136
    %9123 = vmatprep.subr.bf16.mxu0 %v7141
    %9124 = vmatpush1.bf16.msra.mxu0 %v7140
    %9125 = vmatprep.subr.bf16.mxu0 %v7145
    %9126 = vmatpush1.bf16.msra.mxu0 %v7144
    %9127 = vmatprep.subr.bf16.mxu0 %v7149
    %9128 = vmatpush1.bf16.msra.mxu0 %v7148
    %9129 = vmatprep.mubr.bf16.mxu0 %v4839
    %9130 = vmatmul.mubr.bf16.gmra.mrb[0].mxu0 %v4838
    %v9131 = vpop.f32.mrb[0].mxu0
    %v9132 = vadd.f32 %v9019, %v9131
    %v9133 = vpop.f32.mrb[0].mxu0
    %v9134 = vadd.f32 %v9021, %v9133
    %v9135 = vpop.f32.mrb[0].mxu0
    %v9136 = vadd.f32 %v9023, %v9135
    %v9137 = vpop.f32.mrb[0].mxu0
    %v9138 = vadd.f32 %v9025, %v9137
    %9139 = vmatprep.mubr.bf16.mxu0 %v4854
    %9140 = vmatmul.mubr.bf16.gmra.mrb[0].mxu0 %v4853
    %v9141 = vpop.f32.mrb[0].mxu0
    %v9142 = vadd.f32 %v9029, %v9141
    %v9143 = vpop.f32.mrb[0].mxu0
    %v9144 = vadd.f32 %v9031, %v9143
    %v9145 = vpop.f32.mrb[0].mxu0
    %v9146 = vadd.f32 %v9033, %v9145
    %v9147 = vpop.f32.mrb[0].mxu0
    %v9148 = vadd.f32 %v9035, %v9147
    %9149 = vmatprep.mubr.bf16.mxu0 %v4869
    %9150 = vmatmul.mubr.bf16.gmra.mrb[0].mxu0 %v4868
    %v9151 = vpop.f32.mrb[0].mxu0
    %v9152 = vadd.f32 %v9039, %v9151
    %v9153 = vpop.f32.mrb[0].mxu0
    %v9154 = vadd.f32 %v9041, %v9153
    %v9155 = vpop.f32.mrb[0].mxu0
    %v9156 = vadd.f32 %v9043, %v9155
    %v9157 = vpop.f32.mrb[0].mxu0
    %v9158 = vadd.f32 %v9045, %v9157
    %9159 = vmatprep.mubr.bf16.mxu0 %v4884
    %9160 = vmatmul.mubr.bf16.gmra.mrb[0].mxu0 %v4883
    %v9161 = vpop.f32.mrb[0].mxu0
    %v9162 = vadd.f32 %v9049, %v9161
    %v9163 = vpop.f32.mrb[0].mxu0
    %v9164 = vadd.f32 %v9051, %v9163
    %v9165 = vpop.f32.mrb[0].mxu0
    %v9166 = vadd.f32 %v9053, %v9165
    %v9167 = vpop.f32.mrb[0].mxu0
    %v9168 = vadd.f32 %v9055, %v9167
    %9169 = vmatprep.mubr.bf16.mxu0 %v4899
    %9170 = vmatmul.mubr.bf16.gmra.mrb[0].mxu0 %v4898
    %v9171 = vpop.f32.mrb[0].mxu0
    %v9172 = vadd.f32 %v9059, %v9171
    %v9173 = vpop.f32.mrb[0].mxu0
    %v9174 = vadd.f32 %v9061, %v9173
    %v9175 = vpop.f32.mrb[0].mxu0
    %v9176 = vadd.f32 %v9063, %v9175
    %v9177 = vpop.f32.mrb[0].mxu0
    %v9178 = vadd.f32 %v9065, %v9177
    %9179 = vmatprep.mubr.bf16.mxu0 %v4914
    %9180 = vmatmul.mubr.bf16.gmra.mrb[0].mxu0 %v4913
    %v9181 = vpop.f32.mrb[0].mxu0
    %v9182 = vadd.f32 %v9069, %v9181
    %v9183 = vpop.f32.mrb[0].mxu0
    %v9184 = vadd.f32 %v9071, %v9183
    %v9185 = vpop.f32.mrb[0].mxu0
    %v9186 = vadd.f32 %v9073, %v9185
    %v9187 = vpop.f32.mrb[0].mxu0
    %v9188 = vadd.f32 %v9075, %v9187
    %9189 = vmatprep.mubr.bf16.mxu0 %v4929
    %9190 = vmatmul.mubr.bf16.gmra.mrb[0].mxu0 %v4928
    %v9191 = vpop.f32.mrb[0].mxu0
    %v9192 = vadd.f32 %v9079, %v9191
    %v9193 = vpop.f32.mrb[0].mxu0
    %v9194 = vadd.f32 %v9081, %v9193
    %v9195 = vpop.f32.mrb[0].mxu0
    %v9196 = vadd.f32 %v9083, %v9195
    %v9197 = vpop.f32.mrb[0].mxu0
    %v9198 = vadd.f32 %v9085, %v9197
    %9199 = vmatprep.mubr.bf16.mxu0 %v4944
    %9200 = vmatmul.mubr.bf16.gmra.mrb[0].mxu0 %v4943
    %v9201 = vpop.f32.mrb[0].mxu0
    %v9202 = vadd.f32 %v9089, %v9201
    %v9203 = vpop.f32.mrb[0].mxu0
    %v9204 = vadd.f32 %v9091, %v9203
    %v9205 = vpop.f32.mrb[0].mxu0
    %v9206 = vadd.f32 %v9093, %v9205
    %v9207 = vpop.f32.mrb[0].mxu0
    %v9208 = vadd.f32 %v9095, %v9207
    %9209 = vdwg.mxu0
    %9210 = vmatprep.subr.bf16.mxu0 %v7153
    %9211 = vmatpush1.bf16.msra.mxu0 %v7152
    %9212 = vmatprep.subr.bf16.mxu0 %v7157
    %9213 = vmatpush1.bf16.msra.mxu0 %v7156
    %9214 = vmatprep.subr.bf16.mxu0 %v7161
    %9215 = vmatpush1.bf16.msra.mxu0 %v7160
    %9216 = vmatprep.subr.bf16.mxu0 %v7165
    %9217 = vmatpush1.bf16.msra.mxu0 %v7164
    %9218 = vmatprep.subr.bf16.mxu0 %v7169
    %9219 = vmatpush1.bf16.msra.mxu0 %v7168
    %9220 = vmatprep.subr.bf16.mxu0 %v7173
    %9221 = vmatpush1.bf16.msra.mxu0 %v7172
    %9222 = vmatprep.subr.bf16.mxu0 %v7177
    %9223 = vmatpush1.bf16.msra.mxu0 %v7176
    %9224 = vmatprep.subr.bf16.mxu0 %v7181
    %9225 = vmatpush1.bf16.msra.mxu0 %v7180
    %9226 = vmatprep.subr.bf16.mxu0 %v7185
    %9227 = vmatpush1.bf16.msra.mxu0 %v7184
    %9228 = vmatprep.subr.bf16.mxu0 %v7189
    %9229 = vmatpush1.bf16.msra.mxu0 %v7188
    %9230 = vmatprep.subr.bf16.mxu0 %v7193
    %9231 = vmatpush1.bf16.msra.mxu0 %v7192
    %9232 = vmatprep.subr.bf16.mxu0 %v7197
    %9233 = vmatpush1.bf16.msra.mxu0 %v7196
    %9234 = vmatprep.subr.bf16.mxu0 %v7201
    %9235 = vmatpush1.bf16.msra.mxu0 %v7200
    %9236 = vmatprep.subr.bf16.mxu0 %v7205
    %9237 = vmatpush1.bf16.msra.mxu0 %v7204
    %9238 = vmatprep.subr.bf16.mxu0 %v7209
    %9239 = vmatpush1.bf16.msra.mxu0 %v7208
    %9240 = vmatprep.subr.bf16.mxu0 %v7213
    %9241 = vmatpush1.bf16.msra.mxu0 %v7212
    %9242 = vmatprep.mubr.bf16.mxu0 %v4841
    %9243 = vmatmul.mubr.bf16.gmra.mrb[0].mxu0 %v4840
    %v9244 = vpop.f32.mrb[0].mxu0
    %v9245 = vadd.f32 %v9132, %v9244
    %v9246 = vpop.f32.mrb[0].mxu0
    %v9247 = vadd.f32 %v9134, %v9246
    %v9248 = vpop.f32.mrb[0].mxu0
    %v9249 = vadd.f32 %v9136, %v9248
    %v9250 = vpop.f32.mrb[0].mxu0
    %v9251 = vadd.f32 %v9138, %v9250
    %9252 = vmatprep.mubr.bf16.mxu0 %v4856
    %9253 = vmatmul.mubr.bf16.gmra.mrb[0].mxu0 %v4855
    %v9254 = vpop.f32.mrb[0].mxu0
    %v9255 = vadd.f32 %v9142, %v9254
    %v9256 = vpop.f32.mrb[0].mxu0
    %v9257 = vadd.f32 %v9144, %v9256
    %v9258 = vpop.f32.mrb[0].mxu0
    %v9259 = vadd.f32 %v9146, %v9258
    %v9260 = vpop.f32.mrb[0].mxu0
    %v9261 = vadd.f32 %v9148, %v9260
    %9262 = vmatprep.mubr.bf16.mxu0 %v4871
    %9263 = vmatmul.mubr.bf16.gmra.mrb[0].mxu0 %v4870
    %v9264 = vpop.f32.mrb[0].mxu0
    %v9265 = vadd.f32 %v9152, %v9264
    %v9266 = vpop.f32.mrb[0].mxu0
    %v9267 = vadd.f32 %v9154, %v9266
    %v9268 = vpop.f32.mrb[0].mxu0
    %v9269 = vadd.f32 %v9156, %v9268
    %v9270 = vpop.f32.mrb[0].mxu0
    %v9271 = vadd.f32 %v9158, %v9270
    %9272 = vmatprep.mubr.bf16.mxu0 %v4886
    %9273 = vmatmul.mubr.bf16.gmra.mrb[0].mxu0 %v4885
    %v9274 = vpop.f32.mrb[0].mxu0
    %v9275 = vadd.f32 %v9162, %v9274
    %v9276 = vpop.f32.mrb[0].mxu0
    %v9277 = vadd.f32 %v9164, %v9276
    %v9278 = vpop.f32.mrb[0].mxu0
    %v9279 = vadd.f32 %v9166, %v9278
    %v9280 = vpop.f32.mrb[0].mxu0
    %v9281 = vadd.f32 %v9168, %v9280
    %9282 = vmatprep.mubr.bf16.mxu0 %v4901
    %9283 = vmatmul.mubr.bf16.gmra.mrb[0].mxu0 %v4900
    %v9284 = vpop.f32.mrb[0].mxu0
    %v9285 = vadd.f32 %v9172, %v9284
    %v9286 = vpop.f32.mrb[0].mxu0
    %v9287 = vadd.f32 %v9174, %v9286
    %v9288 = vpop.f32.mrb[0].mxu0
    %v9289 = vadd.f32 %v9176, %v9288
    %v9290 = vpop.f32.mrb[0].mxu0
    %v9291 = vadd.f32 %v9178, %v9290
    %9292 = vmatprep.mubr.bf16.mxu0 %v4916
    %9293 = vmatmul.mubr.bf16.gmra.mrb[0].mxu0 %v4915
    %v9294 = vpop.f32.mrb[0].mxu0
    %v9295 = vadd.f32 %v9182, %v9294
    %v9296 = vpop.f32.mrb[0].mxu0
    %v9297 = vadd.f32 %v9184, %v9296
    %v9298 = vpop.f32.mrb[0].mxu0
    %v9299 = vadd.f32 %v9186, %v9298
    %v9300 = vpop.f32.mrb[0].mxu0
    %v9301 = vadd.f32 %v9188, %v9300
    %9302 = vmatprep.mubr.bf16.mxu0 %v4931
    %9303 = vmatmul.mubr.bf16.gmra.mrb[0].mxu0 %v4930
    %v9304 = vpop.f32.mrb[0].mxu0
    %v9305 = vadd.f32 %v9192, %v9304
    %v9306 = vpop.f32.mrb[0].mxu0
    %v9307 = vadd.f32 %v9194, %v9306
    %v9308 = vpop.f32.mrb[0].mxu0
    %v9309 = vadd.f32 %v9196, %v9308
    %v9310 = vpop.f32.mrb[0].mxu0
    %v9311 = vadd.f32 %v9198, %v9310
    %9312 = vmatprep.mubr.bf16.mxu0 %v4946
    %9313 = vmatmul.mubr.bf16.gmra.mrb[0].mxu0 %v4945
    %v9314 = vpop.f32.mrb[0].mxu0
    %v9315 = vadd.f32 %v9202, %v9314
    %v9316 = vpop.f32.mrb[0].mxu0
    %v9317 = vadd.f32 %v9204, %v9316
    %v9318 = vpop.f32.mrb[0].mxu0
    %v9319 = vadd.f32 %v9206, %v9318
    %v9320 = vpop.f32.mrb[0].mxu0
    %v9321 = vadd.f32 %v9208, %v9320
    %9322 = vdwg.mxu0
    %9323 = vmatprep.subr.bf16.mxu0 %v7217
    %9324 = vmatpush1.bf16.msra.mxu0 %v7216
    %9325 = vmatprep.subr.bf16.mxu0 %v7221
    %9326 = vmatpush1.bf16.msra.mxu0 %v7220
    %9327 = vmatprep.subr.bf16.mxu0 %v7225
    %9328 = vmatpush1.bf16.msra.mxu0 %v7224
    %9329 = vmatprep.subr.bf16.mxu0 %v7229
    %9330 = vmatpush1.bf16.msra.mxu0 %v7228
    %9331 = vmatprep.subr.bf16.mxu0 %v7233
    %9332 = vmatpush1.bf16.msra.mxu0 %v7232
    %9333 = vmatprep.subr.bf16.mxu0 %v7237
    %9334 = vmatpush1.bf16.msra.mxu0 %v7236
    %9335 = vmatprep.subr.bf16.mxu0 %v7241
    %9336 = vmatpush1.bf16.msra.mxu0 %v7240
    %9337 = vmatprep.subr.bf16.mxu0 %v7245
    %9338 = vmatpush1.bf16.msra.mxu0 %v7244
    %9339 = vmatprep.subr.bf16.mxu0 %v7249
    %9340 = vmatpush1.bf16.msra.mxu0 %v7248
    %9341 = vmatprep.subr.bf16.mxu0 %v7253
    %9342 = vmatpush1.bf16.msra.mxu0 %v7252
    %9343 = vmatprep.subr.bf16.mxu0 %v7257
    %9344 = vmatpush1.bf16.msra.mxu0 %v7256
    %9345 = vmatprep.subr.bf16.mxu0 %v7261
    %9346 = vmatpush1.bf16.msra.mxu0 %v7260
    %9347 = vmatprep.subr.bf16.mxu0 %v7265
    %9348 = vmatpush1.bf16.msra.mxu0 %v7264
    %9349 = vmatprep.subr.bf16.mxu0 %v7269
    %9350 = vmatpush1.bf16.msra.mxu0 %v7268
    %9351 = vmatprep.subr.bf16.mxu0 %v7273
    %9352 = vmatpush1.bf16.msra.mxu0 %v7272
    %9353 = vmatprep.subr.bf16.mxu0 %v7277
    %9354 = vmatpush1.bf16.msra.mxu0 %v7276
    %9355 = vmatprep.mubr.bf16.mxu0 %v4843
    %9356 = vmatmul.mubr.bf16.gmra.mrb[0].mxu0 %v4842
    %v9357 = vpop.f32.mrb[0].mxu0
    %v9358 = vadd.f32 %v9245, %v9357
    %v9359 = vpop.f32.mrb[0].mxu0
    %v9360 = vadd.f32 %v9247, %v9359
    %v9361 = vpop.f32.mrb[0].mxu0
    %v9362 = vadd.f32 %v9249, %v9361
    %v9363 = vpop.f32.mrb[0].mxu0
    %v9364 = vadd.f32 %v9251, %v9363
    %9365 = vmatprep.mubr.bf16.mxu0 %v4858
    %9366 = vmatmul.mubr.bf16.gmra.mrb[0].mxu0 %v4857
    %v9367 = vpop.f32.mrb[0].mxu0
    %v9368 = vadd.f32 %v9255, %v9367
    %v9369 = vpop.f32.mrb[0].mxu0
    %v9370 = vadd.f32 %v9257, %v9369
    %v9371 = vpop.f32.mrb[0].mxu0
    %v9372 = vadd.f32 %v9259, %v9371
    %v9373 = vpop.f32.mrb[0].mxu0
    %v9374 = vadd.f32 %v9261, %v9373
    %9375 = vmatprep.mubr.bf16.mxu0 %v4873
    %9376 = vmatmul.mubr.bf16.gmra.mrb[0].mxu0 %v4872
    %v9377 = vpop.f32.mrb[0].mxu0
    %v9378 = vadd.f32 %v9265, %v9377
    %v9379 = vpop.f32.mrb[0].mxu0
    %v9380 = vadd.f32 %v9267, %v9379
    %v9381 = vpop.f32.mrb[0].mxu0
    %v9382 = vadd.f32 %v9269, %v9381
    %v9383 = vpop.f32.mrb[0].mxu0
    %v9384 = vadd.f32 %v9271, %v9383
    %9385 = vmatprep.mubr.bf16.mxu0 %v4888
    %9386 = vmatmul.mubr.bf16.gmra.mrb[0].mxu0 %v4887
    %v9387 = vpop.f32.mrb[0].mxu0
    %v9388 = vadd.f32 %v9275, %v9387
    %v9389 = vpop.f32.mrb[0].mxu0
    %v9390 = vadd.f32 %v9277, %v9389
    %v9391 = vpop.f32.mrb[0].mxu0
    %v9392 = vadd.f32 %v9279, %v9391
    %v9393 = vpop.f32.mrb[0].mxu0
    %v9394 = vadd.f32 %v9281, %v9393
    %9395 = vmatprep.mubr.bf16.mxu0 %v4903
    %9396 = vmatmul.mubr.bf16.gmra.mrb[0].mxu0 %v4902
    %v9397 = vpop.f32.mrb[0].mxu0
    %v9398 = vadd.f32 %v9285, %v9397
    %v9399 = vpop.f32.mrb[0].mxu0
    %v9400 = vadd.f32 %v9287, %v9399
    %v9401 = vpop.f32.mrb[0].mxu0
    %v9402 = vadd.f32 %v9289, %v9401
    %v9403 = vpop.f32.mrb[0].mxu0
    %v9404 = vadd.f32 %v9291, %v9403
    %9405 = vmatprep.mubr.bf16.mxu0 %v4918
    %9406 = vmatmul.mubr.bf16.gmra.mrb[0].mxu0 %v4917
    %v9407 = vpop.f32.mrb[0].mxu0
    %v9408 = vadd.f32 %v9295, %v9407
    %v9409 = vpop.f32.mrb[0].mxu0
    %v9410 = vadd.f32 %v9297, %v9409
    %v9411 = vpop.f32.mrb[0].mxu0
    %v9412 = vadd.f32 %v9299, %v9411
    %v9413 = vpop.f32.mrb[0].mxu0
    %v9414 = vadd.f32 %v9301, %v9413
    %9415 = vmatprep.mubr.bf16.mxu0 %v4933
    %9416 = vmatmul.mubr.bf16.gmra.mrb[0].mxu0 %v4932
    %v9417 = vpop.f32.mrb[0].mxu0
    %v9418 = vadd.f32 %v9305, %v9417
    %v9419 = vpop.f32.mrb[0].mxu0
    %v9420 = vadd.f32 %v9307, %v9419
    %v9421 = vpop.f32.mrb[0].mxu0
    %v9422 = vadd.f32 %v9309, %v9421
    %v9423 = vpop.f32.mrb[0].mxu0
    %v9424 = vadd.f32 %v9311, %v9423
    %9425 = vmatprep.mubr.bf16.mxu0 %v4948
    %9426 = vmatmul.mubr.bf16.gmra.mrb[0].mxu0 %v4947
    %v9427 = vpop.f32.mrb[0].mxu0
    %v9428 = vadd.f32 %v9315, %v9427
    %v9429 = vpop.f32.mrb[0].mxu0
    %v9430 = vadd.f32 %v9317, %v9429
    %v9431 = vpop.f32.mrb[0].mxu0
    %v9432 = vadd.f32 %v9319, %v9431
    %v9433 = vpop.f32.mrb[0].mxu0
    %v9434 = vadd.f32 %v9321, %v9433
    %9435 = vdwg.mxu0
    %9436 = vmatprep.subr.bf16.mxu0 %v7281
    %9437 = vmatpush1.bf16.msra.mxu0 %v7280
    %9438 = vmatprep.subr.bf16.mxu0 %v7285
    %9439 = vmatpush1.bf16.msra.mxu0 %v7284
    %9440 = vmatprep.subr.bf16.mxu0 %v7289
    %9441 = vmatpush1.bf16.msra.mxu0 %v7288
    %9442 = vmatprep.subr.bf16.mxu0 %v7293
    %9443 = vmatpush1.bf16.msra.mxu0 %v7292
    %9444 = vmatprep.subr.bf16.mxu0 %v7297
    %9445 = vmatpush1.bf16.msra.mxu0 %v7296
    %9446 = vmatprep.subr.bf16.mxu0 %v7301
    %9447 = vmatpush1.bf16.msra.mxu0 %v7300
    %9448 = vmatprep.subr.bf16.mxu0 %v7305
    %9449 = vmatpush1.bf16.msra.mxu0 %v7304
    %9450 = vmatprep.subr.bf16.mxu0 %v7309
    %9451 = vmatpush1.bf16.msra.mxu0 %v7308
    %9452 = vmatprep.subr.bf16.mxu0 %v7313
    %9453 = vmatpush1.bf16.msra.mxu0 %v7312
    %9454 = vmatprep.subr.bf16.mxu0 %v7317
    %9455 = vmatpush1.bf16.msra.mxu0 %v7316
    %9456 = vmatprep.subr.bf16.mxu0 %v7321
    %9457 = vmatpush1.bf16.msra.mxu0 %v7320
    %9458 = vmatprep.subr.bf16.mxu0 %v7325
    %9459 = vmatpush1.bf16.msra.mxu0 %v7324
    %9460 = vmatprep.subr.bf16.mxu0 %v7329
    %9461 = vmatpush1.bf16.msra.mxu0 %v7328
    %9462 = vmatprep.subr.bf16.mxu0 %v7333
    %9463 = vmatpush1.bf16.msra.mxu0 %v7332
    %9464 = vmatprep.subr.bf16.mxu0 %v7337
    %9465 = vmatpush1.bf16.msra.mxu0 %v7336
    %9466 = vmatprep.subr.bf16.mxu0 %v7341
    %9467 = vmatpush1.bf16.msra.mxu0 %v7340
    %9468 = vmatprep.mubr.bf16.mxu0 %v4845
    %9469 = vmatmul.mubr.bf16.gmra.mrb[0].mxu0 %v4844
    %v9470 = vpop.f32.mrb[0].mxu0
    %v9471 = vadd.f32 %v9358, %v9470
    %v9472 = vpop.f32.mrb[0].mxu0
    %v9473 = vadd.f32 %v9360, %v9472
    %v9474 = vpop.f32.mrb[0].mxu0
    %v9475 = vadd.f32 %v9362, %v9474
    %v9476 = vpop.f32.mrb[0].mxu0
    %v9477 = vadd.f32 %v9364, %v9476
    %9478 = vmatprep.mubr.bf16.mxu0 %v4860
    %9479 = vmatmul.mubr.bf16.gmra.mrb[0].mxu0 %v4859
    %v9480 = vpop.f32.mrb[0].mxu0
    %v9481 = vadd.f32 %v9368, %v9480
    %v9482 = vpop.f32.mrb[0].mxu0
    %v9483 = vadd.f32 %v9370, %v9482
    %v9484 = vpop.f32.mrb[0].mxu0
    %v9485 = vadd.f32 %v9372, %v9484
    %v9486 = vpop.f32.mrb[0].mxu0
    %v9487 = vadd.f32 %v9374, %v9486
    %9488 = vmatprep.mubr.bf16.mxu0 %v4875
    %9489 = vmatmul.mubr.bf16.gmra.mrb[0].mxu0 %v4874
    %v9490 = vpop.f32.mrb[0].mxu0
    %v9491 = vadd.f32 %v9378, %v9490
    %v9492 = vpop.f32.mrb[0].mxu0
    %v9493 = vadd.f32 %v9380, %v9492
    %v9494 = vpop.f32.mrb[0].mxu0
    %v9495 = vadd.f32 %v9382, %v9494
    %v9496 = vpop.f32.mrb[0].mxu0
    %v9497 = vadd.f32 %v9384, %v9496
    %9498 = vmatprep.mubr.bf16.mxu0 %v4890
    %9499 = vmatmul.mubr.bf16.gmra.mrb[0].mxu0 %v4889
    %v9500 = vpop.f32.mrb[0].mxu0
    %v9501 = vadd.f32 %v9388, %v9500
    %v9502 = vpop.f32.mrb[0].mxu0
    %v9503 = vadd.f32 %v9390, %v9502
    %v9504 = vpop.f32.mrb[0].mxu0
    %v9505 = vadd.f32 %v9392, %v9504
    %v9506 = vpop.f32.mrb[0].mxu0
    %v9507 = vadd.f32 %v9394, %v9506
    %9508 = vmatprep.mubr.bf16.mxu0 %v4905
    %9509 = vmatmul.mubr.bf16.gmra.mrb[0].mxu0 %v4904
    %v9510 = vpop.f32.mrb[0].mxu0
    %v9511 = vadd.f32 %v9398, %v9510
    %v9512 = vpop.f32.mrb[0].mxu0
    %v9513 = vadd.f32 %v9400, %v9512
    %v9514 = vpop.f32.mrb[0].mxu0
    %v9515 = vadd.f32 %v9402, %v9514
    %v9516 = vpop.f32.mrb[0].mxu0
    %v9517 = vadd.f32 %v9404, %v9516
    %9518 = vmatprep.mubr.bf16.mxu0 %v4920
    %9519 = vmatmul.mubr.bf16.gmra.mrb[0].mxu0 %v4919
    %v9520 = vpop.f32.mrb[0].mxu0
    %v9521 = vadd.f32 %v9408, %v9520
    %v9522 = vpop.f32.mrb[0].mxu0
    %v9523 = vadd.f32 %v9410, %v9522
    %v9524 = vpop.f32.mrb[0].mxu0
    %v9525 = vadd.f32 %v9412, %v9524
    %v9526 = vpop.f32.mrb[0].mxu0
    %v9527 = vadd.f32 %v9414, %v9526
    %9528 = vmatprep.mubr.bf16.mxu0 %v4935
    %9529 = vmatmul.mubr.bf16.gmra.mrb[0].mxu0 %v4934
    %v9530 = vpop.f32.mrb[0].mxu0
    %v9531 = vadd.f32 %v9418, %v9530
    %v9532 = vpop.f32.mrb[0].mxu0
    %v9533 = vadd.f32 %v9420, %v9532
    %v9534 = vpop.f32.mrb[0].mxu0
    %v9535 = vadd.f32 %v9422, %v9534
    %v9536 = vpop.f32.mrb[0].mxu0
    %v9537 = vadd.f32 %v9424, %v9536
    %9538 = vmatprep.mubr.bf16.mxu0 %v4950
    %9539 = vmatmul.mubr.bf16.gmra.mrb[0].mxu0 %v4949
    %v9540 = vpop.f32.mrb[0].mxu0
    %v9541 = vadd.f32 %v9428, %v9540
    %v9542 = vpop.f32.mrb[0].mxu0
    %v9543 = vadd.f32 %v9430, %v9542
    %v9544 = vpop.f32.mrb[0].mxu0
    %v9545 = vadd.f32 %v9432, %v9544
    %v9546 = vpop.f32.mrb[0].mxu0
    %v9547 = vadd.f32 %v9434, %v9546
    %9548 = vdwg.mxu0
    %9549 = vmatprep.subr.bf16.mxu0 %v7345
    %9550 = vmatpush1.bf16.msra.mxu0 %v7344
    %9551 = vmatprep.subr.bf16.mxu0 %v7349
    %9552 = vmatpush1.bf16.msra.mxu0 %v7348
    %9553 = vmatprep.subr.bf16.mxu0 %v7353
    %9554 = vmatpush1.bf16.msra.mxu0 %v7352
    %9555 = vmatprep.subr.bf16.mxu0 %v7357
    %9556 = vmatpush1.bf16.msra.mxu0 %v7356
    %9557 = vmatprep.subr.bf16.mxu0 %v7361
    %9558 = vmatpush1.bf16.msra.mxu0 %v7360
    %9559 = vmatprep.subr.bf16.mxu0 %v7365
    %9560 = vmatpush1.bf16.msra.mxu0 %v7364
    %9561 = vmatprep.subr.bf16.mxu0 %v7369
    %9562 = vmatpush1.bf16.msra.mxu0 %v7368
    %9563 = vmatprep.subr.bf16.mxu0 %v7373
    %9564 = vmatpush1.bf16.msra.mxu0 %v7372
    %9565 = vmatprep.subr.bf16.mxu0 0
    %9566 = vmatpush1.bf16.msra.mxu0 0
    %9567 = vmatprep.subr.bf16.mxu0 0
    %9568 = vmatpush1.bf16.msra.mxu0 0
    %9569 = vmatprep.subr.bf16.mxu0 0
    %9570 = vmatpush1.bf16.msra.mxu0 0
    %9571 = vmatprep.subr.bf16.mxu0 0
    %9572 = vmatpush1.bf16.msra.mxu0 0
    %9573 = vmatprep.subr.bf16.mxu0 0
    %9574 = vmatpush1.bf16.msra.mxu0 0
    %9575 = vmatprep.subr.bf16.mxu0 0
    %9576 = vmatpush1.bf16.msra.mxu0 0
    %9577 = vmatprep.subr.bf16.mxu0 0
    %9578 = vmatpush1.bf16.msra.mxu0 0
    %9579 = vmatprep.subr.bf16.mxu0 0
    %9580 = vmatpush1.bf16.msra.mxu0 0
    %9581 = vmatprep.mubr.bf16.mxu0 0
    %9582 = vmatmul.mubr.bf16.gmra.mrb[0].mxu0 %v4846
    %v9583 = vpop.f32.mrb[0].mxu0
    %v9584 = vadd.f32 %v9471, %v9583
    %v9585 = vpop.f32.mrb[0].mxu0
    %v9586 = vadd.f32 %v9473, %v9585
    %v9587 = vpop.f32.mrb[0].mxu0
    %v9588 = vadd.f32 %v9475, %v9587
    %v9589 = vpop.f32.mrb[0].mxu0
    %v9590 = vadd.f32 %v9477, %v9589
    %9591 = vmatprep.mubr.bf16.mxu0 0
    %9592 = vmatmul.mubr.bf16.gmra.mrb[0].mxu0 %v4861
    %v9593 = vpop.f32.mrb[0].mxu0
    %v9594 = vadd.f32 %v9481, %v9593
    %v9595 = vpop.f32.mrb[0].mxu0
    %v9596 = vadd.f32 %v9483, %v9595
    %v9597 = vpop.f32.mrb[0].mxu0
    %v9598 = vadd.f32 %v9485, %v9597
    %v9599 = vpop.f32.mrb[0].mxu0
    %v9600 = vadd.f32 %v9487, %v9599
    %9601 = vmatprep.mubr.bf16.mxu0 0
    %9602 = vmatmul.mubr.bf16.gmra.mrb[0].mxu0 %v4876
    %v9603 = vpop.f32.mrb[0].mxu0
    %v9604 = vadd.f32 %v9491, %v9603
    %v9605 = vpop.f32.mrb[0].mxu0
    %v9606 = vadd.f32 %v9493, %v9605
    %v9607 = vpop.f32.mrb[0].mxu0
    %v9608 = vadd.f32 %v9495, %v9607
    %v9609 = vpop.f32.mrb[0].mxu0
    %v9610 = vadd.f32 %v9497, %v9609
    %9611 = vmatprep.mubr.bf16.mxu0 0
    %9612 = vmatmul.mubr.bf16.gmra.mrb[0].mxu0 %v4891
    %v9613 = vpop.f32.mrb[0].mxu0
    %v9614 = vadd.f32 %v9501, %v9613
    %v9615 = vpop.f32.mrb[0].mxu0
    %v9616 = vadd.f32 %v9503, %v9615
    %v9617 = vpop.f32.mrb[0].mxu0
    %v9618 = vadd.f32 %v9505, %v9617
    %v9619 = vpop.f32.mrb[0].mxu0
    %v9620 = vadd.f32 %v9507, %v9619
    %9621 = vmatprep.mubr.bf16.mxu0 0
    %9622 = vmatmul.mubr.bf16.gmra.mrb[0].mxu0 %v4906
    %v9623 = vpop.f32.mrb[0].mxu0
    %v9624 = vadd.f32 %v9511, %v9623
    %v9625 = vpop.f32.mrb[0].mxu0
    %v9626 = vadd.f32 %v9513, %v9625
    %v9627 = vpop.f32.mrb[0].mxu0
    %v9628 = vadd.f32 %v9515, %v9627
    %v9629 = vpop.f32.mrb[0].mxu0
    %v9630 = vadd.f32 %v9517, %v9629
    %9631 = vmatprep.mubr.bf16.mxu0 0
    %9632 = vmatmul.mubr.bf16.gmra.mrb[0].mxu0 %v4921
    %v9633 = vpop.f32.mrb[0].mxu0
    %v9634 = vadd.f32 %v9521, %v9633
    %v9635 = vpop.f32.mrb[0].mxu0
    %v9636 = vadd.f32 %v9523, %v9635
    %v9637 = vpop.f32.mrb[0].mxu0
    %v9638 = vadd.f32 %v9525, %v9637
    %v9639 = vpop.f32.mrb[0].mxu0
    %v9640 = vadd.f32 %v9527, %v9639
    %9641 = vmatprep.mubr.bf16.mxu0 0
    %9642 = vmatmul.mubr.bf16.gmra.mrb[0].mxu0 %v4936
    %v9643 = vpop.f32.mrb[0].mxu0
    %v9644 = vadd.f32 %v9531, %v9643
    %v9645 = vpop.f32.mrb[0].mxu0
    %v9646 = vadd.f32 %v9533, %v9645
    %v9647 = vpop.f32.mrb[0].mxu0
    %v9648 = vadd.f32 %v9535, %v9647
    %v9649 = vpop.f32.mrb[0].mxu0
    %v9650 = vadd.f32 %v9537, %v9649
    %9651 = vmatprep.mubr.bf16.mxu0 0
    %9652 = vmatmul.mubr.bf16.gmra.mrb[0].mxu0 %v4951
    %v9653 = vpop.f32.mrb[0].mxu0
    %v9654 = vadd.f32 %v9541, %v9653
    %v9655 = vpop.f32.mrb[0].mxu0
    %v9656 = vadd.f32 %v9543, %v9655
    %v9657 = vpop.f32.mrb[0].mxu0
    %v9658 = vadd.f32 %v9545, %v9657
    %v9659 = vpop.f32.mrb[0].mxu0
    %v9660 = vadd.f32 %v9547, %v9659
    %9661 = vdwg.mxu0
    %v9662 = vmax.f32 %v8680, 0.0
    %v9663 = vmax.f32 %v8682, 0.0
    %v9664 = vmax.f32 %v9584, 0.0
    %v9665 = vmax.f32 %v9586, 0.0
    %v9666 = vmax.f32 %v8684, 0.0
    %v9667 = vmax.f32 %v8686, 0.0
    %v9668 = vmax.f32 %v9588, 0.0
    %v9669 = vmax.f32 %v9590, 0.0
    %v9670 = vmax.f32 %v8690, 0.0
    %v9671 = vmax.f32 %v8692, 0.0
    %v9672 = vmax.f32 %v9594, 0.0
    %v9673 = vmax.f32 %v9596, 0.0
    %v9674 = vmax.f32 %v8694, 0.0
    %v9675 = vmax.f32 %v8696, 0.0
    %v9676 = vmax.f32 %v9598, 0.0
    %v9677 = vmax.f32 %v9600, 0.0
    %v9678 = vmax.f32 %v8700, 0.0
    %v9679 = vmax.f32 %v8702, 0.0
    %v9680 = vmax.f32 %v9604, 0.0
    %v9681 = vmax.f32 %v9606, 0.0
    %v9682 = vmax.f32 %v8704, 0.0
    %v9683 = vmax.f32 %v8706, 0.0
    %v9684 = vmax.f32 %v9608, 0.0
    %v9685 = vmax.f32 %v9610, 0.0
    %v9686 = vmax.f32 %v8710, 0.0
    %v9687 = vmax.f32 %v8712, 0.0
    %v9688 = vmax.f32 %v9614, 0.0
    %v9689 = vmax.f32 %v9616, 0.0
    %v9690 = vmax.f32 %v8714, 0.0
    %v9691 = vmax.f32 %v8716, 0.0
    %v9692 = vmax.f32 %v9618, 0.0
    %v9693 = vmax.f32 %v9620, 0.0
    %v9694 = vmax.f32 %v8720, 0.0
    %v9695 = vmax.f32 %v8722, 0.0
    %v9696 = vmax.f32 %v9624, 0.0
    %v9697 = vmax.f32 %v9626, 0.0
    %v9698 = vmax.f32 %v8724, 0.0
    %v9699 = vmax.f32 %v8726, 0.0
    %v9700 = vmax.f32 %v9628, 0.0
    %v9701 = vmax.f32 %v9630, 0.0
    %v9702 = vmax.f32 %v8730, 0.0
    %v9703 = vmax.f32 %v8732, 0.0
    %v9704 = vmax.f32 %v9634, 0.0
    %v9705 = vmax.f32 %v9636, 0.0
    %v9706 = vmax.f32 %v8734, 0.0
    %v9707 = vmax.f32 %v8736, 0.0
    %v9708 = vmax.f32 %v9638, 0.0
    %v9709 = vmax.f32 %v9640, 0.0
    %v9710 = vmax.f32 %v8740, 0.0
    %v9711 = vmax.f32 %v8742, 0.0
    %v9712 = vmax.f32 %v9644, 0.0
    %v9713 = vmax.f32 %v9646, 0.0
    %v9714 = vmax.f32 %v8744, 0.0
    %v9715 = vmax.f32 %v8746, 0.0
    %v9716 = vmax.f32 %v9648, 0.0
    %v9717 = vmax.f32 %v9650, 0.0
    %v9718 = vmax.f32 %v8750, 0.0
    %v9719 = vmax.f32 %v8752, 0.0
    %v9720 = vmax.f32 %v9654, 0.0
    %v9721 = vmax.f32 %v9656, 0.0
    %v9722 = vmax.f32 %v8754, 0.0
    %v9723 = vmax.f32 %v8756, 0.0
    %v9724 = vmax.f32 %v9658, 0.0
    %v9725 = vmax.f32 %v9660, 0.0
    %v9726 = vmax.f32 %v9662, %v9663
    %v9727 = vmax.f32 %v9666, %v9667
    %v9728 = vmax.f32 %v9670, %v9671
    %v9729 = vmax.f32 %v9674, %v9675
    %v9730 = vmax.f32 %v9678, %v9679
    %v9731 = vmax.f32 %v9682, %v9683
    %v9732 = vmax.f32 %v9686, %v9687
    %v9733 = vmax.f32 %v9690, %v9691
    %v9734 = vmax.f32 %v9694, %v9695
    %v9735 = vmax.f32 %v9698, %v9699
    %v9736 = vmax.f32 %v9702, %v9703
    %v9737 = vmax.f32 %v9706, %v9707
    %v9738 = vmax.f32 %v9710, %v9711
    %v9739 = vmax.f32 %v9714, %v9715
    %v9740 = vmax.f32 %v9718, %v9719
    %v9741 = vmax.f32 %v9722, %v9723
    %v9742 = vmax.f32 %v9664, %v9665
    %v9743 = vmax.f32 %v9668, %v9669
    %v9744 = vmax.f32 %v9672, %v9673
    %v9745 = vmax.f32 %v9676, %v9677
    %v9746 = vmax.f32 %v9680, %v9681
    %v9747 = vmax.f32 %v9684, %v9685
    %v9748 = vmax.f32 %v9688, %v9689
    %v9749 = vmax.f32 %v9692, %v9693
    %v9750 = vmax.f32 %v9696, %v9697
    %v9751 = vmax.f32 %v9700, %v9701
    %v9752 = vmax.f32 %v9704, %v9705
    %v9753 = vmax.f32 %v9708, %v9709
    %v9754 = vmax.f32 %v9712, %v9713
    %v9755 = vmax.f32 %v9716, %v9717
    %v9756 = vmax.f32 %v9720, %v9721
    %v9757 = vmax.f32 %v9724, %v9725
    %v9758 = vmax.f32 %v9726, %v9742
    %v9759 = vmax.f32 %v9727, %v9743
    %v9760 = vmax.f32 %v9728, %v9744
    %v9761 = vmax.f32 %v9729, %v9745
    %v9762 = vmax.f32 %v9730, %v9746
    %v9763 = vmax.f32 %v9731, %v9747
    %v9764 = vmax.f32 %v9732, %v9748
    %v9765 = vmax.f32 %v9733, %v9749
    %v9766 = vmax.f32 %v9734, %v9750
    %v9767 = vmax.f32 %v9735, %v9751
    %v9768 = vmax.f32 %v9736, %v9752
    %v9769 = vmax.f32 %v9737, %v9753
    %v9770 = vmax.f32 %v9738, %v9754
    %v9771 = vmax.f32 %v9739, %v9755
    %v9772 = vmax.f32 %v9740, %v9756
    %v9773 = vmax.f32 %v9741, %v9757
    %9774 = vst [vmem:[#allocation4] sm:$0xff] %v9758
    %9775 = vst [vmem:[#allocation4 + $0x8] sm:$0xff] %v9759
    %9776 = vst [vmem:[#allocation4 + $0x10] sm:$0xff] %v9760
    %9777 = vst [vmem:[#allocation4 + $0x18] sm:$0xff] %v9761
    %9778 = vst [vmem:[#allocation4 + $0x20] sm:$0xff] %v9762
    %9779 = vst [vmem:[#allocation4 + $0x28] sm:$0xff] %v9763
    %9780 = vst [vmem:[#allocation4 + $0x30] sm:$0xff] %v9764
    %9781 = vst [vmem:[#allocation4 + $0x38] sm:$0xff] %v9765
    %9782 = vst [vmem:[#allocation4 + $0x40] sm:$0xff] %v9766
    %9783 = vst [vmem:[#allocation4 + $0x48] sm:$0xff] %v9767
    %9784 = vst [vmem:[#allocation4 + $0x50] sm:$0xff] %v9768
    %9785 = vst [vmem:[#allocation4 + $0x58] sm:$0xff] %v9769
    %9786 = vst [vmem:[#allocation4 + $0x60] sm:$0xff] %v9770
    %9787 = vst [vmem:[#allocation4 + $0x68] sm:$0xff] %v9771
    %9788 = vst [vmem:[#allocation4 + $0x70] sm:$0xff] %v9772
    %9789 = vst [vmem:[#allocation4 + $0x78] sm:$0xff] %v9773
    %v9790 = vld [vmem:[#allocation4] sm:$0x1]
    %v9791 = vld [vmem:[#allocation4 + $0x8] sm:$0x1]
    %v9792 = vld [vmem:[#allocation4 + $0x10] sm:$0x1]
    %v9793 = vld [vmem:[#allocation4 + $0x18] sm:$0x1]
    %v9794 = vld [vmem:[#allocation4 + $0x20] sm:$0x1]
    %v9795 = vld [vmem:[#allocation4 + $0x28] sm:$0x1]
    %v9796 = vld [vmem:[#allocation4 + $0x30] sm:$0x1]
    %v9797 = vld [vmem:[#allocation4 + $0x38] sm:$0x1]
    %v9798 = vld [vmem:[#allocation4 + $0x40] sm:$0x1]
    %v9799 = vld [vmem:[#allocation4 + $0x48] sm:$0x1]
    %v9800 = vld [vmem:[#allocation4 + $0x50] sm:$0x1]
    %v9801 = vld [vmem:[#allocation4 + $0x58] sm:$0x1]
    %v9802 = vld [vmem:[#allocation4 + $0x60] sm:$0x1]
    %v9803 = vld [vmem:[#allocation4 + $0x68] sm:$0x1]
    %v9804 = vld [vmem:[#allocation4 + $0x70] sm:$0x1]
    %v9805 = vld [vmem:[#allocation4 + $0x78] sm:$0x1]
    %v9806 = vld [vmem:[#allocation4 + $0x1] sm:$0x1]
    %v9807 = vld [vmem:[#allocation4 + $0x9] sm:$0x1]
    %v9808 = vld [vmem:[#allocation4 + $0x11] sm:$0x1]
    %v9809 = vld [vmem:[#allocation4 + $0x19] sm:$0x1]
    %v9810 = vld [vmem:[#allocation4 + $0x21] sm:$0x1]
    %v9811 = vld [vmem:[#allocation4 + $0x29] sm:$0x1]
    %v9812 = vld [vmem:[#allocation4 + $0x31] sm:$0x1]
    %v9813 = vld [vmem:[#allocation4 + $0x39] sm:$0x1]
    %v9814 = vld [vmem:[#allocation4 + $0x41] sm:$0x1]
    %v9815 = vld [vmem:[#allocation4 + $0x49] sm:$0x1]
    %v9816 = vld [vmem:[#allocation4 + $0x51] sm:$0x1]
    %v9817 = vld [vmem:[#allocation4 + $0x59] sm:$0x1]
    %v9818 = vld [vmem:[#allocation4 + $0x61] sm:$0x1]
    %v9819 = vld [vmem:[#allocation4 + $0x69] sm:$0x1]
    %v9820 = vld [vmem:[#allocation4 + $0x71] sm:$0x1]
    %v9821 = vld [vmem:[#allocation4 + $0x79] sm:$0x1]
    %v9822 = vmax.f32 %v9790, %v9806
    %v9823 = vmax.f32 %v9791, %v9807
    %v9824 = vmax.f32 %v9792, %v9808
    %v9825 = vmax.f32 %v9793, %v9809
    %v9826 = vmax.f32 %v9794, %v9810
    %v9827 = vmax.f32 %v9795, %v9811
    %v9828 = vmax.f32 %v9796, %v9812
    %v9829 = vmax.f32 %v9797, %v9813
    %v9830 = vmax.f32 %v9798, %v9814
    %v9831 = vmax.f32 %v9799, %v9815
    %v9832 = vmax.f32 %v9800, %v9816
    %v9833 = vmax.f32 %v9801, %v9817
    %v9834 = vmax.f32 %v9802, %v9818
    %v9835 = vmax.f32 %v9803, %v9819
    %v9836 = vmax.f32 %v9804, %v9820
    %v9837 = vmax.f32 %v9805, %v9821
    %v9838 = vld [vmem:[#allocation4 + $0x2] sm:$0x1]
    %v9839 = vld [vmem:[#allocation4 + $0xa] sm:$0x1]
    %v9840 = vld [vmem:[#allocation4 + $0x12] sm:$0x1]
    %v9841 = vld [vmem:[#allocation4 + $0x1a] sm:$0x1]
    %v9842 = vld [vmem:[#allocation4 + $0x22] sm:$0x1]
    %v9843 = vld [vmem:[#allocation4 + $0x2a] sm:$0x1]
    %v9844 = vld [vmem:[#allocation4 + $0x32] sm:$0x1]
    %v9845 = vld [vmem:[#allocation4 + $0x3a] sm:$0x1]
    %v9846 = vld [vmem:[#allocation4 + $0x42] sm:$0x1]
    %v9847 = vld [vmem:[#allocation4 + $0x4a] sm:$0x1]
    %v9848 = vld [vmem:[#allocation4 + $0x52] sm:$0x1]
    %v9849 = vld [vmem:[#allocation4 + $0x5a] sm:$0x1]
    %v9850 = vld [vmem:[#allocation4 + $0x62] sm:$0x1]
    %v9851 = vld [vmem:[#allocation4 + $0x6a] sm:$0x1]
    %v9852 = vld [vmem:[#allocation4 + $0x72] sm:$0x1]
    %v9853 = vld [vmem:[#allocation4 + $0x7a] sm:$0x1]
    %v9854 = vld [vmem:[#allocation4 + $0x3] sm:$0x1]
    %v9855 = vld [vmem:[#allocation4 + $0xb] sm:$0x1]
    %v9856 = vld [vmem:[#allocation4 + $0x13] sm:$0x1]
    %v9857 = vld [vmem:[#allocation4 + $0x1b] sm:$0x1]
    %v9858 = vld [vmem:[#allocation4 + $0x23] sm:$0x1]
    %v9859 = vld [vmem:[#allocation4 + $0x2b] sm:$0x1]
    %v9860 = vld [vmem:[#allocation4 + $0x33] sm:$0x1]
    %v9861 = vld [vmem:[#allocation4 + $0x3b] sm:$0x1]
    %v9862 = vld [vmem:[#allocation4 + $0x43] sm:$0x1]
    %v9863 = vld [vmem:[#allocation4 + $0x4b] sm:$0x1]
    %v9864 = vld [vmem:[#allocation4 + $0x53] sm:$0x1]
    %v9865 = vld [vmem:[#allocation4 + $0x5b] sm:$0x1]
    %v9866 = vld [vmem:[#allocation4 + $0x63] sm:$0x1]
    %v9867 = vld [vmem:[#allocation4 + $0x6b] sm:$0x1]
    %v9868 = vld [vmem:[#allocation4 + $0x73] sm:$0x1]
    %v9869 = vld [vmem:[#allocation4 + $0x7b] sm:$0x1]
    %v9870 = vmax.f32 %v9838, %v9854
    %v9871 = vmax.f32 %v9839, %v9855
    %v9872 = vmax.f32 %v9840, %v9856
    %v9873 = vmax.f32 %v9841, %v9857
    %v9874 = vmax.f32 %v9842, %v9858
    %v9875 = vmax.f32 %v9843, %v9859
    %v9876 = vmax.f32 %v9844, %v9860
    %v9877 = vmax.f32 %v9845, %v9861
    %v9878 = vmax.f32 %v9846, %v9862
    %v9879 = vmax.f32 %v9847, %v9863
    %v9880 = vmax.f32 %v9848, %v9864
    %v9881 = vmax.f32 %v9849, %v9865
    %v9882 = vmax.f32 %v9850, %v9866
    %v9883 = vmax.f32 %v9851, %v9867
    %v9884 = vmax.f32 %v9852, %v9868
    %v9885 = vmax.f32 %v9853, %v9869
    %v9886 = vmax.f32 %v9822, %v9870
    %v9887 = vmax.f32 %v9823, %v9871
    %v9888 = vmax.f32 %v9824, %v9872
    %v9889 = vmax.f32 %v9825, %v9873
    %v9890 = vmax.f32 %v9826, %v9874
    %v9891 = vmax.f32 %v9827, %v9875
    %v9892 = vmax.f32 %v9828, %v9876
    %v9893 = vmax.f32 %v9829, %v9877
    %v9894 = vmax.f32 %v9830, %v9878
    %v9895 = vmax.f32 %v9831, %v9879
    %v9896 = vmax.f32 %v9832, %v9880
    %v9897 = vmax.f32 %v9833, %v9881
    %v9898 = vmax.f32 %v9834, %v9882
    %v9899 = vmax.f32 %v9835, %v9883
    %v9900 = vmax.f32 %v9836, %v9884
    %v9901 = vmax.f32 %v9837, %v9885
    %v9902 = vld [vmem:[#allocation4 + $0x4] sm:$0x1]
    %v9903 = vld [vmem:[#allocation4 + $0xc] sm:$0x1]
    %v9904 = vld [vmem:[#allocation4 + $0x14] sm:$0x1]
    %v9905 = vld [vmem:[#allocation4 + $0x1c] sm:$0x1]
    %v9906 = vld [vmem:[#allocation4 + $0x24] sm:$0x1]
    %v9907 = vld [vmem:[#allocation4 + $0x2c] sm:$0x1]
    %v9908 = vld [vmem:[#allocation4 + $0x34] sm:$0x1]
    %v9909 = vld [vmem:[#allocation4 + $0x3c] sm:$0x1]
    %v9910 = vld [vmem:[#allocation4 + $0x44] sm:$0x1]
    %v9911 = vld [vmem:[#allocation4 + $0x4c] sm:$0x1]
    %v9912 = vld [vmem:[#allocation4 + $0x54] sm:$0x1]
    %v9913 = vld [vmem:[#allocation4 + $0x5c] sm:$0x1]
    %v9914 = vld [vmem:[#allocation4 + $0x64] sm:$0x1]
    %v9915 = vld [vmem:[#allocation4 + $0x6c] sm:$0x1]
    %v9916 = vld [vmem:[#allocation4 + $0x74] sm:$0x1]
    %v9917 = vld [vmem:[#allocation4 + $0x7c] sm:$0x1]
    %v9918 = vld [vmem:[#allocation4 + $0x5] sm:$0x1]
    %v9919 = vld [vmem:[#allocation4 + $0xd] sm:$0x1]
    %v9920 = vld [vmem:[#allocation4 + $0x15] sm:$0x1]
    %v9921 = vld [vmem:[#allocation4 + $0x1d] sm:$0x1]
    %v9922 = vld [vmem:[#allocation4 + $0x25] sm:$0x1]
    %v9923 = vld [vmem:[#allocation4 + $0x2d] sm:$0x1]
    %v9924 = vld [vmem:[#allocation4 + $0x35] sm:$0x1]
    %v9925 = vld [vmem:[#allocation4 + $0x3d] sm:$0x1]
    %v9926 = vld [vmem:[#allocation4 + $0x45] sm:$0x1]
    %v9927 = vld [vmem:[#allocation4 + $0x4d] sm:$0x1]
    %v9928 = vld [vmem:[#allocation4 + $0x55] sm:$0x1]
    %v9929 = vld [vmem:[#allocation4 + $0x5d] sm:$0x1]
    %v9930 = vld [vmem:[#allocation4 + $0x65] sm:$0x1]
    %v9931 = vld [vmem:[#allocation4 + $0x6d] sm:$0x1]
    %v9932 = vld [vmem:[#allocation4 + $0x75] sm:$0x1]
    %v9933 = vld [vmem:[#allocation4 + $0x7d] sm:$0x1]
    %v9934 = vmax.f32 %v9902, %v9918
    %v9935 = vmax.f32 %v9903, %v9919
    %v9936 = vmax.f32 %v9904, %v9920
    %v9937 = vmax.f32 %v9905, %v9921
    %v9938 = vmax.f32 %v9906, %v9922
    %v9939 = vmax.f32 %v9907, %v9923
    %v9940 = vmax.f32 %v9908, %v9924
    %v9941 = vmax.f32 %v9909, %v9925
    %v9942 = vmax.f32 %v9910, %v9926
    %v9943 = vmax.f32 %v9911, %v9927
    %v9944 = vmax.f32 %v9912, %v9928
    %v9945 = vmax.f32 %v9913, %v9929
    %v9946 = vmax.f32 %v9914, %v9930
    %v9947 = vmax.f32 %v9915, %v9931
    %v9948 = vmax.f32 %v9916, %v9932
    %v9949 = vmax.f32 %v9917, %v9933
    %v9950 = vld [vmem:[#allocation4 + $0x6] sm:$0x1]
    %v9951 = vld [vmem:[#allocation4 + $0xe] sm:$0x1]
    %v9952 = vld [vmem:[#allocation4 + $0x16] sm:$0x1]
    %v9953 = vld [vmem:[#allocation4 + $0x1e] sm:$0x1]
    %v9954 = vld [vmem:[#allocation4 + $0x26] sm:$0x1]
    %v9955 = vld [vmem:[#allocation4 + $0x2e] sm:$0x1]
    %v9956 = vld [vmem:[#allocation4 + $0x36] sm:$0x1]
    %v9957 = vld [vmem:[#allocation4 + $0x3e] sm:$0x1]
    %v9958 = vld [vmem:[#allocation4 + $0x46] sm:$0x1]
    %v9959 = vld [vmem:[#allocation4 + $0x4e] sm:$0x1]
    %v9960 = vld [vmem:[#allocation4 + $0x56] sm:$0x1]
    %v9961 = vld [vmem:[#allocation4 + $0x5e] sm:$0x1]
    %v9962 = vld [vmem:[#allocation4 + $0x66] sm:$0x1]
    %v9963 = vld [vmem:[#allocation4 + $0x6e] sm:$0x1]
    %v9964 = vld [vmem:[#allocation4 + $0x76] sm:$0x1]
    %v9965 = vld [vmem:[#allocation4 + $0x7e] sm:$0x1]
    %v9966 = vld [vmem:[#allocation4 + $0x7] sm:$0x1]
    %v9967 = vld [vmem:[#allocation4 + $0xf] sm:$0x1]
    %v9968 = vld [vmem:[#allocation4 + $0x17] sm:$0x1]
    %v9969 = vld [vmem:[#allocation4 + $0x1f] sm:$0x1]
    %v9970 = vld [vmem:[#allocation4 + $0x27] sm:$0x1]
    %v9971 = vld [vmem:[#allocation4 + $0x2f] sm:$0x1]
    %v9972 = vld [vmem:[#allocation4 + $0x37] sm:$0x1]
    %v9973 = vld [vmem:[#allocation4 + $0x3f] sm:$0x1]
    %v9974 = vld [vmem:[#allocation4 + $0x47] sm:$0x1]
    %v9975 = vld [vmem:[#allocation4 + $0x4f] sm:$0x1]
    %v9976 = vld [vmem:[#allocation4 + $0x57] sm:$0x1]
    %v9977 = vld [vmem:[#allocation4 + $0x5f] sm:$0x1]
    %v9978 = vld [vmem:[#allocation4 + $0x67] sm:$0x1]
    %v9979 = vld [vmem:[#allocation4 + $0x6f] sm:$0x1]
    %v9980 = vld [vmem:[#allocation4 + $0x77] sm:$0x1]
    %v9981 = vld [vmem:[#allocation4 + $0x7f] sm:$0x1]
    %v9982 = vmax.f32 %v9950, %v9966
    %v9983 = vmax.f32 %v9951, %v9967
    %v9984 = vmax.f32 %v9952, %v9968
    %v9985 = vmax.f32 %v9953, %v9969
    %v9986 = vmax.f32 %v9954, %v9970
    %v9987 = vmax.f32 %v9955, %v9971
    %v9988 = vmax.f32 %v9956, %v9972
    %v9989 = vmax.f32 %v9957, %v9973
    %v9990 = vmax.f32 %v9958, %v9974
    %v9991 = vmax.f32 %v9959, %v9975
    %v9992 = vmax.f32 %v9960, %v9976
    %v9993 = vmax.f32 %v9961, %v9977
    %v9994 = vmax.f32 %v9962, %v9978
    %v9995 = vmax.f32 %v9963, %v9979
    %v9996 = vmax.f32 %v9964, %v9980
    %v9997 = vmax.f32 %v9965, %v9981
    %v9998 = vmax.f32 %v9934, %v9982
    %v9999 = vmax.f32 %v9935, %v9983
    %v10000 = vmax.f32 %v9936, %v9984
    %v10001 = vmax.f32 %v9937, %v9985
    %v10002 = vmax.f32 %v9938, %v9986
    %v10003 = vmax.f32 %v9939, %v9987
    %v10004 = vmax.f32 %v9940, %v9988
    %v10005 = vmax.f32 %v9941, %v9989
    %v10006 = vmax.f32 %v9942, %v9990
    %v10007 = vmax.f32 %v9943, %v9991
    %v10008 = vmax.f32 %v9944, %v9992
    %v10009 = vmax.f32 %v9945, %v9993
    %v10010 = vmax.f32 %v9946, %v9994
    %v10011 = vmax.f32 %v9947, %v9995
    %v10012 = vmax.f32 %v9948, %v9996
    %v10013 = vmax.f32 %v9949, %v9997
    %v10014 = vpack.c.bf16 %v9886, %v9886
    %v10015 = vpack.c.bf16 %v9887, %v9887
    %v10016 = vpack.c.bf16 %v9888, %v9888
    %v10017 = vpack.c.bf16 %v9889, %v9889
    %v10018 = vpack.c.bf16 %v9890, %v9890
    %v10019 = vpack.c.bf16 %v9891, %v9891
    %v10020 = vpack.c.bf16 %v9892, %v9892
    %v10021 = vpack.c.bf16 %v9893, %v9893
    %v10022 = vpack.c.bf16 %v9894, %v9894
    %v10023 = vpack.c.bf16 %v9895, %v9895
    %v10024 = vpack.c.bf16 %v9896, %v9896
    %v10025 = vpack.c.bf16 %v9897, %v9897
    %v10026 = vpack.c.bf16 %v9898, %v9898
    %v10027 = vpack.c.bf16 %v9899, %v9899
    %v10028 = vpack.c.bf16 %v9900, %v9900
    %v10029 = vpack.c.bf16 %v9901, %v9901
    %v10030 = vld [vmem:[%s5] sm:$0xf]
    %v10031 = vld [vmem:[%s5 + $0x4] sm:$0xf]
    %v10032 = vld [vmem:[%s5 + $0x8] sm:$0xf]
    %v10033 = vld [vmem:[%s5 + $0xc] sm:$0xf]
    %v10034 = vld [vmem:[%s5 + $0x10] sm:$0xf]
    %v10035 = vld [vmem:[%s5 + $0x14] sm:$0xf]
    %v10036 = vld [vmem:[%s5 + $0x18] sm:$0xf]
    %v10037 = vld [vmem:[%s5 + $0x1c] sm:$0xf]
    %v10038 = vld [vmem:[%s5 + $0x20] sm:$0xf]
    %v10039 = vld [vmem:[%s5 + $0x24] sm:$0xf]
    %v10040 = vld [vmem:[%s5 + $0x28] sm:$0xf]
    %v10041 = vld [vmem:[%s5 + $0x2c] sm:$0xf]
    %v10042 = vld [vmem:[%s5 + $0x30] sm:$0xf]
    %v10043 = vld [vmem:[%s5 + $0x34] sm:$0xf]
    %v10044 = vld [vmem:[%s5 + $0x38] sm:$0xf]
    %v10045 = vld [vmem:[%s5 + $0x3c] sm:$0xf]
    %v10046 = vpack.c.bf16 %v9998, %v9998
    %v10047 = vpack.c.bf16 %v9999, %v9999
    %v10048 = vpack.c.bf16 %v10000, %v10000
    %v10049 = vpack.c.bf16 %v10001, %v10001
    %v10050 = vpack.c.bf16 %v10002, %v10002
    %v10051 = vpack.c.bf16 %v10003, %v10003
    %v10052 = vpack.c.bf16 %v10004, %v10004
    %v10053 = vpack.c.bf16 %v10005, %v10005
    %v10054 = vpack.c.bf16 %v10006, %v10006
    %v10055 = vpack.c.bf16 %v10007, %v10007
    %v10056 = vpack.c.bf16 %v10008, %v10008
    %v10057 = vpack.c.bf16 %v10009, %v10009
    %v10058 = vpack.c.bf16 %v10010, %v10010
    %v10059 = vpack.c.bf16 %v10011, %v10011
    %v10060 = vpack.c.bf16 %v10012, %v10012
    %v10061 = vpack.c.bf16 %v10013, %v10013
    %s10062 = scalar_lea.vmem %s5, 64
    %v10063 = vld [vmem:[%s10062] sm:$0xf]
    %v10064 = vld [vmem:[%s10062 + $0x4] sm:$0xf]
    %v10065 = vld [vmem:[%s10062 + $0x8] sm:$0xf]
    %v10066 = vld [vmem:[%s10062 + $0xc] sm:$0xf]
    %v10067 = vld [vmem:[%s10062 + $0x10] sm:$0xf]
    %v10068 = vld [vmem:[%s10062 + $0x14] sm:$0xf]
    %v10069 = vld [vmem:[%s10062 + $0x18] sm:$0xf]
    %v10070 = vld [vmem:[%s10062 + $0x1c] sm:$0xf]
    %v10071 = vld [vmem:[%s10062 + $0x20] sm:$0xf]
    %v10072 = vld [vmem:[%s10062 + $0x24] sm:$0xf]
    %v10073 = vld [vmem:[%s10062 + $0x28] sm:$0xf]
    %v10074 = vld [vmem:[%s10062 + $0x2c] sm:$0xf]
    %v10075 = vld [vmem:[%s10062 + $0x30] sm:$0xf]
    %v10076 = vld [vmem:[%s10062 + $0x34] sm:$0xf]
    %v10077 = vld [vmem:[%s10062 + $0x38] sm:$0xf]
    %v10078 = vld [vmem:[%s10062 + $0x3c] sm:$0xf]
    %v10095 = vunpack.c.l.b16 %v10046
    %v10096 = vunpack.c.l.b16 %v10047
    %v10097 = vunpack.c.l.b16 %v10048
    %v10098 = vunpack.c.l.b16 %v10049
    %v10099 = vunpack.c.l.b16 %v10050
    %v10100 = vunpack.c.l.b16 %v10051
    %v10101 = vunpack.c.l.b16 %v10052
    %v10102 = vunpack.c.l.b16 %v10053
    %v10103 = vunpack.c.l.b16 %v10054
    %v10104 = vunpack.c.l.b16 %v10055
    %v10105 = vunpack.c.l.b16 %v10056
    %v10106 = vunpack.c.l.b16 %v10057
    %v10107 = vunpack.c.l.b16 %v10058
    %v10108 = vunpack.c.l.b16 %v10059
    %v10109 = vunpack.c.l.b16 %v10060
    %v10110 = vunpack.c.l.b16 %v10061
    %v10111 = vrot.slane %v10096, 7
    %vm10112 = vcmask 1041409
    %v10113 = vsel %vm10112, %v10111, %v10095
    %v10114 = vrot.slane %v10097, 6
    %vm10115 = vcmask 1042434
    %v10116 = vsel %vm10115, %v10114, %v10113
    %v10117 = vrot.slane %v10098, 5
    %vm10118 = vcmask 1043459
    %v10119 = vsel %vm10118, %v10117, %v10116
    %v10120 = vrot.slane %v10099, 4
    %vm10121 = vcmask 1044484
    %v10122 = vsel %vm10121, %v10120, %v10119
    %v10123 = vrot.slane %v10100, 3
    %vm10124 = vcmask 1045509
    %v10125 = vsel %vm10124, %v10123, %v10122
    %v10126 = vrot.slane %v10101, 2
    %vm10127 = vcmask 1046534
    %v10128 = vsel %vm10127, %v10126, %v10125
    %v10129 = vrot.slane %v10102, 1
    %vm10130 = vcmask 1047559
    %v10131 = vsel %vm10130, %v10129, %v10128
    %v10132 = vrot.slane %v10104, 7
    %v10133 = vsel %vm10112, %v10132, %v10103
    %v10134 = vrot.slane %v10105, 6
    %v10135 = vsel %vm10115, %v10134, %v10133
    %v10136 = vrot.slane %v10106, 5
    %v10137 = vsel %vm10118, %v10136, %v10135
    %v10138 = vrot.slane %v10107, 4
    %v10139 = vsel %vm10121, %v10138, %v10137
    %v10140 = vrot.slane %v10108, 3
    %v10141 = vsel %vm10124, %v10140, %v10139
    %v10142 = vrot.slane %v10109, 2
    %v10143 = vsel %vm10127, %v10142, %v10141
    %v10144 = vrot.slane %v10110, 1
    %v10145 = vsel %vm10130, %v10144, %v10143
    %v10146 = vpack.c.b16 %v10145, %v10131
    %v10164 = vunpack.c.l.b16 %v10063
    %v10165 = vunpack.c.l.b16 %v10064
    %v10166 = vunpack.c.l.b16 %v10065
    %v10167 = vunpack.c.l.b16 %v10066
    %v10168 = vunpack.c.l.b16 %v10067
    %v10169 = vunpack.c.l.b16 %v10068
    %v10170 = vunpack.c.l.b16 %v10069
    %v10171 = vunpack.c.l.b16 %v10070
    %v10172 = vunpack.c.l.b16 %v10071
    %v10173 = vunpack.c.l.b16 %v10072
    %v10174 = vunpack.c.l.b16 %v10073
    %v10175 = vunpack.c.l.b16 %v10074
    %v10176 = vunpack.c.l.b16 %v10075
    %v10177 = vunpack.c.l.b16 %v10076
    %v10178 = vunpack.c.l.b16 %v10077
    %v10179 = vunpack.c.l.b16 %v10078
    %v10180 = vpack.c.b16 %v10165, %v10164
    %v10181 = vpack.c.b16 %v10167, %v10166
    %v10182 = vpack.c.b16 %v10169, %v10168
    %v10183 = vpack.c.b16 %v10171, %v10170
    %v10184 = vpack.c.b16 %v10173, %v10172
    %v10185 = vpack.c.b16 %v10175, %v10174
    %v10186 = vpack.c.b16 %v10177, %v10176
    %v10187 = vpack.c.b16 %v10179, %v10178
    %10196 = vmatprep.subr.bf16.mxu0 0
    %10197 = vmatpush1.bf16.msra.mxu0 %v10180
    %10198 = vmatprep.subr.bf16.mxu0 0
    %10199 = vmatpush1.bf16.msra.mxu0 %v10181
    %10200 = vmatprep.subr.bf16.mxu0 0
    %10201 = vmatpush1.bf16.msra.mxu0 %v10182
    %10202 = vmatprep.subr.bf16.mxu0 0
    %10203 = vmatpush1.bf16.msra.mxu0 %v10183
    %10204 = vmatprep.subr.bf16.mxu0 0
    %10205 = vmatpush1.bf16.msra.mxu0 %v10184
    %10206 = vmatprep.subr.bf16.mxu0 0
    %10207 = vmatpush1.bf16.msra.mxu0 %v10185
    %10208 = vmatprep.subr.bf16.mxu0 0
    %10209 = vmatpush1.bf16.msra.mxu0 %v10186
    %10210 = vmatprep.subr.bf16.mxu0 0
    %10211 = vmatpush1.bf16.msra.mxu0 %v10187
    %10212 = vmatprep.subr.bf16.mxu0 0
    %10213 = vmatpush1.bf16.msra.mxu0 0
    %10214 = vmatprep.subr.bf16.mxu0 0
    %10215 = vmatpush1.bf16.msra.mxu0 0
    %10216 = vmatprep.subr.bf16.mxu0 0
    %10217 = vmatpush1.bf16.msra.mxu0 0
    %10218 = vmatprep.subr.bf16.mxu0 0
    %10219 = vmatpush1.bf16.msra.mxu0 0
    %10220 = vmatprep.subr.bf16.mxu0 0
    %10221 = vmatpush1.bf16.msra.mxu0 0
    %10222 = vmatprep.subr.bf16.mxu0 0
    %10223 = vmatpush1.bf16.msra.mxu0 0
    %10224 = vmatprep.subr.bf16.mxu0 0
    %10225 = vmatpush1.bf16.msra.mxu0 0
    %10226 = vmatprep.subr.bf16.mxu0 0
    %10227 = vmatpush1.bf16.msra.mxu0 0
    %10228 = vmatprep.mubr.bf16.mxu0 0
    %10229 = vmatmul.mubr.bf16.gmra.mrb[0].mxu0 %v10146
    %v10230 = vpop.f32.mrb[0].mxu0
    %v10231 = vadd.f32 0.0, %v10230
    %v10232 = vpop.f32.mrb[0].mxu0
    %v10233 = vpop.f32.mrb[0].mxu0
    %v10234 = vadd.f32 0.0, %v10233
    %v10235 = vpop.f32.mrb[0].mxu0
    %10236 = vdwg.mxu0
    %v10253 = vunpack.c.l.b16 %v10014
    %v10254 = vunpack.c.l.b16 %v10015
    %v10255 = vunpack.c.l.b16 %v10016
    %v10256 = vunpack.c.l.b16 %v10017
    %v10257 = vunpack.c.l.b16 %v10018
    %v10258 = vunpack.c.l.b16 %v10019
    %v10259 = vunpack.c.l.b16 %v10020
    %v10260 = vunpack.c.l.b16 %v10021
    %v10261 = vunpack.c.l.b16 %v10022
    %v10262 = vunpack.c.l.b16 %v10023
    %v10263 = vunpack.c.l.b16 %v10024
    %v10264 = vunpack.c.l.b16 %v10025
    %v10265 = vunpack.c.l.b16 %v10026
    %v10266 = vunpack.c.l.b16 %v10027
    %v10267 = vunpack.c.l.b16 %v10028
    %v10268 = vunpack.c.l.b16 %v10029
    %v10269 = vrot.slane %v10254, 7
    %v10270 = vsel %vm10112, %v10269, %v10253
    %v10271 = vrot.slane %v10255, 6
    %v10272 = vsel %vm10115, %v10271, %v10270
    %v10273 = vrot.slane %v10256, 5
    %v10274 = vsel %vm10118, %v10273, %v10272
    %v10275 = vrot.slane %v10257, 4
    %v10276 = vsel %vm10121, %v10275, %v10274
    %v10277 = vrot.slane %v10258, 3
    %v10278 = vsel %vm10124, %v10277, %v10276
    %v10279 = vrot.slane %v10259, 2
    %v10280 = vsel %vm10127, %v10279, %v10278
    %v10281 = vrot.slane %v10260, 1
    %v10282 = vsel %vm10130, %v10281, %v10280
    %v10283 = vrot.slane %v10262, 7
    %v10284 = vsel %vm10112, %v10283, %v10261
    %v10285 = vrot.slane %v10263, 6
    %v10286 = vsel %vm10115, %v10285, %v10284
    %v10287 = vrot.slane %v10264, 5
    %v10288 = vsel %vm10118, %v10287, %v10286
    %v10289 = vrot.slane %v10265, 4
    %v10290 = vsel %vm10121, %v10289, %v10288
    %v10291 = vrot.slane %v10266, 3
    %v10292 = vsel %vm10124, %v10291, %v10290
    %v10293 = vrot.slane %v10267, 2
    %v10294 = vsel %vm10127, %v10293, %v10292
    %v10295 = vrot.slane %v10268, 1
    %v10296 = vsel %vm10130, %v10295, %v10294
    %v10297 = vpack.c.b16 %v10296, %v10282
    %v10315 = vunpack.c.l.b16 %v10030
    %v10316 = vunpack.c.l.b16 %v10031
    %v10317 = vunpack.c.l.b16 %v10032
    %v10318 = vunpack.c.l.b16 %v10033
    %v10319 = vunpack.c.l.b16 %v10034
    %v10320 = vunpack.c.l.b16 %v10035
    %v10321 = vunpack.c.l.b16 %v10036
    %v10322 = vunpack.c.l.b16 %v10037
    %v10323 = vunpack.c.l.b16 %v10038
    %v10324 = vunpack.c.l.b16 %v10039
    %v10325 = vunpack.c.l.b16 %v10040
    %v10326 = vunpack.c.l.b16 %v10041
    %v10327 = vunpack.c.l.b16 %v10042
    %v10328 = vunpack.c.l.b16 %v10043
    %v10329 = vunpack.c.l.b16 %v10044
    %v10330 = vunpack.c.l.b16 %v10045
    %v10331 = vpack.c.b16 %v10316, %v10315
    %v10332 = vpack.c.b16 %v10318, %v10317
    %v10333 = vpack.c.b16 %v10320, %v10319
    %v10334 = vpack.c.b16 %v10322, %v10321
    %v10335 = vpack.c.b16 %v10324, %v10323
    %v10336 = vpack.c.b16 %v10326, %v10325
    %v10337 = vpack.c.b16 %v10328, %v10327
    %v10338 = vpack.c.b16 %v10330, %v10329
    %10347 = vmatprep.subr.bf16.mxu0 0
    %10348 = vmatpush1.bf16.msra.mxu0 %v10331
    %10349 = vmatprep.subr.bf16.mxu0 0
    %10350 = vmatpush1.bf16.msra.mxu0 %v10332
    %10351 = vmatprep.subr.bf16.mxu0 0
    %10352 = vmatpush1.bf16.msra.mxu0 %v10333
    %10353 = vmatprep.subr.bf16.mxu0 0
    %10354 = vmatpush1.bf16.msra.mxu0 %v10334
    %10355 = vmatprep.subr.bf16.mxu0 0
    %10356 = vmatpush1.bf16.msra.mxu0 %v10335
    %10357 = vmatprep.subr.bf16.mxu0 0
    %10358 = vmatpush1.bf16.msra.mxu0 %v10336
    %10359 = vmatprep.subr.bf16.mxu0 0
    %10360 = vmatpush1.bf16.msra.mxu0 %v10337
    %10361 = vmatprep.subr.bf16.mxu0 0
    %10362 = vmatpush1.bf16.msra.mxu0 %v10338
    %10363 = vmatprep.subr.bf16.mxu0 0
    %10364 = vmatpush1.bf16.msra.mxu0 0
    %10365 = vmatprep.subr.bf16.mxu0 0
    %10366 = vmatpush1.bf16.msra.mxu0 0
    %10367 = vmatprep.subr.bf16.mxu0 0
    %10368 = vmatpush1.bf16.msra.mxu0 0
    %10369 = vmatprep.subr.bf16.mxu0 0
    %10370 = vmatpush1.bf16.msra.mxu0 0
    %10371 = vmatprep.subr.bf16.mxu0 0
    %10372 = vmatpush1.bf16.msra.mxu0 0
    %10373 = vmatprep.subr.bf16.mxu0 0
    %10374 = vmatpush1.bf16.msra.mxu0 0
    %10375 = vmatprep.subr.bf16.mxu0 0
    %10376 = vmatpush1.bf16.msra.mxu0 0
    %10377 = vmatprep.subr.bf16.mxu0 0
    %10378 = vmatpush1.bf16.msra.mxu0 0
    %10379 = vmatprep.mubr.bf16.mxu0 0
    %10380 = vmatmul.mubr.bf16.gmra.mrb[0].mxu0 %v10297
    %v10381 = vpop.f32.mrb[0].mxu0
    %v10382 = vadd.f32 %v10231, %v10381
    %v10383 = vpop.f32.mrb[0].mxu0
    %v10384 = vpop.f32.mrb[0].mxu0
    %v10385 = vadd.f32 %v10234, %v10384
    %v10386 = vpop.f32.mrb[0].mxu0
    %10387 = vdwg.mxu0
    %v10388 = vld [vmem:[#allocation12] sm:$0x1]
    %v10390 = vlaneseq
    %v10391 = vshrl.u32 %v10390, 7
    %v10392 = vsub.s32 0, %v10391
    %v10393 = vrot.slane %v10388, %v10392
    %v10395 = vadd.f32 %v10382, %v10393
    %v10396 = vadd.f32 %v10385, %v10393
    %v10397 = vmax.f32 %v10395, 0.0
    %v10398 = vmax.f32 %v10396, 0.0
    %v10399 = vpack.c.bf16 %v10398, %v10397
    %v10400 = vld [vmem:[#allocation13] sm:$0xf]
    %v10401 = vld [vmem:[#allocation13 + $0x4] sm:$0xf]
    %v10402 = vld [vmem:[#allocation13 + $0x8] sm:$0xf]
    %v10403 = vld [vmem:[#allocation13 + $0xc] sm:$0xf]
    %v10404 = vld [vmem:[#allocation13 + $0x10] sm:$0xf]
    %v10405 = vld [vmem:[#allocation13 + $0x14] sm:$0xf]
    %v10406 = vld [vmem:[#allocation13 + $0x18] sm:$0x1]
    %v10407 = vld [vmem:[#allocation15] sm:$0x1]
    %v10409 = vlaneseq
    %v10410 = vshrl.u32 %v10409, 7
    %v10411 = vsub.s32 0, %v10410
    %v10412 = vrot.slane %v10407, %v10411
    %v10421 = vunpack.c.l.b16 %v10400
    %v10422 = vunpack.c.l.b16 %v10401
    %v10423 = vunpack.c.l.b16 %v10402
    %v10424 = vunpack.c.l.b16 %v10403
    %v10425 = vunpack.c.l.b16 %v10404
    %v10426 = vunpack.c.l.b16 %v10405
    %v10427 = vunpack.c.l.b16 %v10406
    %v10428 = vpack.c.b16 %v10422, %v10421
    %v10429 = vpack.c.b16 %v10424, %v10423
    %v10430 = vpack.c.b16 %v10426, %v10425
    %v10431 = vpack.c.b16 %v10427, %v10427
    %vm10435 = vcmask 408576
    %v10437 = vsel %vm10435, %v10399, 0
    %vm10439 = vcmask 1040384
    %v10441 = vsel %vm10439, %v10431, 0
    %10443 = vmatprep.subr.bf16.mxu0 0
    %10444 = vmatpush1.bf16.msra.mxu0 %v10428
    %10445 = vmatprep.subr.bf16.mxu0 0
    %10446 = vmatpush1.bf16.msra.mxu0 %v10429
    %10447 = vmatprep.subr.bf16.mxu0 0
    %10448 = vmatpush1.bf16.msra.mxu0 %v10430
    %10449 = vmatprep.subr.bf16.mxu0 0
    %10450 = vmatpush1.bf16.msra.mxu0 %v10441
    %10451 = vmatprep.subr.bf16.mxu0 0
    %10452 = vmatpush1.bf16.msra.mxu0 0
    %10453 = vmatprep.subr.bf16.mxu0 0
    %10454 = vmatpush1.bf16.msra.mxu0 0
    %10455 = vmatprep.subr.bf16.mxu0 0
    %10456 = vmatpush1.bf16.msra.mxu0 0
    %10457 = vmatprep.subr.bf16.mxu0 0
    %10458 = vmatpush1.bf16.msra.mxu0 0
    %10459 = vmatprep.subr.bf16.mxu0 0
    %10460 = vmatpush1.bf16.msra.mxu0 0
    %10461 = vmatprep.subr.bf16.mxu0 0
    %10462 = vmatpush1.bf16.msra.mxu0 0
    %10463 = vmatprep.subr.bf16.mxu0 0
    %10464 = vmatpush1.bf16.msra.mxu0 0
    %10465 = vmatprep.subr.bf16.mxu0 0
    %10466 = vmatpush1.bf16.msra.mxu0 0
    %10467 = vmatprep.subr.bf16.mxu0 0
    %10468 = vmatpush1.bf16.msra.mxu0 0
    %10469 = vmatprep.subr.bf16.mxu0 0
    %10470 = vmatpush1.bf16.msra.mxu0 0
    %10471 = vmatprep.subr.bf16.mxu0 0
    %10472 = vmatpush1.bf16.msra.mxu0 0
    %10473 = vmatprep.subr.bf16.mxu0 0
    %10474 = vmatpush1.bf16.msra.mxu0 0
    %10475 = vmatprep.mubr.bf16.mxu0 0
    %10476 = vmatmul.mubr.bf16.gmra.mrb[0].mxu0 %v10437
    %v10477 = vpop.f32.mrb[0].mxu0
    %v10478 = vadd.f32 %v10412, %v10477
    %v10479 = vpop.f32.mrb[0].mxu0
    %v10480 = vpop.f32.mrb[0].mxu0
    %v10481 = vadd.f32 %v10412, %v10480
    %v10482 = vpop.f32.mrb[0].mxu0
    %10483 = vdwg.mxu0
    %10484 = vmax.xlane.f32.xlu0 %v10478
    %v10485 = vpop.xlane.xlu0 %10484
    %10486 = vmax.xlane.f32.xlu0 %v10481
    %v10487 = vpop.xlane.xlu0 %10486
    %v10488 = vsub.f32 %v10478, %v10485
    %v10489 = vsub.f32 %v10481, %v10487
    %v10490 = vmul.f32 %v10488, 1.442695
    %v10491 = vpow.pop %v10490
    %v10492 = vmul.f32 %v10489, 1.442695
    %v10493 = vpow.pop %v10492
    %10494 = vadd.xlane.f32.xlu0 %v10491
    %v10495 = vpop.xlane.xlu0 %10494
    %10496 = vadd.xlane.f32.xlu0 %v10493
    %v10497 = vpop.xlane.xlu0 %10496
    %v10498 = vrcp.pop %v10495
    %v10499 = vmul.f32 %v10491, %v10498
    %v10500 = vrcp.pop %v10497
    %v10501 = vmul.f32 %v10493, %v10500
    %10502 = vst [vmem:[%s9] sm:$0xff] %v10499
    %10503 = vst [vmem:[%s9 + $0x8] sm:$0xff] %v10501
    // Predicated region
    $region66: #{cnn_v1_forward.1} parent=1 // pred_check
      _
    $region67: #{cnn_v1_forward.1} parent=1 // pred_check_branch
      %10505 = sbr.rel (0) target = $region69
    $region68: #{cnn_v1_forward.1} parent=1 // pred_region
      _
    $region69: #{cnn_v1_forward.1} parent=1 // pred_fallthru
      _
    // Predicated region
    $region70: #{cnn_v1_forward.1} parent=1 // pred_check
      _
    $region71: #{cnn_v1_forward.1} parent=1 // pred_check_branch
      %10507 = sbr.rel (0) target = $region73
    $region72: #{cnn_v1_forward.1} parent=1 // pred_region
      _
    $region73: #{cnn_v1_forward.1} parent=1 // pred_fallthru
      _
    %10508 = vsyncpa [#allocation6], 1
    %10509 = vsyncpa [#allocation8], 1
    %10510 = vsyncpa [#allocation11], 1
    %10511 = vsyncpa [#allocation14], 1

</llo_original>
